<compile_context>
chip_gen: v7x
topology: tpu7x:2x2x1
jax: 0.10.0
libtpu: 0.0.40
codegen_flags: <defaults>
</compile_context>

<pallas_src>
import jax
import jax.numpy as jnp
from jax.experimental import pallas as pl
from jax.experimental.pallas import tpu as pltpu

# --------------------------------------------------------------------------------------
# Model hyper-parameters implied by the module (st_fc: 2*d_model -> d_model, s_dim=128,
# t_dim=32, crds_fc: 2 -> 64, t_fc: 1 -> 32  =>  d_model must be 128).
# --------------------------------------------------------------------------------------
D_MODEL    = 128
N_HEAD     = 4
HEAD_DIM   = D_MODEL // N_HEAD
FFN_HIDDEN = 256
N_LAYERS   = 1
ENC_SIZE   = 32          # spatial vocab
DEC_SIZE   = 32          # target vocab (output logits)
T_VOCAB    = 16          # time-span vocab
S_DIM      = 128
T_DIM      = 32
PAD_IDX    = 0

_SCALE   = 1.0 / (HEAD_DIM ** 0.5)
_NEG_INF = -1e9


# --------------------------------------------------------------------------------------
# In-kernel helpers (traced inside the Pallas kernel only)
# --------------------------------------------------------------------------------------
def _mm(a, w):
    """(..., K) x (K, N) matmul: bf16 operands on the MXU, f32 accumulation."""
    return jax.lax.dot_general(
        a.astype(jnp.bfloat16), w.astype(jnp.bfloat16),
        (((a.ndim - 1,), (0,)), ((), ())),
        preferred_element_type=jnp.float32)


def _ln(x, g, b, eps=1e-5):
    """LayerNorm over the last (128-lane) dim; f32 math, rides the XLU/VPU."""
    mu = jnp.mean(x, axis=-1, keepdims=True)
    xc = x - mu
    var = jnp.mean(xc * xc, axis=-1, keepdims=True)
    return xc * jax.lax.rsqrt(var + eps) * g + b


def _split_heads(x, col0):
    """Static 32-lane slices of a (L, >= col0 + D_MODEL) slab stacked to (H, L, Dh)."""
    return jnp.stack(
        [x[:, col0 + h * HEAD_DIM: col0 + (h + 1) * HEAD_DIM] for h in range(N_HEAD)],
        axis=0)


def _attend(qh, kh, vh, bias):
    """Head-batched attention: one score dot, ONE softmax, one PV dot for all heads.
    qh: (H, Lq, Dh); kh/vh: (H, Lk, Dh); bias broadcastable to (H, Lq, Lk)."""
    bf16 = jnp.bfloat16
    s = jax.lax.dot_general(qh.astype(bf16), kh.astype(bf16),
                            (((2,), (2,)), ((0,), (0,))),
                            preferred_element_type=jnp.float32) * _SCALE + bias
    s = s - jnp.max(s, axis=-1, keepdims=True)
    e = jnp.exp(s)
    p = e * pl.reciprocal(jnp.sum(e, axis=-1, keepdims=True), approx=True)
    o = jax.lax.dot_general(p.astype(bf16), vh.astype(bf16),
                            (((2,), (1,)), ((0,), (0,))),
                            preferred_element_type=jnp.float32)           # (H, Lq, Dh)
    return jnp.concatenate([o[h] for h in range(N_HEAD)], axis=-1)        # (Lq, D)


def _self_mha(x, wqkv, bqkv, wo, bo, bias):
    qkv = _mm(x, wqkv) + bqkv                       # ONE fused (128,384) MXU matmul
    qh = _split_heads(qkv, 0)
    kh = _split_heads(qkv, D_MODEL)
    vh = _split_heads(qkv, 2 * D_MODEL)
    return _mm(_attend(qh, kh, vh, bias), wo) + bo  # single (128,128) output proj


def _cross_mha(x, enc, wq, bq, wkv, bkv, wo, bo, bias):
    q = _mm(x, wq) + bq                             # (T, 128)
    kv = _mm(enc, wkv) + bkv                        # (S, 256) fused K|V matmul
    qh = _split_heads(q, 0)
    kh = _split_heads(kv, 0)
    vh = _split_heads(kv, D_MODEL)
    return _mm(_attend(qh, kh, vh, bias), wo) + bo


def _ffn(x, w1, b1, w2, b2):
    return _mm(jax.nn.relu(_mm(x, w1) + b1), w2) + b2


# --------------------------------------------------------------------------------------
# The single fused kernel: featurize -> encoder -> decoder -> packed head
# --------------------------------------------------------------------------------------
def _travel_kernel(
        # per-batch inputs (blocked along the grid axis)
        srcg_ref, srck_ref, trgg_ref, ts_ref, crds0_ref, crds1_ref, tg_ref, ttrg_ref,
        # STLayer + featurization weights (st_fc with crds_fc / t_fc folded in)
        sp_emb, sp_adj, ws, bs, t_emb, t_adj, wt, bt,
        w_src, w_c0, w_c1, w_ts, w_tg, b_feat,
        # encoder layers (stacked on a leading N_LAYERS axis) + final LN
        e_ln1g, e_ln1b, e_wqkv, e_bqkv, e_wo, e_bo,
        e_ln2g, e_ln2b, e_w1, e_b1, e_w2, e_b2, e_lnfg, e_lnfb,
        # decoder layers (stacked) + final LN
        d_ln1g, d_ln1b, d_wqkv, d_bqkv, d_wos, d_bos,
        d_ln2g, d_ln2b, d_wqc, d_bqc, d_wkvc, d_bkvc, d_woc, d_boc,
        d_ln3g, d_ln3b, d_w1, d_b1, d_w2, d_b2, d_lnfg, d_lnfb,
        # packed output head [logits | t_output | pad]
        w_head, w_t_head, b_head,
        # output
        out_ref):
    f32 = jnp.float32
    S = srck_ref.shape[2]
    T = trgg_ref.shape[1]
    V = sp_emb.shape[0]
    TV = t_emb.shape[0]

    src_g = srcg_ref[0]                              # (S, 1) int32 (gather layout)
    src_k = srck_ref[0]                              # (1, S) int32 (key-mask layout)
    trg_g = trgg_ref[0]                              # (T, 1) int32

    # ---- STLayer graph convolutions (tiny shared tables; recomputed per grid step) ----
    # TODO(synk): STLayer source not provided; reconstructed as one graph-conv layer per
    #             modality: relu((adj @ emb) @ W + b), both matmuls on the MXU.
    s_tbl = jax.nn.relu(_mm(_mm(sp_adj[...], sp_emb[...]), ws[...]) + bs[...])    # (V, 128)
    t_tbl = jax.nn.relu(_mm(_mm(t_adj[...], t_emb[...]), wt[...]) + bt[...])      # (TV, 32)

    # ---- embedding gathers as one-hot MXU matmuls (vocab is tiny, stays in VMEM) ----
    oh_src = (src_g == jax.lax.broadcasted_iota(jnp.int32, (S, V), 1)).astype(f32)
    oh_trg = (trg_g == jax.lax.broadcasted_iota(jnp.int32, (T, V), 1)).astype(f32)
    oh_ts = (ts_ref[0] == jax.lax.broadcasted_iota(jnp.int32, (1, TV), 1)).astype(f32)

    trg_emb = _mm(oh_trg, s_tbl)                                                   # (T, 128)

    # st_fc with the K=2 crds_fc and K=1 t_fc folded in (weight composition in the
    # wrapper): the tiny-K contractions become lane-broadcast multiplies on the VPU.
    src_part = _mm(oh_src, _mm(s_tbl, w_src[...]))                                 # (S, 128)
    ts_part = _mm(oh_ts, _mm(t_tbl, w_ts[...]))                                    # (1, 128)
    crds_part = crds0_ref[0] * w_c0[...] + crds1_ref[0] * w_c1[...]                # (S, 128)
    tg_part = tg_ref[0] * w_tg[...]                                                # (S, 128)
    x = src_part + ts_part + crds_part + tg_part + b_feat[...]                     # (S, 128)

    # ---- attention biases derived in-kernel from the raw int ids -----------------------
    # make_src_mask: key padding over source positions (encoder self + decoder cross)
    key_bias = jnp.where(src_k != PAD_IDX, 0.0, _NEG_INF).astype(f32)[None]        # (1,1,S)
    # make_trg_mask: causal AND query-validity.  Keys are intentionally NOT pad-masked so
    # this matches the reference's make_trg_mask exactly (with right-padding, causality
    # already hides trailing pad keys from every valid query).
    row = jax.lax.broadcasted_iota(jnp.int32, (T, T), 0)
    col = jax.lax.broadcasted_iota(jnp.int32, (T, T), 1)
    self_bias = jnp.where(jnp.logical_and(row >= col, trg_g != PAD_IDX),
                          0.0, _NEG_INF).astype(f32)[None]                         # (1,T,T)

    # ---- encoder: all layers fused in this launch (pre-norm) ---------------------------
    # TODO(synk): Encoder source not provided; relative positional encoding ('relative')
    #             and dropout are omitted in this reconstruction.
    for l in range(e_wqkv.shape[0]):
        h = _ln(x, e_ln1g[l], e_ln1b[l])
        x = x + _self_mha(h, e_wqkv[l], e_bqkv[l], e_wo[l], e_bo[l], key_bias)
        h = _ln(x, e_ln2g[l], e_ln2b[l])
        x = x + _ffn(h, e_w1[l], e_b1[l], e_w2[l], e_b2[l])
    enc = _ln(x, e_lnfg[...], e_lnfb[...])                                         # (S, 128)

    # ---- decoder: all layers + packed head fused in this launch ------------------------
    # TODO(synk): Decoder source not provided; t_output reconstructed as a linear head
    #             over [decoder_hidden, t_fc(t_trg)] with t_fc folded into the head.
    y = trg_emb
    for l in range(d_wqkv.shape[0]):
        h = _ln(y, d_ln1g[l], d_ln1b[l])
        y = y + _self_mha(h, d_wqkv[l], d_bqkv[l], d_wos[l], d_bos[l], self_bias)
        h = _ln(y, d_ln2g[l], d_ln2b[l])
        y = y + _cross_mha(h, enc, d_wqc[l], d_bqc[l], d_wkvc[l], d_bkvc[l],
                           d_woc[l], d_boc[l], key_bias)
        h = _ln(y, d_ln3g[l], d_ln3b[l])
        y = y + _ffn(h, d_w1[l], d_b1[l], d_w2[l], d_b2[l])
    yf = _ln(y, d_lnfg[...], d_lnfb[...])

    # lane-dense packed head: [logits(32) | t_output(1) | zero pad] -> one 128-wide store
    head = _mm(yf, w_head[...]) + ttrg_ref[0] * w_t_head[...] + b_head[...]
    out_ref[0] = head.astype(out_ref.dtype)


# --------------------------------------------------------------------------------------
# Travel forward: weight folding / packing + ONE pallas_call
# --------------------------------------------------------------------------------------
def travel_forward(params, src, crds, time_span, time_gaps, trg, t_trg):
    f32, bf16 = jnp.float32, jnp.bfloat16
    B, S = src.shape
    T = trg.shape[1]

    # ---- fold the K=2 crds_fc and K=1 t_fc into st_fc (weight composition) ------------
    # st_fc input order: [src_emb(128) | crds_fc(64) | time_span_emb(32) | t_fc(32)]
    W_st, b_st = params["st_fc"]["w"], params["st_fc"]["b"]
    Wc, bc = params["crds_fc"]["w"], params["crds_fc"]["b"]
    Wtf, btf = params["t_fc"]["w"], params["t_fc"]["b"]
    w_src = W_st[0:128]                                       # (128,128)
    w_crds = Wc @ W_st[128:192]                               # (2,128)
    w_ts = W_st[192:224]                                      # (32,128)
    w_tg = Wtf @ W_st[224:256]                                # (1,128)
    b_feat = b_st + bc @ W_st[128:192] + btf @ W_st[224:256]  # (128,)

    st = params["st_layer"]
    feat_args = [
        params["sp_emb"].astype(bf16), params["sp_adj"].astype(bf16),
        st["ws"]["w"].astype(bf16), st["ws"]["b"][None, :].astype(f32),
        params["t_emb"].astype(bf16), params["t_adj"].astype(bf16),
        st["wt"]["w"].astype(bf16), st["wt"]["b"][None, :].astype(f32),
        w_src.astype(bf16),
        w_crds[0][None, :].astype(f32), w_crds[1][None, :].astype(f32),
        w_ts.astype(bf16), w_tg.astype(f32), b_feat[None, :].astype(f32),
    ]

    # ---- fused-QKV / fused-KV weights, stacked over layers (single launch) -------------
    def qkv_w(ap):
        return jnp.concatenate([ap["wq"]["w"], ap["wk"]["w"], ap["wv"]["w"]], axis=1)

    def qkv_b(ap):
        return jnp.concatenate([ap["wq"]["b"], ap["wk"]["b"], ap["wv"]["b"]])[None, :]

    def kv_w(ap):
        return jnp.concatenate([ap["wk"]["w"], ap["wv"]["w"]], axis=1)

    def kv_b(ap):
        return jnp.concatenate([ap["wk"]["b"], ap["wv"]["b"]])[None, :]

    def stk(layers, get, dtype=f32):
        return jnp.stack([get(lp) for lp in layers]).astype(dtype)

    ep, dp = params["encoder"], params["decoder"]
    eL, dL = ep["layers"], dp["layers"]

    enc_args = [
        stk(eL, lambda l: l["ln1_g"][None, :]), stk(eL, lambda l: l["ln1_b"][None, :]),
        stk(eL, lambda l: qkv_w(l["attn"]), bf16), stk(eL, lambda l: qkv_b(l["attn"])),
        stk(eL, lambda l: l["attn"]["wo"]["w"], bf16),
        stk(eL, lambda l: l["attn"]["wo"]["b"][None, :]),
        stk(eL, lambda l: l["ln2_g"][None, :]), stk(eL, lambda l: l["ln2_b"][None, :]),
        stk(eL, lambda l: l["ffn"]["w1"]["w"], bf16),
        stk(eL, lambda l: l["ffn"]["w1"]["b"][None, :]),
        stk(eL, lambda l: l["ffn"]["w2"]["w"], bf16),
        stk(eL, lambda l: l["ffn"]["w2"]["b"][None, :]),
        ep["lnf_g"][None, :].astype(f32), ep["lnf_b"][None, :].astype(f32),
    ]

    dec_args = [
        stk(dL, lambda l: l["ln1_g"][None, :]), stk(dL, lambda l: l["ln1_b"][None, :]),
        stk(dL, lambda l: qkv_w(l["self_attn"]), bf16),
        stk(dL, lambda l: qkv_b(l["self_attn"])),
        stk(dL, lambda l: l["self_attn"]["wo"]["w"], bf16),
        stk(dL, lambda l: l["self_attn"]["wo"]["b"][None, :]),
        stk(dL, lambda l: l["ln2_g"][None, :]), stk(dL, lambda l: l["ln2_b"][None, :]),
        stk(dL, lambda l: l["cross_attn"]["wq"]["w"], bf16),
        stk(dL, lambda l: l["cross_attn"]["wq"]["b"][None, :]),
        stk(dL, lambda l: kv_w(l["cross_attn"]), bf16),
        stk(dL, lambda l: kv_b(l["cross_attn"])),
        stk(dL, lambda l: l["cross_attn"]["wo"]["w"], bf16),
        stk(dL, lambda l: l["cross_attn"]["wo"]["b"][None, :]),
        stk(dL, lambda l: l["ln3_g"][None, :]), stk(dL, lambda l: l["ln3_b"][None, :]),
        stk(dL, lambda l: l["ffn"]["w1"]["w"], bf16),
        stk(dL, lambda l: l["ffn"]["w1"]["b"][None, :]),
        stk(dL, lambda l: l["ffn"]["w2"]["w"], bf16),
        stk(dL, lambda l: l["ffn"]["w2"]["b"][None, :]),
        dp["lnf_g"][None, :].astype(f32), dp["lnf_b"][None, :].astype(f32),
    ]

    # ---- packed decoder head: [logits(32) | t_output(1) | zero pad] as one 128-lane slab
    W_out, b_out = dp["out"]["w"], dp["out"]["b"]             # (128,32), (32,)
    W_to, b_to = dp["t_out"]["w"], dp["t_out"]["b"]           # (160,1),  (1,)
    pad_n = D_MODEL - DEC_SIZE - 1
    w_head = jnp.concatenate(
        [W_out, W_to[:D_MODEL], jnp.zeros((D_MODEL, pad_n), f32)], axis=1)        # (128,128)
    w_t_head = jnp.concatenate(
        [jnp.zeros((1, DEC_SIZE), f32), Wtf @ W_to[D_MODEL:],
         jnp.zeros((1, pad_n), f32)], axis=1)                                     # (1,128)
    b_head = jnp.concatenate(
        [b_out, b_to + btf @ W_to[D_MODEL:], jnp.zeros((pad_n,), f32)])[None, :]  # (1,128)
    head_args = [w_head.astype(bf16), w_t_head.astype(f32), b_head.astype(f32)]

    # ---- per-batch inputs laid out so the kernel needs no transposes --------------------
    batch_args = [
        src.reshape(B, S, 1).astype(jnp.int32),      # gather layout
        src.reshape(B, 1, S).astype(jnp.int32),      # key-pad-mask layout
        trg.reshape(B, T, 1).astype(jnp.int32),      # gather + query-mask layout
        time_span.reshape(B, 1, 1).astype(jnp.int32),
        crds[..., 0:1].astype(f32),                  # (B,S,1)
        crds[..., 1:2].astype(f32),                  # (B,S,1)
        time_gaps.reshape(B, S, 1).astype(f32),
        t_trg.reshape(B, T, 1).astype(f32),
    ]

    all_inputs = batch_args + feat_args + enc_args + dec_args + head_args

    def batch_spec(a):
        nd = a.ndim
        return pl.BlockSpec((1,) + a.shape[1:], lambda b, nd=nd: (b,) + (0,) * (nd - 1))

    def rep_spec(a):
        nd = a.ndim
        return pl.BlockSpec(a.shape, lambda b, nd=nd: (0,) * nd)

    in_specs = ([batch_spec(a) for a in batch_args]
                + [rep_spec(a) for a in all_inputs[len(batch_args):]])

    # Single launch; grid over the batch so v7x's second TensorCore gets half the work.
    # Weight refs use constant index maps -> fetched once, kept VMEM-resident across steps.
    packed = pl.pallas_call(
        _travel_kernel,
        out_shape=jax.ShapeDtypeStruct((B, T, D_MODEL), f32),
        grid=(B,),
        in_specs=in_specs,
        out_specs=pl.BlockSpec((1, T, D_MODEL), lambda b: (b, 0, 0)),
        compiler_params=pltpu.CompilerParams(dimension_semantics=("parallel",)),
    )(*all_inputs)

    output = packed[..., :DEC_SIZE]                   # (B, T, DEC_SIZE)
    t_output = packed[..., DEC_SIZE:DEC_SIZE + 1]     # (B, T, 1)
    return output, t_output


# --------------------------------------------------------------------------------------
# Deterministic parameter init
# --------------------------------------------------------------------------------------
def init_params(key):
    keys = iter(jax.random.split(key, 128))

    def dense(k_in, k_out):
        w = jax.random.normal(next(keys), (k_in, k_out), jnp.float32) / jnp.sqrt(float(k_in))
        return {"w": w, "b": jnp.zeros((k_out,), jnp.float32)}

    def attn_params():
        return {"wq": dense(D_MODEL, D_MODEL), "wk": dense(D_MODEL, D_MODEL),
                "wv": dense(D_MODEL, D_MODEL), "wo": dense(D_MODEL, D_MODEL)}

    def ffn_params():
        return {"w1": dense(D_MODEL, FFN_HIDDEN), "w2": dense(FFN_HIDDEN, D_MODEL)}

    def enc_layer_params():
        return {"attn": attn_params(), "ffn": ffn_params(),
                "ln1_g": jnp.ones((D_MODEL,)), "ln1_b": jnp.zeros((D_MODEL,)),
                "ln2_g": jnp.ones((D_MODEL,)), "ln2_b": jnp.zeros((D_MODEL,))}

    def dec_layer_params():
        return {"self_attn": attn_params(), "cross_attn": attn_params(), "ffn": ffn_params(),
                "ln1_g": jnp.ones((D_MODEL,)), "ln1_b": jnp.zeros((D_MODEL,)),
                "ln2_g": jnp.ones((D_MODEL,)), "ln2_b": jnp.zeros((D_MODEL,)),
                "ln3_g": jnp.ones((D_MODEL,)), "ln3_b": jnp.zeros((D_MODEL,))}

    def adj(n):
        a = jax.random.uniform(next(keys), (n, n), jnp.float32)
        return a / jnp.sum(a, axis=-1, keepdims=True)

    params = {
        "sp_emb": jax.random.normal(next(keys), (ENC_SIZE, S_DIM), jnp.float32) * 0.1,
        "t_emb":  jax.random.normal(next(keys), (T_VOCAB, T_DIM), jnp.float32) * 0.1,
        "sp_adj": adj(ENC_SIZE),
        "t_adj":  adj(T_VOCAB),
        "st_layer": {"ws": dense(S_DIM, S_DIM), "wt": dense(T_DIM, T_DIM)},
        "crds_fc": dense(2, 64),
        "t_fc":    dense(1, 32),
        "st_fc":   dense(2 * D_MODEL, D_MODEL),
        "encoder": {"layers": [enc_layer_params() for _ in range(N_LAYERS)],
                    "lnf_g": jnp.ones((D_MODEL,)), "lnf_b": jnp.zeros((D_MODEL,))},
        "decoder": {"layers": [dec_layer_params() for _ in range(N_LAYERS)],
                    "lnf_g": jnp.ones((D_MODEL,)), "lnf_b": jnp.zeros((D_MODEL,)),
                    "out": dense(D_MODEL, DEC_SIZE),
                    "t_out": dense(D_MODEL + T_DIM, 1)},
    }
    return params


# --------------------------------------------------------------------------------------
if __name__ == "__main__":
    key = jax.random.PRNGKey(0)
    k_param, k1, k2, k3, k4, k5, k6 = jax.random.split(key, 7)

    params = init_params(k_param)

    B, S, T = 2, 8, 8
    src       = jax.random.randint(k1, (B, S), 1, ENC_SIZE, dtype=jnp.int32)
    crds      = jax.random.normal(k2, (B, S, 2), jnp.float32)
    time_span = jax.random.randint(k3, (B, 1), 1, T_VOCAB, dtype=jnp.int32)
    time_gaps = jax.random.uniform(k4, (B, S), jnp.float32)
    trg       = jax.random.randint(k5, (B, T), 1, ENC_SIZE, dtype=jnp.int32)
    t_trg     = jax.random.uniform(k6, (B, T), jnp.float32)

    fwd = jax.jit(travel_forward)
    output, t_output = fwd(params, src, crds, time_span, time_gaps, trg, t_trg)
    jax.block_until_ready((output, t_output))

    assert output.shape == (B, T, DEC_SIZE)
    assert t_output.shape == (B, T, 1)
    assert bool(jnp.all(jnp.isfinite(output))) and bool(jnp.all(jnp.isfinite(t_output)))
    print("KERNEL_OK")
</pallas_src>

<mosaic_0001>
module attributes {stable_mosaic.version = 11 : i64} {
  func.func @_travel_kernel(%arg0: i32, %arg1: memref<1x8x1xi32, #tpu.memory_space<vmem>>, %arg2: memref<1x1x8xi32, #tpu.memory_space<vmem>>, %arg3: memref<1x8x1xi32, #tpu.memory_space<vmem>>, %arg4: memref<1x1x1xi32, #tpu.memory_space<vmem>>, %arg5: memref<1x8x1xf32, #tpu.memory_space<vmem>>, %arg6: memref<1x8x1xf32, #tpu.memory_space<vmem>>, %arg7: memref<1x8x1xf32, #tpu.memory_space<vmem>>, %arg8: memref<1x8x1xf32, #tpu.memory_space<vmem>>, %arg9: memref<32x128xbf16, #tpu.memory_space<vmem>>, %arg10: memref<32x32xbf16, #tpu.memory_space<vmem>>, %arg11: memref<128x128xbf16, #tpu.memory_space<vmem>>, %arg12: memref<1x128xf32, #tpu.memory_space<vmem>>, %arg13: memref<16x32xbf16, #tpu.memory_space<vmem>>, %arg14: memref<16x16xbf16, #tpu.memory_space<vmem>>, %arg15: memref<32x32xbf16, #tpu.memory_space<vmem>>, %arg16: memref<1x32xf32, #tpu.memory_space<vmem>>, %arg17: memref<128x128xbf16, #tpu.memory_space<vmem>>, %arg18: memref<1x128xf32, #tpu.memory_space<vmem>>, %arg19: memref<1x128xf32, #tpu.memory_space<vmem>>, %arg20: memref<32x128xbf16, #tpu.memory_space<vmem>>, %arg21: memref<1x128xf32, #tpu.memory_space<vmem>>, %arg22: memref<1x128xf32, #tpu.memory_space<vmem>>, %arg23: memref<1x1x128xf32, #tpu.memory_space<vmem>>, %arg24: memref<1x1x128xf32, #tpu.memory_space<vmem>>, %arg25: memref<1x128x384xbf16, #tpu.memory_space<vmem>>, %arg26: memref<1x1x384xf32, #tpu.memory_space<vmem>>, %arg27: memref<1x128x128xbf16, #tpu.memory_space<vmem>>, %arg28: memref<1x1x128xf32, #tpu.memory_space<vmem>>, %arg29: memref<1x1x128xf32, #tpu.memory_space<vmem>>, %arg30: memref<1x1x128xf32, #tpu.memory_space<vmem>>, %arg31: memref<1x128x256xbf16, #tpu.memory_space<vmem>>, %arg32: memref<1x1x256xf32, #tpu.memory_space<vmem>>, %arg33: memref<1x256x128xbf16, #tpu.memory_space<vmem>>, %arg34: memref<1x1x128xf32, #tpu.memory_space<vmem>>, %arg35: memref<1x128xf32, #tpu.memory_space<vmem>>, %arg36: memref<1x128xf32, #tpu.memory_space<vmem>>, %arg37: memref<1x1x128xf32, #tpu.memory_space<vmem>>, %arg38: memref<1x1x128xf32, #tpu.memory_space<vmem>>, %arg39: memref<1x128x384xbf16, #tpu.memory_space<vmem>>, %arg40: memref<1x1x384xf32, #tpu.memory_space<vmem>>, %arg41: memref<1x128x128xbf16, #tpu.memory_space<vmem>>, %arg42: memref<1x1x128xf32, #tpu.memory_space<vmem>>, %arg43: memref<1x1x128xf32, #tpu.memory_space<vmem>>, %arg44: memref<1x1x128xf32, #tpu.memory_space<vmem>>, %arg45: memref<1x128x128xbf16, #tpu.memory_space<vmem>>, %arg46: memref<1x1x128xf32, #tpu.memory_space<vmem>>, %arg47: memref<1x128x256xbf16, #tpu.memory_space<vmem>>, %arg48: memref<1x1x256xf32, #tpu.memory_space<vmem>>, %arg49: memref<1x128x128xbf16, #tpu.memory_space<vmem>>, %arg50: memref<1x1x128xf32, #tpu.memory_space<vmem>>, %arg51: memref<1x1x128xf32, #tpu.memory_space<vmem>>, %arg52: memref<1x1x128xf32, #tpu.memory_space<vmem>>, %arg53: memref<1x128x256xbf16, #tpu.memory_space<vmem>>, %arg54: memref<1x1x256xf32, #tpu.memory_space<vmem>>, %arg55: memref<1x256x128xbf16, #tpu.memory_space<vmem>>, %arg56: memref<1x1x128xf32, #tpu.memory_space<vmem>>, %arg57: memref<1x128xf32, #tpu.memory_space<vmem>>, %arg58: memref<1x128xf32, #tpu.memory_space<vmem>>, %arg59: memref<128x128xbf16, #tpu.memory_space<vmem>>, %arg60: memref<1x128xf32, #tpu.memory_space<vmem>>, %arg61: memref<1x128xf32, #tpu.memory_space<vmem>>, %arg62: memref<1x8x128xf32, #tpu.memory_space<vmem>>) attributes {dimension_semantics = [#tpu.dimension_semantics<parallel>], iteration_bounds = array<i64: 2>, scalar_prefetch = 0 : i64, scratch_operands = 0 : i64, tpu.core_type = #tpu.core_type<tc>, window_params = [{transform_indices = @transform_0, window_bounds = array<i64: 1, 8, 1>}, {transform_indices = @transform_1, window_bounds = array<i64: 1, 1, 8>}, {transform_indices = @transform_2, window_bounds = array<i64: 1, 8, 1>}, {transform_indices = @transform_3, window_bounds = array<i64: 1, 1, 1>}, {transform_indices = @transform_4, window_bounds = array<i64: 1, 8, 1>}, {transform_indices = @transform_5, window_bounds = array<i64: 1, 8, 1>}, {transform_indices = @transform_6, window_bounds = array<i64: 1, 8, 1>}, {transform_indices = @transform_7, window_bounds = array<i64: 1, 8, 1>}, {pipeline_mode = #tpu.pipeline_mode<synchronous>, transform_indices = @transform_8, window_bounds = array<i64: 32, 128>}, {pipeline_mode = #tpu.pipeline_mode<synchronous>, transform_indices = @transform_9, window_bounds = array<i64: 32, 32>}, {pipeline_mode = #tpu.pipeline_mode<synchronous>, transform_indices = @transform_10, window_bounds = array<i64: 128, 128>}, {pipeline_mode = #tpu.pipeline_mode<synchronous>, transform_indices = @transform_11, window_bounds = array<i64: 1, 128>}, {pipeline_mode = #tpu.pipeline_mode<synchronous>, transform_indices = @transform_12, window_bounds = array<i64: 16, 32>}, {pipeline_mode = #tpu.pipeline_mode<synchronous>, transform_indices = @transform_13, window_bounds = array<i64: 16, 16>}, {pipeline_mode = #tpu.pipeline_mode<synchronous>, transform_indices = @transform_14, window_bounds = array<i64: 32, 32>}, {pipeline_mode = #tpu.pipeline_mode<synchronous>, transform_indices = @transform_15, window_bounds = array<i64: 1, 32>}, {pipeline_mode = #tpu.pipeline_mode<synchronous>, transform_indices = @transform_16, window_bounds = array<i64: 128, 128>}, {pipeline_mode = #tpu.pipeline_mode<synchronous>, transform_indices = @transform_17, window_bounds = array<i64: 1, 128>}, {pipeline_mode = #tpu.pipeline_mode<synchronous>, transform_indices = @transform_18, window_bounds = array<i64: 1, 128>}, {pipeline_mode = #tpu.pipeline_mode<synchronous>, transform_indices = @transform_19, window_bounds = array<i64: 32, 128>}, {pipeline_mode = #tpu.pipeline_mode<synchronous>, transform_indices = @transform_20, window_bounds = array<i64: 1, 128>}, {pipeline_mode = #tpu.pipeline_mode<synchronous>, transform_indices = @transform_21, window_bounds = array<i64: 1, 128>}, {pipeline_mode = #tpu.pipeline_mode<synchronous>, transform_indices = @transform_22, window_bounds = array<i64: 1, 1, 128>}, {pipeline_mode = #tpu.pipeline_mode<synchronous>, transform_indices = @transform_23, window_bounds = array<i64: 1, 1, 128>}, {pipeline_mode = #tpu.pipeline_mode<synchronous>, transform_indices = @transform_24, window_bounds = array<i64: 1, 128, 384>}, {pipeline_mode = #tpu.pipeline_mode<synchronous>, transform_indices = @transform_25, window_bounds = array<i64: 1, 1, 384>}, {pipeline_mode = #tpu.pipeline_mode<synchronous>, transform_indices = @transform_26, window_bounds = array<i64: 1, 128, 128>}, {pipeline_mode = #tpu.pipeline_mode<synchronous>, transform_indices = @transform_27, window_bounds = array<i64: 1, 1, 128>}, {pipeline_mode = #tpu.pipeline_mode<synchronous>, transform_indices = @transform_28, window_bounds = array<i64: 1, 1, 128>}, {pipeline_mode = #tpu.pipeline_mode<synchronous>, transform_indices = @transform_29, window_bounds = array<i64: 1, 1, 128>}, {pipeline_mode = #tpu.pipeline_mode<synchronous>, transform_indices = @transform_30, window_bounds = array<i64: 1, 128, 256>}, {pipeline_mode = #tpu.pipeline_mode<synchronous>, transform_indices = @transform_31, window_bounds = array<i64: 1, 1, 256>}, {pipeline_mode = #tpu.pipeline_mode<synchronous>, transform_indices = @transform_32, window_bounds = array<i64: 1, 256, 128>}, {pipeline_mode = #tpu.pipeline_mode<synchronous>, transform_indices = @transform_33, window_bounds = array<i64: 1, 1, 128>}, {pipeline_mode = #tpu.pipeline_mode<synchronous>, transform_indices = @transform_34, window_bounds = array<i64: 1, 128>}, {pipeline_mode = #tpu.pipeline_mode<synchronous>, transform_indices = @transform_35, window_bounds = array<i64: 1, 128>}, {pipeline_mode = #tpu.pipeline_mode<synchronous>, transform_indices = @transform_36, window_bounds = array<i64: 1, 1, 128>}, {pipeline_mode = #tpu.pipeline_mode<synchronous>, transform_indices = @transform_37, window_bounds = array<i64: 1, 1, 128>}, {pipeline_mode = #tpu.pipeline_mode<synchronous>, transform_indices = @transform_38, window_bounds = array<i64: 1, 128, 384>}, {pipeline_mode = #tpu.pipeline_mode<synchronous>, transform_indices = @transform_39, window_bounds = array<i64: 1, 1, 384>}, {pipeline_mode = #tpu.pipeline_mode<synchronous>, transform_indices = @transform_40, window_bounds = array<i64: 1, 128, 128>}, {pipeline_mode = #tpu.pipeline_mode<synchronous>, transform_indices = @transform_41, window_bounds = array<i64: 1, 1, 128>}, {pipeline_mode = #tpu.pipeline_mode<synchronous>, transform_indices = @transform_42, window_bounds = array<i64: 1, 1, 128>}, {pipeline_mode = #tpu.pipeline_mode<synchronous>, transform_indices = @transform_43, window_bounds = array<i64: 1, 1, 128>}, {pipeline_mode = #tpu.pipeline_mode<synchronous>, transform_indices = @transform_44, window_bounds = array<i64: 1, 128, 128>}, {pipeline_mode = #tpu.pipeline_mode<synchronous>, transform_indices = @transform_45, window_bounds = array<i64: 1, 1, 128>}, {pipeline_mode = #tpu.pipeline_mode<synchronous>, transform_indices = @transform_46, window_bounds = array<i64: 1, 128, 256>}, {pipeline_mode = #tpu.pipeline_mode<synchronous>, transform_indices = @transform_47, window_bounds = array<i64: 1, 1, 256>}, {pipeline_mode = #tpu.pipeline_mode<synchronous>, transform_indices = @transform_48, window_bounds = array<i64: 1, 128, 128>}, {pipeline_mode = #tpu.pipeline_mode<synchronous>, transform_indices = @transform_49, window_bounds = array<i64: 1, 1, 128>}, {pipeline_mode = #tpu.pipeline_mode<synchronous>, transform_indices = @transform_50, window_bounds = array<i64: 1, 1, 128>}, {pipeline_mode = #tpu.pipeline_mode<synchronous>, transform_indices = @transform_51, window_bounds = array<i64: 1, 1, 128>}, {pipeline_mode = #tpu.pipeline_mode<synchronous>, transform_indices = @transform_52, window_bounds = array<i64: 1, 128, 256>}, {pipeline_mode = #tpu.pipeline_mode<synchronous>, transform_indices = @transform_53, window_bounds = array<i64: 1, 1, 256>}, {pipeline_mode = #tpu.pipeline_mode<synchronous>, transform_indices = @transform_54, window_bounds = array<i64: 1, 256, 128>}, {pipeline_mode = #tpu.pipeline_mode<synchronous>, transform_indices = @transform_55, window_bounds = array<i64: 1, 1, 128>}, {pipeline_mode = #tpu.pipeline_mode<synchronous>, transform_indices = @transform_56, window_bounds = array<i64: 1, 128>}, {pipeline_mode = #tpu.pipeline_mode<synchronous>, transform_indices = @transform_57, window_bounds = array<i64: 1, 128>}, {pipeline_mode = #tpu.pipeline_mode<synchronous>, transform_indices = @transform_58, window_bounds = array<i64: 128, 128>}, {pipeline_mode = #tpu.pipeline_mode<synchronous>, transform_indices = @transform_59, window_bounds = array<i64: 1, 128>}, {pipeline_mode = #tpu.pipeline_mode<synchronous>, transform_indices = @transform_60, window_bounds = array<i64: 1, 128>}, {transform_indices = @transform_61, window_bounds = array<i64: 1, 8, 128>}]} {
    %c0 = arith.constant 0 : index
    %c0_0 = arith.constant 0 : index
    %c0_1 = arith.constant 0 : index
    %0 = vector.load %arg1[%c0, %c0_0, %c0_1] : memref<1x8x1xi32, #tpu.memory_space<vmem>>, vector<1x8x1xi32>
    %1 = vector.shape_cast %0 : vector<1x8x1xi32> to vector<8x1xi32>
    %c0_2 = arith.constant 0 : index
    %c0_3 = arith.constant 0 : index
    %c0_4 = arith.constant 0 : index
    %2 = vector.load %arg2[%c0_2, %c0_3, %c0_4] : memref<1x1x8xi32, #tpu.memory_space<vmem>>, vector<1x1x8xi32>
    %3 = vector.shape_cast %2 : vector<1x1x8xi32> to vector<1x8xi32>
    %c0_5 = arith.constant 0 : index
    %c0_6 = arith.constant 0 : index
    %c0_7 = arith.constant 0 : index
    %4 = vector.load %arg3[%c0_5, %c0_6, %c0_7] : memref<1x8x1xi32, #tpu.memory_space<vmem>>, vector<1x8x1xi32>
    %5 = vector.shape_cast %4 : vector<1x8x1xi32> to vector<8x1xi32>
    %c0_8 = arith.constant 0 : index
    %c0_9 = arith.constant 0 : index
    %6 = vector.load %arg10[%c0_8, %c0_9] : memref<32x32xbf16, #tpu.memory_space<vmem>>, vector<32x32xbf16>
    %c0_10 = arith.constant 0 : index
    %c0_11 = arith.constant 0 : index
    %7 = vector.load %arg9[%c0_10, %c0_11] : memref<32x128xbf16, #tpu.memory_space<vmem>>, vector<32x128xbf16>
    %cst = arith.constant dense<0.000000e+00> : vector<32x128xf32>
    %8 = tpu.matmul %6, %7, %cst {dimension_numbers = #tpu.dot_dimension_numbers<[1], [0], [0], [1], [0, 0, 1, 1], [], []>} : vector<32x32xbf16>, vector<32x128xbf16>, vector<32x128xf32> -> vector<32x128xf32>
    %c0_12 = arith.constant 0 : index
    %c0_13 = arith.constant 0 : index
    %9 = vector.load %arg11[%c0_12, %c0_13] : memref<128x128xbf16, #tpu.memory_space<vmem>>, vector<128x128xbf16>
    %10 = arith.truncf %8 : vector<32x128xf32> to vector<32x128xbf16>
    %cst_14 = arith.constant dense<0.000000e+00> : vector<32x128xf32>
    %11 = tpu.matmul %10, %9, %cst_14 {dimension_numbers = #tpu.dot_dimension_numbers<[1], [0], [0], [1], [0, 0, 1, 1], [], []>} : vector<32x128xbf16>, vector<128x128xbf16>, vector<32x128xf32> -> vector<32x128xf32>
    %c0_15 = arith.constant 0 : index
    %c0_16 = arith.constant 0 : index
    %12 = vector.load %arg12[%c0_15, %c0_16] : memref<1x128xf32, #tpu.memory_space<vmem>>, vector<1x128xf32>
    %13 = vector.broadcast %12 : vector<1x128xf32> to vector<32x128xf32>
    %14 = arith.addf %11, %13 : vector<32x128xf32>
    %cst_17 = arith.constant 0.000000e+00 : f32
    %15 = vector.broadcast %cst_17 : f32 to vector<32x128xf32>
    %16 = arith.maximumf %14, %15 : vector<32x128xf32>
    %c0_18 = arith.constant 0 : index
    %c0_19 = arith.constant 0 : index
    %17 = vector.load %arg14[%c0_18, %c0_19] : memref<16x16xbf16, #tpu.memory_space<vmem>>, vector<16x16xbf16>
    %c0_20 = arith.constant 0 : index
    %c0_21 = arith.constant 0 : index
    %18 = vector.load %arg13[%c0_20, %c0_21] : memref<16x32xbf16, #tpu.memory_space<vmem>>, vector<16x32xbf16>
    %cst_22 = arith.constant dense<0.000000e+00> : vector<16x32xf32>
    %19 = tpu.matmul %17, %18, %cst_22 {dimension_numbers = #tpu.dot_dimension_numbers<[1], [0], [0], [1], [0, 0, 1, 1], [], []>} : vector<16x16xbf16>, vector<16x32xbf16>, vector<16x32xf32> -> vector<16x32xf32>
    %c0_23 = arith.constant 0 : index
    %c0_24 = arith.constant 0 : index
    %20 = vector.load %arg15[%c0_23, %c0_24] : memref<32x32xbf16, #tpu.memory_space<vmem>>, vector<32x32xbf16>
    %21 = arith.truncf %19 : vector<16x32xf32> to vector<16x32xbf16>
    %cst_25 = arith.constant dense<0.000000e+00> : vector<16x32xf32>
    %22 = tpu.matmul %21, %20, %cst_25 {dimension_numbers = #tpu.dot_dimension_numbers<[1], [0], [0], [1], [0, 0, 1, 1], [], []>} : vector<16x32xbf16>, vector<32x32xbf16>, vector<16x32xf32> -> vector<16x32xf32>
    %c0_26 = arith.constant 0 : index
    %c0_27 = arith.constant 0 : index
    %23 = vector.load %arg16[%c0_26, %c0_27] : memref<1x32xf32, #tpu.memory_space<vmem>>, vector<1x32xf32>
    %24 = vector.broadcast %23 : vector<1x32xf32> to vector<16x32xf32>
    %25 = arith.addf %22, %24 : vector<16x32xf32>
    %cst_28 = arith.constant 0.000000e+00 : f32
    %26 = vector.broadcast %cst_28 : f32 to vector<16x32xf32>
    %27 = arith.maximumf %25, %26 : vector<16x32xf32>
    %28 = tpu.iota {dimensions = array<i32: 1>} : vector<8x32xi32>
    %29 = vector.broadcast %1 : vector<8x1xi32> to vector<8x32xi32>
    %30 = arith.cmpi eq, %29, %28 : vector<8x32xi32>
    %31 = arith.extui %30 : vector<8x32xi1> to vector<8x32xi32>
    %32 = arith.sitofp %31 : vector<8x32xi32> to vector<8x32xf32>
    %33 = tpu.iota {dimensions = array<i32: 1>} : vector<8x32xi32>
    %34 = vector.broadcast %5 : vector<8x1xi32> to vector<8x32xi32>
    %35 = arith.cmpi eq, %34, %33 : vector<8x32xi32>
    %36 = arith.extui %35 : vector<8x32xi1> to vector<8x32xi32>
    %37 = arith.sitofp %36 : vector<8x32xi32> to vector<8x32xf32>
    %c0_29 = arith.constant 0 : index
    %c0_30 = arith.constant 0 : index
    %c0_31 = arith.constant 0 : index
    %38 = vector.load %arg4[%c0_29, %c0_30, %c0_31] : memref<1x1x1xi32, #tpu.memory_space<vmem>>, vector<1x1x1xi32>
    %39 = vector.shape_cast %38 : vector<1x1x1xi32> to vector<1x1xi32>
    %40 = tpu.iota {dimensions = array<i32: 1>} : vector<1x16xi32>
    %41 = vector.broadcast %39 : vector<1x1xi32> to vector<1x16xi32>
    %42 = arith.cmpi eq, %41, %40 : vector<1x16xi32>
    %43 = arith.extui %42 : vector<1x16xi1> to vector<1x16xi32>
    %44 = arith.sitofp %43 : vector<1x16xi32> to vector<1x16xf32>
    %45 = arith.truncf %37 : vector<8x32xf32> to vector<8x32xbf16>
    %46 = arith.truncf %16 : vector<32x128xf32> to vector<32x128xbf16>
    %cst_32 = arith.constant dense<0.000000e+00> : vector<8x128xf32>
    %47 = tpu.matmul %45, %46, %cst_32 {dimension_numbers = #tpu.dot_dimension_numbers<[1], [0], [0], [1], [0, 0, 1, 1], [], []>} : vector<8x32xbf16>, vector<32x128xbf16>, vector<8x128xf32> -> vector<8x128xf32>
    %c0_33 = arith.constant 0 : index
    %c0_34 = arith.constant 0 : index
    %48 = vector.load %arg17[%c0_33, %c0_34] : memref<128x128xbf16, #tpu.memory_space<vmem>>, vector<128x128xbf16>
    %49 = arith.truncf %16 : vector<32x128xf32> to vector<32x128xbf16>
    %cst_35 = arith.constant dense<0.000000e+00> : vector<32x128xf32>
    %50 = tpu.matmul %49, %48, %cst_35 {dimension_numbers = #tpu.dot_dimension_numbers<[1], [0], [0], [1], [0, 0, 1, 1], [], []>} : vector<32x128xbf16>, vector<128x128xbf16>, vector<32x128xf32> -> vector<32x128xf32>
    %51 = arith.truncf %32 : vector<8x32xf32> to vector<8x32xbf16>
    %52 = arith.truncf %50 : vector<32x128xf32> to vector<32x128xbf16>
    %cst_36 = arith.constant dense<0.000000e+00> : vector<8x128xf32>
    %53 = tpu.matmul %51, %52, %cst_36 {dimension_numbers = #tpu.dot_dimension_numbers<[1], [0], [0], [1], [0, 0, 1, 1], [], []>} : vector<8x32xbf16>, vector<32x128xbf16>, vector<8x128xf32> -> vector<8x128xf32>
    %c0_37 = arith.constant 0 : index
    %c0_38 = arith.constant 0 : index
    %54 = vector.load %arg20[%c0_37, %c0_38] : memref<32x128xbf16, #tpu.memory_space<vmem>>, vector<32x128xbf16>
    %55 = arith.truncf %27 : vector<16x32xf32> to vector<16x32xbf16>
    %cst_39 = arith.constant dense<0.000000e+00> : vector<16x128xf32>
    %56 = tpu.matmul %55, %54, %cst_39 {dimension_numbers = #tpu.dot_dimension_numbers<[1], [0], [0], [1], [0, 0, 1, 1], [], []>} : vector<16x32xbf16>, vector<32x128xbf16>, vector<16x128xf32> -> vector<16x128xf32>
    %57 = arith.truncf %44 : vector<1x16xf32> to vector<1x16xbf16>
    %58 = arith.truncf %56 : vector<16x128xf32> to vector<16x128xbf16>
    %cst_40 = arith.constant dense<0.000000e+00> : vector<1x128xf32>
    %59 = tpu.matmul %57, %58, %cst_40 {dimension_numbers = #tpu.dot_dimension_numbers<[1], [0], [0], [1], [0, 0, 1, 1], [], []>} : vector<1x16xbf16>, vector<16x128xbf16>, vector<1x128xf32> -> vector<1x128xf32>
    %c0_41 = arith.constant 0 : index
    %c0_42 = arith.constant 0 : index
    %c0_43 = arith.constant 0 : index
    %60 = vector.load %arg5[%c0_41, %c0_42, %c0_43] : memref<1x8x1xf32, #tpu.memory_space<vmem>>, vector<1x8x1xf32>
    %61 = vector.shape_cast %60 : vector<1x8x1xf32> to vector<8x1xf32>
    %c0_44 = arith.constant 0 : index
    %c0_45 = arith.constant 0 : index
    %62 = vector.load %arg18[%c0_44, %c0_45] : memref<1x128xf32, #tpu.memory_space<vmem>>, vector<1x128xf32>
    %63 = vector.broadcast %61 : vector<8x1xf32> to vector<8x128xf32>
    %64 = vector.broadcast %62 : vector<1x128xf32> to vector<8x128xf32>
    %65 = arith.mulf %63, %64 : vector<8x128xf32>
    %c0_46 = arith.constant 0 : index
    %c0_47 = arith.constant 0 : index
    %c0_48 = arith.constant 0 : index
    %66 = vector.load %arg6[%c0_46, %c0_47, %c0_48] : memref<1x8x1xf32, #tpu.memory_space<vmem>>, vector<1x8x1xf32>
    %67 = vector.shape_cast %66 : vector<1x8x1xf32> to vector<8x1xf32>
    %c0_49 = arith.constant 0 : index
    %c0_50 = arith.constant 0 : index
    %68 = vector.load %arg19[%c0_49, %c0_50] : memref<1x128xf32, #tpu.memory_space<vmem>>, vector<1x128xf32>
    %69 = vector.broadcast %67 : vector<8x1xf32> to vector<8x128xf32>
    %70 = vector.broadcast %68 : vector<1x128xf32> to vector<8x128xf32>
    %71 = arith.mulf %69, %70 : vector<8x128xf32>
    %72 = arith.addf %65, %71 : vector<8x128xf32>
    %c0_51 = arith.constant 0 : index
    %c0_52 = arith.constant 0 : index
    %c0_53 = arith.constant 0 : index
    %73 = vector.load %arg7[%c0_51, %c0_52, %c0_53] : memref<1x8x1xf32, #tpu.memory_space<vmem>>, vector<1x8x1xf32>
    %74 = vector.shape_cast %73 : vector<1x8x1xf32> to vector<8x1xf32>
    %c0_54 = arith.constant 0 : index
    %c0_55 = arith.constant 0 : index
    %75 = vector.load %arg21[%c0_54, %c0_55] : memref<1x128xf32, #tpu.memory_space<vmem>>, vector<1x128xf32>
    %76 = vector.broadcast %74 : vector<8x1xf32> to vector<8x128xf32>
    %77 = vector.broadcast %75 : vector<1x128xf32> to vector<8x128xf32>
    %78 = arith.mulf %76, %77 : vector<8x128xf32>
    %79 = vector.broadcast %59 : vector<1x128xf32> to vector<8x128xf32>
    %80 = arith.addf %53, %79 : vector<8x128xf32>
    %81 = arith.addf %80, %72 : vector<8x128xf32>
    %82 = arith.addf %81, %78 : vector<8x128xf32>
    %c0_56 = arith.constant 0 : index
    %c0_57 = arith.constant 0 : index
    %83 = vector.load %arg22[%c0_56, %c0_57] : memref<1x128xf32, #tpu.memory_space<vmem>>, vector<1x128xf32>
    %84 = vector.broadcast %83 : vector<1x128xf32> to vector<8x128xf32>
    %85 = arith.addf %82, %84 : vector<8x128xf32>
    %c0_i32 = arith.constant 0 : i32
    %86 = vector.broadcast %c0_i32 : i32 to vector<1x8xi32>
    %87 = arith.cmpi ne, %3, %86 : vector<1x8xi32>
    %cst_58 = arith.constant 0.000000e+00 : f32
    %cst_59 = arith.constant -1.000000e+09 : f32
    %88 = vector.broadcast %cst_58 : f32 to vector<1x8xf32>
    %89 = vector.broadcast %cst_59 : f32 to vector<1x8xf32>
    %90 = arith.select %87, %88, %89 : vector<1x8xi1>, vector<1x8xf32>
    %91 = vector.shape_cast %90 : vector<1x8xf32> to vector<1x1x8xf32>
    %92 = tpu.iota {dimensions = array<i32: 0>} : vector<8x8xi32>
    %93 = tpu.iota {dimensions = array<i32: 1>} : vector<8x8xi32>
    %94 = arith.cmpi sge, %92, %93 : vector<8x8xi32>
    %c0_i32_60 = arith.constant 0 : i32
    %95 = vector.broadcast %c0_i32_60 : i32 to vector<8x1xi32>
    %96 = arith.cmpi ne, %5, %95 : vector<8x1xi32>
    %97 = vector.broadcast %96 : vector<8x1xi1> to vector<8x8xi1>
    %98 = arith.andi %94, %97 : vector<8x8xi1>
    %cst_61 = arith.constant 0.000000e+00 : f32
    %cst_62 = arith.constant -1.000000e+09 : f32
    %99 = vector.broadcast %cst_61 : f32 to vector<8x8xf32>
    %100 = vector.broadcast %cst_62 : f32 to vector<8x8xf32>
    %101 = arith.select %98, %99, %100 : vector<8x8xi1>, vector<8x8xf32>
    %102 = vector.shape_cast %101 : vector<8x8xf32> to vector<1x8x8xf32>
    %c0_63 = arith.constant 0 : index
    %c0_64 = arith.constant 0 : index
    %c0_65 = arith.constant 0 : index
    %103 = vector.load %arg23[%c0_63, %c0_64, %c0_65] : memref<1x1x128xf32, #tpu.memory_space<vmem>>, vector<1x1x128xf32>
    %104 = vector.shape_cast %103 : vector<1x1x128xf32> to vector<1x128xf32>
    %c0_66 = arith.constant 0 : index
    %c0_67 = arith.constant 0 : index
    %c0_68 = arith.constant 0 : index
    %105 = vector.load %arg24[%c0_66, %c0_67, %c0_68] : memref<1x1x128xf32, #tpu.memory_space<vmem>>, vector<1x1x128xf32>
    %106 = vector.shape_cast %105 : vector<1x1x128xf32> to vector<1x128xf32>
    %cst_69 = arith.constant dense<0.000000e+00> : vector<8xf32>
    %107 = vector.multi_reduction <add>, %85, %cst_69 [1] : vector<8x128xf32> to vector<8xf32>
    %108 = vector.shape_cast %107 : vector<8xf32> to vector<8x1xf32>
    %cst_70 = arith.constant 1.280000e+02 : f32
    %109 = vector.broadcast %cst_70 : f32 to vector<8x1xf32>
    %110 = arith.divf %108, %109 : vector<8x1xf32>
    %111 = vector.broadcast %110 : vector<8x1xf32> to vector<8x128xf32>
    %112 = arith.subf %85, %111 : vector<8x128xf32>
    %113 = arith.mulf %112, %112 : vector<8x128xf32>
    %cst_71 = arith.constant dense<0.000000e+00> : vector<8xf32>
    %114 = vector.multi_reduction <add>, %113, %cst_71 [1] : vector<8x128xf32> to vector<8xf32>
    %115 = vector.shape_cast %114 : vector<8xf32> to vector<8x1xf32>
    %cst_72 = arith.constant 1.280000e+02 : f32
    %116 = vector.broadcast %cst_72 : f32 to vector<8x1xf32>
    %117 = arith.divf %115, %116 : vector<8x1xf32>
    %cst_73 = arith.constant 9.99999974E-6 : f32
    %118 = vector.broadcast %cst_73 : f32 to vector<8x1xf32>
    %119 = arith.addf %117, %118 : vector<8x1xf32>
    %120 = math.rsqrt %119 : vector<8x1xf32>
    %121 = vector.broadcast %120 : vector<8x1xf32> to vector<8x128xf32>
    %122 = arith.mulf %112, %121 : vector<8x128xf32>
    %123 = vector.broadcast %104 : vector<1x128xf32> to vector<8x128xf32>
    %124 = arith.mulf %122, %123 : vector<8x128xf32>
    %125 = vector.broadcast %106 : vector<1x128xf32> to vector<8x128xf32>
    %126 = arith.addf %124, %125 : vector<8x128xf32>
    %c0_74 = arith.constant 0 : index
    %c0_75 = arith.constant 0 : index
    %c0_76 = arith.constant 0 : index
    %127 = vector.load %arg25[%c0_74, %c0_75, %c0_76] : memref<1x128x384xbf16, #tpu.memory_space<vmem>>, vector<1x128x384xbf16>
    %128 = vector.shape_cast %127 : vector<1x128x384xbf16> to vector<128x384xbf16>
    %c0_77 = arith.constant 0 : index
    %c0_78 = arith.constant 0 : index
    %c0_79 = arith.constant 0 : index
    %129 = vector.load %arg26[%c0_77, %c0_78, %c0_79] : memref<1x1x384xf32, #tpu.memory_space<vmem>>, vector<1x1x384xf32>
    %130 = vector.shape_cast %129 : vector<1x1x384xf32> to vector<1x384xf32>
    %c0_80 = arith.constant 0 : index
    %c0_81 = arith.constant 0 : index
    %c0_82 = arith.constant 0 : index
    %131 = vector.load %arg27[%c0_80, %c0_81, %c0_82] : memref<1x128x128xbf16, #tpu.memory_space<vmem>>, vector<1x128x128xbf16>
    %132 = vector.shape_cast %131 : vector<1x128x128xbf16> to vector<128x128xbf16>
    %c0_83 = arith.constant 0 : index
    %c0_84 = arith.constant 0 : index
    %c0_85 = arith.constant 0 : index
    %133 = vector.load %arg28[%c0_83, %c0_84, %c0_85] : memref<1x1x128xf32, #tpu.memory_space<vmem>>, vector<1x1x128xf32>
    %134 = vector.shape_cast %133 : vector<1x1x128xf32> to vector<1x128xf32>
    %135 = arith.truncf %126 : vector<8x128xf32> to vector<8x128xbf16>
    %cst_86 = arith.constant dense<0.000000e+00> : vector<8x384xf32>
    %136 = tpu.matmul %135, %128, %cst_86 {dimension_numbers = #tpu.dot_dimension_numbers<[1], [0], [0], [1], [0, 0, 1, 1], [], []>} : vector<8x128xbf16>, vector<128x384xbf16>, vector<8x384xf32> -> vector<8x384xf32>
    %137 = vector.broadcast %130 : vector<1x384xf32> to vector<8x384xf32>
    %138 = arith.addf %136, %137 : vector<8x384xf32>
    %139 = vector.extract_strided_slice %138 {offsets = [0, 0], sizes = [8, 32], strides = [1, 1]} : vector<8x384xf32> to vector<8x32xf32>
    %140 = vector.extract_strided_slice %138 {offsets = [0, 32], sizes = [8, 32], strides = [1, 1]} : vector<8x384xf32> to vector<8x32xf32>
    %141 = vector.extract_strided_slice %138 {offsets = [0, 64], sizes = [8, 32], strides = [1, 1]} : vector<8x384xf32> to vector<8x32xf32>
    %142 = vector.extract_strided_slice %138 {offsets = [0, 96], sizes = [8, 32], strides = [1, 1]} : vector<8x384xf32> to vector<8x32xf32>
    %143 = vector.shape_cast %139 : vector<8x32xf32> to vector<1x8x32xf32>
    %144 = vector.shape_cast %140 : vector<8x32xf32> to vector<1x8x32xf32>
    %145 = vector.shape_cast %141 : vector<8x32xf32> to vector<1x8x32xf32>
    %146 = vector.shape_cast %142 : vector<8x32xf32> to vector<1x8x32xf32>
    %147 = tpu.concatenate %143, %144, %145, %146 in 0 : vector<1x8x32xf32>, vector<1x8x32xf32>, vector<1x8x32xf32>, vector<1x8x32xf32> -> vector<4x8x32xf32>
    %148 = vector.extract_strided_slice %138 {offsets = [0, 128], sizes = [8, 32], strides = [1, 1]} : vector<8x384xf32> to vector<8x32xf32>
    %149 = vector.extract_strided_slice %138 {offsets = [0, 160], sizes = [8, 32], strides = [1, 1]} : vector<8x384xf32> to vector<8x32xf32>
    %150 = vector.extract_strided_slice %138 {offsets = [0, 192], sizes = [8, 32], strides = [1, 1]} : vector<8x384xf32> to vector<8x32xf32>
    %151 = vector.extract_strided_slice %138 {offsets = [0, 224], sizes = [8, 32], strides = [1, 1]} : vector<8x384xf32> to vector<8x32xf32>
    %152 = vector.shape_cast %148 : vector<8x32xf32> to vector<1x8x32xf32>
    %153 = vector.shape_cast %149 : vector<8x32xf32> to vector<1x8x32xf32>
    %154 = vector.shape_cast %150 : vector<8x32xf32> to vector<1x8x32xf32>
    %155 = vector.shape_cast %151 : vector<8x32xf32> to vector<1x8x32xf32>
    %156 = tpu.concatenate %152, %153, %154, %155 in 0 : vector<1x8x32xf32>, vector<1x8x32xf32>, vector<1x8x32xf32>, vector<1x8x32xf32> -> vector<4x8x32xf32>
    %157 = vector.extract_strided_slice %138 {offsets = [0, 256], sizes = [8, 32], strides = [1, 1]} : vector<8x384xf32> to vector<8x32xf32>
    %158 = vector.extract_strided_slice %138 {offsets = [0, 288], sizes = [8, 32], strides = [1, 1]} : vector<8x384xf32> to vector<8x32xf32>
    %159 = vector.extract_strided_slice %138 {offsets = [0, 320], sizes = [8, 32], strides = [1, 1]} : vector<8x384xf32> to vector<8x32xf32>
    %160 = vector.extract_strided_slice %138 {offsets = [0, 352], sizes = [8, 32], strides = [1, 1]} : vector<8x384xf32> to vector<8x32xf32>
    %161 = vector.shape_cast %157 : vector<8x32xf32> to vector<1x8x32xf32>
    %162 = vector.shape_cast %158 : vector<8x32xf32> to vector<1x8x32xf32>
    %163 = vector.shape_cast %159 : vector<8x32xf32> to vector<1x8x32xf32>
    %164 = vector.shape_cast %160 : vector<8x32xf32> to vector<1x8x32xf32>
    %165 = tpu.concatenate %161, %162, %163, %164 in 0 : vector<1x8x32xf32>, vector<1x8x32xf32>, vector<1x8x32xf32>, vector<1x8x32xf32> -> vector<4x8x32xf32>
    %166 = arith.truncf %147 : vector<4x8x32xf32> to vector<4x8x32xbf16>
    %167 = arith.truncf %156 : vector<4x8x32xf32> to vector<4x8x32xbf16>
    %cst_87 = arith.constant dense<0.000000e+00> : vector<4x8x8xf32>
    %168 = tpu.matmul %166, %167, %cst_87 {dimension_numbers = #tpu.dot_dimension_numbers<[2], [2], [1], [1], [0, 0, 0, 1, 1, 1], [0], [0]>} : vector<4x8x32xbf16>, vector<4x8x32xbf16>, vector<4x8x8xf32> -> vector<4x8x8xf32>
    %cst_88 = arith.constant 0.176776692 : f32
    %169 = vector.broadcast %cst_88 : f32 to vector<4x8x8xf32>
    %170 = arith.mulf %168, %169 : vector<4x8x8xf32>
    %171 = vector.broadcast %91 : vector<1x1x8xf32> to vector<4x8x8xf32>
    %172 = arith.addf %170, %171 : vector<4x8x8xf32>
    %cst_89 = arith.constant dense<0xFF800000> : vector<4x8xf32>
    %173 = vector.multi_reduction <maximumf>, %172, %cst_89 [2] : vector<4x8x8xf32> to vector<4x8xf32>
    %174 = vector.shape_cast %173 : vector<4x8xf32> to vector<4x8x1xf32>
    %175 = vector.broadcast %174 : vector<4x8x1xf32> to vector<4x8x8xf32>
    %176 = arith.subf %172, %175 : vector<4x8x8xf32>
    %177 = math.exp %176 : vector<4x8x8xf32>
    %cst_90 = arith.constant dense<0.000000e+00> : vector<4x8xf32>
    %178 = vector.multi_reduction <add>, %177, %cst_90 [2] : vector<4x8x8xf32> to vector<4x8xf32>
    %179 = vector.shape_cast %178 : vector<4x8xf32> to vector<4x8x1xf32>
    %180 = tpu.reciprocal %179 {approx = true} : vector<4x8x1xf32> -> vector<4x8x1xf32>
    %181 = vector.broadcast %180 : vector<4x8x1xf32> to vector<4x8x8xf32>
    %182 = arith.mulf %177, %181 : vector<4x8x8xf32>
    %183 = arith.truncf %182 : vector<4x8x8xf32> to vector<4x8x8xbf16>
    %184 = arith.truncf %165 : vector<4x8x32xf32> to vector<4x8x32xbf16>
    %cst_91 = arith.constant dense<0.000000e+00> : vector<4x8x32xf32>
    %185 = tpu.matmul %183, %184, %cst_91 {dimension_numbers = #tpu.dot_dimension_numbers<[2], [1], [1], [2], [0, 0, 0, 1, 1, 2], [0], [0]>} : vector<4x8x8xbf16>, vector<4x8x32xbf16>, vector<4x8x32xf32> -> vector<4x8x32xf32>
    %186 = vector.extract_strided_slice %185 {offsets = [0, 0, 0], sizes = [1, 8, 32], strides = [1, 1, 1]} : vector<4x8x32xf32> to vector<1x8x32xf32>
    %187 = vector.shape_cast %186 : vector<1x8x32xf32> to vector<8x32xf32>
    %188 = vector.extract_strided_slice %185 {offsets = [1, 0, 0], sizes = [1, 8, 32], strides = [1, 1, 1]} : vector<4x8x32xf32> to vector<1x8x32xf32>
    %189 = vector.shape_cast %188 : vector<1x8x32xf32> to vector<8x32xf32>
    %190 = vector.extract_strided_slice %185 {offsets = [2, 0, 0], sizes = [1, 8, 32], strides = [1, 1, 1]} : vector<4x8x32xf32> to vector<1x8x32xf32>
    %191 = vector.shape_cast %190 : vector<1x8x32xf32> to vector<8x32xf32>
    %192 = vector.extract_strided_slice %185 {offsets = [3, 0, 0], sizes = [1, 8, 32], strides = [1, 1, 1]} : vector<4x8x32xf32> to vector<1x8x32xf32>
    %193 = vector.shape_cast %192 : vector<1x8x32xf32> to vector<8x32xf32>
    %194 = tpu.concatenate %187, %189, %191, %193 in 1 : vector<8x32xf32>, vector<8x32xf32>, vector<8x32xf32>, vector<8x32xf32> -> vector<8x128xf32>
    %195 = arith.truncf %194 : vector<8x128xf32> to vector<8x128xbf16>
    %cst_92 = arith.constant dense<0.000000e+00> : vector<8x128xf32>
    %196 = tpu.matmul %195, %132, %cst_92 {dimension_numbers = #tpu.dot_dimension_numbers<[1], [0], [0], [1], [0, 0, 1, 1], [], []>} : vector<8x128xbf16>, vector<128x128xbf16>, vector<8x128xf32> -> vector<8x128xf32>
    %197 = vector.broadcast %134 : vector<1x128xf32> to vector<8x128xf32>
    %198 = arith.addf %196, %197 : vector<8x128xf32>
    %199 = arith.addf %85, %198 : vector<8x128xf32>
    %c0_93 = arith.constant 0 : index
    %c0_94 = arith.constant 0 : index
    %c0_95 = arith.constant 0 : index
    %200 = vector.load %arg29[%c0_93, %c0_94, %c0_95] : memref<1x1x128xf32, #tpu.memory_space<vmem>>, vector<1x1x128xf32>
    %201 = vector.shape_cast %200 : vector<1x1x128xf32> to vector<1x128xf32>
    %c0_96 = arith.constant 0 : index
    %c0_97 = arith.constant 0 : index
    %c0_98 = arith.constant 0 : index
    %202 = vector.load %arg30[%c0_96, %c0_97, %c0_98] : memref<1x1x128xf32, #tpu.memory_space<vmem>>, vector<1x1x128xf32>
    %203 = vector.shape_cast %202 : vector<1x1x128xf32> to vector<1x128xf32>
    %cst_99 = arith.constant dense<0.000000e+00> : vector<8xf32>
    %204 = vector.multi_reduction <add>, %199, %cst_99 [1] : vector<8x128xf32> to vector<8xf32>
    %205 = vector.shape_cast %204 : vector<8xf32> to vector<8x1xf32>
    %cst_100 = arith.constant 1.280000e+02 : f32
    %206 = vector.broadcast %cst_100 : f32 to vector<8x1xf32>
    %207 = arith.divf %205, %206 : vector<8x1xf32>
    %208 = vector.broadcast %207 : vector<8x1xf32> to vector<8x128xf32>
    %209 = arith.subf %199, %208 : vector<8x128xf32>
    %210 = arith.mulf %209, %209 : vector<8x128xf32>
    %cst_101 = arith.constant dense<0.000000e+00> : vector<8xf32>
    %211 = vector.multi_reduction <add>, %210, %cst_101 [1] : vector<8x128xf32> to vector<8xf32>
    %212 = vector.shape_cast %211 : vector<8xf32> to vector<8x1xf32>
    %cst_102 = arith.constant 1.280000e+02 : f32
    %213 = vector.broadcast %cst_102 : f32 to vector<8x1xf32>
    %214 = arith.divf %212, %213 : vector<8x1xf32>
    %cst_103 = arith.constant 9.99999974E-6 : f32
    %215 = vector.broadcast %cst_103 : f32 to vector<8x1xf32>
    %216 = arith.addf %214, %215 : vector<8x1xf32>
    %217 = math.rsqrt %216 : vector<8x1xf32>
    %218 = vector.broadcast %217 : vector<8x1xf32> to vector<8x128xf32>
    %219 = arith.mulf %209, %218 : vector<8x128xf32>
    %220 = vector.broadcast %201 : vector<1x128xf32> to vector<8x128xf32>
    %221 = arith.mulf %219, %220 : vector<8x128xf32>
    %222 = vector.broadcast %203 : vector<1x128xf32> to vector<8x128xf32>
    %223 = arith.addf %221, %222 : vector<8x128xf32>
    %c0_104 = arith.constant 0 : index
    %c0_105 = arith.constant 0 : index
    %c0_106 = arith.constant 0 : index
    %224 = vector.load %arg31[%c0_104, %c0_105, %c0_106] : memref<1x128x256xbf16, #tpu.memory_space<vmem>>, vector<1x128x256xbf16>
    %225 = vector.shape_cast %224 : vector<1x128x256xbf16> to vector<128x256xbf16>
    %c0_107 = arith.constant 0 : index
    %c0_108 = arith.constant 0 : index
    %c0_109 = arith.constant 0 : index
    %226 = vector.load %arg32[%c0_107, %c0_108, %c0_109] : memref<1x1x256xf32, #tpu.memory_space<vmem>>, vector<1x1x256xf32>
    %227 = vector.shape_cast %226 : vector<1x1x256xf32> to vector<1x256xf32>
    %c0_110 = arith.constant 0 : index
    %c0_111 = arith.constant 0 : index
    %c0_112 = arith.constant 0 : index
    %228 = vector.load %arg33[%c0_110, %c0_111, %c0_112] : memref<1x256x128xbf16, #tpu.memory_space<vmem>>, vector<1x256x128xbf16>
    %229 = vector.shape_cast %228 : vector<1x256x128xbf16> to vector<256x128xbf16>
    %c0_113 = arith.constant 0 : index
    %c0_114 = arith.constant 0 : index
    %c0_115 = arith.constant 0 : index
    %230 = vector.load %arg34[%c0_113, %c0_114, %c0_115] : memref<1x1x128xf32, #tpu.memory_space<vmem>>, vector<1x1x128xf32>
    %231 = vector.shape_cast %230 : vector<1x1x128xf32> to vector<1x128xf32>
    %232 = arith.truncf %223 : vector<8x128xf32> to vector<8x128xbf16>
    %cst_116 = arith.constant dense<0.000000e+00> : vector<8x256xf32>
    %233 = tpu.matmul %232, %225, %cst_116 {dimension_numbers = #tpu.dot_dimension_numbers<[1], [0], [0], [1], [0, 0, 1, 1], [], []>} : vector<8x128xbf16>, vector<128x256xbf16>, vector<8x256xf32> -> vector<8x256xf32>
    %234 = vector.broadcast %227 : vector<1x256xf32> to vector<8x256xf32>
    %235 = arith.addf %233, %234 : vector<8x256xf32>
    %cst_117 = arith.constant 0.000000e+00 : f32
    %236 = vector.broadcast %cst_117 : f32 to vector<8x256xf32>
    %237 = arith.maximumf %235, %236 : vector<8x256xf32>
    %238 = arith.truncf %237 : vector<8x256xf32> to vector<8x256xbf16>
    %cst_118 = arith.constant dense<0.000000e+00> : vector<8x128xf32>
    %239 = tpu.matmul %238, %229, %cst_118 {dimension_numbers = #tpu.dot_dimension_numbers<[1], [0], [0], [1], [0, 0, 1, 1], [], []>} : vector<8x256xbf16>, vector<256x128xbf16>, vector<8x128xf32> -> vector<8x128xf32>
    %240 = vector.broadcast %231 : vector<1x128xf32> to vector<8x128xf32>
    %241 = arith.addf %239, %240 : vector<8x128xf32>
    %242 = arith.addf %199, %241 : vector<8x128xf32>
    %c0_119 = arith.constant 0 : index
    %c0_120 = arith.constant 0 : index
    %243 = vector.load %arg35[%c0_119, %c0_120] : memref<1x128xf32, #tpu.memory_space<vmem>>, vector<1x128xf32>
    %c0_121 = arith.constant 0 : index
    %c0_122 = arith.constant 0 : index
    %244 = vector.load %arg36[%c0_121, %c0_122] : memref<1x128xf32, #tpu.memory_space<vmem>>, vector<1x128xf32>
    %cst_123 = arith.constant dense<0.000000e+00> : vector<8xf32>
    %245 = vector.multi_reduction <add>, %242, %cst_123 [1] : vector<8x128xf32> to vector<8xf32>
    %246 = vector.shape_cast %245 : vector<8xf32> to vector<8x1xf32>
    %cst_124 = arith.constant 1.280000e+02 : f32
    %247 = vector.broadcast %cst_124 : f32 to vector<8x1xf32>
    %248 = arith.divf %246, %247 : vector<8x1xf32>
    %249 = vector.broadcast %248 : vector<8x1xf32> to vector<8x128xf32>
    %250 = arith.subf %242, %249 : vector<8x128xf32>
    %251 = arith.mulf %250, %250 : vector<8x128xf32>
    %cst_125 = arith.constant dense<0.000000e+00> : vector<8xf32>
    %252 = vector.multi_reduction <add>, %251, %cst_125 [1] : vector<8x128xf32> to vector<8xf32>
    %253 = vector.shape_cast %252 : vector<8xf32> to vector<8x1xf32>
    %cst_126 = arith.constant 1.280000e+02 : f32
    %254 = vector.broadcast %cst_126 : f32 to vector<8x1xf32>
    %255 = arith.divf %253, %254 : vector<8x1xf32>
    %cst_127 = arith.constant 9.99999974E-6 : f32
    %256 = vector.broadcast %cst_127 : f32 to vector<8x1xf32>
    %257 = arith.addf %255, %256 : vector<8x1xf32>
    %258 = math.rsqrt %257 : vector<8x1xf32>
    %259 = vector.broadcast %258 : vector<8x1xf32> to vector<8x128xf32>
    %260 = arith.mulf %250, %259 : vector<8x128xf32>
    %261 = vector.broadcast %243 : vector<1x128xf32> to vector<8x128xf32>
    %262 = arith.mulf %260, %261 : vector<8x128xf32>
    %263 = vector.broadcast %244 : vector<1x128xf32> to vector<8x128xf32>
    %264 = arith.addf %262, %263 : vector<8x128xf32>
    %c0_128 = arith.constant 0 : index
    %c0_129 = arith.constant 0 : index
    %c0_130 = arith.constant 0 : index
    %265 = vector.load %arg37[%c0_128, %c0_129, %c0_130] : memref<1x1x128xf32, #tpu.memory_space<vmem>>, vector<1x1x128xf32>
    %266 = vector.shape_cast %265 : vector<1x1x128xf32> to vector<1x128xf32>
    %c0_131 = arith.constant 0 : index
    %c0_132 = arith.constant 0 : index
    %c0_133 = arith.constant 0 : index
    %267 = vector.load %arg38[%c0_131, %c0_132, %c0_133] : memref<1x1x128xf32, #tpu.memory_space<vmem>>, vector<1x1x128xf32>
    %268 = vector.shape_cast %267 : vector<1x1x128xf32> to vector<1x128xf32>
    %cst_134 = arith.constant dense<0.000000e+00> : vector<8xf32>
    %269 = vector.multi_reduction <add>, %47, %cst_134 [1] : vector<8x128xf32> to vector<8xf32>
    %270 = vector.shape_cast %269 : vector<8xf32> to vector<8x1xf32>
    %cst_135 = arith.constant 1.280000e+02 : f32
    %271 = vector.broadcast %cst_135 : f32 to vector<8x1xf32>
    %272 = arith.divf %270, %271 : vector<8x1xf32>
    %273 = vector.broadcast %272 : vector<8x1xf32> to vector<8x128xf32>
    %274 = arith.subf %47, %273 : vector<8x128xf32>
    %275 = arith.mulf %274, %274 : vector<8x128xf32>
    %cst_136 = arith.constant dense<0.000000e+00> : vector<8xf32>
    %276 = vector.multi_reduction <add>, %275, %cst_136 [1] : vector<8x128xf32> to vector<8xf32>
    %277 = vector.shape_cast %276 : vector<8xf32> to vector<8x1xf32>
    %cst_137 = arith.constant 1.280000e+02 : f32
    %278 = vector.broadcast %cst_137 : f32 to vector<8x1xf32>
    %279 = arith.divf %277, %278 : vector<8x1xf32>
    %cst_138 = arith.constant 9.99999974E-6 : f32
    %280 = vector.broadcast %cst_138 : f32 to vector<8x1xf32>
    %281 = arith.addf %279, %280 : vector<8x1xf32>
    %282 = math.rsqrt %281 : vector<8x1xf32>
    %283 = vector.broadcast %282 : vector<8x1xf32> to vector<8x128xf32>
    %284 = arith.mulf %274, %283 : vector<8x128xf32>
    %285 = vector.broadcast %266 : vector<1x128xf32> to vector<8x128xf32>
    %286 = arith.mulf %284, %285 : vector<8x128xf32>
    %287 = vector.broadcast %268 : vector<1x128xf32> to vector<8x128xf32>
    %288 = arith.addf %286, %287 : vector<8x128xf32>
    %c0_139 = arith.constant 0 : index
    %c0_140 = arith.constant 0 : index
    %c0_141 = arith.constant 0 : index
    %289 = vector.load %arg39[%c0_139, %c0_140, %c0_141] : memref<1x128x384xbf16, #tpu.memory_space<vmem>>, vector<1x128x384xbf16>
    %290 = vector.shape_cast %289 : vector<1x128x384xbf16> to vector<128x384xbf16>
    %c0_142 = arith.constant 0 : index
    %c0_143 = arith.constant 0 : index
    %c0_144 = arith.constant 0 : index
    %291 = vector.load %arg40[%c0_142, %c0_143, %c0_144] : memref<1x1x384xf32, #tpu.memory_space<vmem>>, vector<1x1x384xf32>
    %292 = vector.shape_cast %291 : vector<1x1x384xf32> to vector<1x384xf32>
    %c0_145 = arith.constant 0 : index
    %c0_146 = arith.constant 0 : index
    %c0_147 = arith.constant 0 : index
    %293 = vector.load %arg41[%c0_145, %c0_146, %c0_147] : memref<1x128x128xbf16, #tpu.memory_space<vmem>>, vector<1x128x128xbf16>
    %294 = vector.shape_cast %293 : vector<1x128x128xbf16> to vector<128x128xbf16>
    %c0_148 = arith.constant 0 : index
    %c0_149 = arith.constant 0 : index
    %c0_150 = arith.constant 0 : index
    %295 = vector.load %arg42[%c0_148, %c0_149, %c0_150] : memref<1x1x128xf32, #tpu.memory_space<vmem>>, vector<1x1x128xf32>
    %296 = vector.shape_cast %295 : vector<1x1x128xf32> to vector<1x128xf32>
    %297 = arith.truncf %288 : vector<8x128xf32> to vector<8x128xbf16>
    %cst_151 = arith.constant dense<0.000000e+00> : vector<8x384xf32>
    %298 = tpu.matmul %297, %290, %cst_151 {dimension_numbers = #tpu.dot_dimension_numbers<[1], [0], [0], [1], [0, 0, 1, 1], [], []>} : vector<8x128xbf16>, vector<128x384xbf16>, vector<8x384xf32> -> vector<8x384xf32>
    %299 = vector.broadcast %292 : vector<1x384xf32> to vector<8x384xf32>
    %300 = arith.addf %298, %299 : vector<8x384xf32>
    %301 = vector.extract_strided_slice %300 {offsets = [0, 0], sizes = [8, 32], strides = [1, 1]} : vector<8x384xf32> to vector<8x32xf32>
    %302 = vector.extract_strided_slice %300 {offsets = [0, 32], sizes = [8, 32], strides = [1, 1]} : vector<8x384xf32> to vector<8x32xf32>
    %303 = vector.extract_strided_slice %300 {offsets = [0, 64], sizes = [8, 32], strides = [1, 1]} : vector<8x384xf32> to vector<8x32xf32>
    %304 = vector.extract_strided_slice %300 {offsets = [0, 96], sizes = [8, 32], strides = [1, 1]} : vector<8x384xf32> to vector<8x32xf32>
    %305 = vector.shape_cast %301 : vector<8x32xf32> to vector<1x8x32xf32>
    %306 = vector.shape_cast %302 : vector<8x32xf32> to vector<1x8x32xf32>
    %307 = vector.shape_cast %303 : vector<8x32xf32> to vector<1x8x32xf32>
    %308 = vector.shape_cast %304 : vector<8x32xf32> to vector<1x8x32xf32>
    %309 = tpu.concatenate %305, %306, %307, %308 in 0 : vector<1x8x32xf32>, vector<1x8x32xf32>, vector<1x8x32xf32>, vector<1x8x32xf32> -> vector<4x8x32xf32>
    %310 = vector.extract_strided_slice %300 {offsets = [0, 128], sizes = [8, 32], strides = [1, 1]} : vector<8x384xf32> to vector<8x32xf32>
    %311 = vector.extract_strided_slice %300 {offsets = [0, 160], sizes = [8, 32], strides = [1, 1]} : vector<8x384xf32> to vector<8x32xf32>
    %312 = vector.extract_strided_slice %300 {offsets = [0, 192], sizes = [8, 32], strides = [1, 1]} : vector<8x384xf32> to vector<8x32xf32>
    %313 = vector.extract_strided_slice %300 {offsets = [0, 224], sizes = [8, 32], strides = [1, 1]} : vector<8x384xf32> to vector<8x32xf32>
    %314 = vector.shape_cast %310 : vector<8x32xf32> to vector<1x8x32xf32>
    %315 = vector.shape_cast %311 : vector<8x32xf32> to vector<1x8x32xf32>
    %316 = vector.shape_cast %312 : vector<8x32xf32> to vector<1x8x32xf32>
    %317 = vector.shape_cast %313 : vector<8x32xf32> to vector<1x8x32xf32>
    %318 = tpu.concatenate %314, %315, %316, %317 in 0 : vector<1x8x32xf32>, vector<1x8x32xf32>, vector<1x8x32xf32>, vector<1x8x32xf32> -> vector<4x8x32xf32>
    %319 = vector.extract_strided_slice %300 {offsets = [0, 256], sizes = [8, 32], strides = [1, 1]} : vector<8x384xf32> to vector<8x32xf32>
    %320 = vector.extract_strided_slice %300 {offsets = [0, 288], sizes = [8, 32], strides = [1, 1]} : vector<8x384xf32> to vector<8x32xf32>
    %321 = vector.extract_strided_slice %300 {offsets = [0, 320], sizes = [8, 32], strides = [1, 1]} : vector<8x384xf32> to vector<8x32xf32>
    %322 = vector.extract_strided_slice %300 {offsets = [0, 352], sizes = [8, 32], strides = [1, 1]} : vector<8x384xf32> to vector<8x32xf32>
    %323 = vector.shape_cast %319 : vector<8x32xf32> to vector<1x8x32xf32>
    %324 = vector.shape_cast %320 : vector<8x32xf32> to vector<1x8x32xf32>
    %325 = vector.shape_cast %321 : vector<8x32xf32> to vector<1x8x32xf32>
    %326 = vector.shape_cast %322 : vector<8x32xf32> to vector<1x8x32xf32>
    %327 = tpu.concatenate %323, %324, %325, %326 in 0 : vector<1x8x32xf32>, vector<1x8x32xf32>, vector<1x8x32xf32>, vector<1x8x32xf32> -> vector<4x8x32xf32>
    %328 = arith.truncf %309 : vector<4x8x32xf32> to vector<4x8x32xbf16>
    %329 = arith.truncf %318 : vector<4x8x32xf32> to vector<4x8x32xbf16>
    %cst_152 = arith.constant dense<0.000000e+00> : vector<4x8x8xf32>
    %330 = tpu.matmul %328, %329, %cst_152 {dimension_numbers = #tpu.dot_dimension_numbers<[2], [2], [1], [1], [0, 0, 0, 1, 1, 1], [0], [0]>} : vector<4x8x32xbf16>, vector<4x8x32xbf16>, vector<4x8x8xf32> -> vector<4x8x8xf32>
    %cst_153 = arith.constant 0.176776692 : f32
    %331 = vector.broadcast %cst_153 : f32 to vector<4x8x8xf32>
    %332 = arith.mulf %330, %331 : vector<4x8x8xf32>
    %333 = vector.broadcast %102 : vector<1x8x8xf32> to vector<4x8x8xf32>
    %334 = arith.addf %332, %333 : vector<4x8x8xf32>
    %cst_154 = arith.constant dense<0xFF800000> : vector<4x8xf32>
    %335 = vector.multi_reduction <maximumf>, %334, %cst_154 [2] : vector<4x8x8xf32> to vector<4x8xf32>
    %336 = vector.shape_cast %335 : vector<4x8xf32> to vector<4x8x1xf32>
    %337 = vector.broadcast %336 : vector<4x8x1xf32> to vector<4x8x8xf32>
    %338 = arith.subf %334, %337 : vector<4x8x8xf32>
    %339 = math.exp %338 : vector<4x8x8xf32>
    %cst_155 = arith.constant dense<0.000000e+00> : vector<4x8xf32>
    %340 = vector.multi_reduction <add>, %339, %cst_155 [2] : vector<4x8x8xf32> to vector<4x8xf32>
    %341 = vector.shape_cast %340 : vector<4x8xf32> to vector<4x8x1xf32>
    %342 = tpu.reciprocal %341 {approx = true} : vector<4x8x1xf32> -> vector<4x8x1xf32>
    %343 = vector.broadcast %342 : vector<4x8x1xf32> to vector<4x8x8xf32>
    %344 = arith.mulf %339, %343 : vector<4x8x8xf32>
    %345 = arith.truncf %344 : vector<4x8x8xf32> to vector<4x8x8xbf16>
    %346 = arith.truncf %327 : vector<4x8x32xf32> to vector<4x8x32xbf16>
    %cst_156 = arith.constant dense<0.000000e+00> : vector<4x8x32xf32>
    %347 = tpu.matmul %345, %346, %cst_156 {dimension_numbers = #tpu.dot_dimension_numbers<[2], [1], [1], [2], [0, 0, 0, 1, 1, 2], [0], [0]>} : vector<4x8x8xbf16>, vector<4x8x32xbf16>, vector<4x8x32xf32> -> vector<4x8x32xf32>
    %348 = vector.extract_strided_slice %347 {offsets = [0, 0, 0], sizes = [1, 8, 32], strides = [1, 1, 1]} : vector<4x8x32xf32> to vector<1x8x32xf32>
    %349 = vector.shape_cast %348 : vector<1x8x32xf32> to vector<8x32xf32>
    %350 = vector.extract_strided_slice %347 {offsets = [1, 0, 0], sizes = [1, 8, 32], strides = [1, 1, 1]} : vector<4x8x32xf32> to vector<1x8x32xf32>
    %351 = vector.shape_cast %350 : vector<1x8x32xf32> to vector<8x32xf32>
    %352 = vector.extract_strided_slice %347 {offsets = [2, 0, 0], sizes = [1, 8, 32], strides = [1, 1, 1]} : vector<4x8x32xf32> to vector<1x8x32xf32>
    %353 = vector.shape_cast %352 : vector<1x8x32xf32> to vector<8x32xf32>
    %354 = vector.extract_strided_slice %347 {offsets = [3, 0, 0], sizes = [1, 8, 32], strides = [1, 1, 1]} : vector<4x8x32xf32> to vector<1x8x32xf32>
    %355 = vector.shape_cast %354 : vector<1x8x32xf32> to vector<8x32xf32>
    %356 = tpu.concatenate %349, %351, %353, %355 in 1 : vector<8x32xf32>, vector<8x32xf32>, vector<8x32xf32>, vector<8x32xf32> -> vector<8x128xf32>
    %357 = arith.truncf %356 : vector<8x128xf32> to vector<8x128xbf16>
    %cst_157 = arith.constant dense<0.000000e+00> : vector<8x128xf32>
    %358 = tpu.matmul %357, %294, %cst_157 {dimension_numbers = #tpu.dot_dimension_numbers<[1], [0], [0], [1], [0, 0, 1, 1], [], []>} : vector<8x128xbf16>, vector<128x128xbf16>, vector<8x128xf32> -> vector<8x128xf32>
    %359 = vector.broadcast %296 : vector<1x128xf32> to vector<8x128xf32>
    %360 = arith.addf %358, %359 : vector<8x128xf32>
    %361 = arith.addf %47, %360 : vector<8x128xf32>
    %c0_158 = arith.constant 0 : index
    %c0_159 = arith.constant 0 : index
    %c0_160 = arith.constant 0 : index
    %362 = vector.load %arg43[%c0_158, %c0_159, %c0_160] : memref<1x1x128xf32, #tpu.memory_space<vmem>>, vector<1x1x128xf32>
    %363 = vector.shape_cast %362 : vector<1x1x128xf32> to vector<1x128xf32>
    %c0_161 = arith.constant 0 : index
    %c0_162 = arith.constant 0 : index
    %c0_163 = arith.constant 0 : index
    %364 = vector.load %arg44[%c0_161, %c0_162, %c0_163] : memref<1x1x128xf32, #tpu.memory_space<vmem>>, vector<1x1x128xf32>
    %365 = vector.shape_cast %364 : vector<1x1x128xf32> to vector<1x128xf32>
    %cst_164 = arith.constant dense<0.000000e+00> : vector<8xf32>
    %366 = vector.multi_reduction <add>, %361, %cst_164 [1] : vector<8x128xf32> to vector<8xf32>
    %367 = vector.shape_cast %366 : vector<8xf32> to vector<8x1xf32>
    %cst_165 = arith.constant 1.280000e+02 : f32
    %368 = vector.broadcast %cst_165 : f32 to vector<8x1xf32>
    %369 = arith.divf %367, %368 : vector<8x1xf32>
    %370 = vector.broadcast %369 : vector<8x1xf32> to vector<8x128xf32>
    %371 = arith.subf %361, %370 : vector<8x128xf32>
    %372 = arith.mulf %371, %371 : vector<8x128xf32>
    %cst_166 = arith.constant dense<0.000000e+00> : vector<8xf32>
    %373 = vector.multi_reduction <add>, %372, %cst_166 [1] : vector<8x128xf32> to vector<8xf32>
    %374 = vector.shape_cast %373 : vector<8xf32> to vector<8x1xf32>
    %cst_167 = arith.constant 1.280000e+02 : f32
    %375 = vector.broadcast %cst_167 : f32 to vector<8x1xf32>
    %376 = arith.divf %374, %375 : vector<8x1xf32>
    %cst_168 = arith.constant 9.99999974E-6 : f32
    %377 = vector.broadcast %cst_168 : f32 to vector<8x1xf32>
    %378 = arith.addf %376, %377 : vector<8x1xf32>
    %379 = math.rsqrt %378 : vector<8x1xf32>
    %380 = vector.broadcast %379 : vector<8x1xf32> to vector<8x128xf32>
    %381 = arith.mulf %371, %380 : vector<8x128xf32>
    %382 = vector.broadcast %363 : vector<1x128xf32> to vector<8x128xf32>
    %383 = arith.mulf %381, %382 : vector<8x128xf32>
    %384 = vector.broadcast %365 : vector<1x128xf32> to vector<8x128xf32>
    %385 = arith.addf %383, %384 : vector<8x128xf32>
    %c0_169 = arith.constant 0 : index
    %c0_170 = arith.constant 0 : index
    %c0_171 = arith.constant 0 : index
    %386 = vector.load %arg45[%c0_169, %c0_170, %c0_171] : memref<1x128x128xbf16, #tpu.memory_space<vmem>>, vector<1x128x128xbf16>
    %387 = vector.shape_cast %386 : vector<1x128x128xbf16> to vector<128x128xbf16>
    %c0_172 = arith.constant 0 : index
    %c0_173 = arith.constant 0 : index
    %c0_174 = arith.constant 0 : index
    %388 = vector.load %arg46[%c0_172, %c0_173, %c0_174] : memref<1x1x128xf32, #tpu.memory_space<vmem>>, vector<1x1x128xf32>
    %389 = vector.shape_cast %388 : vector<1x1x128xf32> to vector<1x128xf32>
    %c0_175 = arith.constant 0 : index
    %c0_176 = arith.constant 0 : index
    %c0_177 = arith.constant 0 : index
    %390 = vector.load %arg47[%c0_175, %c0_176, %c0_177] : memref<1x128x256xbf16, #tpu.memory_space<vmem>>, vector<1x128x256xbf16>
    %391 = vector.shape_cast %390 : vector<1x128x256xbf16> to vector<128x256xbf16>
    %c0_178 = arith.constant 0 : index
    %c0_179 = arith.constant 0 : index
    %c0_180 = arith.constant 0 : index
    %392 = vector.load %arg48[%c0_178, %c0_179, %c0_180] : memref<1x1x256xf32, #tpu.memory_space<vmem>>, vector<1x1x256xf32>
    %393 = vector.shape_cast %392 : vector<1x1x256xf32> to vector<1x256xf32>
    %c0_181 = arith.constant 0 : index
    %c0_182 = arith.constant 0 : index
    %c0_183 = arith.constant 0 : index
    %394 = vector.load %arg49[%c0_181, %c0_182, %c0_183] : memref<1x128x128xbf16, #tpu.memory_space<vmem>>, vector<1x128x128xbf16>
    %395 = vector.shape_cast %394 : vector<1x128x128xbf16> to vector<128x128xbf16>
    %c0_184 = arith.constant 0 : index
    %c0_185 = arith.constant 0 : index
    %c0_186 = arith.constant 0 : index
    %396 = vector.load %arg50[%c0_184, %c0_185, %c0_186] : memref<1x1x128xf32, #tpu.memory_space<vmem>>, vector<1x1x128xf32>
    %397 = vector.shape_cast %396 : vector<1x1x128xf32> to vector<1x128xf32>
    %398 = arith.truncf %385 : vector<8x128xf32> to vector<8x128xbf16>
    %cst_187 = arith.constant dense<0.000000e+00> : vector<8x128xf32>
    %399 = tpu.matmul %398, %387, %cst_187 {dimension_numbers = #tpu.dot_dimension_numbers<[1], [0], [0], [1], [0, 0, 1, 1], [], []>} : vector<8x128xbf16>, vector<128x128xbf16>, vector<8x128xf32> -> vector<8x128xf32>
    %400 = vector.broadcast %389 : vector<1x128xf32> to vector<8x128xf32>
    %401 = arith.addf %399, %400 : vector<8x128xf32>
    %402 = arith.truncf %264 : vector<8x128xf32> to vector<8x128xbf16>
    %cst_188 = arith.constant dense<0.000000e+00> : vector<8x256xf32>
    %403 = tpu.matmul %402, %391, %cst_188 {dimension_numbers = #tpu.dot_dimension_numbers<[1], [0], [0], [1], [0, 0, 1, 1], [], []>} : vector<8x128xbf16>, vector<128x256xbf16>, vector<8x256xf32> -> vector<8x256xf32>
    %404 = vector.broadcast %393 : vector<1x256xf32> to vector<8x256xf32>
    %405 = arith.addf %403, %404 : vector<8x256xf32>
    %406 = vector.extract_strided_slice %401 {offsets = [0, 0], sizes = [8, 32], strides = [1, 1]} : vector<8x128xf32> to vector<8x32xf32>
    %407 = vector.extract_strided_slice %401 {offsets = [0, 32], sizes = [8, 32], strides = [1, 1]} : vector<8x128xf32> to vector<8x32xf32>
    %408 = vector.extract_strided_slice %401 {offsets = [0, 64], sizes = [8, 32], strides = [1, 1]} : vector<8x128xf32> to vector<8x32xf32>
    %409 = vector.extract_strided_slice %401 {offsets = [0, 96], sizes = [8, 32], strides = [1, 1]} : vector<8x128xf32> to vector<8x32xf32>
    %410 = vector.shape_cast %406 : vector<8x32xf32> to vector<1x8x32xf32>
    %411 = vector.shape_cast %407 : vector<8x32xf32> to vector<1x8x32xf32>
    %412 = vector.shape_cast %408 : vector<8x32xf32> to vector<1x8x32xf32>
    %413 = vector.shape_cast %409 : vector<8x32xf32> to vector<1x8x32xf32>
    %414 = tpu.concatenate %410, %411, %412, %413 in 0 : vector<1x8x32xf32>, vector<1x8x32xf32>, vector<1x8x32xf32>, vector<1x8x32xf32> -> vector<4x8x32xf32>
    %415 = vector.extract_strided_slice %405 {offsets = [0, 0], sizes = [8, 32], strides = [1, 1]} : vector<8x256xf32> to vector<8x32xf32>
    %416 = vector.extract_strided_slice %405 {offsets = [0, 32], sizes = [8, 32], strides = [1, 1]} : vector<8x256xf32> to vector<8x32xf32>
    %417 = vector.extract_strided_slice %405 {offsets = [0, 64], sizes = [8, 32], strides = [1, 1]} : vector<8x256xf32> to vector<8x32xf32>
    %418 = vector.extract_strided_slice %405 {offsets = [0, 96], sizes = [8, 32], strides = [1, 1]} : vector<8x256xf32> to vector<8x32xf32>
    %419 = vector.shape_cast %415 : vector<8x32xf32> to vector<1x8x32xf32>
    %420 = vector.shape_cast %416 : vector<8x32xf32> to vector<1x8x32xf32>
    %421 = vector.shape_cast %417 : vector<8x32xf32> to vector<1x8x32xf32>
    %422 = vector.shape_cast %418 : vector<8x32xf32> to vector<1x8x32xf32>
    %423 = tpu.concatenate %419, %420, %421, %422 in 0 : vector<1x8x32xf32>, vector<1x8x32xf32>, vector<1x8x32xf32>, vector<1x8x32xf32> -> vector<4x8x32xf32>
    %424 = vector.extract_strided_slice %405 {offsets = [0, 128], sizes = [8, 32], strides = [1, 1]} : vector<8x256xf32> to vector<8x32xf32>
    %425 = vector.extract_strided_slice %405 {offsets = [0, 160], sizes = [8, 32], strides = [1, 1]} : vector<8x256xf32> to vector<8x32xf32>
    %426 = vector.extract_strided_slice %405 {offsets = [0, 192], sizes = [8, 32], strides = [1, 1]} : vector<8x256xf32> to vector<8x32xf32>
    %427 = vector.extract_strided_slice %405 {offsets = [0, 224], sizes = [8, 32], strides = [1, 1]} : vector<8x256xf32> to vector<8x32xf32>
    %428 = vector.shape_cast %424 : vector<8x32xf32> to vector<1x8x32xf32>
    %429 = vector.shape_cast %425 : vector<8x32xf32> to vector<1x8x32xf32>
    %430 = vector.shape_cast %426 : vector<8x32xf32> to vector<1x8x32xf32>
    %431 = vector.shape_cast %427 : vector<8x32xf32> to vector<1x8x32xf32>
    %432 = tpu.concatenate %428, %429, %430, %431 in 0 : vector<1x8x32xf32>, vector<1x8x32xf32>, vector<1x8x32xf32>, vector<1x8x32xf32> -> vector<4x8x32xf32>
    %433 = arith.truncf %414 : vector<4x8x32xf32> to vector<4x8x32xbf16>
    %434 = arith.truncf %423 : vector<4x8x32xf32> to vector<4x8x32xbf16>
    %cst_189 = arith.constant dense<0.000000e+00> : vector<4x8x8xf32>
    %435 = tpu.matmul %433, %434, %cst_189 {dimension_numbers = #tpu.dot_dimension_numbers<[2], [2], [1], [1], [0, 0, 0, 1, 1, 1], [0], [0]>} : vector<4x8x32xbf16>, vector<4x8x32xbf16>, vector<4x8x8xf32> -> vector<4x8x8xf32>
    %cst_190 = arith.constant 0.176776692 : f32
    %436 = vector.broadcast %cst_190 : f32 to vector<4x8x8xf32>
    %437 = arith.mulf %435, %436 : vector<4x8x8xf32>
    %438 = vector.broadcast %91 : vector<1x1x8xf32> to vector<4x8x8xf32>
    %439 = arith.addf %437, %438 : vector<4x8x8xf32>
    %cst_191 = arith.constant dense<0xFF800000> : vector<4x8xf32>
    %440 = vector.multi_reduction <maximumf>, %439, %cst_191 [2] : vector<4x8x8xf32> to vector<4x8xf32>
    %441 = vector.shape_cast %440 : vector<4x8xf32> to vector<4x8x1xf32>
    %442 = vector.broadcast %441 : vector<4x8x1xf32> to vector<4x8x8xf32>
    %443 = arith.subf %439, %442 : vector<4x8x8xf32>
    %444 = math.exp %443 : vector<4x8x8xf32>
    %cst_192 = arith.constant dense<0.000000e+00> : vector<4x8xf32>
    %445 = vector.multi_reduction <add>, %444, %cst_192 [2] : vector<4x8x8xf32> to vector<4x8xf32>
    %446 = vector.shape_cast %445 : vector<4x8xf32> to vector<4x8x1xf32>
    %447 = tpu.reciprocal %446 {approx = true} : vector<4x8x1xf32> -> vector<4x8x1xf32>
    %448 = vector.broadcast %447 : vector<4x8x1xf32> to vector<4x8x8xf32>
    %449 = arith.mulf %444, %448 : vector<4x8x8xf32>
    %450 = arith.truncf %449 : vector<4x8x8xf32> to vector<4x8x8xbf16>
    %451 = arith.truncf %432 : vector<4x8x32xf32> to vector<4x8x32xbf16>
    %cst_193 = arith.constant dense<0.000000e+00> : vector<4x8x32xf32>
    %452 = tpu.matmul %450, %451, %cst_193 {dimension_numbers = #tpu.dot_dimension_numbers<[2], [1], [1], [2], [0, 0, 0, 1, 1, 2], [0], [0]>} : vector<4x8x8xbf16>, vector<4x8x32xbf16>, vector<4x8x32xf32> -> vector<4x8x32xf32>
    %453 = vector.extract_strided_slice %452 {offsets = [0, 0, 0], sizes = [1, 8, 32], strides = [1, 1, 1]} : vector<4x8x32xf32> to vector<1x8x32xf32>
    %454 = vector.shape_cast %453 : vector<1x8x32xf32> to vector<8x32xf32>
    %455 = vector.extract_strided_slice %452 {offsets = [1, 0, 0], sizes = [1, 8, 32], strides = [1, 1, 1]} : vector<4x8x32xf32> to vector<1x8x32xf32>
    %456 = vector.shape_cast %455 : vector<1x8x32xf32> to vector<8x32xf32>
    %457 = vector.extract_strided_slice %452 {offsets = [2, 0, 0], sizes = [1, 8, 32], strides = [1, 1, 1]} : vector<4x8x32xf32> to vector<1x8x32xf32>
    %458 = vector.shape_cast %457 : vector<1x8x32xf32> to vector<8x32xf32>
    %459 = vector.extract_strided_slice %452 {offsets = [3, 0, 0], sizes = [1, 8, 32], strides = [1, 1, 1]} : vector<4x8x32xf32> to vector<1x8x32xf32>
    %460 = vector.shape_cast %459 : vector<1x8x32xf32> to vector<8x32xf32>
    %461 = tpu.concatenate %454, %456, %458, %460 in 1 : vector<8x32xf32>, vector<8x32xf32>, vector<8x32xf32>, vector<8x32xf32> -> vector<8x128xf32>
    %462 = arith.truncf %461 : vector<8x128xf32> to vector<8x128xbf16>
    %cst_194 = arith.constant dense<0.000000e+00> : vector<8x128xf32>
    %463 = tpu.matmul %462, %395, %cst_194 {dimension_numbers = #tpu.dot_dimension_numbers<[1], [0], [0], [1], [0, 0, 1, 1], [], []>} : vector<8x128xbf16>, vector<128x128xbf16>, vector<8x128xf32> -> vector<8x128xf32>
    %464 = vector.broadcast %397 : vector<1x128xf32> to vector<8x128xf32>
    %465 = arith.addf %463, %464 : vector<8x128xf32>
    %466 = arith.addf %361, %465 : vector<8x128xf32>
    %c0_195 = arith.constant 0 : index
    %c0_196 = arith.constant 0 : index
    %c0_197 = arith.constant 0 : index
    %467 = vector.load %arg51[%c0_195, %c0_196, %c0_197] : memref<1x1x128xf32, #tpu.memory_space<vmem>>, vector<1x1x128xf32>
    %468 = vector.shape_cast %467 : vector<1x1x128xf32> to vector<1x128xf32>
    %c0_198 = arith.constant 0 : index
    %c0_199 = arith.constant 0 : index
    %c0_200 = arith.constant 0 : index
    %469 = vector.load %arg52[%c0_198, %c0_199, %c0_200] : memref<1x1x128xf32, #tpu.memory_space<vmem>>, vector<1x1x128xf32>
    %470 = vector.shape_cast %469 : vector<1x1x128xf32> to vector<1x128xf32>
    %cst_201 = arith.constant dense<0.000000e+00> : vector<8xf32>
    %471 = vector.multi_reduction <add>, %466, %cst_201 [1] : vector<8x128xf32> to vector<8xf32>
    %472 = vector.shape_cast %471 : vector<8xf32> to vector<8x1xf32>
    %cst_202 = arith.constant 1.280000e+02 : f32
    %473 = vector.broadcast %cst_202 : f32 to vector<8x1xf32>
    %474 = arith.divf %472, %473 : vector<8x1xf32>
    %475 = vector.broadcast %474 : vector<8x1xf32> to vector<8x128xf32>
    %476 = arith.subf %466, %475 : vector<8x128xf32>
    %477 = arith.mulf %476, %476 : vector<8x128xf32>
    %cst_203 = arith.constant dense<0.000000e+00> : vector<8xf32>
    %478 = vector.multi_reduction <add>, %477, %cst_203 [1] : vector<8x128xf32> to vector<8xf32>
    %479 = vector.shape_cast %478 : vector<8xf32> to vector<8x1xf32>
    %cst_204 = arith.constant 1.280000e+02 : f32
    %480 = vector.broadcast %cst_204 : f32 to vector<8x1xf32>
    %481 = arith.divf %479, %480 : vector<8x1xf32>
    %cst_205 = arith.constant 9.99999974E-6 : f32
    %482 = vector.broadcast %cst_205 : f32 to vector<8x1xf32>
    %483 = arith.addf %481, %482 : vector<8x1xf32>
    %484 = math.rsqrt %483 : vector<8x1xf32>
    %485 = vector.broadcast %484 : vector<8x1xf32> to vector<8x128xf32>
    %486 = arith.mulf %476, %485 : vector<8x128xf32>
    %487 = vector.broadcast %468 : vector<1x128xf32> to vector<8x128xf32>
    %488 = arith.mulf %486, %487 : vector<8x128xf32>
    %489 = vector.broadcast %470 : vector<1x128xf32> to vector<8x128xf32>
    %490 = arith.addf %488, %489 : vector<8x128xf32>
    %c0_206 = arith.constant 0 : index
    %c0_207 = arith.constant 0 : index
    %c0_208 = arith.constant 0 : index
    %491 = vector.load %arg53[%c0_206, %c0_207, %c0_208] : memref<1x128x256xbf16, #tpu.memory_space<vmem>>, vector<1x128x256xbf16>
    %492 = vector.shape_cast %491 : vector<1x128x256xbf16> to vector<128x256xbf16>
    %c0_209 = arith.constant 0 : index
    %c0_210 = arith.constant 0 : index
    %c0_211 = arith.constant 0 : index
    %493 = vector.load %arg54[%c0_209, %c0_210, %c0_211] : memref<1x1x256xf32, #tpu.memory_space<vmem>>, vector<1x1x256xf32>
    %494 = vector.shape_cast %493 : vector<1x1x256xf32> to vector<1x256xf32>
    %c0_212 = arith.constant 0 : index
    %c0_213 = arith.constant 0 : index
    %c0_214 = arith.constant 0 : index
    %495 = vector.load %arg55[%c0_212, %c0_213, %c0_214] : memref<1x256x128xbf16, #tpu.memory_space<vmem>>, vector<1x256x128xbf16>
    %496 = vector.shape_cast %495 : vector<1x256x128xbf16> to vector<256x128xbf16>
    %c0_215 = arith.constant 0 : index
    %c0_216 = arith.constant 0 : index
    %c0_217 = arith.constant 0 : index
    %497 = vector.load %arg56[%c0_215, %c0_216, %c0_217] : memref<1x1x128xf32, #tpu.memory_space<vmem>>, vector<1x1x128xf32>
    %498 = vector.shape_cast %497 : vector<1x1x128xf32> to vector<1x128xf32>
    %499 = arith.truncf %490 : vector<8x128xf32> to vector<8x128xbf16>
    %cst_218 = arith.constant dense<0.000000e+00> : vector<8x256xf32>
    %500 = tpu.matmul %499, %492, %cst_218 {dimension_numbers = #tpu.dot_dimension_numbers<[1], [0], [0], [1], [0, 0, 1, 1], [], []>} : vector<8x128xbf16>, vector<128x256xbf16>, vector<8x256xf32> -> vector<8x256xf32>
    %501 = vector.broadcast %494 : vector<1x256xf32> to vector<8x256xf32>
    %502 = arith.addf %500, %501 : vector<8x256xf32>
    %cst_219 = arith.constant 0.000000e+00 : f32
    %503 = vector.broadcast %cst_219 : f32 to vector<8x256xf32>
    %504 = arith.maximumf %502, %503 : vector<8x256xf32>
    %505 = arith.truncf %504 : vector<8x256xf32> to vector<8x256xbf16>
    %cst_220 = arith.constant dense<0.000000e+00> : vector<8x128xf32>
    %506 = tpu.matmul %505, %496, %cst_220 {dimension_numbers = #tpu.dot_dimension_numbers<[1], [0], [0], [1], [0, 0, 1, 1], [], []>} : vector<8x256xbf16>, vector<256x128xbf16>, vector<8x128xf32> -> vector<8x128xf32>
    %507 = vector.broadcast %498 : vector<1x128xf32> to vector<8x128xf32>
    %508 = arith.addf %506, %507 : vector<8x128xf32>
    %509 = arith.addf %466, %508 : vector<8x128xf32>
    %c0_221 = arith.constant 0 : index
    %c0_222 = arith.constant 0 : index
    %510 = vector.load %arg57[%c0_221, %c0_222] : memref<1x128xf32, #tpu.memory_space<vmem>>, vector<1x128xf32>
    %c0_223 = arith.constant 0 : index
    %c0_224 = arith.constant 0 : index
    %511 = vector.load %arg58[%c0_223, %c0_224] : memref<1x128xf32, #tpu.memory_space<vmem>>, vector<1x128xf32>
    %cst_225 = arith.constant dense<0.000000e+00> : vector<8xf32>
    %512 = vector.multi_reduction <add>, %509, %cst_225 [1] : vector<8x128xf32> to vector<8xf32>
    %513 = vector.shape_cast %512 : vector<8xf32> to vector<8x1xf32>
    %cst_226 = arith.constant 1.280000e+02 : f32
    %514 = vector.broadcast %cst_226 : f32 to vector<8x1xf32>
    %515 = arith.divf %513, %514 : vector<8x1xf32>
    %516 = vector.broadcast %515 : vector<8x1xf32> to vector<8x128xf32>
    %517 = arith.subf %509, %516 : vector<8x128xf32>
    %518 = arith.mulf %517, %517 : vector<8x128xf32>
    %cst_227 = arith.constant dense<0.000000e+00> : vector<8xf32>
    %519 = vector.multi_reduction <add>, %518, %cst_227 [1] : vector<8x128xf32> to vector<8xf32>
    %520 = vector.shape_cast %519 : vector<8xf32> to vector<8x1xf32>
    %cst_228 = arith.constant 1.280000e+02 : f32
    %521 = vector.broadcast %cst_228 : f32 to vector<8x1xf32>
    %522 = arith.divf %520, %521 : vector<8x1xf32>
    %cst_229 = arith.constant 9.99999974E-6 : f32
    %523 = vector.broadcast %cst_229 : f32 to vector<8x1xf32>
    %524 = arith.addf %522, %523 : vector<8x1xf32>
    %525 = math.rsqrt %524 : vector<8x1xf32>
    %526 = vector.broadcast %525 : vector<8x1xf32> to vector<8x128xf32>
    %527 = arith.mulf %517, %526 : vector<8x128xf32>
    %528 = vector.broadcast %510 : vector<1x128xf32> to vector<8x128xf32>
    %529 = arith.mulf %527, %528 : vector<8x128xf32>
    %530 = vector.broadcast %511 : vector<1x128xf32> to vector<8x128xf32>
    %531 = arith.addf %529, %530 : vector<8x128xf32>
    %c0_230 = arith.constant 0 : index
    %c0_231 = arith.constant 0 : index
    %532 = vector.load %arg59[%c0_230, %c0_231] : memref<128x128xbf16, #tpu.memory_space<vmem>>, vector<128x128xbf16>
    %533 = arith.truncf %531 : vector<8x128xf32> to vector<8x128xbf16>
    %cst_232 = arith.constant dense<0.000000e+00> : vector<8x128xf32>
    %534 = tpu.matmul %533, %532, %cst_232 {dimension_numbers = #tpu.dot_dimension_numbers<[1], [0], [0], [1], [0, 0, 1, 1], [], []>} : vector<8x128xbf16>, vector<128x128xbf16>, vector<8x128xf32> -> vector<8x128xf32>
    %c0_233 = arith.constant 0 : index
    %c0_234 = arith.constant 0 : index
    %c0_235 = arith.constant 0 : index
    %535 = vector.load %arg8[%c0_233, %c0_234, %c0_235] : memref<1x8x1xf32, #tpu.memory_space<vmem>>, vector<1x8x1xf32>
    %536 = vector.shape_cast %535 : vector<1x8x1xf32> to vector<8x1xf32>
    %c0_236 = arith.constant 0 : index
    %c0_237 = arith.constant 0 : index
    %537 = vector.load %arg60[%c0_236, %c0_237] : memref<1x128xf32, #tpu.memory_space<vmem>>, vector<1x128xf32>
    %538 = vector.broadcast %536 : vector<8x1xf32> to vector<8x128xf32>
    %539 = vector.broadcast %537 : vector<1x128xf32> to vector<8x128xf32>
    %540 = arith.mulf %538, %539 : vector<8x128xf32>
    %541 = arith.addf %534, %540 : vector<8x128xf32>
    %c0_238 = arith.constant 0 : index
    %c0_239 = arith.constant 0 : index
    %542 = vector.load %arg61[%c0_238, %c0_239] : memref<1x128xf32, #tpu.memory_space<vmem>>, vector<1x128xf32>
    %543 = vector.broadcast %542 : vector<1x128xf32> to vector<8x128xf32>
    %544 = arith.addf %541, %543 : vector<8x128xf32>
    %c0_240 = arith.constant 0 : index
    %c0_241 = arith.constant 0 : index
    %c0_242 = arith.constant 0 : index
    %545 = vector.load %arg62[%c0_240, %c0_241, %c0_242] : memref<1x8x128xf32, #tpu.memory_space<vmem>>, vector<1x8x128xf32>
    %546 = vector.shape_cast %545 : vector<1x8x128xf32> to vector<8x128xf32>
    %547 = vector.shape_cast %544 : vector<8x128xf32> to vector<1x8x128xf32>
    tpu.vector_store %arg62[%c0_240, %c0_241, %c0_242], %547 {strides = array<i32>} : memref<1x8x128xf32, #tpu.memory_space<vmem>>, vector<1x8x128xf32>,
    return
  }
  func.func @transform_0(%arg0: i32) -> (i32, i32, i32) {
    %c0_i32 = arith.constant 0 : i32
    %c0_i32_0 = arith.constant 0 : i32
    %c0_i32_1 = arith.constant 0 : i32
    return %arg0, %c0_i32, %c0_i32_0 : i32, i32, i32
  }
  func.func @transform_1(%arg0: i32) -> (i32, i32, i32) {
    %c0_i32 = arith.constant 0 : i32
    %c0_i32_0 = arith.constant 0 : i32
    %c0_i32_1 = arith.constant 0 : i32
    return %arg0, %c0_i32, %c0_i32_0 : i32, i32, i32
  }
  func.func @transform_2(%arg0: i32) -> (i32, i32, i32) {
    %c0_i32 = arith.constant 0 : i32
    %c0_i32_0 = arith.constant 0 : i32
    %c0_i32_1 = arith.constant 0 : i32
    return %arg0, %c0_i32, %c0_i32_0 : i32, i32, i32
  }
  func.func @transform_3(%arg0: i32) -> (i32, i32, i32) {
    %c0_i32 = arith.constant 0 : i32
    %c0_i32_0 = arith.constant 0 : i32
    %c0_i32_1 = arith.constant 0 : i32
    return %arg0, %c0_i32, %c0_i32_0 : i32, i32, i32
  }
  func.func @transform_4(%arg0: i32) -> (i32, i32, i32) {
    %c0_i32 = arith.constant 0 : i32
    %c0_i32_0 = arith.constant 0 : i32
    %c0_i32_1 = arith.constant 0 : i32
    return %arg0, %c0_i32, %c0_i32_0 : i32, i32, i32
  }
  func.func @transform_5(%arg0: i32) -> (i32, i32, i32) {
    %c0_i32 = arith.constant 0 : i32
    %c0_i32_0 = arith.constant 0 : i32
    %c0_i32_1 = arith.constant 0 : i32
    return %arg0, %c0_i32, %c0_i32_0 : i32, i32, i32
  }
  func.func @transform_6(%arg0: i32) -> (i32, i32, i32) {
    %c0_i32 = arith.constant 0 : i32
    %c0_i32_0 = arith.constant 0 : i32
    %c0_i32_1 = arith.constant 0 : i32
    return %arg0, %c0_i32, %c0_i32_0 : i32, i32, i32
  }
  func.func @transform_7(%arg0: i32) -> (i32, i32, i32) {
    %c0_i32 = arith.constant 0 : i32
    %c0_i32_0 = arith.constant 0 : i32
    %c0_i32_1 = arith.constant 0 : i32
    return %arg0, %c0_i32, %c0_i32_0 : i32, i32, i32
  }
  func.func @transform_8(%arg0: i32) -> (i32, i32) {
    %c0_i32 = arith.constant 0 : i32
    %c0_i32_0 = arith.constant 0 : i32
    %c0_i32_1 = arith.constant 0 : i32
    return %c0_i32, %c0_i32_0 : i32, i32
  }
  func.func @transform_9(%arg0: i32) -> (i32, i32) {
    %c0_i32 = arith.constant 0 : i32
    %c0_i32_0 = arith.constant 0 : i32
    %c0_i32_1 = arith.constant 0 : i32
    return %c0_i32, %c0_i32_0 : i32, i32
  }
  func.func @transform_10(%arg0: i32) -> (i32, i32) {
    %c0_i32 = arith.constant 0 : i32
    %c0_i32_0 = arith.constant 0 : i32
    %c0_i32_1 = arith.constant 0 : i32
    return %c0_i32, %c0_i32_0 : i32, i32
  }
  func.func @transform_11(%arg0: i32) -> (i32, i32) {
    %c0_i32 = arith.constant 0 : i32
    %c0_i32_0 = arith.constant 0 : i32
    %c0_i32_1 = arith.constant 0 : i32
    return %c0_i32, %c0_i32_0 : i32, i32
  }
  func.func @transform_12(%arg0: i32) -> (i32, i32) {
    %c0_i32 = arith.constant 0 : i32
    %c0_i32_0 = arith.constant 0 : i32
    %c0_i32_1 = arith.constant 0 : i32
    return %c0_i32, %c0_i32_0 : i32, i32
  }
  func.func @transform_13(%arg0: i32) -> (i32, i32) {
    %c0_i32 = arith.constant 0 : i32
    %c0_i32_0 = arith.constant 0 : i32
    %c0_i32_1 = arith.constant 0 : i32
    return %c0_i32, %c0_i32_0 : i32, i32
  }
  func.func @transform_14(%arg0: i32) -> (i32, i32) {
    %c0_i32 = arith.constant 0 : i32
    %c0_i32_0 = arith.constant 0 : i32
    %c0_i32_1 = arith.constant 0 : i32
    return %c0_i32, %c0_i32_0 : i32, i32
  }
  func.func @transform_15(%arg0: i32) -> (i32, i32) {
    %c0_i32 = arith.constant 0 : i32
    %c0_i32_0 = arith.constant 0 : i32
    %c0_i32_1 = arith.constant 0 : i32
    return %c0_i32, %c0_i32_0 : i32, i32
  }
  func.func @transform_16(%arg0: i32) -> (i32, i32) {
    %c0_i32 = arith.constant 0 : i32
    %c0_i32_0 = arith.constant 0 : i32
    %c0_i32_1 = arith.constant 0 : i32
    return %c0_i32, %c0_i32_0 : i32, i32
  }
  func.func @transform_17(%arg0: i32) -> (i32, i32) {
    %c0_i32 = arith.constant 0 : i32
    %c0_i32_0 = arith.constant 0 : i32
    %c0_i32_1 = arith.constant 0 : i32
    return %c0_i32, %c0_i32_0 : i32, i32
  }
  func.func @transform_18(%arg0: i32) -> (i32, i32) {
    %c0_i32 = arith.constant 0 : i32
    %c0_i32_0 = arith.constant 0 : i32
    %c0_i32_1 = arith.constant 0 : i32
    return %c0_i32, %c0_i32_0 : i32, i32
  }
  func.func @transform_19(%arg0: i32) -> (i32, i32) {
    %c0_i32 = arith.constant 0 : i32
    %c0_i32_0 = arith.constant 0 : i32
    %c0_i32_1 = arith.constant 0 : i32
    return %c0_i32, %c0_i32_0 : i32, i32
  }
  func.func @transform_20(%arg0: i32) -> (i32, i32) {
    %c0_i32 = arith.constant 0 : i32
    %c0_i32_0 = arith.constant 0 : i32
    %c0_i32_1 = arith.constant 0 : i32
    return %c0_i32, %c0_i32_0 : i32, i32
  }
  func.func @transform_21(%arg0: i32) -> (i32, i32) {
    %c0_i32 = arith.constant 0 : i32
    %c0_i32_0 = arith.constant 0 : i32
    %c0_i32_1 = arith.constant 0 : i32
    return %c0_i32, %c0_i32_0 : i32, i32
  }
  func.func @transform_22(%arg0: i32) -> (i32, i32, i32) {
    %c0_i32 = arith.constant 0 : i32
    %c0_i32_0 = arith.constant 0 : i32
    %c0_i32_1 = arith.constant 0 : i32
    %c0_i32_2 = arith.constant 0 : i32
    return %c0_i32, %c0_i32_0, %c0_i32_1 : i32, i32, i32
  }
  func.func @transform_23(%arg0: i32) -> (i32, i32, i32) {
    %c0_i32 = arith.constant 0 : i32
    %c0_i32_0 = arith.constant 0 : i32
    %c0_i32_1 = arith.constant 0 : i32
    %c0_i32_2 = arith.constant 0 : i32
    return %c0_i32, %c0_i32_0, %c0_i32_1 : i32, i32, i32
  }
  func.func @transform_24(%arg0: i32) -> (i32, i32, i32) {
    %c0_i32 = arith.constant 0 : i32
    %c0_i32_0 = arith.constant 0 : i32
    %c0_i32_1 = arith.constant 0 : i32
    %c0_i32_2 = arith.constant 0 : i32
    return %c0_i32, %c0_i32_0, %c0_i32_1 : i32, i32, i32
  }
  func.func @transform_25(%arg0: i32) -> (i32, i32, i32) {
    %c0_i32 = arith.constant 0 : i32
    %c0_i32_0 = arith.constant 0 : i32
    %c0_i32_1 = arith.constant 0 : i32
    %c0_i32_2 = arith.constant 0 : i32
    return %c0_i32, %c0_i32_0, %c0_i32_1 : i32, i32, i32
  }
  func.func @transform_26(%arg0: i32) -> (i32, i32, i32) {
    %c0_i32 = arith.constant 0 : i32
    %c0_i32_0 = arith.constant 0 : i32
    %c0_i32_1 = arith.constant 0 : i32
    %c0_i32_2 = arith.constant 0 : i32
    return %c0_i32, %c0_i32_0, %c0_i32_1 : i32, i32, i32
  }
  func.func @transform_27(%arg0: i32) -> (i32, i32, i32) {
    %c0_i32 = arith.constant 0 : i32
    %c0_i32_0 = arith.constant 0 : i32
    %c0_i32_1 = arith.constant 0 : i32
    %c0_i32_2 = arith.constant 0 : i32
    return %c0_i32, %c0_i32_0, %c0_i32_1 : i32, i32, i32
  }
  func.func @transform_28(%arg0: i32) -> (i32, i32, i32) {
    %c0_i32 = arith.constant 0 : i32
    %c0_i32_0 = arith.constant 0 : i32
    %c0_i32_1 = arith.constant 0 : i32
    %c0_i32_2 = arith.constant 0 : i32
    return %c0_i32, %c0_i32_0, %c0_i32_1 : i32, i32, i32
  }
  func.func @transform_29(%arg0: i32) -> (i32, i32, i32) {
    %c0_i32 = arith.constant 0 : i32
    %c0_i32_0 = arith.constant 0 : i32
    %c0_i32_1 = arith.constant 0 : i32
    %c0_i32_2 = arith.constant 0 : i32
    return %c0_i32, %c0_i32_0, %c0_i32_1 : i32, i32, i32
  }
  func.func @transform_30(%arg0: i32) -> (i32, i32, i32) {
    %c0_i32 = arith.constant 0 : i32
    %c0_i32_0 = arith.constant 0 : i32
    %c0_i32_1 = arith.constant 0 : i32
    %c0_i32_2 = arith.constant 0 : i32
    return %c0_i32, %c0_i32_0, %c0_i32_1 : i32, i32, i32
  }
  func.func @transform_31(%arg0: i32) -> (i32, i32, i32) {
    %c0_i32 = arith.constant 0 : i32
    %c0_i32_0 = arith.constant 0 : i32
    %c0_i32_1 = arith.constant 0 : i32
    %c0_i32_2 = arith.constant 0 : i32
    return %c0_i32, %c0_i32_0, %c0_i32_1 : i32, i32, i32
  }
  func.func @transform_32(%arg0: i32) -> (i32, i32, i32) {
    %c0_i32 = arith.constant 0 : i32
    %c0_i32_0 = arith.constant 0 : i32
    %c0_i32_1 = arith.constant 0 : i32
    %c0_i32_2 = arith.constant 0 : i32
    return %c0_i32, %c0_i32_0, %c0_i32_1 : i32, i32, i32
  }
  func.func @transform_33(%arg0: i32) -> (i32, i32, i32) {
    %c0_i32 = arith.constant 0 : i32
    %c0_i32_0 = arith.constant 0 : i32
    %c0_i32_1 = arith.constant 0 : i32
    %c0_i32_2 = arith.constant 0 : i32
    return %c0_i32, %c0_i32_0, %c0_i32_1 : i32, i32, i32
  }
  func.func @transform_34(%arg0: i32) -> (i32, i32) {
    %c0_i32 = arith.constant 0 : i32
    %c0_i32_0 = arith.constant 0 : i32
    %c0_i32_1 = arith.constant 0 : i32
    return %c0_i32, %c0_i32_0 : i32, i32
  }
  func.func @transform_35(%arg0: i32) -> (i32, i32) {
    %c0_i32 = arith.constant 0 : i32
    %c0_i32_0 = arith.constant 0 : i32
    %c0_i32_1 = arith.constant 0 : i32
    return %c0_i32, %c0_i32_0 : i32, i32
  }
  func.func @transform_36(%arg0: i32) -> (i32, i32, i32) {
    %c0_i32 = arith.constant 0 : i32
    %c0_i32_0 = arith.constant 0 : i32
    %c0_i32_1 = arith.constant 0 : i32
    %c0_i32_2 = arith.constant 0 : i32
    return %c0_i32, %c0_i32_0, %c0_i32_1 : i32, i32, i32
  }
  func.func @transform_37(%arg0: i32) -> (i32, i32, i32) {
    %c0_i32 = arith.constant 0 : i32
    %c0_i32_0 = arith.constant 0 : i32
    %c0_i32_1 = arith.constant 0 : i32
    %c0_i32_2 = arith.constant 0 : i32
    return %c0_i32, %c0_i32_0, %c0_i32_1 : i32, i32, i32
  }
  func.func @transform_38(%arg0: i32) -> (i32, i32, i32) {
    %c0_i32 = arith.constant 0 : i32
    %c0_i32_0 = arith.constant 0 : i32
    %c0_i32_1 = arith.constant 0 : i32
    %c0_i32_2 = arith.constant 0 : i32
    return %c0_i32, %c0_i32_0, %c0_i32_1 : i32, i32, i32
  }
  func.func @transform_39(%arg0: i32) -> (i32, i32, i32) {
    %c0_i32 = arith.constant 0 : i32
    %c0_i32_0 = arith.constant 0 : i32
    %c0_i32_1 = arith.constant 0 : i32
    %c0_i32_2 = arith.constant 0 : i32
    return %c0_i32, %c0_i32_0, %c0_i32_1 : i32, i32, i32
  }
  func.func @transform_40(%arg0: i32) -> (i32, i32, i32) {
    %c0_i32 = arith.constant 0 : i32
    %c0_i32_0 = arith.constant 0 : i32
    %c0_i32_1 = arith.constant 0 : i32
    %c0_i32_2 = arith.constant 0 : i32
    return %c0_i32, %c0_i32_0, %c0_i32_1 : i32, i32, i32
  }
  func.func @transform_41(%arg0: i32) -> (i32, i32, i32) {
    %c0_i32 = arith.constant 0 : i32
    %c0_i32_0 = arith.constant 0 : i32
    %c0_i32_1 = arith.constant 0 : i32
    %c0_i32_2 = arith.constant 0 : i32
    return %c0_i32, %c0_i32_0, %c0_i32_1 : i32, i32, i32
  }
  func.func @transform_42(%arg0: i32) -> (i32, i32, i32) {
    %c0_i32 = arith.constant 0 : i32
    %c0_i32_0 = arith.constant 0 : i32
    %c0_i32_1 = arith.constant 0 : i32
    %c0_i32_2 = arith.constant 0 : i32
    return %c0_i32, %c0_i32_0, %c0_i32_1 : i32, i32, i32
  }
  func.func @transform_43(%arg0: i32) -> (i32, i32, i32) {
    %c0_i32 = arith.constant 0 : i32
    %c0_i32_0 = arith.constant 0 : i32
    %c0_i32_1 = arith.constant 0 : i32
    %c0_i32_2 = arith.constant 0 : i32
    return %c0_i32, %c0_i32_0, %c0_i32_1 : i32, i32, i32
  }
  func.func @transform_44(%arg0: i32) -> (i32, i32, i32) {
    %c0_i32 = arith.constant 0 : i32
    %c0_i32_0 = arith.constant 0 : i32
    %c0_i32_1 = arith.constant 0 : i32
    %c0_i32_2 = arith.constant 0 : i32
    return %c0_i32, %c0_i32_0, %c0_i32_1 : i32, i32, i32
  }
  func.func @transform_45(%arg0: i32) -> (i32, i32, i32) {
    %c0_i32 = arith.constant 0 : i32
    %c0_i32_0 = arith.constant 0 : i32
    %c0_i32_1 = arith.constant 0 : i32
    %c0_i32_2 = arith.constant 0 : i32
    return %c0_i32, %c0_i32_0, %c0_i32_1 : i32, i32, i32
  }
  func.func @transform_46(%arg0: i32) -> (i32, i32, i32) {
    %c0_i32 = arith.constant 0 : i32
    %c0_i32_0 = arith.constant 0 : i32
    %c0_i32_1 = arith.constant 0 : i32
    %c0_i32_2 = arith.constant 0 : i32
    return %c0_i32, %c0_i32_0, %c0_i32_1 : i32, i32, i32
  }
  func.func @transform_47(%arg0: i32) -> (i32, i32, i32) {
    %c0_i32 = arith.constant 0 : i32
    %c0_i32_0 = arith.constant 0 : i32
    %c0_i32_1 = arith.constant 0 : i32
    %c0_i32_2 = arith.constant 0 : i32
    return %c0_i32, %c0_i32_0, %c0_i32_1 : i32, i32, i32
  }
  func.func @transform_48(%arg0: i32) -> (i32, i32, i32) {
    %c0_i32 = arith.constant 0 : i32
    %c0_i32_0 = arith.constant 0 : i32
    %c0_i32_1 = arith.constant 0 : i32
    %c0_i32_2 = arith.constant 0 : i32
    return %c0_i32, %c0_i32_0, %c0_i32_1 : i32, i32, i32
  }
  func.func @transform_49(%arg0: i32) -> (i32, i32, i32) {
    %c0_i32 = arith.constant 0 : i32
    %c0_i32_0 = arith.constant 0 : i32
    %c0_i32_1 = arith.constant 0 : i32
    %c0_i32_2 = arith.constant 0 : i32
    return %c0_i32, %c0_i32_0, %c0_i32_1 : i32, i32, i32
  }
  func.func @transform_50(%arg0: i32) -> (i32, i32, i32) {
    %c0_i32 = arith.constant 0 : i32
    %c0_i32_0 = arith.constant 0 : i32
    %c0_i32_1 = arith.constant 0 : i32
    %c0_i32_2 = arith.constant 0 : i32
    return %c0_i32, %c0_i32_0, %c0_i32_1 : i32, i32, i32
  }
  func.func @transform_51(%arg0: i32) -> (i32, i32, i32) {
    %c0_i32 = arith.constant 0 : i32
    %c0_i32_0 = arith.constant 0 : i32
    %c0_i32_1 = arith.constant 0 : i32
    %c0_i32_2 = arith.constant 0 : i32
    return %c0_i32, %c0_i32_0, %c0_i32_1 : i32, i32, i32
  }
  func.func @transform_52(%arg0: i32) -> (i32, i32, i32) {
    %c0_i32 = arith.constant 0 : i32
    %c0_i32_0 = arith.constant 0 : i32
    %c0_i32_1 = arith.constant 0 : i32
    %c0_i32_2 = arith.constant 0 : i32
    return %c0_i32, %c0_i32_0, %c0_i32_1 : i32, i32, i32
  }
  func.func @transform_53(%arg0: i32) -> (i32, i32, i32) {
    %c0_i32 = arith.constant 0 : i32
    %c0_i32_0 = arith.constant 0 : i32
    %c0_i32_1 = arith.constant 0 : i32
    %c0_i32_2 = arith.constant 0 : i32
    return %c0_i32, %c0_i32_0, %c0_i32_1 : i32, i32, i32
  }
  func.func @transform_54(%arg0: i32) -> (i32, i32, i32) {
    %c0_i32 = arith.constant 0 : i32
    %c0_i32_0 = arith.constant 0 : i32
    %c0_i32_1 = arith.constant 0 : i32
    %c0_i32_2 = arith.constant 0 : i32
    return %c0_i32, %c0_i32_0, %c0_i32_1 : i32, i32, i32
  }
  func.func @transform_55(%arg0: i32) -> (i32, i32, i32) {
    %c0_i32 = arith.constant 0 : i32
    %c0_i32_0 = arith.constant 0 : i32
    %c0_i32_1 = arith.constant 0 : i32
    %c0_i32_2 = arith.constant 0 : i32
    return %c0_i32, %c0_i32_0, %c0_i32_1 : i32, i32, i32
  }
  func.func @transform_56(%arg0: i32) -> (i32, i32) {
    %c0_i32 = arith.constant 0 : i32
    %c0_i32_0 = arith.constant 0 : i32
    %c0_i32_1 = arith.constant 0 : i32
    return %c0_i32, %c0_i32_0 : i32, i32
  }
  func.func @transform_57(%arg0: i32) -> (i32, i32) {
    %c0_i32 = arith.constant 0 : i32
    %c0_i32_0 = arith.constant 0 : i32
    %c0_i32_1 = arith.constant 0 : i32
    return %c0_i32, %c0_i32_0 : i32, i32
  }
  func.func @transform_58(%arg0: i32) -> (i32, i32) {
    %c0_i32 = arith.constant 0 : i32
    %c0_i32_0 = arith.constant 0 : i32
    %c0_i32_1 = arith.constant 0 : i32
    return %c0_i32, %c0_i32_0 : i32, i32
  }
  func.func @transform_59(%arg0: i32) -> (i32, i32) {
    %c0_i32 = arith.constant 0 : i32
    %c0_i32_0 = arith.constant 0 : i32
    %c0_i32_1 = arith.constant 0 : i32
    return %c0_i32, %c0_i32_0 : i32, i32
  }
  func.func @transform_60(%arg0: i32) -> (i32, i32) {
    %c0_i32 = arith.constant 0 : i32
    %c0_i32_0 = arith.constant 0 : i32
    %c0_i32_1 = arith.constant 0 : i32
    return %c0_i32, %c0_i32_0 : i32, i32
  }
  func.func @transform_61(%arg0: i32) -> (i32, i32, i32) {
    %c0_i32 = arith.constant 0 : i32
    %c0_i32_0 = arith.constant 0 : i32
    %c0_i32_1 = arith.constant 0 : i32
    return %arg0, %c0_i32, %c0_i32_0 : i32, i32, i32
  }
}

</mosaic_0001>

<llo_original>
// kernel: travel_forward.1
$region0: #{travel_forward.1}
  #allocation0 [shape = 'u32[]', space=smem, size = 0x4, offset = 0x4, fixed_abs, tag = 'smem constant byte address 0x4 - core index']
  #allocation1 [shape = 'u32[144,128]{1,0:T(1,128)}', space=vmem, size = 0x12000, scoped, tag = 'internal scratch']
  %s0 = inlined_call_operand.smem [shape: u32[62], index: -1, kind: input, shape index: {}]
  %s1 = sld [smem:[%s0]]
  %s2 = scalar_lea.smem %s0, 1
  %s3 = sld [smem:[%s2]]
  %s4 = scalar_lea.smem %s0, 2
  %s5 = sld [smem:[%s4]]
  %s6 = scalar_lea.smem %s0, 3
  %s7 = sld [smem:[%s6]]
  %s8 = scalar_lea.smem %s0, 4
  %s9 = sld [smem:[%s8]]
  %s10 = scalar_lea.smem %s0, 5
  %s11 = sld [smem:[%s10]]
  %s12 = scalar_lea.smem %s0, 6
  %s13 = sld [smem:[%s12]]
  %s14 = scalar_lea.smem %s0, 7
  %s15 = sld [smem:[%s14]]
  %s16 = scalar_lea.smem %s0, 8
  %s17 = sld [smem:[%s16]]
  %s18 = scalar_lea.smem %s0, 9
  %s19 = sld [smem:[%s18]]
  %s20 = scalar_lea.smem %s0, 10
  %s21 = sld [smem:[%s20]]
  %s22 = scalar_lea.smem %s0, 11
  %s23 = sld [smem:[%s22]]
  %s24 = scalar_lea.smem %s0, 12
  %s25 = sld [smem:[%s24]]
  %s26 = scalar_lea.smem %s0, 13
  %s27 = sld [smem:[%s26]]
  %s28 = scalar_lea.smem %s0, 14
  %s29 = sld [smem:[%s28]]
  %s30 = scalar_lea.smem %s0, 15
  %s31 = sld [smem:[%s30]]
  %s32 = scalar_lea.smem %s0, 16
  %s33 = sld [smem:[%s32]]
  %s34 = scalar_lea.smem %s0, 17
  %s35 = sld [smem:[%s34]]
  %s36 = scalar_lea.smem %s0, 18
  %s37 = sld [smem:[%s36]]
  %s38 = scalar_lea.smem %s0, 19
  %s39 = sld [smem:[%s38]]
  %s40 = scalar_lea.smem %s0, 20
  %s41 = sld [smem:[%s40]]
  %s42 = scalar_lea.smem %s0, 21
  %s43 = sld [smem:[%s42]]
  %s44 = scalar_lea.smem %s0, 22
  %s45 = sld [smem:[%s44]]
  %s46 = scalar_lea.smem %s0, 23
  %s47 = sld [smem:[%s46]]
  %s48 = scalar_lea.smem %s0, 24
  %s49 = sld [smem:[%s48]]
  %s50 = scalar_lea.smem %s0, 25
  %s51 = sld [smem:[%s50]]
  %s52 = scalar_lea.smem %s0, 26
  %s53 = sld [smem:[%s52]]
  %s54 = scalar_lea.smem %s0, 27
  %s55 = sld [smem:[%s54]]
  %s56 = scalar_lea.smem %s0, 28
  %s57 = sld [smem:[%s56]]
  %s58 = scalar_lea.smem %s0, 29
  %s59 = sld [smem:[%s58]]
  %s60 = scalar_lea.smem %s0, 30
  %s61 = sld [smem:[%s60]]
  %s62 = scalar_lea.smem %s0, 31
  %s63 = sld [smem:[%s62]]
  %s64 = scalar_lea.smem %s0, 32
  %s65 = sld [smem:[%s64]]
  %s66 = scalar_lea.smem %s0, 33
  %s67 = sld [smem:[%s66]]
  %s68 = scalar_lea.smem %s0, 34
  %s69 = sld [smem:[%s68]]
  %s70 = scalar_lea.smem %s0, 35
  %s71 = sld [smem:[%s70]]
  %s72 = scalar_lea.smem %s0, 36
  %s73 = sld [smem:[%s72]]
  %s74 = scalar_lea.smem %s0, 37
  %s75 = sld [smem:[%s74]]
  %s76 = scalar_lea.smem %s0, 38
  %s77 = sld [smem:[%s76]]
  %s78 = scalar_lea.smem %s0, 39
  %s79 = sld [smem:[%s78]]
  %s80 = scalar_lea.smem %s0, 40
  %s81 = sld [smem:[%s80]]
  %s82 = scalar_lea.smem %s0, 41
  %s83 = sld [smem:[%s82]]
  %s84 = scalar_lea.smem %s0, 42
  %s85 = sld [smem:[%s84]]
  %s86 = scalar_lea.smem %s0, 43
  %s87 = sld [smem:[%s86]]
  %s88 = scalar_lea.smem %s0, 44
  %s89 = sld [smem:[%s88]]
  %s90 = scalar_lea.smem %s0, 45
  %s91 = sld [smem:[%s90]]
  %s92 = scalar_lea.smem %s0, 46
  %s93 = sld [smem:[%s92]]
  %s94 = scalar_lea.smem %s0, 47
  %s95 = sld [smem:[%s94]]
  %s96 = scalar_lea.smem %s0, 48
  %s97 = sld [smem:[%s96]]
  %s98 = scalar_lea.smem %s0, 49
  %s99 = sld [smem:[%s98]]
  %s100 = scalar_lea.smem %s0, 50
  %s101 = sld [smem:[%s100]]
  %s102 = scalar_lea.smem %s0, 51
  %s103 = sld [smem:[%s102]]
  %s104 = scalar_lea.smem %s0, 52
  %s105 = sld [smem:[%s104]]
  %s106 = scalar_lea.smem %s0, 53
  %s107 = sld [smem:[%s106]]
  %s108 = scalar_lea.smem %s0, 54
  %s109 = sld [smem:[%s108]]
  %s110 = scalar_lea.smem %s0, 55
  %s111 = sld [smem:[%s110]]
  %s112 = scalar_lea.smem %s0, 56
  %s113 = sld [smem:[%s112]]
  %s114 = scalar_lea.smem %s0, 57
  %s115 = sld [smem:[%s114]]
  %s116 = scalar_lea.smem %s0, 58
  %s117 = sld [smem:[%s116]]
  %s118 = scalar_lea.smem %s0, 59
  %s119 = sld [smem:[%s118]]
  %s120 = scalar_lea.smem %s0, 60
  %s121 = sld [smem:[%s120]]
  %s122 = scalar_lea.smem %s0, 61
  %s123 = sld [smem:[%s122]]
  %s124 = sld [smem:[#allocation0]]
  $region277: #{travel_forward.1} parent=0
    _
  %s126 = ssub.s32 1, %s124
  %s127 = scalar_select 0, %s126, %s124
  loop: start=0, step=1, limit=4
  $region2: #{travel_forward.1} parent=0 // loop_pre_header
    _
  $region3: #{travel_forward.1} parent=0 // loop_header
    %s129 = sphi 0, %s133
    %p130 = scmp.ge.s32.totalorder %s129, 4
    %s139 = sphi 0, %s141
    %s142 = sphi 0, %s139
    %s143 = sphi 0, %s142
    %s159 = sphi 0, %s143
    %s165 = sphi 0, %s167
    %s168 = sphi 0, %s165
    %s169 = sphi 0, %s168
    %s185 = sphi 0, %s169
    %s191 = sphi 0, %s193
    %s194 = sphi 0, %s191
    %s195 = sphi 0, %s194
    %s211 = sphi 0, %s195
    %s217 = sphi 0, %s219
    %s220 = sphi 0, %s217
    %s221 = sphi 0, %s220
    %s237 = sphi 0, %s221
    %s243 = sphi 0, %s245
    %s246 = sphi 0, %s243
    %s247 = sphi 0, %s246
    %s263 = sphi 0, %s247
    %s269 = sphi 0, %s271
    %s272 = sphi 0, %s269
    %s273 = sphi 0, %s272
    %s289 = sphi 0, %s273
    %s295 = sphi 0, %s297
    %s298 = sphi 0, %s295
    %s299 = sphi 0, %s298
    %s315 = sphi 0, %s299
    %s321 = sphi 0, %s323
    %s324 = sphi 0, %s321
    %s325 = sphi 0, %s324
    %s341 = sphi 0, %s325
    %s345 = sphi 0, %s345
    %s347 = sphi 0, %s345
    %s348 = sphi 0, %s347
    %s362 = sphi 0, %s348
    %s366 = sphi 0, %s366
    %s368 = sphi 0, %s366
    %s369 = sphi 0, %s368
    %s383 = sphi 0, %s369
    %s387 = sphi 0, %s387
    %s389 = sphi 0, %s387
    %s390 = sphi 0, %s389
    %s404 = sphi 0, %s390
    %s408 = sphi 0, %s408
    %s410 = sphi 0, %s408
    %s411 = sphi 0, %s410
    %s425 = sphi 0, %s411
    %s429 = sphi 0, %s429
    %s431 = sphi 0, %s429
    %s432 = sphi 0, %s431
    %s446 = sphi 0, %s432
    %s450 = sphi 0, %s450
    %s452 = sphi 0, %s450
    %s453 = sphi 0, %s452
    %s467 = sphi 0, %s453
    %s471 = sphi 0, %s471
    %s473 = sphi 0, %s471
    %s474 = sphi 0, %s473
    %s488 = sphi 0, %s474
    %s492 = sphi 0, %s492
    %s494 = sphi 0, %s492
    %s495 = sphi 0, %s494
    %s509 = sphi 0, %s495
    %s513 = sphi 0, %s513
    %s515 = sphi 0, %s513
    %s516 = sphi 0, %s515
    %s530 = sphi 0, %s516
    %s534 = sphi 0, %s534
    %s536 = sphi 0, %s534
    %s537 = sphi 0, %s536
    %s551 = sphi 0, %s537
    %s555 = sphi 0, %s555
    %s557 = sphi 0, %s555
    %s558 = sphi 0, %s557
    %s572 = sphi 0, %s558
    %s576 = sphi 0, %s576
    %s578 = sphi 0, %s576
    %s579 = sphi 0, %s578
    %s593 = sphi 0, %s579
    %s597 = sphi 0, %s597
    %s599 = sphi 0, %s597
    %s600 = sphi 0, %s599
    %s614 = sphi 0, %s600
    %s618 = sphi 0, %s618
    %s620 = sphi 0, %s618
    %s621 = sphi 0, %s620
    %s635 = sphi 0, %s621
    %s639 = sphi 0, %s639
    %s641 = sphi 0, %s639
    %s642 = sphi 0, %s641
    %s656 = sphi 0, %s642
    %s660 = sphi 0, %s660
    %s662 = sphi 0, %s660
    %s663 = sphi 0, %s662
    %s677 = sphi 0, %s663
    %s681 = sphi 0, %s681
    %s683 = sphi 0, %s681
    %s684 = sphi 0, %s683
    %s698 = sphi 0, %s684
    %s702 = sphi 0, %s702
    %s704 = sphi 0, %s702
    %s705 = sphi 0, %s704
    %s719 = sphi 0, %s705
    %s723 = sphi 0, %s723
    %s725 = sphi 0, %s723
    %s726 = sphi 0, %s725
    %s740 = sphi 0, %s726
    %s744 = sphi 0, %s744
    %s746 = sphi 0, %s744
    %s747 = sphi 0, %s746
    %s761 = sphi 0, %s747
    %s765 = sphi 0, %s765
    %s767 = sphi 0, %s765
    %s768 = sphi 0, %s767
    %s782 = sphi 0, %s768
    %s786 = sphi 0, %s786
    %s788 = sphi 0, %s786
    %s789 = sphi 0, %s788
    %s803 = sphi 0, %s789
    %s807 = sphi 0, %s807
    %s809 = sphi 0, %s807
    %s810 = sphi 0, %s809
    %s824 = sphi 0, %s810
    %s828 = sphi 0, %s828
    %s830 = sphi 0, %s828
    %s831 = sphi 0, %s830
    %s845 = sphi 0, %s831
    %s849 = sphi 0, %s849
    %s851 = sphi 0, %s849
    %s852 = sphi 0, %s851
    %s866 = sphi 0, %s852
    %s870 = sphi 0, %s870
    %s872 = sphi 0, %s870
    %s873 = sphi 0, %s872
    %s887 = sphi 0, %s873
    %s891 = sphi 0, %s891
    %s893 = sphi 0, %s891
    %s894 = sphi 0, %s893
    %s908 = sphi 0, %s894
    %s912 = sphi 0, %s912
    %s914 = sphi 0, %s912
    %s915 = sphi 0, %s914
    %s929 = sphi 0, %s915
    %s933 = sphi 0, %s933
    %s935 = sphi 0, %s933
    %s936 = sphi 0, %s935
    %s950 = sphi 0, %s936
    %s954 = sphi 0, %s954
    %s956 = sphi 0, %s954
    %s957 = sphi 0, %s956
    %s971 = sphi 0, %s957
    %s975 = sphi 0, %s975
    %s977 = sphi 0, %s975
    %s978 = sphi 0, %s977
    %s992 = sphi 0, %s978
    %s996 = sphi 0, %s996
    %s998 = sphi 0, %s996
    %s999 = sphi 0, %s998
    %s1013 = sphi 0, %s999
    %s1017 = sphi 0, %s1017
    %s1019 = sphi 0, %s1017
    %s1020 = sphi 0, %s1019
    %s1034 = sphi 0, %s1020
    %s1038 = sphi 0, %s1038
    %s1040 = sphi 0, %s1038
    %s1041 = sphi 0, %s1040
    %s1055 = sphi 0, %s1041
    %s1059 = sphi 0, %s1059
    %s1061 = sphi 0, %s1059
    %s1062 = sphi 0, %s1061
    %s1076 = sphi 0, %s1062
    %s1080 = sphi 0, %s1080
    %s1082 = sphi 0, %s1080
    %s1083 = sphi 0, %s1082
    %s1097 = sphi 0, %s1083
    %s1101 = sphi 0, %s1101
    %s1103 = sphi 0, %s1101
    %s1104 = sphi 0, %s1103
    %s1118 = sphi 0, %s1104
    %s1122 = sphi 0, %s1122
    %s1124 = sphi 0, %s1122
    %s1125 = sphi 0, %s1124
    %s1139 = sphi 0, %s1125
    %s1143 = sphi 0, %s1143
    %s1145 = sphi 0, %s1143
    %s1146 = sphi 0, %s1145
    %s1160 = sphi 0, %s1146
    %s1164 = sphi 0, %s1164
    %s1166 = sphi 0, %s1164
    %s1167 = sphi 0, %s1166
    %s1181 = sphi 0, %s1167
    %s1185 = sphi 0, %s1185
    %s1187 = sphi 0, %s1185
    %s1188 = sphi 0, %s1187
    %s1202 = sphi 0, %s1188
    %s1206 = sphi 0, %s1206
    %s1208 = sphi 0, %s1206
    %s1209 = sphi 0, %s1208
    %s1223 = sphi 0, %s1209
    %s1227 = sphi 0, %s1227
    %s1229 = sphi 0, %s1227
    %s1230 = sphi 0, %s1229
    %s1244 = sphi 0, %s1230
    %s1248 = sphi 0, %s1248
    %s1250 = sphi 0, %s1248
    %s1251 = sphi 0, %s1250
    %s1265 = sphi 0, %s1251
    %s1269 = sphi 0, %s1269
    %s1271 = sphi 0, %s1269
    %s1272 = sphi 0, %s1271
    %s1286 = sphi 0, %s1272
    %s1290 = sphi 0, %s1290
    %s1292 = sphi 0, %s1290
    %s1293 = sphi 0, %s1292
    %s1307 = sphi 0, %s1293
    %s1311 = sphi 0, %s1311
    %s1313 = sphi 0, %s1311
    %s1314 = sphi 0, %s1313
    %s1328 = sphi 0, %s1314
    %s1332 = sphi 0, %s1332
    %s1334 = sphi 0, %s1332
    %s1335 = sphi 0, %s1334
    %s1349 = sphi 0, %s1335
    %s1353 = sphi 0, %s1353
    %s1355 = sphi 0, %s1353
    %s1356 = sphi 0, %s1355
    %s1370 = sphi 0, %s1356
    %s1374 = sphi 0, %s1374
    %s1376 = sphi 0, %s1374
    %s1377 = sphi 0, %s1376
    %s1391 = sphi 0, %s1377
    %s1395 = sphi 0, %s1395
    %s1397 = sphi 0, %s1395
    %s1398 = sphi 0, %s1397
    %s1412 = sphi 0, %s1398
    %s1416 = sphi 0, %s1416
    %s1418 = sphi 0, %s1416
    %s1419 = sphi 0, %s1418
    %s1433 = sphi 0, %s1419
    %s1437 = sphi 0, %s1437
    %s1439 = sphi 0, %s1437
    %s1440 = sphi 0, %s1439
    %s1454 = sphi 0, %s1440
    %s1460 = sphi 0, %s1462
    %s1463 = sphi 0, %s1460
    %s1464 = sphi 0, %s1463
    %s1480 = sphi 0, %s1464
  $region4: #{travel_forward.1} parent=0 // loop_header_branch
    %132 = sbr.rel (%p130) target = $region8
  $region5: #{travel_forward.1} parent=0 // loop_body
    %s134 = ssub.s32 %s129, 1
    %s135 = ssub.s32 %s129, 2
    %s136 = sadd.s32 %s129, 1
    %s137 = ssub.s32 %s129, %s136
    %p138 = scmp.eq.s32.totalorder %s137, 0
    %s140 = sadd.s32 %s139, 1
    %s141 = scalar_select %p138, %s139, %s140
    %p144 = pneg %p138
    %p145 = scmp.eq.s32.totalorder %s129, 1
    %p146 = por %p144, %p145
    %p147 = scmp.ne.s32.totalorder %s139, %s142
    %p148 = scmp.eq.s32.totalorder %s129, 0
    %p149 = por %p147, %p148
    %p150 = scmp.ne.s32.totalorder %s139, %s142
    %p151 = scmp.eq.s32.totalorder %s134, 1
    %p152 = por %p150, %p151
    %p153 = scmp.ne.s32.totalorder %s142, %s143
    %p154 = scmp.eq.s32.totalorder %s134, 0
    %p155 = por %p153, %p154
    %p156 = scmp.ne.s32.totalorder %s142, %s143
    %p157 = scmp.eq.s32.totalorder %s135, 1
    %p158 = por %p156, %p157
    %p160 = scmp.ne.s32.totalorder %s143, %s159
    %p161 = scmp.eq.s32.totalorder %s135, 0
    %p162 = por %p160, %p161
    %s163 = ssub.s32 %s129, %s136
    %p164 = scmp.eq.s32.totalorder %s163, 0
    %s166 = sadd.s32 %s165, 1
    %s167 = scalar_select %p164, %s165, %s166
    %p170 = pneg %p164
    %p171 = scmp.eq.s32.totalorder %s129, 1
    %p172 = por %p170, %p171
    %p173 = scmp.ne.s32.totalorder %s165, %s168
    %p174 = scmp.eq.s32.totalorder %s129, 0
    %p175 = por %p173, %p174
    %p176 = scmp.ne.s32.totalorder %s165, %s168
    %p177 = scmp.eq.s32.totalorder %s134, 1
    %p178 = por %p176, %p177
    %p179 = scmp.ne.s32.totalorder %s168, %s169
    %p180 = scmp.eq.s32.totalorder %s134, 0
    %p181 = por %p179, %p180
    %p182 = scmp.ne.s32.totalorder %s168, %s169
    %p183 = scmp.eq.s32.totalorder %s135, 1
    %p184 = por %p182, %p183
    %p186 = scmp.ne.s32.totalorder %s169, %s185
    %p187 = scmp.eq.s32.totalorder %s135, 0
    %p188 = por %p186, %p187
    %s189 = ssub.s32 %s129, %s136
    %p190 = scmp.eq.s32.totalorder %s189, 0
    %s192 = sadd.s32 %s191, 1
    %s193 = scalar_select %p190, %s191, %s192
    %p196 = pneg %p190
    %p197 = scmp.eq.s32.totalorder %s129, 1
    %p198 = por %p196, %p197
    %p199 = scmp.ne.s32.totalorder %s191, %s194
    %p200 = scmp.eq.s32.totalorder %s129, 0
    %p201 = por %p199, %p200
    %p202 = scmp.ne.s32.totalorder %s191, %s194
    %p203 = scmp.eq.s32.totalorder %s134, 1
    %p204 = por %p202, %p203
    %p205 = scmp.ne.s32.totalorder %s194, %s195
    %p206 = scmp.eq.s32.totalorder %s134, 0
    %p207 = por %p205, %p206
    %p208 = scmp.ne.s32.totalorder %s194, %s195
    %p209 = scmp.eq.s32.totalorder %s135, 1
    %p210 = por %p208, %p209
    %p212 = scmp.ne.s32.totalorder %s195, %s211
    %p213 = scmp.eq.s32.totalorder %s135, 0
    %p214 = por %p212, %p213
    %s215 = ssub.s32 %s129, %s136
    %p216 = scmp.eq.s32.totalorder %s215, 0
    %s218 = sadd.s32 %s217, 1
    %s219 = scalar_select %p216, %s217, %s218
    %p222 = pneg %p216
    %p223 = scmp.eq.s32.totalorder %s129, 1
    %p224 = por %p222, %p223
    %p225 = scmp.ne.s32.totalorder %s217, %s220
    %p226 = scmp.eq.s32.totalorder %s129, 0
    %p227 = por %p225, %p226
    %p228 = scmp.ne.s32.totalorder %s217, %s220
    %p229 = scmp.eq.s32.totalorder %s134, 1
    %p230 = por %p228, %p229
    %p231 = scmp.ne.s32.totalorder %s220, %s221
    %p232 = scmp.eq.s32.totalorder %s134, 0
    %p233 = por %p231, %p232
    %p234 = scmp.ne.s32.totalorder %s220, %s221
    %p235 = scmp.eq.s32.totalorder %s135, 1
    %p236 = por %p234, %p235
    %p238 = scmp.ne.s32.totalorder %s221, %s237
    %p239 = scmp.eq.s32.totalorder %s135, 0
    %p240 = por %p238, %p239
    %s241 = ssub.s32 %s129, %s136
    %p242 = scmp.eq.s32.totalorder %s241, 0
    %s244 = sadd.s32 %s243, 1
    %s245 = scalar_select %p242, %s243, %s244
    %p248 = pneg %p242
    %p249 = scmp.eq.s32.totalorder %s129, 1
    %p250 = por %p248, %p249
    %p251 = scmp.ne.s32.totalorder %s243, %s246
    %p252 = scmp.eq.s32.totalorder %s129, 0
    %p253 = por %p251, %p252
    %p254 = scmp.ne.s32.totalorder %s243, %s246
    %p255 = scmp.eq.s32.totalorder %s134, 1
    %p256 = por %p254, %p255
    %p257 = scmp.ne.s32.totalorder %s246, %s247
    %p258 = scmp.eq.s32.totalorder %s134, 0
    %p259 = por %p257, %p258
    %p260 = scmp.ne.s32.totalorder %s246, %s247
    %p261 = scmp.eq.s32.totalorder %s135, 1
    %p262 = por %p260, %p261
    %p264 = scmp.ne.s32.totalorder %s247, %s263
    %p265 = scmp.eq.s32.totalorder %s135, 0
    %p266 = por %p264, %p265
    %s267 = ssub.s32 %s129, %s136
    %p268 = scmp.eq.s32.totalorder %s267, 0
    %s270 = sadd.s32 %s269, 1
    %s271 = scalar_select %p268, %s269, %s270
    %p274 = pneg %p268
    %p275 = scmp.eq.s32.totalorder %s129, 1
    %p276 = por %p274, %p275
    %p277 = scmp.ne.s32.totalorder %s269, %s272
    %p278 = scmp.eq.s32.totalorder %s129, 0
    %p279 = por %p277, %p278
    %p280 = scmp.ne.s32.totalorder %s269, %s272
    %p281 = scmp.eq.s32.totalorder %s134, 1
    %p282 = por %p280, %p281
    %p283 = scmp.ne.s32.totalorder %s272, %s273
    %p284 = scmp.eq.s32.totalorder %s134, 0
    %p285 = por %p283, %p284
    %p286 = scmp.ne.s32.totalorder %s272, %s273
    %p287 = scmp.eq.s32.totalorder %s135, 1
    %p288 = por %p286, %p287
    %p290 = scmp.ne.s32.totalorder %s273, %s289
    %p291 = scmp.eq.s32.totalorder %s135, 0
    %p292 = por %p290, %p291
    %s293 = ssub.s32 %s129, %s136
    %p294 = scmp.eq.s32.totalorder %s293, 0
    %s296 = sadd.s32 %s295, 1
    %s297 = scalar_select %p294, %s295, %s296
    %p300 = pneg %p294
    %p301 = scmp.eq.s32.totalorder %s129, 1
    %p302 = por %p300, %p301
    %p303 = scmp.ne.s32.totalorder %s295, %s298
    %p304 = scmp.eq.s32.totalorder %s129, 0
    %p305 = por %p303, %p304
    %p306 = scmp.ne.s32.totalorder %s295, %s298
    %p307 = scmp.eq.s32.totalorder %s134, 1
    %p308 = por %p306, %p307
    %p309 = scmp.ne.s32.totalorder %s298, %s299
    %p310 = scmp.eq.s32.totalorder %s134, 0
    %p311 = por %p309, %p310
    %p312 = scmp.ne.s32.totalorder %s298, %s299
    %p313 = scmp.eq.s32.totalorder %s135, 1
    %p314 = por %p312, %p313
    %p316 = scmp.ne.s32.totalorder %s299, %s315
    %p317 = scmp.eq.s32.totalorder %s135, 0
    %p318 = por %p316, %p317
    %s319 = ssub.s32 %s129, %s136
    %p320 = scmp.eq.s32.totalorder %s319, 0
    %s322 = sadd.s32 %s321, 1
    %s323 = scalar_select %p320, %s321, %s322
    %p326 = pneg %p320
    %p327 = scmp.eq.s32.totalorder %s129, 1
    %p328 = por %p326, %p327
    %p329 = scmp.ne.s32.totalorder %s321, %s324
    %p330 = scmp.eq.s32.totalorder %s129, 0
    %p331 = por %p329, %p330
    %p332 = scmp.ne.s32.totalorder %s321, %s324
    %p333 = scmp.eq.s32.totalorder %s134, 1
    %p334 = por %p332, %p333
    %p335 = scmp.ne.s32.totalorder %s324, %s325
    %p336 = scmp.eq.s32.totalorder %s134, 0
    %p337 = por %p335, %p336
    %p338 = scmp.ne.s32.totalorder %s324, %s325
    %p339 = scmp.eq.s32.totalorder %s135, 1
    %p340 = por %p338, %p339
    %p342 = scmp.ne.s32.totalorder %s325, %s341
    %p343 = scmp.eq.s32.totalorder %s135, 0
    %p344 = por %p342, %p343
    %s346 = sadd.s32 %s345, 1
    %p349 = scmp.eq.s32.totalorder %s129, 1
    %p350 = scmp.ne.s32.totalorder %s345, %s347
    %p351 = scmp.eq.s32.totalorder %s129, 0
    %p352 = por %p350, %p351
    %p353 = scmp.ne.s32.totalorder %s345, %s347
    %p354 = scmp.eq.s32.totalorder %s134, 1
    %p355 = por %p353, %p354
    %p356 = scmp.ne.s32.totalorder %s347, %s348
    %p357 = scmp.eq.s32.totalorder %s134, 0
    %p358 = por %p356, %p357
    %p359 = scmp.ne.s32.totalorder %s347, %s348
    %p360 = scmp.eq.s32.totalorder %s135, 1
    %p361 = por %p359, %p360
    %p363 = scmp.ne.s32.totalorder %s348, %s362
    %p364 = scmp.eq.s32.totalorder %s135, 0
    %p365 = por %p363, %p364
    %s367 = sadd.s32 %s366, 1
    %p370 = scmp.eq.s32.totalorder %s129, 1
    %p371 = scmp.ne.s32.totalorder %s366, %s368
    %p372 = scmp.eq.s32.totalorder %s129, 0
    %p373 = por %p371, %p372
    %p374 = scmp.ne.s32.totalorder %s366, %s368
    %p375 = scmp.eq.s32.totalorder %s134, 1
    %p376 = por %p374, %p375
    %p377 = scmp.ne.s32.totalorder %s368, %s369
    %p378 = scmp.eq.s32.totalorder %s134, 0
    %p379 = por %p377, %p378
    %p380 = scmp.ne.s32.totalorder %s368, %s369
    %p381 = scmp.eq.s32.totalorder %s135, 1
    %p382 = por %p380, %p381
    %p384 = scmp.ne.s32.totalorder %s369, %s383
    %p385 = scmp.eq.s32.totalorder %s135, 0
    %p386 = por %p384, %p385
    %s388 = sadd.s32 %s387, 1
    %p391 = scmp.eq.s32.totalorder %s129, 1
    %p392 = scmp.ne.s32.totalorder %s387, %s389
    %p393 = scmp.eq.s32.totalorder %s129, 0
    %p394 = por %p392, %p393
    %p395 = scmp.ne.s32.totalorder %s387, %s389
    %p396 = scmp.eq.s32.totalorder %s134, 1
    %p397 = por %p395, %p396
    %p398 = scmp.ne.s32.totalorder %s389, %s390
    %p399 = scmp.eq.s32.totalorder %s134, 0
    %p400 = por %p398, %p399
    %p401 = scmp.ne.s32.totalorder %s389, %s390
    %p402 = scmp.eq.s32.totalorder %s135, 1
    %p403 = por %p401, %p402
    %p405 = scmp.ne.s32.totalorder %s390, %s404
    %p406 = scmp.eq.s32.totalorder %s135, 0
    %p407 = por %p405, %p406
    %s409 = sadd.s32 %s408, 1
    %p412 = scmp.eq.s32.totalorder %s129, 1
    %p413 = scmp.ne.s32.totalorder %s408, %s410
    %p414 = scmp.eq.s32.totalorder %s129, 0
    %p415 = por %p413, %p414
    %p416 = scmp.ne.s32.totalorder %s408, %s410
    %p417 = scmp.eq.s32.totalorder %s134, 1
    %p418 = por %p416, %p417
    %p419 = scmp.ne.s32.totalorder %s410, %s411
    %p420 = scmp.eq.s32.totalorder %s134, 0
    %p421 = por %p419, %p420
    %p422 = scmp.ne.s32.totalorder %s410, %s411
    %p423 = scmp.eq.s32.totalorder %s135, 1
    %p424 = por %p422, %p423
    %p426 = scmp.ne.s32.totalorder %s411, %s425
    %p427 = scmp.eq.s32.totalorder %s135, 0
    %p428 = por %p426, %p427
    %s430 = sadd.s32 %s429, 1
    %p433 = scmp.eq.s32.totalorder %s129, 1
    %p434 = scmp.ne.s32.totalorder %s429, %s431
    %p435 = scmp.eq.s32.totalorder %s129, 0
    %p436 = por %p434, %p435
    %p437 = scmp.ne.s32.totalorder %s429, %s431
    %p438 = scmp.eq.s32.totalorder %s134, 1
    %p439 = por %p437, %p438
    %p440 = scmp.ne.s32.totalorder %s431, %s432
    %p441 = scmp.eq.s32.totalorder %s134, 0
    %p442 = por %p440, %p441
    %p443 = scmp.ne.s32.totalorder %s431, %s432
    %p444 = scmp.eq.s32.totalorder %s135, 1
    %p445 = por %p443, %p444
    %p447 = scmp.ne.s32.totalorder %s432, %s446
    %p448 = scmp.eq.s32.totalorder %s135, 0
    %p449 = por %p447, %p448
    %s451 = sadd.s32 %s450, 1
    %p454 = scmp.eq.s32.totalorder %s129, 1
    %p455 = scmp.ne.s32.totalorder %s450, %s452
    %p456 = scmp.eq.s32.totalorder %s129, 0
    %p457 = por %p455, %p456
    %p458 = scmp.ne.s32.totalorder %s450, %s452
    %p459 = scmp.eq.s32.totalorder %s134, 1
    %p460 = por %p458, %p459
    %p461 = scmp.ne.s32.totalorder %s452, %s453
    %p462 = scmp.eq.s32.totalorder %s134, 0
    %p463 = por %p461, %p462
    %p464 = scmp.ne.s32.totalorder %s452, %s453
    %p465 = scmp.eq.s32.totalorder %s135, 1
    %p466 = por %p464, %p465
    %p468 = scmp.ne.s32.totalorder %s453, %s467
    %p469 = scmp.eq.s32.totalorder %s135, 0
    %p470 = por %p468, %p469
    %s472 = sadd.s32 %s471, 1
    %p475 = scmp.eq.s32.totalorder %s129, 1
    %p476 = scmp.ne.s32.totalorder %s471, %s473
    %p477 = scmp.eq.s32.totalorder %s129, 0
    %p478 = por %p476, %p477
    %p479 = scmp.ne.s32.totalorder %s471, %s473
    %p480 = scmp.eq.s32.totalorder %s134, 1
    %p481 = por %p479, %p480
    %p482 = scmp.ne.s32.totalorder %s473, %s474
    %p483 = scmp.eq.s32.totalorder %s134, 0
    %p484 = por %p482, %p483
    %p485 = scmp.ne.s32.totalorder %s473, %s474
    %p486 = scmp.eq.s32.totalorder %s135, 1
    %p487 = por %p485, %p486
    %p489 = scmp.ne.s32.totalorder %s474, %s488
    %p490 = scmp.eq.s32.totalorder %s135, 0
    %p491 = por %p489, %p490
    %s493 = sadd.s32 %s492, 1
    %p496 = scmp.eq.s32.totalorder %s129, 1
    %p497 = scmp.ne.s32.totalorder %s492, %s494
    %p498 = scmp.eq.s32.totalorder %s129, 0
    %p499 = por %p497, %p498
    %p500 = scmp.ne.s32.totalorder %s492, %s494
    %p501 = scmp.eq.s32.totalorder %s134, 1
    %p502 = por %p500, %p501
    %p503 = scmp.ne.s32.totalorder %s494, %s495
    %p504 = scmp.eq.s32.totalorder %s134, 0
    %p505 = por %p503, %p504
    %p506 = scmp.ne.s32.totalorder %s494, %s495
    %p507 = scmp.eq.s32.totalorder %s135, 1
    %p508 = por %p506, %p507
    %p510 = scmp.ne.s32.totalorder %s495, %s509
    %p511 = scmp.eq.s32.totalorder %s135, 0
    %p512 = por %p510, %p511
    %s514 = sadd.s32 %s513, 1
    %p517 = scmp.eq.s32.totalorder %s129, 1
    %p518 = scmp.ne.s32.totalorder %s513, %s515
    %p519 = scmp.eq.s32.totalorder %s129, 0
    %p520 = por %p518, %p519
    %p521 = scmp.ne.s32.totalorder %s513, %s515
    %p522 = scmp.eq.s32.totalorder %s134, 1
    %p523 = por %p521, %p522
    %p524 = scmp.ne.s32.totalorder %s515, %s516
    %p525 = scmp.eq.s32.totalorder %s134, 0
    %p526 = por %p524, %p525
    %p527 = scmp.ne.s32.totalorder %s515, %s516
    %p528 = scmp.eq.s32.totalorder %s135, 1
    %p529 = por %p527, %p528
    %p531 = scmp.ne.s32.totalorder %s516, %s530
    %p532 = scmp.eq.s32.totalorder %s135, 0
    %p533 = por %p531, %p532
    %s535 = sadd.s32 %s534, 1
    %p538 = scmp.eq.s32.totalorder %s129, 1
    %p539 = scmp.ne.s32.totalorder %s534, %s536
    %p540 = scmp.eq.s32.totalorder %s129, 0
    %p541 = por %p539, %p540
    %p542 = scmp.ne.s32.totalorder %s534, %s536
    %p543 = scmp.eq.s32.totalorder %s134, 1
    %p544 = por %p542, %p543
    %p545 = scmp.ne.s32.totalorder %s536, %s537
    %p546 = scmp.eq.s32.totalorder %s134, 0
    %p547 = por %p545, %p546
    %p548 = scmp.ne.s32.totalorder %s536, %s537
    %p549 = scmp.eq.s32.totalorder %s135, 1
    %p550 = por %p548, %p549
    %p552 = scmp.ne.s32.totalorder %s537, %s551
    %p553 = scmp.eq.s32.totalorder %s135, 0
    %p554 = por %p552, %p553
    %s556 = sadd.s32 %s555, 1
    %p559 = scmp.eq.s32.totalorder %s129, 1
    %p560 = scmp.ne.s32.totalorder %s555, %s557
    %p561 = scmp.eq.s32.totalorder %s129, 0
    %p562 = por %p560, %p561
    %p563 = scmp.ne.s32.totalorder %s555, %s557
    %p564 = scmp.eq.s32.totalorder %s134, 1
    %p565 = por %p563, %p564
    %p566 = scmp.ne.s32.totalorder %s557, %s558
    %p567 = scmp.eq.s32.totalorder %s134, 0
    %p568 = por %p566, %p567
    %p569 = scmp.ne.s32.totalorder %s557, %s558
    %p570 = scmp.eq.s32.totalorder %s135, 1
    %p571 = por %p569, %p570
    %p573 = scmp.ne.s32.totalorder %s558, %s572
    %p574 = scmp.eq.s32.totalorder %s135, 0
    %p575 = por %p573, %p574
    %s577 = sadd.s32 %s576, 1
    %p580 = scmp.eq.s32.totalorder %s129, 1
    %p581 = scmp.ne.s32.totalorder %s576, %s578
    %p582 = scmp.eq.s32.totalorder %s129, 0
    %p583 = por %p581, %p582
    %p584 = scmp.ne.s32.totalorder %s576, %s578
    %p585 = scmp.eq.s32.totalorder %s134, 1
    %p586 = por %p584, %p585
    %p587 = scmp.ne.s32.totalorder %s578, %s579
    %p588 = scmp.eq.s32.totalorder %s134, 0
    %p589 = por %p587, %p588
    %p590 = scmp.ne.s32.totalorder %s578, %s579
    %p591 = scmp.eq.s32.totalorder %s135, 1
    %p592 = por %p590, %p591
    %p594 = scmp.ne.s32.totalorder %s579, %s593
    %p595 = scmp.eq.s32.totalorder %s135, 0
    %p596 = por %p594, %p595
    %s598 = sadd.s32 %s597, 1
    %p601 = scmp.eq.s32.totalorder %s129, 1
    %p602 = scmp.ne.s32.totalorder %s597, %s599
    %p603 = scmp.eq.s32.totalorder %s129, 0
    %p604 = por %p602, %p603
    %p605 = scmp.ne.s32.totalorder %s597, %s599
    %p606 = scmp.eq.s32.totalorder %s134, 1
    %p607 = por %p605, %p606
    %p608 = scmp.ne.s32.totalorder %s599, %s600
    %p609 = scmp.eq.s32.totalorder %s134, 0
    %p610 = por %p608, %p609
    %p611 = scmp.ne.s32.totalorder %s599, %s600
    %p612 = scmp.eq.s32.totalorder %s135, 1
    %p613 = por %p611, %p612
    %p615 = scmp.ne.s32.totalorder %s600, %s614
    %p616 = scmp.eq.s32.totalorder %s135, 0
    %p617 = por %p615, %p616
    %s619 = sadd.s32 %s618, 1
    %p622 = scmp.eq.s32.totalorder %s129, 1
    %p623 = scmp.ne.s32.totalorder %s618, %s620
    %p624 = scmp.eq.s32.totalorder %s129, 0
    %p625 = por %p623, %p624
    %p626 = scmp.ne.s32.totalorder %s618, %s620
    %p627 = scmp.eq.s32.totalorder %s134, 1
    %p628 = por %p626, %p627
    %p629 = scmp.ne.s32.totalorder %s620, %s621
    %p630 = scmp.eq.s32.totalorder %s134, 0
    %p631 = por %p629, %p630
    %p632 = scmp.ne.s32.totalorder %s620, %s621
    %p633 = scmp.eq.s32.totalorder %s135, 1
    %p634 = por %p632, %p633
    %p636 = scmp.ne.s32.totalorder %s621, %s635
    %p637 = scmp.eq.s32.totalorder %s135, 0
    %p638 = por %p636, %p637
    %s640 = sadd.s32 %s639, 1
    %p643 = scmp.eq.s32.totalorder %s129, 1
    %p644 = scmp.ne.s32.totalorder %s639, %s641
    %p645 = scmp.eq.s32.totalorder %s129, 0
    %p646 = por %p644, %p645
    %p647 = scmp.ne.s32.totalorder %s639, %s641
    %p648 = scmp.eq.s32.totalorder %s134, 1
    %p649 = por %p647, %p648
    %p650 = scmp.ne.s32.totalorder %s641, %s642
    %p651 = scmp.eq.s32.totalorder %s134, 0
    %p652 = por %p650, %p651
    %p653 = scmp.ne.s32.totalorder %s641, %s642
    %p654 = scmp.eq.s32.totalorder %s135, 1
    %p655 = por %p653, %p654
    %p657 = scmp.ne.s32.totalorder %s642, %s656
    %p658 = scmp.eq.s32.totalorder %s135, 0
    %p659 = por %p657, %p658
    %s661 = sadd.s32 %s660, 1
    %p664 = scmp.eq.s32.totalorder %s129, 1
    %p665 = scmp.ne.s32.totalorder %s660, %s662
    %p666 = scmp.eq.s32.totalorder %s129, 0
    %p667 = por %p665, %p666
    %p668 = scmp.ne.s32.totalorder %s660, %s662
    %p669 = scmp.eq.s32.totalorder %s134, 1
    %p670 = por %p668, %p669
    %p671 = scmp.ne.s32.totalorder %s662, %s663
    %p672 = scmp.eq.s32.totalorder %s134, 0
    %p673 = por %p671, %p672
    %p674 = scmp.ne.s32.totalorder %s662, %s663
    %p675 = scmp.eq.s32.totalorder %s135, 1
    %p676 = por %p674, %p675
    %p678 = scmp.ne.s32.totalorder %s663, %s677
    %p679 = scmp.eq.s32.totalorder %s135, 0
    %p680 = por %p678, %p679
    %s682 = sadd.s32 %s681, 1
    %p685 = scmp.eq.s32.totalorder %s129, 1
    %p686 = scmp.ne.s32.totalorder %s681, %s683
    %p687 = scmp.eq.s32.totalorder %s129, 0
    %p688 = por %p686, %p687
    %p689 = scmp.ne.s32.totalorder %s681, %s683
    %p690 = scmp.eq.s32.totalorder %s134, 1
    %p691 = por %p689, %p690
    %p692 = scmp.ne.s32.totalorder %s683, %s684
    %p693 = scmp.eq.s32.totalorder %s134, 0
    %p694 = por %p692, %p693
    %p695 = scmp.ne.s32.totalorder %s683, %s684
    %p696 = scmp.eq.s32.totalorder %s135, 1
    %p697 = por %p695, %p696
    %p699 = scmp.ne.s32.totalorder %s684, %s698
    %p700 = scmp.eq.s32.totalorder %s135, 0
    %p701 = por %p699, %p700
    %s703 = sadd.s32 %s702, 1
    %p706 = scmp.eq.s32.totalorder %s129, 1
    %p707 = scmp.ne.s32.totalorder %s702, %s704
    %p708 = scmp.eq.s32.totalorder %s129, 0
    %p709 = por %p707, %p708
    %p710 = scmp.ne.s32.totalorder %s702, %s704
    %p711 = scmp.eq.s32.totalorder %s134, 1
    %p712 = por %p710, %p711
    %p713 = scmp.ne.s32.totalorder %s704, %s705
    %p714 = scmp.eq.s32.totalorder %s134, 0
    %p715 = por %p713, %p714
    %p716 = scmp.ne.s32.totalorder %s704, %s705
    %p717 = scmp.eq.s32.totalorder %s135, 1
    %p718 = por %p716, %p717
    %p720 = scmp.ne.s32.totalorder %s705, %s719
    %p721 = scmp.eq.s32.totalorder %s135, 0
    %p722 = por %p720, %p721
    %s724 = sadd.s32 %s723, 1
    %p727 = scmp.eq.s32.totalorder %s129, 1
    %p728 = scmp.ne.s32.totalorder %s723, %s725
    %p729 = scmp.eq.s32.totalorder %s129, 0
    %p730 = por %p728, %p729
    %p731 = scmp.ne.s32.totalorder %s723, %s725
    %p732 = scmp.eq.s32.totalorder %s134, 1
    %p733 = por %p731, %p732
    %p734 = scmp.ne.s32.totalorder %s725, %s726
    %p735 = scmp.eq.s32.totalorder %s134, 0
    %p736 = por %p734, %p735
    %p737 = scmp.ne.s32.totalorder %s725, %s726
    %p738 = scmp.eq.s32.totalorder %s135, 1
    %p739 = por %p737, %p738
    %p741 = scmp.ne.s32.totalorder %s726, %s740
    %p742 = scmp.eq.s32.totalorder %s135, 0
    %p743 = por %p741, %p742
    %s745 = sadd.s32 %s744, 1
    %p748 = scmp.eq.s32.totalorder %s129, 1
    %p749 = scmp.ne.s32.totalorder %s744, %s746
    %p750 = scmp.eq.s32.totalorder %s129, 0
    %p751 = por %p749, %p750
    %p752 = scmp.ne.s32.totalorder %s744, %s746
    %p753 = scmp.eq.s32.totalorder %s134, 1
    %p754 = por %p752, %p753
    %p755 = scmp.ne.s32.totalorder %s746, %s747
    %p756 = scmp.eq.s32.totalorder %s134, 0
    %p757 = por %p755, %p756
    %p758 = scmp.ne.s32.totalorder %s746, %s747
    %p759 = scmp.eq.s32.totalorder %s135, 1
    %p760 = por %p758, %p759
    %p762 = scmp.ne.s32.totalorder %s747, %s761
    %p763 = scmp.eq.s32.totalorder %s135, 0
    %p764 = por %p762, %p763
    %s766 = sadd.s32 %s765, 1
    %p769 = scmp.eq.s32.totalorder %s129, 1
    %p770 = scmp.ne.s32.totalorder %s765, %s767
    %p771 = scmp.eq.s32.totalorder %s129, 0
    %p772 = por %p770, %p771
    %p773 = scmp.ne.s32.totalorder %s765, %s767
    %p774 = scmp.eq.s32.totalorder %s134, 1
    %p775 = por %p773, %p774
    %p776 = scmp.ne.s32.totalorder %s767, %s768
    %p777 = scmp.eq.s32.totalorder %s134, 0
    %p778 = por %p776, %p777
    %p779 = scmp.ne.s32.totalorder %s767, %s768
    %p780 = scmp.eq.s32.totalorder %s135, 1
    %p781 = por %p779, %p780
    %p783 = scmp.ne.s32.totalorder %s768, %s782
    %p784 = scmp.eq.s32.totalorder %s135, 0
    %p785 = por %p783, %p784
    %s787 = sadd.s32 %s786, 1
    %p790 = scmp.eq.s32.totalorder %s129, 1
    %p791 = scmp.ne.s32.totalorder %s786, %s788
    %p792 = scmp.eq.s32.totalorder %s129, 0
    %p793 = por %p791, %p792
    %p794 = scmp.ne.s32.totalorder %s786, %s788
    %p795 = scmp.eq.s32.totalorder %s134, 1
    %p796 = por %p794, %p795
    %p797 = scmp.ne.s32.totalorder %s788, %s789
    %p798 = scmp.eq.s32.totalorder %s134, 0
    %p799 = por %p797, %p798
    %p800 = scmp.ne.s32.totalorder %s788, %s789
    %p801 = scmp.eq.s32.totalorder %s135, 1
    %p802 = por %p800, %p801
    %p804 = scmp.ne.s32.totalorder %s789, %s803
    %p805 = scmp.eq.s32.totalorder %s135, 0
    %p806 = por %p804, %p805
    %s808 = sadd.s32 %s807, 1
    %p811 = scmp.eq.s32.totalorder %s129, 1
    %p812 = scmp.ne.s32.totalorder %s807, %s809
    %p813 = scmp.eq.s32.totalorder %s129, 0
    %p814 = por %p812, %p813
    %p815 = scmp.ne.s32.totalorder %s807, %s809
    %p816 = scmp.eq.s32.totalorder %s134, 1
    %p817 = por %p815, %p816
    %p818 = scmp.ne.s32.totalorder %s809, %s810
    %p819 = scmp.eq.s32.totalorder %s134, 0
    %p820 = por %p818, %p819
    %p821 = scmp.ne.s32.totalorder %s809, %s810
    %p822 = scmp.eq.s32.totalorder %s135, 1
    %p823 = por %p821, %p822
    %p825 = scmp.ne.s32.totalorder %s810, %s824
    %p826 = scmp.eq.s32.totalorder %s135, 0
    %p827 = por %p825, %p826
    %s829 = sadd.s32 %s828, 1
    %p832 = scmp.eq.s32.totalorder %s129, 1
    %p833 = scmp.ne.s32.totalorder %s828, %s830
    %p834 = scmp.eq.s32.totalorder %s129, 0
    %p835 = por %p833, %p834
    %p836 = scmp.ne.s32.totalorder %s828, %s830
    %p837 = scmp.eq.s32.totalorder %s134, 1
    %p838 = por %p836, %p837
    %p839 = scmp.ne.s32.totalorder %s830, %s831
    %p840 = scmp.eq.s32.totalorder %s134, 0
    %p841 = por %p839, %p840
    %p842 = scmp.ne.s32.totalorder %s830, %s831
    %p843 = scmp.eq.s32.totalorder %s135, 1
    %p844 = por %p842, %p843
    %p846 = scmp.ne.s32.totalorder %s831, %s845
    %p847 = scmp.eq.s32.totalorder %s135, 0
    %p848 = por %p846, %p847
    %s850 = sadd.s32 %s849, 1
    %p853 = scmp.eq.s32.totalorder %s129, 1
    %p854 = scmp.ne.s32.totalorder %s849, %s851
    %p855 = scmp.eq.s32.totalorder %s129, 0
    %p856 = por %p854, %p855
    %p857 = scmp.ne.s32.totalorder %s849, %s851
    %p858 = scmp.eq.s32.totalorder %s134, 1
    %p859 = por %p857, %p858
    %p860 = scmp.ne.s32.totalorder %s851, %s852
    %p861 = scmp.eq.s32.totalorder %s134, 0
    %p862 = por %p860, %p861
    %p863 = scmp.ne.s32.totalorder %s851, %s852
    %p864 = scmp.eq.s32.totalorder %s135, 1
    %p865 = por %p863, %p864
    %p867 = scmp.ne.s32.totalorder %s852, %s866
    %p868 = scmp.eq.s32.totalorder %s135, 0
    %p869 = por %p867, %p868
    %s871 = sadd.s32 %s870, 1
    %p874 = scmp.eq.s32.totalorder %s129, 1
    %p875 = scmp.ne.s32.totalorder %s870, %s872
    %p876 = scmp.eq.s32.totalorder %s129, 0
    %p877 = por %p875, %p876
    %p878 = scmp.ne.s32.totalorder %s870, %s872
    %p879 = scmp.eq.s32.totalorder %s134, 1
    %p880 = por %p878, %p879
    %p881 = scmp.ne.s32.totalorder %s872, %s873
    %p882 = scmp.eq.s32.totalorder %s134, 0
    %p883 = por %p881, %p882
    %p884 = scmp.ne.s32.totalorder %s872, %s873
    %p885 = scmp.eq.s32.totalorder %s135, 1
    %p886 = por %p884, %p885
    %p888 = scmp.ne.s32.totalorder %s873, %s887
    %p889 = scmp.eq.s32.totalorder %s135, 0
    %p890 = por %p888, %p889
    %s892 = sadd.s32 %s891, 1
    %p895 = scmp.eq.s32.totalorder %s129, 1
    %p896 = scmp.ne.s32.totalorder %s891, %s893
    %p897 = scmp.eq.s32.totalorder %s129, 0
    %p898 = por %p896, %p897
    %p899 = scmp.ne.s32.totalorder %s891, %s893
    %p900 = scmp.eq.s32.totalorder %s134, 1
    %p901 = por %p899, %p900
    %p902 = scmp.ne.s32.totalorder %s893, %s894
    %p903 = scmp.eq.s32.totalorder %s134, 0
    %p904 = por %p902, %p903
    %p905 = scmp.ne.s32.totalorder %s893, %s894
    %p906 = scmp.eq.s32.totalorder %s135, 1
    %p907 = por %p905, %p906
    %p909 = scmp.ne.s32.totalorder %s894, %s908
    %p910 = scmp.eq.s32.totalorder %s135, 0
    %p911 = por %p909, %p910
    %s913 = sadd.s32 %s912, 1
    %p916 = scmp.eq.s32.totalorder %s129, 1
    %p917 = scmp.ne.s32.totalorder %s912, %s914
    %p918 = scmp.eq.s32.totalorder %s129, 0
    %p919 = por %p917, %p918
    %p920 = scmp.ne.s32.totalorder %s912, %s914
    %p921 = scmp.eq.s32.totalorder %s134, 1
    %p922 = por %p920, %p921
    %p923 = scmp.ne.s32.totalorder %s914, %s915
    %p924 = scmp.eq.s32.totalorder %s134, 0
    %p925 = por %p923, %p924
    %p926 = scmp.ne.s32.totalorder %s914, %s915
    %p927 = scmp.eq.s32.totalorder %s135, 1
    %p928 = por %p926, %p927
    %p930 = scmp.ne.s32.totalorder %s915, %s929
    %p931 = scmp.eq.s32.totalorder %s135, 0
    %p932 = por %p930, %p931
    %s934 = sadd.s32 %s933, 1
    %p937 = scmp.eq.s32.totalorder %s129, 1
    %p938 = scmp.ne.s32.totalorder %s933, %s935
    %p939 = scmp.eq.s32.totalorder %s129, 0
    %p940 = por %p938, %p939
    %p941 = scmp.ne.s32.totalorder %s933, %s935
    %p942 = scmp.eq.s32.totalorder %s134, 1
    %p943 = por %p941, %p942
    %p944 = scmp.ne.s32.totalorder %s935, %s936
    %p945 = scmp.eq.s32.totalorder %s134, 0
    %p946 = por %p944, %p945
    %p947 = scmp.ne.s32.totalorder %s935, %s936
    %p948 = scmp.eq.s32.totalorder %s135, 1
    %p949 = por %p947, %p948
    %p951 = scmp.ne.s32.totalorder %s936, %s950
    %p952 = scmp.eq.s32.totalorder %s135, 0
    %p953 = por %p951, %p952
    %s955 = sadd.s32 %s954, 1
    %p958 = scmp.eq.s32.totalorder %s129, 1
    %p959 = scmp.ne.s32.totalorder %s954, %s956
    %p960 = scmp.eq.s32.totalorder %s129, 0
    %p961 = por %p959, %p960
    %p962 = scmp.ne.s32.totalorder %s954, %s956
    %p963 = scmp.eq.s32.totalorder %s134, 1
    %p964 = por %p962, %p963
    %p965 = scmp.ne.s32.totalorder %s956, %s957
    %p966 = scmp.eq.s32.totalorder %s134, 0
    %p967 = por %p965, %p966
    %p968 = scmp.ne.s32.totalorder %s956, %s957
    %p969 = scmp.eq.s32.totalorder %s135, 1
    %p970 = por %p968, %p969
    %p972 = scmp.ne.s32.totalorder %s957, %s971
    %p973 = scmp.eq.s32.totalorder %s135, 0
    %p974 = por %p972, %p973
    %s976 = sadd.s32 %s975, 1
    %p979 = scmp.eq.s32.totalorder %s129, 1
    %p980 = scmp.ne.s32.totalorder %s975, %s977
    %p981 = scmp.eq.s32.totalorder %s129, 0
    %p982 = por %p980, %p981
    %p983 = scmp.ne.s32.totalorder %s975, %s977
    %p984 = scmp.eq.s32.totalorder %s134, 1
    %p985 = por %p983, %p984
    %p986 = scmp.ne.s32.totalorder %s977, %s978
    %p987 = scmp.eq.s32.totalorder %s134, 0
    %p988 = por %p986, %p987
    %p989 = scmp.ne.s32.totalorder %s977, %s978
    %p990 = scmp.eq.s32.totalorder %s135, 1
    %p991 = por %p989, %p990
    %p993 = scmp.ne.s32.totalorder %s978, %s992
    %p994 = scmp.eq.s32.totalorder %s135, 0
    %p995 = por %p993, %p994
    %s997 = sadd.s32 %s996, 1
    %p1000 = scmp.eq.s32.totalorder %s129, 1
    %p1001 = scmp.ne.s32.totalorder %s996, %s998
    %p1002 = scmp.eq.s32.totalorder %s129, 0
    %p1003 = por %p1001, %p1002
    %p1004 = scmp.ne.s32.totalorder %s996, %s998
    %p1005 = scmp.eq.s32.totalorder %s134, 1
    %p1006 = por %p1004, %p1005
    %p1007 = scmp.ne.s32.totalorder %s998, %s999
    %p1008 = scmp.eq.s32.totalorder %s134, 0
    %p1009 = por %p1007, %p1008
    %p1010 = scmp.ne.s32.totalorder %s998, %s999
    %p1011 = scmp.eq.s32.totalorder %s135, 1
    %p1012 = por %p1010, %p1011
    %p1014 = scmp.ne.s32.totalorder %s999, %s1013
    %p1015 = scmp.eq.s32.totalorder %s135, 0
    %p1016 = por %p1014, %p1015
    %s1018 = sadd.s32 %s1017, 1
    %p1021 = scmp.eq.s32.totalorder %s129, 1
    %p1022 = scmp.ne.s32.totalorder %s1017, %s1019
    %p1023 = scmp.eq.s32.totalorder %s129, 0
    %p1024 = por %p1022, %p1023
    %p1025 = scmp.ne.s32.totalorder %s1017, %s1019
    %p1026 = scmp.eq.s32.totalorder %s134, 1
    %p1027 = por %p1025, %p1026
    %p1028 = scmp.ne.s32.totalorder %s1019, %s1020
    %p1029 = scmp.eq.s32.totalorder %s134, 0
    %p1030 = por %p1028, %p1029
    %p1031 = scmp.ne.s32.totalorder %s1019, %s1020
    %p1032 = scmp.eq.s32.totalorder %s135, 1
    %p1033 = por %p1031, %p1032
    %p1035 = scmp.ne.s32.totalorder %s1020, %s1034
    %p1036 = scmp.eq.s32.totalorder %s135, 0
    %p1037 = por %p1035, %p1036
    %s1039 = sadd.s32 %s1038, 1
    %p1042 = scmp.eq.s32.totalorder %s129, 1
    %p1043 = scmp.ne.s32.totalorder %s1038, %s1040
    %p1044 = scmp.eq.s32.totalorder %s129, 0
    %p1045 = por %p1043, %p1044
    %p1046 = scmp.ne.s32.totalorder %s1038, %s1040
    %p1047 = scmp.eq.s32.totalorder %s134, 1
    %p1048 = por %p1046, %p1047
    %p1049 = scmp.ne.s32.totalorder %s1040, %s1041
    %p1050 = scmp.eq.s32.totalorder %s134, 0
    %p1051 = por %p1049, %p1050
    %p1052 = scmp.ne.s32.totalorder %s1040, %s1041
    %p1053 = scmp.eq.s32.totalorder %s135, 1
    %p1054 = por %p1052, %p1053
    %p1056 = scmp.ne.s32.totalorder %s1041, %s1055
    %p1057 = scmp.eq.s32.totalorder %s135, 0
    %p1058 = por %p1056, %p1057
    %s1060 = sadd.s32 %s1059, 1
    %p1063 = scmp.eq.s32.totalorder %s129, 1
    %p1064 = scmp.ne.s32.totalorder %s1059, %s1061
    %p1065 = scmp.eq.s32.totalorder %s129, 0
    %p1066 = por %p1064, %p1065
    %p1067 = scmp.ne.s32.totalorder %s1059, %s1061
    %p1068 = scmp.eq.s32.totalorder %s134, 1
    %p1069 = por %p1067, %p1068
    %p1070 = scmp.ne.s32.totalorder %s1061, %s1062
    %p1071 = scmp.eq.s32.totalorder %s134, 0
    %p1072 = por %p1070, %p1071
    %p1073 = scmp.ne.s32.totalorder %s1061, %s1062
    %p1074 = scmp.eq.s32.totalorder %s135, 1
    %p1075 = por %p1073, %p1074
    %p1077 = scmp.ne.s32.totalorder %s1062, %s1076
    %p1078 = scmp.eq.s32.totalorder %s135, 0
    %p1079 = por %p1077, %p1078
    %s1081 = sadd.s32 %s1080, 1
    %p1084 = scmp.eq.s32.totalorder %s129, 1
    %p1085 = scmp.ne.s32.totalorder %s1080, %s1082
    %p1086 = scmp.eq.s32.totalorder %s129, 0
    %p1087 = por %p1085, %p1086
    %p1088 = scmp.ne.s32.totalorder %s1080, %s1082
    %p1089 = scmp.eq.s32.totalorder %s134, 1
    %p1090 = por %p1088, %p1089
    %p1091 = scmp.ne.s32.totalorder %s1082, %s1083
    %p1092 = scmp.eq.s32.totalorder %s134, 0
    %p1093 = por %p1091, %p1092
    %p1094 = scmp.ne.s32.totalorder %s1082, %s1083
    %p1095 = scmp.eq.s32.totalorder %s135, 1
    %p1096 = por %p1094, %p1095
    %p1098 = scmp.ne.s32.totalorder %s1083, %s1097
    %p1099 = scmp.eq.s32.totalorder %s135, 0
    %p1100 = por %p1098, %p1099
    %s1102 = sadd.s32 %s1101, 1
    %p1105 = scmp.eq.s32.totalorder %s129, 1
    %p1106 = scmp.ne.s32.totalorder %s1101, %s1103
    %p1107 = scmp.eq.s32.totalorder %s129, 0
    %p1108 = por %p1106, %p1107
    %p1109 = scmp.ne.s32.totalorder %s1101, %s1103
    %p1110 = scmp.eq.s32.totalorder %s134, 1
    %p1111 = por %p1109, %p1110
    %p1112 = scmp.ne.s32.totalorder %s1103, %s1104
    %p1113 = scmp.eq.s32.totalorder %s134, 0
    %p1114 = por %p1112, %p1113
    %p1115 = scmp.ne.s32.totalorder %s1103, %s1104
    %p1116 = scmp.eq.s32.totalorder %s135, 1
    %p1117 = por %p1115, %p1116
    %p1119 = scmp.ne.s32.totalorder %s1104, %s1118
    %p1120 = scmp.eq.s32.totalorder %s135, 0
    %p1121 = por %p1119, %p1120
    %s1123 = sadd.s32 %s1122, 1
    %p1126 = scmp.eq.s32.totalorder %s129, 1
    %p1127 = scmp.ne.s32.totalorder %s1122, %s1124
    %p1128 = scmp.eq.s32.totalorder %s129, 0
    %p1129 = por %p1127, %p1128
    %p1130 = scmp.ne.s32.totalorder %s1122, %s1124
    %p1131 = scmp.eq.s32.totalorder %s134, 1
    %p1132 = por %p1130, %p1131
    %p1133 = scmp.ne.s32.totalorder %s1124, %s1125
    %p1134 = scmp.eq.s32.totalorder %s134, 0
    %p1135 = por %p1133, %p1134
    %p1136 = scmp.ne.s32.totalorder %s1124, %s1125
    %p1137 = scmp.eq.s32.totalorder %s135, 1
    %p1138 = por %p1136, %p1137
    %p1140 = scmp.ne.s32.totalorder %s1125, %s1139
    %p1141 = scmp.eq.s32.totalorder %s135, 0
    %p1142 = por %p1140, %p1141
    %s1144 = sadd.s32 %s1143, 1
    %p1147 = scmp.eq.s32.totalorder %s129, 1
    %p1148 = scmp.ne.s32.totalorder %s1143, %s1145
    %p1149 = scmp.eq.s32.totalorder %s129, 0
    %p1150 = por %p1148, %p1149
    %p1151 = scmp.ne.s32.totalorder %s1143, %s1145
    %p1152 = scmp.eq.s32.totalorder %s134, 1
    %p1153 = por %p1151, %p1152
    %p1154 = scmp.ne.s32.totalorder %s1145, %s1146
    %p1155 = scmp.eq.s32.totalorder %s134, 0
    %p1156 = por %p1154, %p1155
    %p1157 = scmp.ne.s32.totalorder %s1145, %s1146
    %p1158 = scmp.eq.s32.totalorder %s135, 1
    %p1159 = por %p1157, %p1158
    %p1161 = scmp.ne.s32.totalorder %s1146, %s1160
    %p1162 = scmp.eq.s32.totalorder %s135, 0
    %p1163 = por %p1161, %p1162
    %s1165 = sadd.s32 %s1164, 1
    %p1168 = scmp.eq.s32.totalorder %s129, 1
    %p1169 = scmp.ne.s32.totalorder %s1164, %s1166
    %p1170 = scmp.eq.s32.totalorder %s129, 0
    %p1171 = por %p1169, %p1170
    %p1172 = scmp.ne.s32.totalorder %s1164, %s1166
    %p1173 = scmp.eq.s32.totalorder %s134, 1
    %p1174 = por %p1172, %p1173
    %p1175 = scmp.ne.s32.totalorder %s1166, %s1167
    %p1176 = scmp.eq.s32.totalorder %s134, 0
    %p1177 = por %p1175, %p1176
    %p1178 = scmp.ne.s32.totalorder %s1166, %s1167
    %p1179 = scmp.eq.s32.totalorder %s135, 1
    %p1180 = por %p1178, %p1179
    %p1182 = scmp.ne.s32.totalorder %s1167, %s1181
    %p1183 = scmp.eq.s32.totalorder %s135, 0
    %p1184 = por %p1182, %p1183
    %s1186 = sadd.s32 %s1185, 1
    %p1189 = scmp.eq.s32.totalorder %s129, 1
    %p1190 = scmp.ne.s32.totalorder %s1185, %s1187
    %p1191 = scmp.eq.s32.totalorder %s129, 0
    %p1192 = por %p1190, %p1191
    %p1193 = scmp.ne.s32.totalorder %s1185, %s1187
    %p1194 = scmp.eq.s32.totalorder %s134, 1
    %p1195 = por %p1193, %p1194
    %p1196 = scmp.ne.s32.totalorder %s1187, %s1188
    %p1197 = scmp.eq.s32.totalorder %s134, 0
    %p1198 = por %p1196, %p1197
    %p1199 = scmp.ne.s32.totalorder %s1187, %s1188
    %p1200 = scmp.eq.s32.totalorder %s135, 1
    %p1201 = por %p1199, %p1200
    %p1203 = scmp.ne.s32.totalorder %s1188, %s1202
    %p1204 = scmp.eq.s32.totalorder %s135, 0
    %p1205 = por %p1203, %p1204
    %s1207 = sadd.s32 %s1206, 1
    %p1210 = scmp.eq.s32.totalorder %s129, 1
    %p1211 = scmp.ne.s32.totalorder %s1206, %s1208
    %p1212 = scmp.eq.s32.totalorder %s129, 0
    %p1213 = por %p1211, %p1212
    %p1214 = scmp.ne.s32.totalorder %s1206, %s1208
    %p1215 = scmp.eq.s32.totalorder %s134, 1
    %p1216 = por %p1214, %p1215
    %p1217 = scmp.ne.s32.totalorder %s1208, %s1209
    %p1218 = scmp.eq.s32.totalorder %s134, 0
    %p1219 = por %p1217, %p1218
    %p1220 = scmp.ne.s32.totalorder %s1208, %s1209
    %p1221 = scmp.eq.s32.totalorder %s135, 1
    %p1222 = por %p1220, %p1221
    %p1224 = scmp.ne.s32.totalorder %s1209, %s1223
    %p1225 = scmp.eq.s32.totalorder %s135, 0
    %p1226 = por %p1224, %p1225
    %s1228 = sadd.s32 %s1227, 1
    %p1231 = scmp.eq.s32.totalorder %s129, 1
    %p1232 = scmp.ne.s32.totalorder %s1227, %s1229
    %p1233 = scmp.eq.s32.totalorder %s129, 0
    %p1234 = por %p1232, %p1233
    %p1235 = scmp.ne.s32.totalorder %s1227, %s1229
    %p1236 = scmp.eq.s32.totalorder %s134, 1
    %p1237 = por %p1235, %p1236
    %p1238 = scmp.ne.s32.totalorder %s1229, %s1230
    %p1239 = scmp.eq.s32.totalorder %s134, 0
    %p1240 = por %p1238, %p1239
    %p1241 = scmp.ne.s32.totalorder %s1229, %s1230
    %p1242 = scmp.eq.s32.totalorder %s135, 1
    %p1243 = por %p1241, %p1242
    %p1245 = scmp.ne.s32.totalorder %s1230, %s1244
    %p1246 = scmp.eq.s32.totalorder %s135, 0
    %p1247 = por %p1245, %p1246
    %s1249 = sadd.s32 %s1248, 1
    %p1252 = scmp.eq.s32.totalorder %s129, 1
    %p1253 = scmp.ne.s32.totalorder %s1248, %s1250
    %p1254 = scmp.eq.s32.totalorder %s129, 0
    %p1255 = por %p1253, %p1254
    %p1256 = scmp.ne.s32.totalorder %s1248, %s1250
    %p1257 = scmp.eq.s32.totalorder %s134, 1
    %p1258 = por %p1256, %p1257
    %p1259 = scmp.ne.s32.totalorder %s1250, %s1251
    %p1260 = scmp.eq.s32.totalorder %s134, 0
    %p1261 = por %p1259, %p1260
    %p1262 = scmp.ne.s32.totalorder %s1250, %s1251
    %p1263 = scmp.eq.s32.totalorder %s135, 1
    %p1264 = por %p1262, %p1263
    %p1266 = scmp.ne.s32.totalorder %s1251, %s1265
    %p1267 = scmp.eq.s32.totalorder %s135, 0
    %p1268 = por %p1266, %p1267
    %s1270 = sadd.s32 %s1269, 1
    %p1273 = scmp.eq.s32.totalorder %s129, 1
    %p1274 = scmp.ne.s32.totalorder %s1269, %s1271
    %p1275 = scmp.eq.s32.totalorder %s129, 0
    %p1276 = por %p1274, %p1275
    %p1277 = scmp.ne.s32.totalorder %s1269, %s1271
    %p1278 = scmp.eq.s32.totalorder %s134, 1
    %p1279 = por %p1277, %p1278
    %p1280 = scmp.ne.s32.totalorder %s1271, %s1272
    %p1281 = scmp.eq.s32.totalorder %s134, 0
    %p1282 = por %p1280, %p1281
    %p1283 = scmp.ne.s32.totalorder %s1271, %s1272
    %p1284 = scmp.eq.s32.totalorder %s135, 1
    %p1285 = por %p1283, %p1284
    %p1287 = scmp.ne.s32.totalorder %s1272, %s1286
    %p1288 = scmp.eq.s32.totalorder %s135, 0
    %p1289 = por %p1287, %p1288
    %s1291 = sadd.s32 %s1290, 1
    %p1294 = scmp.eq.s32.totalorder %s129, 1
    %p1295 = scmp.ne.s32.totalorder %s1290, %s1292
    %p1296 = scmp.eq.s32.totalorder %s129, 0
    %p1297 = por %p1295, %p1296
    %p1298 = scmp.ne.s32.totalorder %s1290, %s1292
    %p1299 = scmp.eq.s32.totalorder %s134, 1
    %p1300 = por %p1298, %p1299
    %p1301 = scmp.ne.s32.totalorder %s1292, %s1293
    %p1302 = scmp.eq.s32.totalorder %s134, 0
    %p1303 = por %p1301, %p1302
    %p1304 = scmp.ne.s32.totalorder %s1292, %s1293
    %p1305 = scmp.eq.s32.totalorder %s135, 1
    %p1306 = por %p1304, %p1305
    %p1308 = scmp.ne.s32.totalorder %s1293, %s1307
    %p1309 = scmp.eq.s32.totalorder %s135, 0
    %p1310 = por %p1308, %p1309
    %s1312 = sadd.s32 %s1311, 1
    %p1315 = scmp.eq.s32.totalorder %s129, 1
    %p1316 = scmp.ne.s32.totalorder %s1311, %s1313
    %p1317 = scmp.eq.s32.totalorder %s129, 0
    %p1318 = por %p1316, %p1317
    %p1319 = scmp.ne.s32.totalorder %s1311, %s1313
    %p1320 = scmp.eq.s32.totalorder %s134, 1
    %p1321 = por %p1319, %p1320
    %p1322 = scmp.ne.s32.totalorder %s1313, %s1314
    %p1323 = scmp.eq.s32.totalorder %s134, 0
    %p1324 = por %p1322, %p1323
    %p1325 = scmp.ne.s32.totalorder %s1313, %s1314
    %p1326 = scmp.eq.s32.totalorder %s135, 1
    %p1327 = por %p1325, %p1326
    %p1329 = scmp.ne.s32.totalorder %s1314, %s1328
    %p1330 = scmp.eq.s32.totalorder %s135, 0
    %p1331 = por %p1329, %p1330
    %s1333 = sadd.s32 %s1332, 1
    %p1336 = scmp.eq.s32.totalorder %s129, 1
    %p1337 = scmp.ne.s32.totalorder %s1332, %s1334
    %p1338 = scmp.eq.s32.totalorder %s129, 0
    %p1339 = por %p1337, %p1338
    %p1340 = scmp.ne.s32.totalorder %s1332, %s1334
    %p1341 = scmp.eq.s32.totalorder %s134, 1
    %p1342 = por %p1340, %p1341
    %p1343 = scmp.ne.s32.totalorder %s1334, %s1335
    %p1344 = scmp.eq.s32.totalorder %s134, 0
    %p1345 = por %p1343, %p1344
    %p1346 = scmp.ne.s32.totalorder %s1334, %s1335
    %p1347 = scmp.eq.s32.totalorder %s135, 1
    %p1348 = por %p1346, %p1347
    %p1350 = scmp.ne.s32.totalorder %s1335, %s1349
    %p1351 = scmp.eq.s32.totalorder %s135, 0
    %p1352 = por %p1350, %p1351
    %s1354 = sadd.s32 %s1353, 1
    %p1357 = scmp.eq.s32.totalorder %s129, 1
    %p1358 = scmp.ne.s32.totalorder %s1353, %s1355
    %p1359 = scmp.eq.s32.totalorder %s129, 0
    %p1360 = por %p1358, %p1359
    %p1361 = scmp.ne.s32.totalorder %s1353, %s1355
    %p1362 = scmp.eq.s32.totalorder %s134, 1
    %p1363 = por %p1361, %p1362
    %p1364 = scmp.ne.s32.totalorder %s1355, %s1356
    %p1365 = scmp.eq.s32.totalorder %s134, 0
    %p1366 = por %p1364, %p1365
    %p1367 = scmp.ne.s32.totalorder %s1355, %s1356
    %p1368 = scmp.eq.s32.totalorder %s135, 1
    %p1369 = por %p1367, %p1368
    %p1371 = scmp.ne.s32.totalorder %s1356, %s1370
    %p1372 = scmp.eq.s32.totalorder %s135, 0
    %p1373 = por %p1371, %p1372
    %s1375 = sadd.s32 %s1374, 1
    %p1378 = scmp.eq.s32.totalorder %s129, 1
    %p1379 = scmp.ne.s32.totalorder %s1374, %s1376
    %p1380 = scmp.eq.s32.totalorder %s129, 0
    %p1381 = por %p1379, %p1380
    %p1382 = scmp.ne.s32.totalorder %s1374, %s1376
    %p1383 = scmp.eq.s32.totalorder %s134, 1
    %p1384 = por %p1382, %p1383
    %p1385 = scmp.ne.s32.totalorder %s1376, %s1377
    %p1386 = scmp.eq.s32.totalorder %s134, 0
    %p1387 = por %p1385, %p1386
    %p1388 = scmp.ne.s32.totalorder %s1376, %s1377
    %p1389 = scmp.eq.s32.totalorder %s135, 1
    %p1390 = por %p1388, %p1389
    %p1392 = scmp.ne.s32.totalorder %s1377, %s1391
    %p1393 = scmp.eq.s32.totalorder %s135, 0
    %p1394 = por %p1392, %p1393
    %s1396 = sadd.s32 %s1395, 1
    %p1399 = scmp.eq.s32.totalorder %s129, 1
    %p1400 = scmp.ne.s32.totalorder %s1395, %s1397
    %p1401 = scmp.eq.s32.totalorder %s129, 0
    %p1402 = por %p1400, %p1401
    %p1403 = scmp.ne.s32.totalorder %s1395, %s1397
    %p1404 = scmp.eq.s32.totalorder %s134, 1
    %p1405 = por %p1403, %p1404
    %p1406 = scmp.ne.s32.totalorder %s1397, %s1398
    %p1407 = scmp.eq.s32.totalorder %s134, 0
    %p1408 = por %p1406, %p1407
    %p1409 = scmp.ne.s32.totalorder %s1397, %s1398
    %p1410 = scmp.eq.s32.totalorder %s135, 1
    %p1411 = por %p1409, %p1410
    %p1413 = scmp.ne.s32.totalorder %s1398, %s1412
    %p1414 = scmp.eq.s32.totalorder %s135, 0
    %p1415 = por %p1413, %p1414
    %s1417 = sadd.s32 %s1416, 1
    %p1420 = scmp.eq.s32.totalorder %s129, 1
    %p1421 = scmp.ne.s32.totalorder %s1416, %s1418
    %p1422 = scmp.eq.s32.totalorder %s129, 0
    %p1423 = por %p1421, %p1422
    %p1424 = scmp.ne.s32.totalorder %s1416, %s1418
    %p1425 = scmp.eq.s32.totalorder %s134, 1
    %p1426 = por %p1424, %p1425
    %p1427 = scmp.ne.s32.totalorder %s1418, %s1419
    %p1428 = scmp.eq.s32.totalorder %s134, 0
    %p1429 = por %p1427, %p1428
    %p1430 = scmp.ne.s32.totalorder %s1418, %s1419
    %p1431 = scmp.eq.s32.totalorder %s135, 1
    %p1432 = por %p1430, %p1431
    %p1434 = scmp.ne.s32.totalorder %s1419, %s1433
    %p1435 = scmp.eq.s32.totalorder %s135, 0
    %p1436 = por %p1434, %p1435
    %s1438 = sadd.s32 %s1437, 1
    %p1441 = scmp.eq.s32.totalorder %s129, 1
    %p1442 = scmp.ne.s32.totalorder %s1437, %s1439
    %p1443 = scmp.eq.s32.totalorder %s129, 0
    %p1444 = por %p1442, %p1443
    %p1445 = scmp.ne.s32.totalorder %s1437, %s1439
    %p1446 = scmp.eq.s32.totalorder %s134, 1
    %p1447 = por %p1445, %p1446
    %p1448 = scmp.ne.s32.totalorder %s1439, %s1440
    %p1449 = scmp.eq.s32.totalorder %s134, 0
    %p1450 = por %p1448, %p1449
    %p1451 = scmp.ne.s32.totalorder %s1439, %s1440
    %p1452 = scmp.eq.s32.totalorder %s135, 1
    %p1453 = por %p1451, %p1452
    %p1455 = scmp.ne.s32.totalorder %s1440, %s1454
    %p1456 = scmp.eq.s32.totalorder %s135, 0
    %p1457 = por %p1455, %p1456
    %s1458 = ssub.s32 %s129, %s136
    %p1459 = scmp.eq.s32.totalorder %s1458, 0
    %s1461 = sadd.s32 %s1460, 1
    %s1462 = scalar_select %p1459, %s1460, %s1461
    %p1465 = pneg %p1459
    %p1466 = scmp.eq.s32.totalorder %s129, 1
    %p1467 = por %p1465, %p1466
    %p1468 = scmp.ne.s32.totalorder %s1460, %s1463
    %p1469 = scmp.eq.s32.totalorder %s129, 0
    %p1470 = por %p1468, %p1469
    %p1471 = scmp.ne.s32.totalorder %s1460, %s1463
    %p1472 = scmp.eq.s32.totalorder %s134, 1
    %p1473 = por %p1471, %p1472
    %p1474 = scmp.ne.s32.totalorder %s1463, %s1464
    %p1475 = scmp.eq.s32.totalorder %s134, 0
    %p1476 = por %p1474, %p1475
    %p1477 = scmp.ne.s32.totalorder %s1463, %s1464
    %p1478 = scmp.eq.s32.totalorder %s135, 1
    %p1479 = por %p1477, %p1478
    %p1481 = scmp.ne.s32.totalorder %s1464, %s1480
    %p1482 = scmp.eq.s32.totalorder %s135, 0
    %p1483 = por %p1481, %p1482
    %p1484 = scmp.le.s32.totalorder 1, %s129
    %p1485 = scmp.lt.s32.totalorder %s129, 3
    %p1486 = pnand %p1484, %p1485
    %p1487 = pneg %p1486
    // Predicated region
    $region9: #{travel_forward.1} parent=5 // pred_check
      _
    $region10: #{travel_forward.1} parent=5 // pred_check_branch
      %1489 = sbr.rel (%p1486) target = $region12
    $region11: #{travel_forward.1} parent=5 // pred_region
      %s1490 = ssub.s32 %s129, 1
      // Predicated region
      $region13: #{travel_forward.1} parent=11 // pred_check
        %p1491 = pneg %p358
      $region14: #{travel_forward.1} parent=11 // pred_check_branch
        %1493 = sbr.rel (%p1491) target = $region16
      $region15: #{travel_forward.1} parent=11 // pred_region
        _
      $region16: #{travel_forward.1} parent=11 // pred_fallthru
        _
      // Predicated region
      $region17: #{travel_forward.1} parent=11 // pred_check
        %p1494 = pneg %p379
      $region18: #{travel_forward.1} parent=11 // pred_check_branch
        %1496 = sbr.rel (%p1494) target = $region20
      $region19: #{travel_forward.1} parent=11 // pred_region
        _
      $region20: #{travel_forward.1} parent=11 // pred_fallthru
        _
      // Predicated region
      $region21: #{travel_forward.1} parent=11 // pred_check
        %p1497 = pneg %p400
      $region22: #{travel_forward.1} parent=11 // pred_check_branch
        %1499 = sbr.rel (%p1497) target = $region24
      $region23: #{travel_forward.1} parent=11 // pred_region
        _
      $region24: #{travel_forward.1} parent=11 // pred_fallthru
        _
      // Predicated region
      $region25: #{travel_forward.1} parent=11 // pred_check
        %p1500 = pneg %p421
      $region26: #{travel_forward.1} parent=11 // pred_check_branch
        %1502 = sbr.rel (%p1500) target = $region28
      $region27: #{travel_forward.1} parent=11 // pred_region
        _
      $region28: #{travel_forward.1} parent=11 // pred_fallthru
        _
      // Predicated region
      $region29: #{travel_forward.1} parent=11 // pred_check
        %p1503 = pneg %p442
      $region30: #{travel_forward.1} parent=11 // pred_check_branch
        %1505 = sbr.rel (%p1503) target = $region32
      $region31: #{travel_forward.1} parent=11 // pred_region
        _
      $region32: #{travel_forward.1} parent=11 // pred_fallthru
        _
      // Predicated region
      $region33: #{travel_forward.1} parent=11 // pred_check
        %p1506 = pneg %p463
      $region34: #{travel_forward.1} parent=11 // pred_check_branch
        %1508 = sbr.rel (%p1506) target = $region36
      $region35: #{travel_forward.1} parent=11 // pred_region
        _
      $region36: #{travel_forward.1} parent=11 // pred_fallthru
        _
      // Predicated region
      $region37: #{travel_forward.1} parent=11 // pred_check
        %p1509 = pneg %p484
      $region38: #{travel_forward.1} parent=11 // pred_check_branch
        %1511 = sbr.rel (%p1509) target = $region40
      $region39: #{travel_forward.1} parent=11 // pred_region
        _
      $region40: #{travel_forward.1} parent=11 // pred_fallthru
        _
      // Predicated region
      $region41: #{travel_forward.1} parent=11 // pred_check
        %p1512 = pneg %p505
      $region42: #{travel_forward.1} parent=11 // pred_check_branch
        %1514 = sbr.rel (%p1512) target = $region44
      $region43: #{travel_forward.1} parent=11 // pred_region
        _
      $region44: #{travel_forward.1} parent=11 // pred_fallthru
        _
      // Predicated region
      $region45: #{travel_forward.1} parent=11 // pred_check
        %p1515 = pneg %p526
      $region46: #{travel_forward.1} parent=11 // pred_check_branch
        %1517 = sbr.rel (%p1515) target = $region48
      $region47: #{travel_forward.1} parent=11 // pred_region
        _
      $region48: #{travel_forward.1} parent=11 // pred_fallthru
        _
      // Predicated region
      $region49: #{travel_forward.1} parent=11 // pred_check
        %p1518 = pneg %p547
      $region50: #{travel_forward.1} parent=11 // pred_check_branch
        %1520 = sbr.rel (%p1518) target = $region52
      $region51: #{travel_forward.1} parent=11 // pred_region
        _
      $region52: #{travel_forward.1} parent=11 // pred_fallthru
        _
      // Predicated region
      $region53: #{travel_forward.1} parent=11 // pred_check
        %p1521 = pneg %p568
      $region54: #{travel_forward.1} parent=11 // pred_check_branch
        %1523 = sbr.rel (%p1521) target = $region56
      $region55: #{travel_forward.1} parent=11 // pred_region
        _
      $region56: #{travel_forward.1} parent=11 // pred_fallthru
        _
      // Predicated region
      $region57: #{travel_forward.1} parent=11 // pred_check
        %p1524 = pneg %p589
      $region58: #{travel_forward.1} parent=11 // pred_check_branch
        %1526 = sbr.rel (%p1524) target = $region60
      $region59: #{travel_forward.1} parent=11 // pred_region
        _
      $region60: #{travel_forward.1} parent=11 // pred_fallthru
        _
      // Predicated region
      $region61: #{travel_forward.1} parent=11 // pred_check
        %p1527 = pneg %p610
      $region62: #{travel_forward.1} parent=11 // pred_check_branch
        %1529 = sbr.rel (%p1527) target = $region64
      $region63: #{travel_forward.1} parent=11 // pred_region
        _
      $region64: #{travel_forward.1} parent=11 // pred_fallthru
        _
      // Predicated region
      $region65: #{travel_forward.1} parent=11 // pred_check
        %p1530 = pneg %p631
      $region66: #{travel_forward.1} parent=11 // pred_check_branch
        %1532 = sbr.rel (%p1530) target = $region68
      $region67: #{travel_forward.1} parent=11 // pred_region
        _
      $region68: #{travel_forward.1} parent=11 // pred_fallthru
        _
      // Predicated region
      $region69: #{travel_forward.1} parent=11 // pred_check
        %p1533 = pneg %p652
      $region70: #{travel_forward.1} parent=11 // pred_check_branch
        %1535 = sbr.rel (%p1533) target = $region72
      $region71: #{travel_forward.1} parent=11 // pred_region
        _
      $region72: #{travel_forward.1} parent=11 // pred_fallthru
        _
      // Predicated region
      $region73: #{travel_forward.1} parent=11 // pred_check
        %p1536 = pneg %p673
      $region74: #{travel_forward.1} parent=11 // pred_check_branch
        %1538 = sbr.rel (%p1536) target = $region76
      $region75: #{travel_forward.1} parent=11 // pred_region
        _
      $region76: #{travel_forward.1} parent=11 // pred_fallthru
        _
      // Predicated region
      $region77: #{travel_forward.1} parent=11 // pred_check
        %p1539 = pneg %p694
      $region78: #{travel_forward.1} parent=11 // pred_check_branch
        %1541 = sbr.rel (%p1539) target = $region80
      $region79: #{travel_forward.1} parent=11 // pred_region
        _
      $region80: #{travel_forward.1} parent=11 // pred_fallthru
        _
      // Predicated region
      $region81: #{travel_forward.1} parent=11 // pred_check
        %p1542 = pneg %p715
      $region82: #{travel_forward.1} parent=11 // pred_check_branch
        %1544 = sbr.rel (%p1542) target = $region84
      $region83: #{travel_forward.1} parent=11 // pred_region
        _
      $region84: #{travel_forward.1} parent=11 // pred_fallthru
        _
      // Predicated region
      $region85: #{travel_forward.1} parent=11 // pred_check
        %p1545 = pneg %p736
      $region86: #{travel_forward.1} parent=11 // pred_check_branch
        %1547 = sbr.rel (%p1545) target = $region88
      $region87: #{travel_forward.1} parent=11 // pred_region
        _
      $region88: #{travel_forward.1} parent=11 // pred_fallthru
        _
      // Predicated region
      $region89: #{travel_forward.1} parent=11 // pred_check
        %p1548 = pneg %p757
      $region90: #{travel_forward.1} parent=11 // pred_check_branch
        %1550 = sbr.rel (%p1548) target = $region92
      $region91: #{travel_forward.1} parent=11 // pred_region
        _
      $region92: #{travel_forward.1} parent=11 // pred_fallthru
        _
      // Predicated region
      $region93: #{travel_forward.1} parent=11 // pred_check
        %p1551 = pneg %p778
      $region94: #{travel_forward.1} parent=11 // pred_check_branch
        %1553 = sbr.rel (%p1551) target = $region96
      $region95: #{travel_forward.1} parent=11 // pred_region
        _
      $region96: #{travel_forward.1} parent=11 // pred_fallthru
        _
      // Predicated region
      $region97: #{travel_forward.1} parent=11 // pred_check
        %p1554 = pneg %p799
      $region98: #{travel_forward.1} parent=11 // pred_check_branch
        %1556 = sbr.rel (%p1554) target = $region100
      $region99: #{travel_forward.1} parent=11 // pred_region
        _
      $region100: #{travel_forward.1} parent=11 // pred_fallthru
        _
      // Predicated region
      $region101: #{travel_forward.1} parent=11 // pred_check
        %p1557 = pneg %p820
      $region102: #{travel_forward.1} parent=11 // pred_check_branch
        %1559 = sbr.rel (%p1557) target = $region104
      $region103: #{travel_forward.1} parent=11 // pred_region
        _
      $region104: #{travel_forward.1} parent=11 // pred_fallthru
        _
      // Predicated region
      $region105: #{travel_forward.1} parent=11 // pred_check
        %p1560 = pneg %p841
      $region106: #{travel_forward.1} parent=11 // pred_check_branch
        %1562 = sbr.rel (%p1560) target = $region108
      $region107: #{travel_forward.1} parent=11 // pred_region
        _
      $region108: #{travel_forward.1} parent=11 // pred_fallthru
        _
      // Predicated region
      $region109: #{travel_forward.1} parent=11 // pred_check
        %p1563 = pneg %p862
      $region110: #{travel_forward.1} parent=11 // pred_check_branch
        %1565 = sbr.rel (%p1563) target = $region112
      $region111: #{travel_forward.1} parent=11 // pred_region
        _
      $region112: #{travel_forward.1} parent=11 // pred_fallthru
        _
      // Predicated region
      $region113: #{travel_forward.1} parent=11 // pred_check
        %p1566 = pneg %p883
      $region114: #{travel_forward.1} parent=11 // pred_check_branch
        %1568 = sbr.rel (%p1566) target = $region116
      $region115: #{travel_forward.1} parent=11 // pred_region
        _
      $region116: #{travel_forward.1} parent=11 // pred_fallthru
        _
      // Predicated region
      $region117: #{travel_forward.1} parent=11 // pred_check
        %p1569 = pneg %p904
      $region118: #{travel_forward.1} parent=11 // pred_check_branch
        %1571 = sbr.rel (%p1569) target = $region120
      $region119: #{travel_forward.1} parent=11 // pred_region
        _
      $region120: #{travel_forward.1} parent=11 // pred_fallthru
        _
      // Predicated region
      $region121: #{travel_forward.1} parent=11 // pred_check
        %p1572 = pneg %p925
      $region122: #{travel_forward.1} parent=11 // pred_check_branch
        %1574 = sbr.rel (%p1572) target = $region124
      $region123: #{travel_forward.1} parent=11 // pred_region
        _
      $region124: #{travel_forward.1} parent=11 // pred_fallthru
        _
      // Predicated region
      $region125: #{travel_forward.1} parent=11 // pred_check
        %p1575 = pneg %p946
      $region126: #{travel_forward.1} parent=11 // pred_check_branch
        %1577 = sbr.rel (%p1575) target = $region128
      $region127: #{travel_forward.1} parent=11 // pred_region
        _
      $region128: #{travel_forward.1} parent=11 // pred_fallthru
        _
      // Predicated region
      $region129: #{travel_forward.1} parent=11 // pred_check
        %p1578 = pneg %p967
      $region130: #{travel_forward.1} parent=11 // pred_check_branch
        %1580 = sbr.rel (%p1578) target = $region132
      $region131: #{travel_forward.1} parent=11 // pred_region
        _
      $region132: #{travel_forward.1} parent=11 // pred_fallthru
        _
      // Predicated region
      $region133: #{travel_forward.1} parent=11 // pred_check
        %p1581 = pneg %p988
      $region134: #{travel_forward.1} parent=11 // pred_check_branch
        %1583 = sbr.rel (%p1581) target = $region136
      $region135: #{travel_forward.1} parent=11 // pred_region
        _
      $region136: #{travel_forward.1} parent=11 // pred_fallthru
        _
      // Predicated region
      $region137: #{travel_forward.1} parent=11 // pred_check
        %p1584 = pneg %p1009
      $region138: #{travel_forward.1} parent=11 // pred_check_branch
        %1586 = sbr.rel (%p1584) target = $region140
      $region139: #{travel_forward.1} parent=11 // pred_region
        _
      $region140: #{travel_forward.1} parent=11 // pred_fallthru
        _
      // Predicated region
      $region141: #{travel_forward.1} parent=11 // pred_check
        %p1587 = pneg %p1030
      $region142: #{travel_forward.1} parent=11 // pred_check_branch
        %1589 = sbr.rel (%p1587) target = $region144
      $region143: #{travel_forward.1} parent=11 // pred_region
        _
      $region144: #{travel_forward.1} parent=11 // pred_fallthru
        _
      // Predicated region
      $region145: #{travel_forward.1} parent=11 // pred_check
        %p1590 = pneg %p1051
      $region146: #{travel_forward.1} parent=11 // pred_check_branch
        %1592 = sbr.rel (%p1590) target = $region148
      $region147: #{travel_forward.1} parent=11 // pred_region
        _
      $region148: #{travel_forward.1} parent=11 // pred_fallthru
        _
      // Predicated region
      $region149: #{travel_forward.1} parent=11 // pred_check
        %p1593 = pneg %p1072
      $region150: #{travel_forward.1} parent=11 // pred_check_branch
        %1595 = sbr.rel (%p1593) target = $region152
      $region151: #{travel_forward.1} parent=11 // pred_region
        _
      $region152: #{travel_forward.1} parent=11 // pred_fallthru
        _
      // Predicated region
      $region153: #{travel_forward.1} parent=11 // pred_check
        %p1596 = pneg %p1093
      $region154: #{travel_forward.1} parent=11 // pred_check_branch
        %1598 = sbr.rel (%p1596) target = $region156
      $region155: #{travel_forward.1} parent=11 // pred_region
        _
      $region156: #{travel_forward.1} parent=11 // pred_fallthru
        _
      // Predicated region
      $region157: #{travel_forward.1} parent=11 // pred_check
        %p1599 = pneg %p1114
      $region158: #{travel_forward.1} parent=11 // pred_check_branch
        %1601 = sbr.rel (%p1599) target = $region160
      $region159: #{travel_forward.1} parent=11 // pred_region
        _
      $region160: #{travel_forward.1} parent=11 // pred_fallthru
        _
      // Predicated region
      $region161: #{travel_forward.1} parent=11 // pred_check
        %p1602 = pneg %p1135
      $region162: #{travel_forward.1} parent=11 // pred_check_branch
        %1604 = sbr.rel (%p1602) target = $region164
      $region163: #{travel_forward.1} parent=11 // pred_region
        _
      $region164: #{travel_forward.1} parent=11 // pred_fallthru
        _
      // Predicated region
      $region165: #{travel_forward.1} parent=11 // pred_check
        %p1605 = pneg %p1156
      $region166: #{travel_forward.1} parent=11 // pred_check_branch
        %1607 = sbr.rel (%p1605) target = $region168
      $region167: #{travel_forward.1} parent=11 // pred_region
        _
      $region168: #{travel_forward.1} parent=11 // pred_fallthru
        _
      // Predicated region
      $region169: #{travel_forward.1} parent=11 // pred_check
        %p1608 = pneg %p1177
      $region170: #{travel_forward.1} parent=11 // pred_check_branch
        %1610 = sbr.rel (%p1608) target = $region172
      $region171: #{travel_forward.1} parent=11 // pred_region
        _
      $region172: #{travel_forward.1} parent=11 // pred_fallthru
        _
      // Predicated region
      $region173: #{travel_forward.1} parent=11 // pred_check
        %p1611 = pneg %p1198
      $region174: #{travel_forward.1} parent=11 // pred_check_branch
        %1613 = sbr.rel (%p1611) target = $region176
      $region175: #{travel_forward.1} parent=11 // pred_region
        _
      $region176: #{travel_forward.1} parent=11 // pred_fallthru
        _
      // Predicated region
      $region177: #{travel_forward.1} parent=11 // pred_check
        %p1614 = pneg %p1219
      $region178: #{travel_forward.1} parent=11 // pred_check_branch
        %1616 = sbr.rel (%p1614) target = $region180
      $region179: #{travel_forward.1} parent=11 // pred_region
        _
      $region180: #{travel_forward.1} parent=11 // pred_fallthru
        _
      // Predicated region
      $region181: #{travel_forward.1} parent=11 // pred_check
        %p1617 = pneg %p1240
      $region182: #{travel_forward.1} parent=11 // pred_check_branch
        %1619 = sbr.rel (%p1617) target = $region184
      $region183: #{travel_forward.1} parent=11 // pred_region
        _
      $region184: #{travel_forward.1} parent=11 // pred_fallthru
        _
      // Predicated region
      $region185: #{travel_forward.1} parent=11 // pred_check
        %p1620 = pneg %p1261
      $region186: #{travel_forward.1} parent=11 // pred_check_branch
        %1622 = sbr.rel (%p1620) target = $region188
      $region187: #{travel_forward.1} parent=11 // pred_region
        _
      $region188: #{travel_forward.1} parent=11 // pred_fallthru
        _
      // Predicated region
      $region189: #{travel_forward.1} parent=11 // pred_check
        %p1623 = pneg %p1282
      $region190: #{travel_forward.1} parent=11 // pred_check_branch
        %1625 = sbr.rel (%p1623) target = $region192
      $region191: #{travel_forward.1} parent=11 // pred_region
        _
      $region192: #{travel_forward.1} parent=11 // pred_fallthru
        _
      // Predicated region
      $region193: #{travel_forward.1} parent=11 // pred_check
        %p1626 = pneg %p1303
      $region194: #{travel_forward.1} parent=11 // pred_check_branch
        %1628 = sbr.rel (%p1626) target = $region196
      $region195: #{travel_forward.1} parent=11 // pred_region
        _
      $region196: #{travel_forward.1} parent=11 // pred_fallthru
        _
      // Predicated region
      $region197: #{travel_forward.1} parent=11 // pred_check
        %p1629 = pneg %p1324
      $region198: #{travel_forward.1} parent=11 // pred_check_branch
        %1631 = sbr.rel (%p1629) target = $region200
      $region199: #{travel_forward.1} parent=11 // pred_region
        _
      $region200: #{travel_forward.1} parent=11 // pred_fallthru
        _
      // Predicated region
      $region201: #{travel_forward.1} parent=11 // pred_check
        %p1632 = pneg %p1345
      $region202: #{travel_forward.1} parent=11 // pred_check_branch
        %1634 = sbr.rel (%p1632) target = $region204
      $region203: #{travel_forward.1} parent=11 // pred_region
        _
      $region204: #{travel_forward.1} parent=11 // pred_fallthru
        _
      // Predicated region
      $region205: #{travel_forward.1} parent=11 // pred_check
        %p1635 = pneg %p1366
      $region206: #{travel_forward.1} parent=11 // pred_check_branch
        %1637 = sbr.rel (%p1635) target = $region208
      $region207: #{travel_forward.1} parent=11 // pred_region
        _
      $region208: #{travel_forward.1} parent=11 // pred_fallthru
        _
      // Predicated region
      $region209: #{travel_forward.1} parent=11 // pred_check
        %p1638 = pneg %p1387
      $region210: #{travel_forward.1} parent=11 // pred_check_branch
        %1640 = sbr.rel (%p1638) target = $region212
      $region211: #{travel_forward.1} parent=11 // pred_region
        _
      $region212: #{travel_forward.1} parent=11 // pred_fallthru
        _
      // Predicated region
      $region213: #{travel_forward.1} parent=11 // pred_check
        %p1641 = pneg %p1408
      $region214: #{travel_forward.1} parent=11 // pred_check_branch
        %1643 = sbr.rel (%p1641) target = $region216
      $region215: #{travel_forward.1} parent=11 // pred_region
        _
      $region216: #{travel_forward.1} parent=11 // pred_fallthru
        _
      // Predicated region
      $region217: #{travel_forward.1} parent=11 // pred_check
        %p1644 = pneg %p1429
      $region218: #{travel_forward.1} parent=11 // pred_check_branch
        %1646 = sbr.rel (%p1644) target = $region220
      $region219: #{travel_forward.1} parent=11 // pred_region
        _
      $region220: #{travel_forward.1} parent=11 // pred_fallthru
        _
      // Predicated region
      $region221: #{travel_forward.1} parent=11 // pred_check
        %p1647 = pneg %p1450
      $region222: #{travel_forward.1} parent=11 // pred_check_branch
        %1649 = sbr.rel (%p1647) target = $region224
      $region223: #{travel_forward.1} parent=11 // pred_region
        _
      $region224: #{travel_forward.1} parent=11 // pred_fallthru
        _
    $region12: #{travel_forward.1} parent=5 // pred_fallthru
      _
    %p1650 = scmp.lt.s32.totalorder %s129, 2
    // Predicated region
    $region225: #{travel_forward.1} parent=5 // pred_check
      %p1651 = pneg %p1650
    $region226: #{travel_forward.1} parent=5 // pred_check_branch
      %1653 = sbr.rel (%p1651) target = $region228
    $region227: #{travel_forward.1} parent=5 // pred_region
      // Predicated region
      $region229: #{travel_forward.1} parent=227 // pred_check
        %p1654 = pneg %p149
      $region230: #{travel_forward.1} parent=227 // pred_check_branch
        %1656 = sbr.rel (%p1654) target = $region232
      $region231: #{travel_forward.1} parent=227 // pred_region
        %p1657 = scmp.lt.s32.totalorder %s129, 1
        %s1658 = scalar_select %p1657, %s129, 1
        %s1659 = smul.addr %s1658, 8
        %s1660 = scalar_lea.vmem %s1, %s1659
      $region232: #{travel_forward.1} parent=227 // pred_fallthru
        _
      // Predicated region
      $region233: #{travel_forward.1} parent=227 // pred_check
        %p1661 = pneg %p175
      $region234: #{travel_forward.1} parent=227 // pred_check_branch
        %1663 = sbr.rel (%p1661) target = $region236
      $region235: #{travel_forward.1} parent=227 // pred_region
        %p1664 = scmp.lt.s32.totalorder %s129, 1
        %s1665 = scalar_select %p1664, %s129, 1
        %s1666 = scalar_lea.vmem %s3, %s1665
      $region236: #{travel_forward.1} parent=227 // pred_fallthru
        _
      // Predicated region
      $region237: #{travel_forward.1} parent=227 // pred_check
        %p1667 = pneg %p201
      $region238: #{travel_forward.1} parent=227 // pred_check_branch
        %1669 = sbr.rel (%p1667) target = $region240
      $region239: #{travel_forward.1} parent=227 // pred_region
        %p1670 = scmp.lt.s32.totalorder %s129, 1
        %s1671 = scalar_select %p1670, %s129, 1
        %s1672 = smul.addr %s1671, 8
        %s1673 = scalar_lea.vmem %s5, %s1672
      $region240: #{travel_forward.1} parent=227 // pred_fallthru
        _
      // Predicated region
      $region241: #{travel_forward.1} parent=227 // pred_check
        %p1674 = pneg %p227
      $region242: #{travel_forward.1} parent=227 // pred_check_branch
        %1676 = sbr.rel (%p1674) target = $region244
      $region243: #{travel_forward.1} parent=227 // pred_region
        %p1677 = scmp.lt.s32.totalorder %s129, 1
        %s1678 = scalar_select %p1677, %s129, 1
        %s1679 = scalar_lea.vmem %s7, %s1678
      $region244: #{travel_forward.1} parent=227 // pred_fallthru
        _
      // Predicated region
      $region245: #{travel_forward.1} parent=227 // pred_check
        %p1680 = pneg %p253
      $region246: #{travel_forward.1} parent=227 // pred_check_branch
        %1682 = sbr.rel (%p1680) target = $region248
      $region247: #{travel_forward.1} parent=227 // pred_region
        %p1683 = scmp.lt.s32.totalorder %s129, 1
        %s1684 = scalar_select %p1683, %s129, 1
        %s1685 = smul.addr %s1684, 8
        %s1686 = scalar_lea.vmem %s9, %s1685
      $region248: #{travel_forward.1} parent=227 // pred_fallthru
        _
      // Predicated region
      $region249: #{travel_forward.1} parent=227 // pred_check
        %p1687 = pneg %p279
      $region250: #{travel_forward.1} parent=227 // pred_check_branch
        %1689 = sbr.rel (%p1687) target = $region252
      $region251: #{travel_forward.1} parent=227 // pred_region
        %p1690 = scmp.lt.s32.totalorder %s129, 1
        %s1691 = scalar_select %p1690, %s129, 1
        %s1692 = smul.addr %s1691, 8
        %s1693 = scalar_lea.vmem %s11, %s1692
      $region252: #{travel_forward.1} parent=227 // pred_fallthru
        _
      // Predicated region
      $region253: #{travel_forward.1} parent=227 // pred_check
        %p1694 = pneg %p305
      $region254: #{travel_forward.1} parent=227 // pred_check_branch
        %1696 = sbr.rel (%p1694) target = $region256
      $region255: #{travel_forward.1} parent=227 // pred_region
        %p1697 = scmp.lt.s32.totalorder %s129, 1
        %s1698 = scalar_select %p1697, %s129, 1
        %s1699 = smul.addr %s1698, 8
        %s1700 = scalar_lea.vmem %s13, %s1699
      $region256: #{travel_forward.1} parent=227 // pred_fallthru
        _
      // Predicated region
      $region257: #{travel_forward.1} parent=227 // pred_check
        %p1701 = pneg %p331
      $region258: #{travel_forward.1} parent=227 // pred_check_branch
        %1703 = sbr.rel (%p1701) target = $region260
      $region259: #{travel_forward.1} parent=227 // pred_region
        %p1704 = scmp.lt.s32.totalorder %s129, 1
        %s1705 = scalar_select %p1704, %s129, 1
        %s1706 = smul.addr %s1705, 8
        %s1707 = scalar_lea.vmem %s15, %s1706
      $region260: #{travel_forward.1} parent=227 // pred_fallthru
        _
    $region228: #{travel_forward.1} parent=5 // pred_fallthru
      _
    %p1708 = scmp.le.s32.totalorder 1, %s129
    %p1709 = scmp.lt.s32.totalorder %s129, 3
    %p1710 = pnand %p1708, %p1709
    %p1711 = pneg %p1710
    // Predicated region
    $region261: #{travel_forward.1} parent=5 // pred_check
      _
    $region262: #{travel_forward.1} parent=5 // pred_check_branch
      %1713 = sbr.rel (%p1710) target = $region264
    $region263: #{travel_forward.1} parent=5 // pred_region
      %s1714 = ssub.s32 %s129, 1
      %p1715 = scmp.lt.s32.totalorder %s134, 1
      %s1716 = scalar_select %p1715, %s134, 1
      %s1717 = smul.addr %s1716, 8
      %s1718 = scalar_lea.vmem %s1, %s1717
      %p1719 = pneg %p155
      %p1720 = pneg %p152
      %p1721 = scmp.lt.s32.totalorder %s134, 1
      %s1722 = scalar_select %p1721, %s134, 1
      %s1723 = scalar_lea.vmem %s3, %s1722
      %p1724 = pneg %p181
      %p1725 = pneg %p178
      %p1726 = scmp.lt.s32.totalorder %s134, 1
      %s1727 = scalar_select %p1726, %s134, 1
      %s1728 = smul.addr %s1727, 8
      %s1729 = scalar_lea.vmem %s5, %s1728
      %p1730 = pneg %p207
      %p1731 = pneg %p204
      %p1732 = scmp.lt.s32.totalorder %s134, 1
      %s1733 = scalar_select %p1732, %s134, 1
      %s1734 = scalar_lea.vmem %s7, %s1733
      %p1735 = pneg %p233
      %p1736 = pneg %p230
      %p1737 = scmp.lt.s32.totalorder %s134, 1
      %s1738 = scalar_select %p1737, %s134, 1
      %s1739 = smul.addr %s1738, 8
      %s1740 = scalar_lea.vmem %s9, %s1739
      %p1741 = pneg %p259
      %p1742 = pneg %p256
      %p1743 = scmp.lt.s32.totalorder %s134, 1
      %s1744 = scalar_select %p1743, %s134, 1
      %s1745 = smul.addr %s1744, 8
      %s1746 = scalar_lea.vmem %s11, %s1745
      %p1747 = pneg %p285
      %p1748 = pneg %p282
      %p1749 = scmp.lt.s32.totalorder %s134, 1
      %s1750 = scalar_select %p1749, %s134, 1
      %s1751 = smul.addr %s1750, 8
      %s1752 = scalar_lea.vmem %s13, %s1751
      %p1753 = pneg %p311
      %p1754 = pneg %p308
      %p1755 = scmp.lt.s32.totalorder %s134, 1
      %s1756 = scalar_select %p1755, %s134, 1
      %s1757 = smul.addr %s1756, 8
      %s1758 = scalar_lea.vmem %s15, %s1757
      %p1759 = pneg %p337
      %p1760 = pneg %p334
      %p1761 = pneg %p358
      %p1762 = pneg %p355
      %p1763 = pneg %p379
      %p1764 = pneg %p376
      %p1765 = pneg %p400
      %p1766 = pneg %p397
      %p1767 = pneg %p421
      %p1768 = pneg %p418
      %p1769 = pneg %p442
      %p1770 = pneg %p439
      %p1771 = pneg %p463
      %p1772 = pneg %p460
      %p1773 = pneg %p484
      %p1774 = pneg %p481
      %p1775 = pneg %p505
      %p1776 = pneg %p502
      %p1777 = pneg %p526
      %p1778 = pneg %p523
      %p1779 = pneg %p547
      %p1780 = pneg %p544
      %p1781 = pneg %p568
      %p1782 = pneg %p565
      %p1783 = pneg %p589
      %p1784 = pneg %p586
      %p1785 = pneg %p610
      %p1786 = pneg %p607
      %p1787 = pneg %p631
      %p1788 = pneg %p628
      %p1789 = pneg %p652
      %p1790 = pneg %p649
      %p1791 = pneg %p673
      %p1792 = pneg %p670
      %p1793 = pneg %p694
      %p1794 = pneg %p691
      %p1795 = pneg %p715
      %p1796 = pneg %p712
      %p1797 = pneg %p736
      %p1798 = pneg %p733
      %p1799 = pneg %p757
      %p1800 = pneg %p754
      %p1801 = pneg %p778
      %p1802 = pneg %p775
      %p1803 = pneg %p799
      %p1804 = pneg %p796
      %p1805 = pneg %p820
      %p1806 = pneg %p817
      %p1807 = pneg %p841
      %p1808 = pneg %p838
      %p1809 = pneg %p862
      %p1810 = pneg %p859
      %p1811 = pneg %p883
      %p1812 = pneg %p880
      %p1813 = pneg %p904
      %p1814 = pneg %p901
      %p1815 = pneg %p925
      %p1816 = pneg %p922
      %p1817 = pneg %p946
      %p1818 = pneg %p943
      %p1819 = pneg %p967
      %p1820 = pneg %p964
      %p1821 = pneg %p988
      %p1822 = pneg %p985
      %p1823 = pneg %p1009
      %p1824 = pneg %p1006
      %p1825 = pneg %p1030
      %p1826 = pneg %p1027
      %p1827 = pneg %p1051
      %p1828 = pneg %p1048
      %p1829 = pneg %p1072
      %p1830 = pneg %p1069
      %p1831 = pneg %p1093
      %p1832 = pneg %p1090
      %p1833 = pneg %p1114
      %p1834 = pneg %p1111
      %p1835 = pneg %p1135
      %p1836 = pneg %p1132
      %p1837 = pneg %p1156
      %p1838 = pneg %p1153
      %p1839 = pneg %p1177
      %p1840 = pneg %p1174
      %p1841 = pneg %p1198
      %p1842 = pneg %p1195
      %p1843 = pneg %p1219
      %p1844 = pneg %p1216
      %p1845 = pneg %p1240
      %p1846 = pneg %p1237
      %p1847 = pneg %p1261
      %p1848 = pneg %p1258
      %p1849 = pneg %p1282
      %p1850 = pneg %p1279
      %p1851 = pneg %p1303
      %p1852 = pneg %p1300
      %p1853 = pneg %p1324
      %p1854 = pneg %p1321
      %p1855 = pneg %p1345
      %p1856 = pneg %p1342
      %p1857 = pneg %p1366
      %p1858 = pneg %p1363
      %p1859 = pneg %p1387
      %p1860 = pneg %p1384
      %p1861 = pneg %p1408
      %p1862 = pneg %p1405
      %p1863 = pneg %p1429
      %p1864 = pneg %p1426
      %p1865 = pneg %p1450
      %p1866 = pneg %p1447
      %p1867 = pneg %p1476
      %p1868 = pneg %p1473
      %p1869 = scmp.lt.s32.totalorder %s134, 1
      %s1870 = scalar_select %p1869, %s134, 1
      %s1871 = smul.addr %s1870, 8
      %s1872 = scalar_lea.vmem %s123, %s1871
      %p1873 = scmp.lt.s32.totalorder %s134, 1
      %s1874 = scalar_select %p1873, %s134, 1
      %s1875 = smul.addr %s1874, 8
      %s1876 = scalar_lea.vmem %s1, %s1875
      %p1877 = scmp.lt.s32.totalorder %s134, 1
      %s1878 = scalar_select %p1877, %s134, 1
      %s1879 = scalar_lea.vmem %s3, %s1878
      %p1880 = scmp.lt.s32.totalorder %s134, 1
      %s1881 = scalar_select %p1880, %s134, 1
      %s1882 = smul.addr %s1881, 8
      %s1883 = scalar_lea.vmem %s5, %s1882
      %p1884 = scmp.lt.s32.totalorder %s134, 1
      %s1885 = scalar_select %p1884, %s134, 1
      %s1886 = scalar_lea.vmem %s7, %s1885
      %p1887 = scmp.lt.s32.totalorder %s134, 1
      %s1888 = scalar_select %p1887, %s134, 1
      %s1889 = smul.addr %s1888, 8
      %s1890 = scalar_lea.vmem %s9, %s1889
      %p1891 = scmp.lt.s32.totalorder %s134, 1
      %s1892 = scalar_select %p1891, %s134, 1
      %s1893 = smul.addr %s1892, 8
      %s1894 = scalar_lea.vmem %s11, %s1893
      %p1895 = scmp.lt.s32.totalorder %s134, 1
      %s1896 = scalar_select %p1895, %s134, 1
      %s1897 = smul.addr %s1896, 8
      %s1898 = scalar_lea.vmem %s13, %s1897
      %p1899 = scmp.lt.s32.totalorder %s134, 1
      %s1900 = scalar_select %p1899, %s134, 1
      %s1901 = smul.addr %s1900, 8
      %s1902 = scalar_lea.vmem %s15, %s1901
      %p1903 = scmp.lt.s32.totalorder %s134, 1
      %s1904 = scalar_select %p1903, %s134, 1
      %s1905 = smul.addr %s1904, 8
      %s1906 = scalar_lea.vmem %s123, %s1905
      %v1908 = vld [vmem:[%s1876] sm:$0xff]
      %v1909 = vld [vmem:[%s1879] sm:$0x1]
      %v1910 = vld [vmem:[%s1883] sm:$0xff]
      %v1911 = vld [vmem:[%s19] sm:$0xf]
      %v1912 = vld [vmem:[%s19 + $0x4] sm:$0xf]
      %v1913 = vld [vmem:[%s19 + $0x8] sm:$0xf]
      %v1914 = vld [vmem:[%s19 + $0xc] sm:$0xf]
      %v1915 = vld [vmem:[%s17] sm:$0xf]
      %v1916 = vld [vmem:[%s17 + $0x4] sm:$0xf]
      %v1917 = vld [vmem:[%s17 + $0x8] sm:$0xf]
      %v1918 = vld [vmem:[%s17 + $0xc] sm:$0xf]
      %v1923 = vunpack.c.l.b16 %v1911
      %v1924 = vunpack.c.l.b16 %v1912
      %v1925 = vunpack.c.l.b16 %v1913
      %v1926 = vunpack.c.l.b16 %v1914
      %v1927 = vpack.c.b16 %v1924, %v1923
      %v1928 = vpack.c.b16 %v1926, %v1925
      %v1933 = vunpack.c.l.b16 %v1915
      %v1934 = vunpack.c.l.b16 %v1916
      %v1935 = vunpack.c.l.b16 %v1917
      %v1936 = vunpack.c.l.b16 %v1918
      %v1937 = vpack.c.b16 %v1934, %v1933
      %v1938 = vpack.c.b16 %v1936, %v1935
      %vm1941 = vcmask 261120
      %v1943 = vsel %vm1941, %v1927, 0
      %v1946 = vsel %vm1941, %v1928, 0
      %1948 = vmatprep.subr.bf16.mxu0 0
      %1949 = vmatpush1.bf16.msra.mxu0 %v1937
      %1950 = vmatprep.subr.bf16.mxu0 0
      %1951 = vmatpush1.bf16.msra.mxu0 %v1938
      %1952 = vmatprep.subr.bf16.mxu0 0
      %1953 = vmatpush1.bf16.msra.mxu0 0
      %1954 = vmatprep.subr.bf16.mxu0 0
      %1955 = vmatpush1.bf16.msra.mxu0 0
      %1956 = vmatprep.subr.bf16.mxu0 0
      %1957 = vmatpush1.bf16.msra.mxu0 0
      %1958 = vmatprep.subr.bf16.mxu0 0
      %1959 = vmatpush1.bf16.msra.mxu0 0
      %1960 = vmatprep.subr.bf16.mxu0 0
      %1961 = vmatpush1.bf16.msra.mxu0 0
      %1962 = vmatprep.subr.bf16.mxu0 0
      %1963 = vmatpush1.bf16.msra.mxu0 0
      %1964 = vmatprep.subr.bf16.mxu0 0
      %1965 = vmatpush1.bf16.msra.mxu0 0
      %1966 = vmatprep.subr.bf16.mxu0 0
      %1967 = vmatpush1.bf16.msra.mxu0 0
      %1968 = vmatprep.subr.bf16.mxu0 0
      %1969 = vmatpush1.bf16.msra.mxu0 0
      %1970 = vmatprep.subr.bf16.mxu0 0
      %1971 = vmatpush1.bf16.msra.mxu0 0
      %1972 = vmatprep.subr.bf16.mxu0 0
      %1973 = vmatpush1.bf16.msra.mxu0 0
      %1974 = vmatprep.subr.bf16.mxu0 0
      %1975 = vmatpush1.bf16.msra.mxu0 0
      %1976 = vmatprep.subr.bf16.mxu0 0
      %1977 = vmatpush1.bf16.msra.mxu0 0
      %1978 = vmatprep.subr.bf16.mxu0 0
      %1979 = vmatpush1.bf16.msra.mxu0 0
      %1980 = vmatprep.mubr.bf16.mxu0 0
      %1981 = vmatmul.mubr.bf16.gmra.mrb[0].mxu0 %v1943
      %v1982 = vpop.f32.mrb[0].mxu0
      %v1983 = vadd.f32 0.0, %v1982
      %v1984 = vpop.f32.mrb[0].mxu0
      %v1985 = vpop.f32.mrb[0].mxu0
      %v1986 = vadd.f32 0.0, %v1985
      %v1987 = vpop.f32.mrb[0].mxu0
      %1988 = vmatprep.mubr.bf16.mxu0 0
      %1989 = vmatmul.mubr.bf16.gmra.mrb[0].mxu0 %v1946
      %v1990 = vpop.f32.mrb[0].mxu0
      %v1991 = vadd.f32 0.0, %v1990
      %v1992 = vpop.f32.mrb[0].mxu0
      %v1993 = vpop.f32.mrb[0].mxu0
      %v1994 = vadd.f32 0.0, %v1993
      %v1995 = vpop.f32.mrb[0].mxu0
      %1996 = vdwg.mxu0
      %v1997 = vld [vmem:[%s21] sm:$0xf]
      %v1998 = vld [vmem:[%s21 + $0x4] sm:$0xf]
      %v1999 = vld [vmem:[%s21 + $0x8] sm:$0xf]
      %v2000 = vld [vmem:[%s21 + $0xc] sm:$0xf]
      %v2001 = vld [vmem:[%s21 + $0x10] sm:$0xf]
      %v2002 = vld [vmem:[%s21 + $0x14] sm:$0xf]
      %v2003 = vld [vmem:[%s21 + $0x18] sm:$0xf]
      %v2004 = vld [vmem:[%s21 + $0x1c] sm:$0xf]
      %v2005 = vld [vmem:[%s21 + $0x20] sm:$0xf]
      %v2006 = vld [vmem:[%s21 + $0x24] sm:$0xf]
      %v2007 = vld [vmem:[%s21 + $0x28] sm:$0xf]
      %v2008 = vld [vmem:[%s21 + $0x2c] sm:$0xf]
      %v2009 = vld [vmem:[%s21 + $0x30] sm:$0xf]
      %v2010 = vld [vmem:[%s21 + $0x34] sm:$0xf]
      %v2011 = vld [vmem:[%s21 + $0x38] sm:$0xf]
      %v2012 = vld [vmem:[%s21 + $0x3c] sm:$0xf]
      %v2013 = vpack.c.bf16 %v1986, %v1983
      %v2014 = vpack.c.bf16 %v1994, %v1991
      %v2015 = vld [vmem:[%s23] sm:$0x1]
      %v2017 = vlaneseq
      %v2018 = vshrl.u32 %v2017, 7
      %v2019 = vsub.s32 0, %v2018
      %v2020 = vrot.slane %v2015, %v2019
      %v2038 = vunpack.c.l.b16 %v1997
      %v2039 = vunpack.c.l.b16 %v1998
      %v2040 = vunpack.c.l.b16 %v1999
      %v2041 = vunpack.c.l.b16 %v2000
      %v2042 = vunpack.c.l.b16 %v2001
      %v2043 = vunpack.c.l.b16 %v2002
      %v2044 = vunpack.c.l.b16 %v2003
      %v2045 = vunpack.c.l.b16 %v2004
      %v2046 = vunpack.c.l.b16 %v2005
      %v2047 = vunpack.c.l.b16 %v2006
      %v2048 = vunpack.c.l.b16 %v2007
      %v2049 = vunpack.c.l.b16 %v2008
      %v2050 = vunpack.c.l.b16 %v2009
      %v2051 = vunpack.c.l.b16 %v2010
      %v2052 = vunpack.c.l.b16 %v2011
      %v2053 = vunpack.c.l.b16 %v2012
      %v2054 = vpack.c.b16 %v2039, %v2038
      %v2055 = vpack.c.b16 %v2041, %v2040
      %v2056 = vpack.c.b16 %v2043, %v2042
      %v2057 = vpack.c.b16 %v2045, %v2044
      %v2058 = vpack.c.b16 %v2047, %v2046
      %v2059 = vpack.c.b16 %v2049, %v2048
      %v2060 = vpack.c.b16 %v2051, %v2050
      %v2061 = vpack.c.b16 %v2053, %v2052
      %2070 = vmatprep.subr.bf16.mxu0 0
      %2071 = vmatpush1.bf16.msra.mxu0 %v2054
      %2072 = vmatprep.subr.bf16.mxu0 0
      %2073 = vmatpush1.bf16.msra.mxu0 %v2055
      %2074 = vmatprep.subr.bf16.mxu0 0
      %2075 = vmatpush1.bf16.msra.mxu0 %v2056
      %2076 = vmatprep.subr.bf16.mxu0 0
      %2077 = vmatpush1.bf16.msra.mxu0 %v2057
      %2078 = vmatprep.subr.bf16.mxu0 0
      %2079 = vmatpush1.bf16.msra.mxu0 %v2058
      %2080 = vmatprep.subr.bf16.mxu0 0
      %2081 = vmatpush1.bf16.msra.mxu0 %v2059
      %2082 = vmatprep.subr.bf16.mxu0 0
      %2083 = vmatpush1.bf16.msra.mxu0 %v2060
      %2084 = vmatprep.subr.bf16.mxu0 0
      %2085 = vmatpush1.bf16.msra.mxu0 %v2061
      %2086 = vmatprep.subr.bf16.mxu0 0
      %2087 = vmatpush1.bf16.msra.mxu0 0
      %2088 = vmatprep.subr.bf16.mxu0 0
      %2089 = vmatpush1.bf16.msra.mxu0 0
      %2090 = vmatprep.subr.bf16.mxu0 0
      %2091 = vmatpush1.bf16.msra.mxu0 0
      %2092 = vmatprep.subr.bf16.mxu0 0
      %2093 = vmatpush1.bf16.msra.mxu0 0
      %2094 = vmatprep.subr.bf16.mxu0 0
      %2095 = vmatpush1.bf16.msra.mxu0 0
      %2096 = vmatprep.subr.bf16.mxu0 0
      %2097 = vmatpush1.bf16.msra.mxu0 0
      %2098 = vmatprep.subr.bf16.mxu0 0
      %2099 = vmatpush1.bf16.msra.mxu0 0
      %2100 = vmatprep.subr.bf16.mxu0 0
      %2101 = vmatpush1.bf16.msra.mxu0 0
      %2102 = vmatprep.mubr.bf16.mxu0 0
      %2103 = vmatmul.mubr.bf16.gmra.mrb[0].mxu0 %v2013
      %v2104 = vpop.f32.mrb[0].mxu0
      %v2105 = vadd.f32 %v2020, %v2104
      %v2106 = vpop.f32.mrb[0].mxu0
      %v2107 = vpop.f32.mrb[0].mxu0
      %v2108 = vadd.f32 %v2020, %v2107
      %v2109 = vpop.f32.mrb[0].mxu0
      %2110 = vmatprep.mubr.bf16.mxu0 0
      %2111 = vmatmul.mubr.bf16.gmra.mrb[0].mxu0 %v2014
      %v2112 = vpop.f32.mrb[0].mxu0
      %v2113 = vadd.f32 %v2020, %v2112
      %v2114 = vpop.f32.mrb[0].mxu0
      %v2115 = vpop.f32.mrb[0].mxu0
      %v2116 = vadd.f32 %v2020, %v2115
      %v2117 = vpop.f32.mrb[0].mxu0
      %2118 = vdwg.mxu0
      %v2119 = vmax.f32 %v2105, 0.0
      %v2120 = vmax.f32 %v2108, 0.0
      %v2121 = vmax.f32 %v2113, 0.0
      %v2122 = vmax.f32 %v2116, 0.0
      %v2123 = vld [vmem:[%s27] sm:$0xf]
      %v2124 = vld [vmem:[%s27 + $0x4] sm:$0xf]
      %v2125 = vld [vmem:[%s25] sm:$0xf]
      %v2126 = vld [vmem:[%s25 + $0x4] sm:$0xf]
      %v2129 = vunpack.c.l.b16 %v2123
      %v2130 = vunpack.c.l.b16 %v2124
      %v2131 = vpack.c.b16 %v2130, %v2129
      %v2134 = vunpack.c.l.b16 %v2125
      %v2135 = vunpack.c.l.b16 %v2126
      %v2136 = vpack.c.b16 %v2135, %v2134
      %vm2138 = vcmask 130048
      %v2140 = vsel %vm2138, %v2131, 0
      %2142 = vmatprep.subr.bf16.mxu0 0
      %2143 = vmatpush1.bf16.msra.mxu0 %v2136
      %2144 = vmatprep.subr.bf16.mxu0 0
      %2145 = vmatpush1.bf16.msra.mxu0 0
      %2146 = vmatprep.subr.bf16.mxu0 0
      %2147 = vmatpush1.bf16.msra.mxu0 0
      %2148 = vmatprep.subr.bf16.mxu0 0
      %2149 = vmatpush1.bf16.msra.mxu0 0
      %2150 = vmatprep.subr.bf16.mxu0 0
      %2151 = vmatpush1.bf16.msra.mxu0 0
      %2152 = vmatprep.subr.bf16.mxu0 0
      %2153 = vmatpush1.bf16.msra.mxu0 0
      %2154 = vmatprep.subr.bf16.mxu0 0
      %2155 = vmatpush1.bf16.msra.mxu0 0
      %2156 = vmatprep.subr.bf16.mxu0 0
      %2157 = vmatpush1.bf16.msra.mxu0 0
      %2158 = vmatprep.subr.bf16.mxu0 0
      %2159 = vmatpush1.bf16.msra.mxu0 0
      %2160 = vmatprep.subr.bf16.mxu0 0
      %2161 = vmatpush1.bf16.msra.mxu0 0
      %2162 = vmatprep.subr.bf16.mxu0 0
      %2163 = vmatpush1.bf16.msra.mxu0 0
      %2164 = vmatprep.subr.bf16.mxu0 0
      %2165 = vmatpush1.bf16.msra.mxu0 0
      %2166 = vmatprep.subr.bf16.mxu0 0
      %2167 = vmatpush1.bf16.msra.mxu0 0
      %2168 = vmatprep.subr.bf16.mxu0 0
      %2169 = vmatpush1.bf16.msra.mxu0 0
      %2170 = vmatprep.subr.bf16.mxu0 0
      %2171 = vmatpush1.bf16.msra.mxu0 0
      %2172 = vmatprep.subr.bf16.mxu0 0
      %2173 = vmatpush1.bf16.msra.mxu0 0
      %2174 = vmatprep.mubr.bf16.mxu0 0
      %2175 = vmatmul.mubr.bf16.gmra.mrb[0].mxu0 %v2140
      %v2176 = vpop.f32.mrb[0].mxu0
      %v2177 = vadd.f32 0.0, %v2176
      %v2178 = vpop.f32.mrb[0].mxu0
      %v2179 = vpop.f32.mrb[0].mxu0
      %v2180 = vadd.f32 0.0, %v2179
      %v2181 = vpop.f32.mrb[0].mxu0
      %2182 = vdwg.mxu0
      %v2183 = vld [vmem:[%s29] sm:$0xf]
      %v2184 = vld [vmem:[%s29 + $0x4] sm:$0xf]
      %v2185 = vld [vmem:[%s29 + $0x8] sm:$0xf]
      %v2186 = vld [vmem:[%s29 + $0xc] sm:$0xf]
      %v2187 = vpack.c.bf16 %v2180, %v2177
      %v2188 = vld [vmem:[%s31] sm:$0x1]
      %v2190 = vlaneseq
      %v2191 = vshrl.u32 %v2190, 7
      %v2192 = vsub.s32 0, %v2191
      %v2193 = vrot.slane %v2188, %v2192
      %v2199 = vunpack.c.l.b16 %v2183
      %v2200 = vunpack.c.l.b16 %v2184
      %v2201 = vunpack.c.l.b16 %v2185
      %v2202 = vunpack.c.l.b16 %v2186
      %v2203 = vpack.c.b16 %v2200, %v2199
      %v2204 = vpack.c.b16 %v2202, %v2201
      %v2208 = vsel %vm1941, %v2187, 0
      %2210 = vmatprep.subr.bf16.mxu0 0
      %2211 = vmatpush1.bf16.msra.mxu0 %v2203
      %2212 = vmatprep.subr.bf16.mxu0 0
      %2213 = vmatpush1.bf16.msra.mxu0 %v2204
      %2214 = vmatprep.subr.bf16.mxu0 0
      %2215 = vmatpush1.bf16.msra.mxu0 0
      %2216 = vmatprep.subr.bf16.mxu0 0
      %2217 = vmatpush1.bf16.msra.mxu0 0
      %2218 = vmatprep.subr.bf16.mxu0 0
      %2219 = vmatpush1.bf16.msra.mxu0 0
      %2220 = vmatprep.subr.bf16.mxu0 0
      %2221 = vmatpush1.bf16.msra.mxu0 0
      %2222 = vmatprep.subr.bf16.mxu0 0
      %2223 = vmatpush1.bf16.msra.mxu0 0
      %2224 = vmatprep.subr.bf16.mxu0 0
      %2225 = vmatpush1.bf16.msra.mxu0 0
      %2226 = vmatprep.subr.bf16.mxu0 0
      %2227 = vmatpush1.bf16.msra.mxu0 0
      %2228 = vmatprep.subr.bf16.mxu0 0
      %2229 = vmatpush1.bf16.msra.mxu0 0
      %2230 = vmatprep.subr.bf16.mxu0 0
      %2231 = vmatpush1.bf16.msra.mxu0 0
      %2232 = vmatprep.subr.bf16.mxu0 0
      %2233 = vmatpush1.bf16.msra.mxu0 0
      %2234 = vmatprep.subr.bf16.mxu0 0
      %2235 = vmatpush1.bf16.msra.mxu0 0
      %2236 = vmatprep.subr.bf16.mxu0 0
      %2237 = vmatpush1.bf16.msra.mxu0 0
      %2238 = vmatprep.subr.bf16.mxu0 0
      %2239 = vmatpush1.bf16.msra.mxu0 0
      %2240 = vmatprep.subr.bf16.mxu0 0
      %2241 = vmatpush1.bf16.msra.mxu0 0
      %2242 = vmatprep.mubr.bf16.mxu0 0
      %2243 = vmatmul.mubr.bf16.gmra.mrb[0].mxu0 %v2208
      %v2244 = vpop.f32.mrb[0].mxu0
      %v2245 = vadd.f32 %v2193, %v2244
      %v2246 = vpop.f32.mrb[0].mxu0
      %v2247 = vpop.f32.mrb[0].mxu0
      %v2248 = vadd.f32 %v2193, %v2247
      %v2249 = vpop.f32.mrb[0].mxu0
      %2250 = vdwg.mxu0
      %v2251 = vmax.f32 %v2245, 0.0
      %v2252 = vmax.f32 %v2248, 0.0
      %v2253 = vlaneseq
      %v2254 = vand.u32 %v2253, 127
      %2255 = vset.pattern.permute.xlu0 0
      %2256 = vperm.xlu0 %2255, %v1908
      %v2257 = vpop.permute.xlu0 %2256
      %vm2258 = vcmp.eq.s32.totalorder %v2257, %v2254
      %2259 = vset.pattern.permute.xlu0 0
      %2260 = vperm.xlu0 %2259, %v1910
      %v2261 = vpop.permute.xlu0 %2260
      %vm2262 = vcmp.eq.s32.totalorder %v2261, %v2254
      %v2263 = vld [vmem:[%s1886] sm:$0x1]
      %2264 = vset.pattern.permute.xlu0 0
      %2265 = vperm.xlu0 %2264, %v2263
      %v2266 = vpop.permute.xlu0 %2265
      %v2267 = vlaneseq
      %v2268 = vshrl.u32 %v2267, 7
      %v2269 = vsub.s32 0, %v2268
      %v2270 = vrot.slane %v2266, %v2269
      %vm2271 = vcmp.eq.s32.totalorder %v2270, %v2254
      %v2272 = vsel %vm2262, 1, 0
      %v2273 = vcvt.s32.f32 %v2272
      %v2274 = vpack.c.bf16 %v2273, %v2273
      %v2275 = vpack.c.bf16 %v2120, %v2119
      %v2276 = vpack.c.bf16 %v2122, %v2121
      %v2278 = vsel %vm1941, %v2274, 0
      %2280 = vmatprep.subr.bf16.mxu0 0
      %2281 = vmatpush1.bf16.msra.mxu0 %v2275
      %2282 = vmatprep.subr.bf16.mxu0 0
      %2283 = vmatpush1.bf16.msra.mxu0 %v2276
      %2284 = vmatprep.subr.bf16.mxu0 0
      %2285 = vmatpush1.bf16.msra.mxu0 0
      %2286 = vmatprep.subr.bf16.mxu0 0
      %2287 = vmatpush1.bf16.msra.mxu0 0
      %2288 = vmatprep.subr.bf16.mxu0 0
      %2289 = vmatpush1.bf16.msra.mxu0 0
      %2290 = vmatprep.subr.bf16.mxu0 0
      %2291 = vmatpush1.bf16.msra.mxu0 0
      %2292 = vmatprep.subr.bf16.mxu0 0
      %2293 = vmatpush1.bf16.msra.mxu0 0
      %2294 = vmatprep.subr.bf16.mxu0 0
      %2295 = vmatpush1.bf16.msra.mxu0 0
      %2296 = vmatprep.subr.bf16.mxu0 0
      %2297 = vmatpush1.bf16.msra.mxu0 0
      %2298 = vmatprep.subr.bf16.mxu0 0
      %2299 = vmatpush1.bf16.msra.mxu0 0
      %2300 = vmatprep.subr.bf16.mxu0 0
      %2301 = vmatpush1.bf16.msra.mxu0 0
      %2302 = vmatprep.subr.bf16.mxu0 0
      %2303 = vmatpush1.bf16.msra.mxu0 0
      %2304 = vmatprep.subr.bf16.mxu0 0
      %2305 = vmatpush1.bf16.msra.mxu0 0
      %2306 = vmatprep.subr.bf16.mxu0 0
      %2307 = vmatpush1.bf16.msra.mxu0 0
      %2308 = vmatprep.subr.bf16.mxu0 0
      %2309 = vmatpush1.bf16.msra.mxu0 0
      %2310 = vmatprep.subr.bf16.mxu0 0
      %2311 = vmatpush1.bf16.msra.mxu0 0
      %2312 = vmatprep.mubr.bf16.mxu0 0
      %2313 = vmatmul.mubr.bf16.gmra.mrb[0].mxu0 %v2278
      %v2314 = vpop.f32.mrb[0].mxu0
      %v2315 = vadd.f32 0.0, %v2314
      %v2316 = vpop.f32.mrb[0].mxu0
      %v2317 = vpop.f32.mrb[0].mxu0
      %v2318 = vpop.f32.mrb[0].mxu0
      %2319 = vdwg.mxu0
      %v2320 = vld [vmem:[%s33] sm:$0xf]
      %v2321 = vld [vmem:[%s33 + $0x4] sm:$0xf]
      %v2322 = vld [vmem:[%s33 + $0x8] sm:$0xf]
      %v2323 = vld [vmem:[%s33 + $0xc] sm:$0xf]
      %v2324 = vld [vmem:[%s33 + $0x10] sm:$0xf]
      %v2325 = vld [vmem:[%s33 + $0x14] sm:$0xf]
      %v2326 = vld [vmem:[%s33 + $0x18] sm:$0xf]
      %v2327 = vld [vmem:[%s33 + $0x1c] sm:$0xf]
      %v2328 = vld [vmem:[%s33 + $0x20] sm:$0xf]
      %v2329 = vld [vmem:[%s33 + $0x24] sm:$0xf]
      %v2330 = vld [vmem:[%s33 + $0x28] sm:$0xf]
      %v2331 = vld [vmem:[%s33 + $0x2c] sm:$0xf]
      %v2332 = vld [vmem:[%s33 + $0x30] sm:$0xf]
      %v2333 = vld [vmem:[%s33 + $0x34] sm:$0xf]
      %v2334 = vld [vmem:[%s33 + $0x38] sm:$0xf]
      %v2335 = vld [vmem:[%s33 + $0x3c] sm:$0xf]
      %v2352 = vunpack.c.l.b16 %v2320
      %v2353 = vunpack.c.l.b16 %v2321
      %v2354 = vunpack.c.l.b16 %v2322
      %v2355 = vunpack.c.l.b16 %v2323
      %v2356 = vunpack.c.l.b16 %v2324
      %v2357 = vunpack.c.l.b16 %v2325
      %v2358 = vunpack.c.l.b16 %v2326
      %v2359 = vunpack.c.l.b16 %v2327
      %v2360 = vunpack.c.l.b16 %v2328
      %v2361 = vunpack.c.l.b16 %v2329
      %v2362 = vunpack.c.l.b16 %v2330
      %v2363 = vunpack.c.l.b16 %v2331
      %v2364 = vunpack.c.l.b16 %v2332
      %v2365 = vunpack.c.l.b16 %v2333
      %v2366 = vunpack.c.l.b16 %v2334
      %v2367 = vunpack.c.l.b16 %v2335
      %v2368 = vpack.c.b16 %v2353, %v2352
      %v2369 = vpack.c.b16 %v2355, %v2354
      %v2370 = vpack.c.b16 %v2357, %v2356
      %v2371 = vpack.c.b16 %v2359, %v2358
      %v2372 = vpack.c.b16 %v2361, %v2360
      %v2373 = vpack.c.b16 %v2363, %v2362
      %v2374 = vpack.c.b16 %v2365, %v2364
      %v2375 = vpack.c.b16 %v2367, %v2366
      %2384 = vmatprep.subr.bf16.mxu0 0
      %2385 = vmatpush1.bf16.msra.mxu0 %v2368
      %2386 = vmatprep.subr.bf16.mxu0 0
      %2387 = vmatpush1.bf16.msra.mxu0 %v2369
      %2388 = vmatprep.subr.bf16.mxu0 0
      %2389 = vmatpush1.bf16.msra.mxu0 %v2370
      %2390 = vmatprep.subr.bf16.mxu0 0
      %2391 = vmatpush1.bf16.msra.mxu0 %v2371
      %2392 = vmatprep.subr.bf16.mxu0 0
      %2393 = vmatpush1.bf16.msra.mxu0 %v2372
      %2394 = vmatprep.subr.bf16.mxu0 0
      %2395 = vmatpush1.bf16.msra.mxu0 %v2373
      %2396 = vmatprep.subr.bf16.mxu0 0
      %2397 = vmatpush1.bf16.msra.mxu0 %v2374
      %2398 = vmatprep.subr.bf16.mxu0 0
      %2399 = vmatpush1.bf16.msra.mxu0 %v2375
      %2400 = vmatprep.subr.bf16.mxu0 0
      %2401 = vmatpush1.bf16.msra.mxu0 0
      %2402 = vmatprep.subr.bf16.mxu0 0
      %2403 = vmatpush1.bf16.msra.mxu0 0
      %2404 = vmatprep.subr.bf16.mxu0 0
      %2405 = vmatpush1.bf16.msra.mxu0 0
      %2406 = vmatprep.subr.bf16.mxu0 0
      %2407 = vmatpush1.bf16.msra.mxu0 0
      %2408 = vmatprep.subr.bf16.mxu0 0
      %2409 = vmatpush1.bf16.msra.mxu0 0
      %2410 = vmatprep.subr.bf16.mxu0 0
      %2411 = vmatpush1.bf16.msra.mxu0 0
      %2412 = vmatprep.subr.bf16.mxu0 0
      %2413 = vmatpush1.bf16.msra.mxu0 0
      %2414 = vmatprep.subr.bf16.mxu0 0
      %2415 = vmatpush1.bf16.msra.mxu0 0
      %2416 = vmatprep.mubr.bf16.mxu0 0
      %2417 = vmatmul.mubr.bf16.gmra.mrb[0].mxu0 %v2275
      %v2418 = vpop.f32.mrb[0].mxu0
      %v2419 = vadd.f32 0.0, %v2418
      %v2420 = vpop.f32.mrb[0].mxu0
      %v2421 = vpop.f32.mrb[0].mxu0
      %v2422 = vadd.f32 0.0, %v2421
      %v2423 = vpop.f32.mrb[0].mxu0
      %2424 = vmatprep.mubr.bf16.mxu0 0
      %2425 = vmatmul.mubr.bf16.gmra.mrb[0].mxu0 %v2276
      %v2426 = vpop.f32.mrb[0].mxu0
      %v2427 = vadd.f32 0.0, %v2426
      %v2428 = vpop.f32.mrb[0].mxu0
      %v2429 = vpop.f32.mrb[0].mxu0
      %v2430 = vadd.f32 0.0, %v2429
      %v2431 = vpop.f32.mrb[0].mxu0
      %2432 = vdwg.mxu0
      %v2433 = vsel %vm2258, 1, 0
      %v2434 = vcvt.s32.f32 %v2433
      %v2435 = vpack.c.bf16 %v2434, %v2434
      %v2436 = vpack.c.bf16 %v2422, %v2419
      %v2437 = vpack.c.bf16 %v2430, %v2427
      %v2438 = vld [vmem:[%s39] sm:$0xf]
      %v2439 = vld [vmem:[%s39 + $0x4] sm:$0xf]
      %v2440 = vld [vmem:[%s39 + $0x8] sm:$0xf]
      %v2441 = vld [vmem:[%s39 + $0xc] sm:$0xf]
      %v2442 = vpack.c.bf16 %v2252, %v2251
      %v2447 = vunpack.c.l.b16 %v2438
      %v2448 = vunpack.c.l.b16 %v2439
      %v2449 = vunpack.c.l.b16 %v2440
      %v2450 = vunpack.c.l.b16 %v2441
      %v2451 = vpack.c.b16 %v2448, %v2447
      %v2452 = vpack.c.b16 %v2450, %v2449
      %v2456 = vsel %vm1941, %v2442, 0
      %2458 = vmatprep.subr.bf16.mxu0 0
      %2459 = vmatpush1.bf16.msra.mxu0 %v2451
      %2460 = vmatprep.subr.bf16.mxu0 0
      %2461 = vmatpush1.bf16.msra.mxu0 %v2452
      %2462 = vmatprep.subr.bf16.mxu0 0
      %2463 = vmatpush1.bf16.msra.mxu0 0
      %2464 = vmatprep.subr.bf16.mxu0 0
      %2465 = vmatpush1.bf16.msra.mxu0 0
      %2466 = vmatprep.subr.bf16.mxu0 0
      %2467 = vmatpush1.bf16.msra.mxu0 0
      %2468 = vmatprep.subr.bf16.mxu0 0
      %2469 = vmatpush1.bf16.msra.mxu0 0
      %2470 = vmatprep.subr.bf16.mxu0 0
      %2471 = vmatpush1.bf16.msra.mxu0 0
      %2472 = vmatprep.subr.bf16.mxu0 0
      %2473 = vmatpush1.bf16.msra.mxu0 0
      %2474 = vmatprep.subr.bf16.mxu0 0
      %2475 = vmatpush1.bf16.msra.mxu0 0
      %2476 = vmatprep.subr.bf16.mxu0 0
      %2477 = vmatpush1.bf16.msra.mxu0 0
      %2478 = vmatprep.subr.bf16.mxu0 0
      %2479 = vmatpush1.bf16.msra.mxu0 0
      %2480 = vmatprep.subr.bf16.mxu0 0
      %2481 = vmatpush1.bf16.msra.mxu0 0
      %2482 = vmatprep.subr.bf16.mxu0 0
      %2483 = vmatpush1.bf16.msra.mxu0 0
      %2484 = vmatprep.subr.bf16.mxu0 0
      %2485 = vmatpush1.bf16.msra.mxu0 0
      %2486 = vmatprep.subr.bf16.mxu0 0
      %2487 = vmatpush1.bf16.msra.mxu0 0
      %2488 = vmatprep.subr.bf16.mxu0 0
      %2489 = vmatpush1.bf16.msra.mxu0 0
      %2490 = vmatprep.mubr.bf16.mxu0 0
      %2491 = vmatmul.mubr.bf16.gmra.mrb[0].mxu0 %v2456
      %v2492 = vpop.f32.mrb[0].mxu0
      %v2493 = vadd.f32 0.0, %v2492
      %v2494 = vpop.f32.mrb[0].mxu0
      %v2495 = vpop.f32.mrb[0].mxu0
      %v2496 = vadd.f32 0.0, %v2495
      %v2497 = vpop.f32.mrb[0].mxu0
      %2498 = vdwg.mxu0
      %v2499 = vsel %vm2271, 1, 0
      %v2500 = vcvt.s32.f32 %v2499
      %v2501 = vpack.c.bf16 %v2500, %v2500
      %v2502 = vpack.c.bf16 %v2496, %v2493
      %v2504 = vsel %vm2138, %v2501, 0
      %2506 = vmatprep.subr.bf16.mxu0 0
      %2507 = vmatpush1.bf16.msra.mxu0 %v2502
      %2508 = vmatprep.subr.bf16.mxu0 0
      %2509 = vmatpush1.bf16.msra.mxu0 0
      %2510 = vmatprep.subr.bf16.mxu0 0
      %2511 = vmatpush1.bf16.msra.mxu0 0
      %2512 = vmatprep.subr.bf16.mxu0 0
      %2513 = vmatpush1.bf16.msra.mxu0 0
      %2514 = vmatprep.subr.bf16.mxu0 0
      %2515 = vmatpush1.bf16.msra.mxu0 0
      %2516 = vmatprep.subr.bf16.mxu0 0
      %2517 = vmatpush1.bf16.msra.mxu0 0
      %2518 = vmatprep.subr.bf16.mxu0 0
      %2519 = vmatpush1.bf16.msra.mxu0 0
      %2520 = vmatprep.subr.bf16.mxu0 0
      %2521 = vmatpush1.bf16.msra.mxu0 0
      %2522 = vmatprep.subr.bf16.mxu0 0
      %2523 = vmatpush1.bf16.msra.mxu0 0
      %2524 = vmatprep.subr.bf16.mxu0 0
      %2525 = vmatpush1.bf16.msra.mxu0 0
      %2526 = vmatprep.subr.bf16.mxu0 0
      %2527 = vmatpush1.bf16.msra.mxu0 0
      %2528 = vmatprep.subr.bf16.mxu0 0
      %2529 = vmatpush1.bf16.msra.mxu0 0
      %2530 = vmatprep.subr.bf16.mxu0 0
      %2531 = vmatpush1.bf16.msra.mxu0 0
      %2532 = vmatprep.subr.bf16.mxu0 0
      %2533 = vmatpush1.bf16.msra.mxu0 0
      %2534 = vmatprep.subr.bf16.mxu0 0
      %2535 = vmatpush1.bf16.msra.mxu0 0
      %2536 = vmatprep.subr.bf16.mxu0 0
      %2537 = vmatpush1.bf16.msra.mxu0 0
      %2538 = vmatprep.mubr.bf16.mxu0 0
      %2539 = vmatmul.mubr.bf16.gmra.mrb[0].mxu0 %v2504
      %v2540 = vpop.f32.mrb[0].mxu0
      %v2541 = vadd.f32 0.0, %v2540
      %v2542 = vpop.f32.mrb[0].mxu0
      %v2543 = vpop.f32.mrb[0].mxu0
      %v2544 = vpop.f32.mrb[0].mxu0
      %2545 = vdwg.mxu0
      %v2546 = vld [vmem:[%s1890] sm:$0xff]
      %v2547 = vld [vmem:[%s35] sm:$0x1]
      %2549 = vset.pattern.permute.xlu0 0
      %2550 = vperm.xlu0 %2549, %v2546
      %v2551 = vpop.permute.xlu0 %2550
      %v2554 = vlaneseq
      %v2555 = vshrl.u32 %v2554, 7
      %v2556 = vsub.s32 0, %v2555
      %v2557 = vrot.slane %v2547, %v2556
      %v2559 = vmul.f32 %v2551, %v2557
      %v2560 = vld [vmem:[%s1894] sm:$0xff]
      %v2561 = vld [vmem:[%s37] sm:$0x1]
      %2563 = vset.pattern.permute.xlu0 0
      %2564 = vperm.xlu0 %2563, %v2560
      %v2565 = vpop.permute.xlu0 %2564
      %v2568 = vlaneseq
      %v2569 = vshrl.u32 %v2568, 7
      %v2570 = vsub.s32 0, %v2569
      %v2571 = vrot.slane %v2561, %v2570
      %v2573 = vmul.f32 %v2565, %v2571
      %v2574 = vadd.f32 %v2559, %v2573
      %v2575 = vld [vmem:[%s1898] sm:$0xff]
      %v2576 = vld [vmem:[%s41] sm:$0x1]
      %2578 = vset.pattern.permute.xlu0 0
      %2579 = vperm.xlu0 %2578, %v2575
      %v2580 = vpop.permute.xlu0 %2579
      %v2583 = vlaneseq
      %v2584 = vshrl.u32 %v2583, 7
      %v2585 = vsub.s32 0, %v2584
      %v2586 = vrot.slane %v2576, %v2585
      %v2588 = vmul.f32 %v2580, %v2586
      %v2589 = vlaneseq
      %v2590 = vshrl.u32 %v2589, 7
      %v2591 = vsub.s32 0, %v2590
      %v2592 = vrot.slane %v2541, %v2591
      %v2594 = vsel %vm1941, %v2435, 0
      %2596 = vmatprep.subr.bf16.mxu0 0
      %2597 = vmatpush1.bf16.msra.mxu0 %v2436
      %2598 = vmatprep.subr.bf16.mxu0 0
      %2599 = vmatpush1.bf16.msra.mxu0 %v2437
      %2600 = vmatprep.subr.bf16.mxu0 0
      %2601 = vmatpush1.bf16.msra.mxu0 0
      %2602 = vmatprep.subr.bf16.mxu0 0
      %2603 = vmatpush1.bf16.msra.mxu0 0
      %2604 = vmatprep.subr.bf16.mxu0 0
      %2605 = vmatpush1.bf16.msra.mxu0 0
      %2606 = vmatprep.subr.bf16.mxu0 0
      %2607 = vmatpush1.bf16.msra.mxu0 0
      %2608 = vmatprep.subr.bf16.mxu0 0
      %2609 = vmatpush1.bf16.msra.mxu0 0
      %2610 = vmatprep.subr.bf16.mxu0 0
      %2611 = vmatpush1.bf16.msra.mxu0 0
      %2612 = vmatprep.subr.bf16.mxu0 0
      %2613 = vmatpush1.bf16.msra.mxu0 0
      %2614 = vmatprep.subr.bf16.mxu0 0
      %2615 = vmatpush1.bf16.msra.mxu0 0
      %2616 = vmatprep.subr.bf16.mxu0 0
      %2617 = vmatpush1.bf16.msra.mxu0 0
      %2618 = vmatprep.subr.bf16.mxu0 0
      %2619 = vmatpush1.bf16.msra.mxu0 0
      %2620 = vmatprep.subr.bf16.mxu0 0
      %2621 = vmatpush1.bf16.msra.mxu0 0
      %2622 = vmatprep.subr.bf16.mxu0 0
      %2623 = vmatpush1.bf16.msra.mxu0 0
      %2624 = vmatprep.subr.bf16.mxu0 0
      %2625 = vmatpush1.bf16.msra.mxu0 0
      %2626 = vmatprep.subr.bf16.mxu0 0
      %2627 = vmatpush1.bf16.msra.mxu0 0
      %2628 = vmatprep.mubr.bf16.mxu0 0
      %2629 = vmatmul.mubr.bf16.gmra.mrb[0].mxu0 %v2594
      %v2630 = vpop.f32.mrb[0].mxu0
      %v2631 = vadd.f32 %v2592, %v2630
      %v2632 = vpop.f32.mrb[0].mxu0
      %v2633 = vpop.f32.mrb[0].mxu0
      %v2634 = vpop.f32.mrb[0].mxu0
      %2635 = vdwg.mxu0
      %v2636 = vadd.f32 %v2631, %v2574
      %v2637 = vadd.f32 %v2636, %v2588
      %v2638 = vld [vmem:[%s43] sm:$0x1]
      %v2640 = vlaneseq
      %v2641 = vshrl.u32 %v2640, 7
      %v2642 = vsub.s32 0, %v2641
      %v2643 = vrot.slane %v2638, %v2642
      %v2645 = vadd.f32 %v2637, %v2643
      %vm2646 = vcmp.ne.s32.totalorder %v1909, 0
      %v2647 = vsel %vm2646, 0.0, -1e+09
      %v2648 = vlaneseq
      %v2649 = vshrl.u32 %v2648, 7
      %vm2650 = vcmp.ge.s32.totalorder %v2649, %v2254
      %vm2651 = vcmp.ne.s32.totalorder %v1910, 0
      %v2652 = vsel %vm2651, 1, 0
      %2653 = vset.pattern.permute.xlu0 0
      %2654 = vperm.xlu0 %2653, %v2652
      %v2655 = vpop.permute.xlu0 %2654
      %vm2656 = vcmp.eq.s32.totalorder %v2655, 1
      %vm2657 = vmand %vm2650, %vm2656
      %v2658 = vsel %vm2657, 0.0, -1e+09
      %v2659 = vld [vmem:[%s45] sm:$0x1]
      %v2660 = vld [vmem:[%s47] sm:$0x1]
      %2661 = vadd.xlane.f32.xlu0 %v2645
      %v2662 = vpop.xlane.xlu0 %2661
      %v2663 = vrcp.pop 128.0
      %v2664 = vmul.f32 %v2662, %v2663
      %v2665 = vsub.f32 %v2645, %v2664
      %v2666 = vmul.f32 %v2665, %v2665
      %2667 = vadd.xlane.f32.xlu0 %v2666
      %v2668 = vpop.xlane.xlu0 %2667
      %v2669 = vmul.f32 %v2668, %v2663
      %v2670 = vadd.f32 %v2669, 1e-05
      %v2671 = vrsqrt.pop %v2670
      %v2672 = vmul.f32 %v2665, %v2671
      %v2674 = vlaneseq
      %v2675 = vshrl.u32 %v2674, 7
      %v2676 = vsub.s32 0, %v2675
      %v2677 = vrot.slane %v2659, %v2676
      %v2679 = vmul.f32 %v2672, %v2677
      %v2681 = vlaneseq
      %v2682 = vshrl.u32 %v2681, 7
      %v2683 = vsub.s32 0, %v2682
      %v2684 = vrot.slane %v2660, %v2683
      %v2686 = vadd.f32 %v2679, %v2684
      %v2687 = vld [vmem:[%s49] sm:$0xff]
      %v2688 = vld [vmem:[%s49 + $0x8] sm:$0xf]
      %v2689 = vld [vmem:[%s49 + $0xc] sm:$0xff]
      %v2690 = vld [vmem:[%s49 + $0x14] sm:$0xf]
      %v2691 = vld [vmem:[%s49 + $0x18] sm:$0xff]
      %v2692 = vld [vmem:[%s49 + $0x20] sm:$0xf]
      %v2693 = vld [vmem:[%s49 + $0x24] sm:$0xff]
      %v2694 = vld [vmem:[%s49 + $0x2c] sm:$0xf]
      %v2695 = vld [vmem:[%s49 + $0x30] sm:$0xff]
      %v2696 = vld [vmem:[%s49 + $0x38] sm:$0xf]
      %v2697 = vld [vmem:[%s49 + $0x3c] sm:$0xff]
      %v2698 = vld [vmem:[%s49 + $0x44] sm:$0xf]
      %v2699 = vld [vmem:[%s49 + $0x48] sm:$0xff]
      %v2700 = vld [vmem:[%s49 + $0x50] sm:$0xf]
      %v2701 = vld [vmem:[%s49 + $0x54] sm:$0xff]
      %v2702 = vld [vmem:[%s49 + $0x5c] sm:$0xf]
      %v2703 = vld [vmem:[%s49 + $0x60] sm:$0xff]
      %v2704 = vld [vmem:[%s49 + $0x68] sm:$0xf]
      %v2705 = vld [vmem:[%s49 + $0x6c] sm:$0xff]
      %v2706 = vld [vmem:[%s49 + $0x74] sm:$0xf]
      %v2707 = vld [vmem:[%s49 + $0x78] sm:$0xff]
      %v2708 = vld [vmem:[%s49 + $0x80] sm:$0xf]
      %v2709 = vld [vmem:[%s49 + $0x84] sm:$0xff]
      %v2710 = vld [vmem:[%s49 + $0x8c] sm:$0xf]
      %v2711 = vld [vmem:[%s49 + $0x90] sm:$0xff]
      %v2712 = vld [vmem:[%s49 + $0x98] sm:$0xf]
      %v2713 = vld [vmem:[%s49 + $0x9c] sm:$0xff]
      %v2714 = vld [vmem:[%s49 + $0xa4] sm:$0xf]
      %v2715 = vld [vmem:[%s49 + $0xa8] sm:$0xff]
      %v2716 = vld [vmem:[%s49 + $0xb0] sm:$0xf]
      %v2717 = vld [vmem:[%s49 + $0xb4] sm:$0xff]
      %v2718 = vld [vmem:[%s49 + $0xbc] sm:$0xf]
      %v2719 = vld [vmem:[%s51] sm:$0x7]
      %v2720 = vld [vmem:[%s53] sm:$0xf]
      %v2721 = vld [vmem:[%s53 + $0x4] sm:$0xf]
      %v2722 = vld [vmem:[%s53 + $0x8] sm:$0xf]
      %v2723 = vld [vmem:[%s53 + $0xc] sm:$0xf]
      %v2724 = vld [vmem:[%s53 + $0x10] sm:$0xf]
      %v2725 = vld [vmem:[%s53 + $0x14] sm:$0xf]
      %v2726 = vld [vmem:[%s53 + $0x18] sm:$0xf]
      %v2727 = vld [vmem:[%s53 + $0x1c] sm:$0xf]
      %v2728 = vld [vmem:[%s53 + $0x20] sm:$0xf]
      %v2729 = vld [vmem:[%s53 + $0x24] sm:$0xf]
      %v2730 = vld [vmem:[%s53 + $0x28] sm:$0xf]
      %v2731 = vld [vmem:[%s53 + $0x2c] sm:$0xf]
      %v2732 = vld [vmem:[%s53 + $0x30] sm:$0xf]
      %v2733 = vld [vmem:[%s53 + $0x34] sm:$0xf]
      %v2734 = vld [vmem:[%s53 + $0x38] sm:$0xf]
      %v2735 = vld [vmem:[%s53 + $0x3c] sm:$0xf]
      %v2736 = vld [vmem:[%s55] sm:$0x1]
      %v2737 = vpack.c.bf16 %v2686, %v2686
      %v2739 = vlaneseq
      %v2740 = vshrl.u32 %v2739, 7
      %v2741 = vsub.s32 0, %v2740
      %v2742 = vrot.slane %v2719, %v2741
      %v2743 = vlaneseq
      %v2744 = vshrl.u32 %v2743, 7
      %v2745 = vsub.s32 1, %v2744
      %v2746 = vrot.slane %v2719, %v2745
      %v2747 = vlaneseq
      %v2748 = vshrl.u32 %v2747, 7
      %v2749 = vsub.s32 2, %v2748
      %v2750 = vrot.slane %v2719, %v2749
      %v2786 = vunpack.c.l.b16 %v2687
      %v2787 = vunpack.c.h.b16 %v2687
      %v2788 = vunpack.c.l.b16 %v2688
      %v2789 = vunpack.c.l.b16 %v2689
      %v2790 = vunpack.c.h.b16 %v2689
      %v2791 = vunpack.c.l.b16 %v2690
      %v2792 = vunpack.c.l.b16 %v2691
      %v2793 = vunpack.c.h.b16 %v2691
      %v2794 = vunpack.c.l.b16 %v2692
      %v2795 = vunpack.c.l.b16 %v2693
      %v2796 = vunpack.c.h.b16 %v2693
      %v2797 = vunpack.c.l.b16 %v2694
      %v2798 = vunpack.c.l.b16 %v2695
      %v2799 = vunpack.c.h.b16 %v2695
      %v2800 = vunpack.c.l.b16 %v2696
      %v2801 = vunpack.c.l.b16 %v2697
      %v2802 = vunpack.c.h.b16 %v2697
      %v2803 = vunpack.c.l.b16 %v2698
      %v2804 = vunpack.c.l.b16 %v2699
      %v2805 = vunpack.c.h.b16 %v2699
      %v2806 = vunpack.c.l.b16 %v2700
      %v2807 = vunpack.c.l.b16 %v2701
      %v2808 = vunpack.c.h.b16 %v2701
      %v2809 = vunpack.c.l.b16 %v2702
      %v2810 = vunpack.c.l.b16 %v2703
      %v2811 = vunpack.c.h.b16 %v2703
      %v2812 = vunpack.c.l.b16 %v2704
      %v2813 = vunpack.c.l.b16 %v2705
      %v2814 = vunpack.c.h.b16 %v2705
      %v2815 = vunpack.c.l.b16 %v2706
      %v2816 = vunpack.c.l.b16 %v2707
      %v2817 = vunpack.c.h.b16 %v2707
      %v2818 = vunpack.c.l.b16 %v2708
      %v2819 = vunpack.c.l.b16 %v2709
      %v2820 = vunpack.c.h.b16 %v2709
      %v2821 = vunpack.c.l.b16 %v2710
      %v2822 = vunpack.c.l.b16 %v2711
      %v2823 = vunpack.c.h.b16 %v2711
      %v2824 = vunpack.c.l.b16 %v2712
      %v2825 = vunpack.c.l.b16 %v2713
      %v2826 = vunpack.c.h.b16 %v2713
      %v2827 = vunpack.c.l.b16 %v2714
      %v2828 = vunpack.c.l.b16 %v2715
      %v2829 = vunpack.c.h.b16 %v2715
      %v2830 = vunpack.c.l.b16 %v2716
      %v2831 = vunpack.c.l.b16 %v2717
      %v2832 = vunpack.c.h.b16 %v2717
      %v2833 = vunpack.c.l.b16 %v2718
      %v2834 = vpack.c.b16 %v2789, %v2786
      %v2835 = vpack.c.b16 %v2790, %v2787
      %v2836 = vpack.c.b16 %v2791, %v2788
      %v2837 = vpack.c.b16 %v2795, %v2792
      %v2838 = vpack.c.b16 %v2796, %v2793
      %v2839 = vpack.c.b16 %v2797, %v2794
      %v2840 = vpack.c.b16 %v2801, %v2798
      %v2841 = vpack.c.b16 %v2802, %v2799
      %v2842 = vpack.c.b16 %v2803, %v2800
      %v2843 = vpack.c.b16 %v2807, %v2804
      %v2844 = vpack.c.b16 %v2808, %v2805
      %v2845 = vpack.c.b16 %v2809, %v2806
      %v2846 = vpack.c.b16 %v2813, %v2810
      %v2847 = vpack.c.b16 %v2814, %v2811
      %v2848 = vpack.c.b16 %v2815, %v2812
      %v2849 = vpack.c.b16 %v2819, %v2816
      %v2850 = vpack.c.b16 %v2820, %v2817
      %v2851 = vpack.c.b16 %v2821, %v2818
      %v2852 = vpack.c.b16 %v2825, %v2822
      %v2853 = vpack.c.b16 %v2826, %v2823
      %v2854 = vpack.c.b16 %v2827, %v2824
      %v2855 = vpack.c.b16 %v2831, %v2828
      %v2856 = vpack.c.b16 %v2832, %v2829
      %v2857 = vpack.c.b16 %v2833, %v2830
      %2882 = vmatprep.subr.bf16.mxu0 %v2835
      %2883 = vmatpush1.bf16.msra.mxu0 %v2834
      %2884 = vmatprep.subr.bf16.mxu0 %v2838
      %2885 = vmatpush1.bf16.msra.mxu0 %v2837
      %2886 = vmatprep.subr.bf16.mxu0 %v2841
      %2887 = vmatpush1.bf16.msra.mxu0 %v2840
      %2888 = vmatprep.subr.bf16.mxu0 %v2844
      %2889 = vmatpush1.bf16.msra.mxu0 %v2843
      %2890 = vmatprep.subr.bf16.mxu0 %v2847
      %2891 = vmatpush1.bf16.msra.mxu0 %v2846
      %2892 = vmatprep.subr.bf16.mxu0 %v2850
      %2893 = vmatpush1.bf16.msra.mxu0 %v2849
      %2894 = vmatprep.subr.bf16.mxu0 %v2853
      %2895 = vmatpush1.bf16.msra.mxu0 %v2852
      %2896 = vmatprep.subr.bf16.mxu0 %v2856
      %2897 = vmatpush1.bf16.msra.mxu0 %v2855
      %2898 = vmatprep.subr.bf16.mxu0 0
      %2899 = vmatpush1.bf16.msra.mxu0 0
      %2900 = vmatprep.subr.bf16.mxu0 0
      %2901 = vmatpush1.bf16.msra.mxu0 0
      %2902 = vmatprep.subr.bf16.mxu0 0
      %2903 = vmatpush1.bf16.msra.mxu0 0
      %2904 = vmatprep.subr.bf16.mxu0 0
      %2905 = vmatpush1.bf16.msra.mxu0 0
      %2906 = vmatprep.subr.bf16.mxu0 0
      %2907 = vmatpush1.bf16.msra.mxu0 0
      %2908 = vmatprep.subr.bf16.mxu0 0
      %2909 = vmatpush1.bf16.msra.mxu0 0
      %2910 = vmatprep.subr.bf16.mxu0 0
      %2911 = vmatpush1.bf16.msra.mxu0 0
      %2912 = vmatprep.subr.bf16.mxu0 0
      %2913 = vmatpush1.bf16.msra.mxu0 0
      %2914 = vmatprep.mubr.bf16.mxu0 0
      %2915 = vmatmul.mubr.bf16.gmra.mrb[0].mxu0 %v2737
      %v2916 = vpop.f32.mrb[0].mxu0
      %v2917 = vadd.f32 %v2742, %v2916
      %v2918 = vpop.f32.mrb[0].mxu0
      %v2919 = vadd.f32 %v2746, %v2918
      %v2920 = vpop.f32.mrb[0].mxu0
      %v2921 = vpop.f32.mrb[0].mxu0
      %2922 = vdwg.mxu0
      %2923 = vmatprep.subr.bf16.mxu0 0
      %2924 = vmatpush1.bf16.msra.mxu0 %v2836
      %2925 = vmatprep.subr.bf16.mxu0 0
      %2926 = vmatpush1.bf16.msra.mxu0 %v2839
      %2927 = vmatprep.subr.bf16.mxu0 0
      %2928 = vmatpush1.bf16.msra.mxu0 %v2842
      %2929 = vmatprep.subr.bf16.mxu0 0
      %2930 = vmatpush1.bf16.msra.mxu0 %v2845
      %2931 = vmatprep.subr.bf16.mxu0 0
      %2932 = vmatpush1.bf16.msra.mxu0 %v2848
      %2933 = vmatprep.subr.bf16.mxu0 0
      %2934 = vmatpush1.bf16.msra.mxu0 %v2851
      %2935 = vmatprep.subr.bf16.mxu0 0
      %2936 = vmatpush1.bf16.msra.mxu0 %v2854
      %2937 = vmatprep.subr.bf16.mxu0 0
      %2938 = vmatpush1.bf16.msra.mxu0 %v2857
      %2939 = vmatprep.subr.bf16.mxu0 0
      %2940 = vmatpush1.bf16.msra.mxu0 0
      %2941 = vmatprep.subr.bf16.mxu0 0
      %2942 = vmatpush1.bf16.msra.mxu0 0
      %2943 = vmatprep.subr.bf16.mxu0 0
      %2944 = vmatpush1.bf16.msra.mxu0 0
      %2945 = vmatprep.subr.bf16.mxu0 0
      %2946 = vmatpush1.bf16.msra.mxu0 0
      %2947 = vmatprep.subr.bf16.mxu0 0
      %2948 = vmatpush1.bf16.msra.mxu0 0
      %2949 = vmatprep.subr.bf16.mxu0 0
      %2950 = vmatpush1.bf16.msra.mxu0 0
      %2951 = vmatprep.subr.bf16.mxu0 0
      %2952 = vmatpush1.bf16.msra.mxu0 0
      %2953 = vmatprep.subr.bf16.mxu0 0
      %2954 = vmatpush1.bf16.msra.mxu0 0
      %2955 = vmatprep.mubr.bf16.mxu0 0
      %2956 = vmatmul.mubr.bf16.gmra.mrb[0].mxu0 %v2737
      %v2957 = vpop.f32.mrb[0].mxu0
      %v2958 = vadd.f32 %v2750, %v2957
      %v2959 = vpop.f32.mrb[0].mxu0
      %v2960 = vpop.f32.mrb[0].mxu0
      %v2961 = vpop.f32.mrb[0].mxu0
      %2962 = vdwg.mxu0
      %2964 = vrot.lane.b32.xlu0 %v2917, 96
      %v2965 = vpop.permute.xlu0 %2964
      %2967 = vrot.lane.b32.xlu0 %v2917, 64
      %v2968 = vpop.permute.xlu0 %2967
      %2970 = vrot.lane.b32.xlu0 %v2917, 32
      %v2971 = vpop.permute.xlu0 %2970
      %2974 = vrot.lane.b32.xlu0 %v2919, 96
      %v2975 = vpop.permute.xlu0 %2974
      %2977 = vrot.lane.b32.xlu0 %v2919, 64
      %v2978 = vpop.permute.xlu0 %2977
      %2980 = vrot.lane.b32.xlu0 %v2919, 32
      %v2981 = vpop.permute.xlu0 %2980
      %2984 = vrot.lane.b32.xlu0 %v2958, 96
      %v2985 = vpop.permute.xlu0 %2984
      %2987 = vrot.lane.b32.xlu0 %v2958, 64
      %v2988 = vpop.permute.xlu0 %2987
      %2990 = vrot.lane.b32.xlu0 %v2958, 32
      %v2991 = vpop.permute.xlu0 %2990
      %v2993 = vpack.c.bf16 %v2917, %v2917
      %v2994 = vpack.c.bf16 %v2965, %v2965
      %v2995 = vpack.c.bf16 %v2968, %v2968
      %v2996 = vpack.c.bf16 %v2971, %v2971
      %v2997 = vpack.c.bf16 %v2919, %v2919
      %v2998 = vpack.c.bf16 %v2975, %v2975
      %v2999 = vpack.c.bf16 %v2978, %v2978
      %v3000 = vpack.c.bf16 %v2981, %v2981
      %v3002 = vsel %vm1941, %v2993, 0
      %v3005 = vsel %vm1941, %v2997, 0
      %3007 = vmatprep.subr.bf16.mxu0 0
      %3008 = vmatpush1.bf16.xpose.msra.mxu0 %v3005
      %3009 = vmatprep.subr.bf16.mxu0 0
      %3010 = vmatpush1.bf16.xpose.msra.mxu0 0
      %3011 = vmatprep.subr.bf16.mxu0 0
      %3012 = vmatpush1.bf16.xpose.msra.mxu0 0
      %3013 = vmatprep.subr.bf16.mxu0 0
      %3014 = vmatpush1.bf16.xpose.msra.mxu0 0
      %3015 = vmatprep.subr.bf16.mxu0 0
      %3016 = vmatpush1.bf16.xpose.msra.mxu0 0
      %3017 = vmatprep.subr.bf16.mxu0 0
      %3018 = vmatpush1.bf16.xpose.msra.mxu0 0
      %3019 = vmatprep.subr.bf16.mxu0 0
      %3020 = vmatpush1.bf16.xpose.msra.mxu0 0
      %3021 = vmatprep.subr.bf16.mxu0 0
      %3022 = vmatpush1.bf16.xpose.msra.mxu0 0
      %3023 = vmatprep.subr.bf16.mxu0 0
      %3024 = vmatpush1.bf16.xpose.msra.mxu0 0
      %3025 = vmatprep.subr.bf16.mxu0 0
      %3026 = vmatpush1.bf16.xpose.msra.mxu0 0
      %3027 = vmatprep.subr.bf16.mxu0 0
      %3028 = vmatpush1.bf16.xpose.msra.mxu0 0
      %3029 = vmatprep.subr.bf16.mxu0 0
      %3030 = vmatpush1.bf16.xpose.msra.mxu0 0
      %3031 = vmatprep.subr.bf16.mxu0 0
      %3032 = vmatpush1.bf16.xpose.msra.mxu0 0
      %3033 = vmatprep.subr.bf16.mxu0 0
      %3034 = vmatpush1.bf16.xpose.msra.mxu0 0
      %3035 = vmatprep.subr.bf16.mxu0 0
      %3036 = vmatpush1.bf16.xpose.msra.mxu0 0
      %3037 = vmatprep.subr.bf16.mxu0 0
      %3038 = vmatpush1.bf16.xpose.msra.mxu0 0
      %3039 = vmatprep.mubr.bf16.mxu0 0
      %3040 = vmatmul.mubr.bf16.gmra.mrb[0].mxu0 %v3002
      %v3041 = vpop.f32.mrb[0].mxu0
      %v3042 = vadd.f32 0.0, %v3041
      %v3043 = vpop.f32.mrb[0].mxu0
      %v3044 = vpop.f32.mrb[0].mxu0
      %v3045 = vpop.f32.mrb[0].mxu0
      %3046 = vdwg.mxu0
      %v3048 = vsel %vm1941, %v2994, 0
      %v3051 = vsel %vm1941, %v2998, 0
      %3053 = vmatprep.subr.bf16.mxu0 0
      %3054 = vmatpush1.bf16.xpose.msra.mxu0 %v3051
      %3055 = vmatprep.subr.bf16.mxu0 0
      %3056 = vmatpush1.bf16.xpose.msra.mxu0 0
      %3057 = vmatprep.subr.bf16.mxu0 0
      %3058 = vmatpush1.bf16.xpose.msra.mxu0 0
      %3059 = vmatprep.subr.bf16.mxu0 0
      %3060 = vmatpush1.bf16.xpose.msra.mxu0 0
      %3061 = vmatprep.subr.bf16.mxu0 0
      %3062 = vmatpush1.bf16.xpose.msra.mxu0 0
      %3063 = vmatprep.subr.bf16.mxu0 0
      %3064 = vmatpush1.bf16.xpose.msra.mxu0 0
      %3065 = vmatprep.subr.bf16.mxu0 0
      %3066 = vmatpush1.bf16.xpose.msra.mxu0 0
      %3067 = vmatprep.subr.bf16.mxu0 0
      %3068 = vmatpush1.bf16.xpose.msra.mxu0 0
      %3069 = vmatprep.subr.bf16.mxu0 0
      %3070 = vmatpush1.bf16.xpose.msra.mxu0 0
      %3071 = vmatprep.subr.bf16.mxu0 0
      %3072 = vmatpush1.bf16.xpose.msra.mxu0 0
      %3073 = vmatprep.subr.bf16.mxu0 0
      %3074 = vmatpush1.bf16.xpose.msra.mxu0 0
      %3075 = vmatprep.subr.bf16.mxu0 0
      %3076 = vmatpush1.bf16.xpose.msra.mxu0 0
      %3077 = vmatprep.subr.bf16.mxu0 0
      %3078 = vmatpush1.bf16.xpose.msra.mxu0 0
      %3079 = vmatprep.subr.bf16.mxu0 0
      %3080 = vmatpush1.bf16.xpose.msra.mxu0 0
      %3081 = vmatprep.subr.bf16.mxu0 0
      %3082 = vmatpush1.bf16.xpose.msra.mxu0 0
      %3083 = vmatprep.subr.bf16.mxu0 0
      %3084 = vmatpush1.bf16.xpose.msra.mxu0 0
      %3085 = vmatprep.mubr.bf16.mxu0 0
      %3086 = vmatmul.mubr.bf16.gmra.mrb[0].mxu0 %v3048
      %v3087 = vpop.f32.mrb[0].mxu0
      %v3088 = vadd.f32 0.0, %v3087
      %v3089 = vpop.f32.mrb[0].mxu0
      %v3090 = vpop.f32.mrb[0].mxu0
      %v3091 = vpop.f32.mrb[0].mxu0
      %3092 = vdwg.mxu0
      %v3094 = vsel %vm1941, %v2995, 0
      %v3097 = vsel %vm1941, %v2999, 0
      %3099 = vmatprep.subr.bf16.mxu0 0
      %3100 = vmatpush1.bf16.xpose.msra.mxu0 %v3097
      %3101 = vmatprep.subr.bf16.mxu0 0
      %3102 = vmatpush1.bf16.xpose.msra.mxu0 0
      %3103 = vmatprep.subr.bf16.mxu0 0
      %3104 = vmatpush1.bf16.xpose.msra.mxu0 0
      %3105 = vmatprep.subr.bf16.mxu0 0
      %3106 = vmatpush1.bf16.xpose.msra.mxu0 0
      %3107 = vmatprep.subr.bf16.mxu0 0
      %3108 = vmatpush1.bf16.xpose.msra.mxu0 0
      %3109 = vmatprep.subr.bf16.mxu0 0
      %3110 = vmatpush1.bf16.xpose.msra.mxu0 0
      %3111 = vmatprep.subr.bf16.mxu0 0
      %3112 = vmatpush1.bf16.xpose.msra.mxu0 0
      %3113 = vmatprep.subr.bf16.mxu0 0
      %3114 = vmatpush1.bf16.xpose.msra.mxu0 0
      %3115 = vmatprep.subr.bf16.mxu0 0
      %3116 = vmatpush1.bf16.xpose.msra.mxu0 0
      %3117 = vmatprep.subr.bf16.mxu0 0
      %3118 = vmatpush1.bf16.xpose.msra.mxu0 0
      %3119 = vmatprep.subr.bf16.mxu0 0
      %3120 = vmatpush1.bf16.xpose.msra.mxu0 0
      %3121 = vmatprep.subr.bf16.mxu0 0
      %3122 = vmatpush1.bf16.xpose.msra.mxu0 0
      %3123 = vmatprep.subr.bf16.mxu0 0
      %3124 = vmatpush1.bf16.xpose.msra.mxu0 0
      %3125 = vmatprep.subr.bf16.mxu0 0
      %3126 = vmatpush1.bf16.xpose.msra.mxu0 0
      %3127 = vmatprep.subr.bf16.mxu0 0
      %3128 = vmatpush1.bf16.xpose.msra.mxu0 0
      %3129 = vmatprep.subr.bf16.mxu0 0
      %3130 = vmatpush1.bf16.xpose.msra.mxu0 0
      %3131 = vmatprep.mubr.bf16.mxu0 0
      %3132 = vmatmul.mubr.bf16.gmra.mrb[0].mxu0 %v3094
      %v3133 = vpop.f32.mrb[0].mxu0
      %v3134 = vadd.f32 0.0, %v3133
      %v3135 = vpop.f32.mrb[0].mxu0
      %v3136 = vpop.f32.mrb[0].mxu0
      %v3137 = vpop.f32.mrb[0].mxu0
      %3138 = vdwg.mxu0
      %v3140 = vsel %vm1941, %v2996, 0
      %v3143 = vsel %vm1941, %v3000, 0
      %3145 = vmatprep.subr.bf16.mxu0 0
      %3146 = vmatpush1.bf16.xpose.msra.mxu0 %v3143
      %3147 = vmatprep.subr.bf16.mxu0 0
      %3148 = vmatpush1.bf16.xpose.msra.mxu0 0
      %3149 = vmatprep.subr.bf16.mxu0 0
      %3150 = vmatpush1.bf16.xpose.msra.mxu0 0
      %3151 = vmatprep.subr.bf16.mxu0 0
      %3152 = vmatpush1.bf16.xpose.msra.mxu0 0
      %3153 = vmatprep.subr.bf16.mxu0 0
      %3154 = vmatpush1.bf16.xpose.msra.mxu0 0
      %3155 = vmatprep.subr.bf16.mxu0 0
      %3156 = vmatpush1.bf16.xpose.msra.mxu0 0
      %3157 = vmatprep.subr.bf16.mxu0 0
      %3158 = vmatpush1.bf16.xpose.msra.mxu0 0
      %3159 = vmatprep.subr.bf16.mxu0 0
      %3160 = vmatpush1.bf16.xpose.msra.mxu0 0
      %3161 = vmatprep.subr.bf16.mxu0 0
      %3162 = vmatpush1.bf16.xpose.msra.mxu0 0
      %3163 = vmatprep.subr.bf16.mxu0 0
      %3164 = vmatpush1.bf16.xpose.msra.mxu0 0
      %3165 = vmatprep.subr.bf16.mxu0 0
      %3166 = vmatpush1.bf16.xpose.msra.mxu0 0
      %3167 = vmatprep.subr.bf16.mxu0 0
      %3168 = vmatpush1.bf16.xpose.msra.mxu0 0
      %3169 = vmatprep.subr.bf16.mxu0 0
      %3170 = vmatpush1.bf16.xpose.msra.mxu0 0
      %3171 = vmatprep.subr.bf16.mxu0 0
      %3172 = vmatpush1.bf16.xpose.msra.mxu0 0
      %3173 = vmatprep.subr.bf16.mxu0 0
      %3174 = vmatpush1.bf16.xpose.msra.mxu0 0
      %3175 = vmatprep.subr.bf16.mxu0 0
      %3176 = vmatpush1.bf16.xpose.msra.mxu0 0
      %3177 = vmatprep.mubr.bf16.mxu0 0
      %3178 = vmatmul.mubr.bf16.gmra.mrb[0].mxu0 %v3140
      %v3179 = vpop.f32.mrb[0].mxu0
      %v3180 = vadd.f32 0.0, %v3179
      %v3181 = vpop.f32.mrb[0].mxu0
      %v3182 = vpop.f32.mrb[0].mxu0
      %v3183 = vpop.f32.mrb[0].mxu0
      %3184 = vdwg.mxu0
      %v3185 = vmul.f32 %v3042, 0.17677669
      %v3186 = vmul.f32 %v3088, 0.17677669
      %v3187 = vmul.f32 %v3134, 0.17677669
      %v3188 = vmul.f32 %v3180, 0.17677669
      %v3190 = vlaneseq
      %v3191 = vshrl.u32 %v3190, 7
      %v3192 = vsub.s32 0, %v3191
      %v3193 = vrot.slane %v2647, %v3192
      %v3195 = vadd.f32 %v3185, %v3193
      %v3196 = vadd.f32 %v3186, %v3193
      %v3197 = vadd.f32 %v3187, %v3193
      %v3198 = vadd.f32 %v3188, %v3193
      %vm3199 = vcmask 64512
      %v3200 = vsel %vm3199, %v3195, -inf
      %3201 = vmax.xlane.f32.xlu0 %v3200
      %v3202 = vpop.xlane.xlu0 %3201
      %v3203 = vsel %vm3199, %v3196, -inf
      %3204 = vmax.xlane.f32.xlu0 %v3203
      %v3205 = vpop.xlane.xlu0 %3204
      %v3206 = vsel %vm3199, %v3197, -inf
      %3207 = vmax.xlane.f32.xlu0 %v3206
      %v3208 = vpop.xlane.xlu0 %3207
      %v3209 = vsel %vm3199, %v3198, -inf
      %3210 = vmax.xlane.f32.xlu0 %v3209
      %v3211 = vpop.xlane.xlu0 %3210
      %v3212 = vsub.f32 %v3195, %v3202
      %v3213 = vsub.f32 %v3196, %v3205
      %v3214 = vsub.f32 %v3197, %v3208
      %v3215 = vsub.f32 %v3198, %v3211
      %v3216 = vmul.f32 %v3212, 1.442695
      %v3217 = vpow.pop %v3216
      %v3218 = vmul.f32 %v3213, 1.442695
      %v3219 = vpow.pop %v3218
      %v3220 = vmul.f32 %v3214, 1.442695
      %v3221 = vpow.pop %v3220
      %v3222 = vmul.f32 %v3215, 1.442695
      %v3223 = vpow.pop %v3222
      %v3224 = vsel %vm3199, %v3217, 0.0
      %3225 = vadd.xlane.f32.xlu0 %v3224
      %v3226 = vpop.xlane.xlu0 %3225
      %v3227 = vsel %vm3199, %v3219, 0.0
      %3228 = vadd.xlane.f32.xlu0 %v3227
      %v3229 = vpop.xlane.xlu0 %3228
      %v3230 = vsel %vm3199, %v3221, 0.0
      %3231 = vadd.xlane.f32.xlu0 %v3230
      %v3232 = vpop.xlane.xlu0 %3231
      %v3233 = vsel %vm3199, %v3223, 0.0
      %3234 = vadd.xlane.f32.xlu0 %v3233
      %v3235 = vpop.xlane.xlu0 %3234
      %v3236 = vrcp.pop %v3226
      %v3237 = vrcp.pop %v3229
      %v3238 = vrcp.pop %v3232
      %v3239 = vrcp.pop %v3235
      %v3240 = vmul.f32 %v3217, %v3236
      %v3241 = vmul.f32 %v3219, %v3237
      %v3242 = vmul.f32 %v3221, %v3238
      %v3243 = vmul.f32 %v3223, %v3239
      %v3244 = vpack.c.bf16 %v3240, %v3240
      %v3245 = vpack.c.bf16 %v3241, %v3241
      %v3246 = vpack.c.bf16 %v3242, %v3242
      %v3247 = vpack.c.bf16 %v3243, %v3243
      %v3248 = vpack.c.bf16 %v2958, %v2958
      %v3249 = vpack.c.bf16 %v2985, %v2985
      %v3250 = vpack.c.bf16 %v2988, %v2988
      %v3251 = vpack.c.bf16 %v2991, %v2991
      %v3253 = vsel %vm3199, %v3244, 0
      %vm3255 = vcmask 1043456
      %v3257 = vsel %vm3255, %v3248, 0
      %3259 = vmatprep.subr.bf16.mxu0 0
      %3260 = vmatpush1.bf16.msra.mxu0 %v3257
      %3261 = vmatprep.subr.bf16.mxu0 0
      %3262 = vmatpush1.bf16.msra.mxu0 0
      %3263 = vmatprep.subr.bf16.mxu0 0
      %3264 = vmatpush1.bf16.msra.mxu0 0
      %3265 = vmatprep.subr.bf16.mxu0 0
      %3266 = vmatpush1.bf16.msra.mxu0 0
      %3267 = vmatprep.subr.bf16.mxu0 0
      %3268 = vmatpush1.bf16.msra.mxu0 0
      %3269 = vmatprep.subr.bf16.mxu0 0
      %3270 = vmatpush1.bf16.msra.mxu0 0
      %3271 = vmatprep.subr.bf16.mxu0 0
      %3272 = vmatpush1.bf16.msra.mxu0 0
      %3273 = vmatprep.subr.bf16.mxu0 0
      %3274 = vmatpush1.bf16.msra.mxu0 0
      %3275 = vmatprep.subr.bf16.mxu0 0
      %3276 = vmatpush1.bf16.msra.mxu0 0
      %3277 = vmatprep.subr.bf16.mxu0 0
      %3278 = vmatpush1.bf16.msra.mxu0 0
      %3279 = vmatprep.subr.bf16.mxu0 0
      %3280 = vmatpush1.bf16.msra.mxu0 0
      %3281 = vmatprep.subr.bf16.mxu0 0
      %3282 = vmatpush1.bf16.msra.mxu0 0
      %3283 = vmatprep.subr.bf16.mxu0 0
      %3284 = vmatpush1.bf16.msra.mxu0 0
      %3285 = vmatprep.subr.bf16.mxu0 0
      %3286 = vmatpush1.bf16.msra.mxu0 0
      %3287 = vmatprep.subr.bf16.mxu0 0
      %3288 = vmatpush1.bf16.msra.mxu0 0
      %3289 = vmatprep.subr.bf16.mxu0 0
      %3290 = vmatpush1.bf16.msra.mxu0 0
      %3291 = vmatprep.mubr.bf16.mxu0 0
      %3292 = vmatmul.mubr.bf16.gmra.mrb[0].mxu0 %v3253
      %v3293 = vpop.f32.mrb[0].mxu0
      %v3294 = vadd.f32 0.0, %v3293
      %v3295 = vpop.f32.mrb[0].mxu0
      %v3296 = vpop.f32.mrb[0].mxu0
      %v3297 = vpop.f32.mrb[0].mxu0
      %3298 = vdwg.mxu0
      %v3300 = vsel %vm3199, %v3245, 0
      %v3303 = vsel %vm3255, %v3249, 0
      %3305 = vmatprep.subr.bf16.mxu0 0
      %3306 = vmatpush1.bf16.msra.mxu0 %v3303
      %3307 = vmatprep.subr.bf16.mxu0 0
      %3308 = vmatpush1.bf16.msra.mxu0 0
      %3309 = vmatprep.subr.bf16.mxu0 0
      %3310 = vmatpush1.bf16.msra.mxu0 0
      %3311 = vmatprep.subr.bf16.mxu0 0
      %3312 = vmatpush1.bf16.msra.mxu0 0
      %3313 = vmatprep.subr.bf16.mxu0 0
      %3314 = vmatpush1.bf16.msra.mxu0 0
      %3315 = vmatprep.subr.bf16.mxu0 0
      %3316 = vmatpush1.bf16.msra.mxu0 0
      %3317 = vmatprep.subr.bf16.mxu0 0
      %3318 = vmatpush1.bf16.msra.mxu0 0
      %3319 = vmatprep.subr.bf16.mxu0 0
      %3320 = vmatpush1.bf16.msra.mxu0 0
      %3321 = vmatprep.subr.bf16.mxu0 0
      %3322 = vmatpush1.bf16.msra.mxu0 0
      %3323 = vmatprep.subr.bf16.mxu0 0
      %3324 = vmatpush1.bf16.msra.mxu0 0
      %3325 = vmatprep.subr.bf16.mxu0 0
      %3326 = vmatpush1.bf16.msra.mxu0 0
      %3327 = vmatprep.subr.bf16.mxu0 0
      %3328 = vmatpush1.bf16.msra.mxu0 0
      %3329 = vmatprep.subr.bf16.mxu0 0
      %3330 = vmatpush1.bf16.msra.mxu0 0
      %3331 = vmatprep.subr.bf16.mxu0 0
      %3332 = vmatpush1.bf16.msra.mxu0 0
      %3333 = vmatprep.subr.bf16.mxu0 0
      %3334 = vmatpush1.bf16.msra.mxu0 0
      %3335 = vmatprep.subr.bf16.mxu0 0
      %3336 = vmatpush1.bf16.msra.mxu0 0
      %3337 = vmatprep.mubr.bf16.mxu0 0
      %3338 = vmatmul.mubr.bf16.gmra.mrb[0].mxu0 %v3300
      %v3339 = vpop.f32.mrb[0].mxu0
      %v3340 = vadd.f32 0.0, %v3339
      %v3341 = vpop.f32.mrb[0].mxu0
      %v3342 = vpop.f32.mrb[0].mxu0
      %v3343 = vpop.f32.mrb[0].mxu0
      %3344 = vdwg.mxu0
      %v3346 = vsel %vm3199, %v3246, 0
      %v3349 = vsel %vm3255, %v3250, 0
      %3351 = vmatprep.subr.bf16.mxu0 0
      %3352 = vmatpush1.bf16.msra.mxu0 %v3349
      %3353 = vmatprep.subr.bf16.mxu0 0
      %3354 = vmatpush1.bf16.msra.mxu0 0
      %3355 = vmatprep.subr.bf16.mxu0 0
      %3356 = vmatpush1.bf16.msra.mxu0 0
      %3357 = vmatprep.subr.bf16.mxu0 0
      %3358 = vmatpush1.bf16.msra.mxu0 0
      %3359 = vmatprep.subr.bf16.mxu0 0
      %3360 = vmatpush1.bf16.msra.mxu0 0
      %3361 = vmatprep.subr.bf16.mxu0 0
      %3362 = vmatpush1.bf16.msra.mxu0 0
      %3363 = vmatprep.subr.bf16.mxu0 0
      %3364 = vmatpush1.bf16.msra.mxu0 0
      %3365 = vmatprep.subr.bf16.mxu0 0
      %3366 = vmatpush1.bf16.msra.mxu0 0
      %3367 = vmatprep.subr.bf16.mxu0 0
      %3368 = vmatpush1.bf16.msra.mxu0 0
      %3369 = vmatprep.subr.bf16.mxu0 0
      %3370 = vmatpush1.bf16.msra.mxu0 0
      %3371 = vmatprep.subr.bf16.mxu0 0
      %3372 = vmatpush1.bf16.msra.mxu0 0
      %3373 = vmatprep.subr.bf16.mxu0 0
      %3374 = vmatpush1.bf16.msra.mxu0 0
      %3375 = vmatprep.subr.bf16.mxu0 0
      %3376 = vmatpush1.bf16.msra.mxu0 0
      %3377 = vmatprep.subr.bf16.mxu0 0
      %3378 = vmatpush1.bf16.msra.mxu0 0
      %3379 = vmatprep.subr.bf16.mxu0 0
      %3380 = vmatpush1.bf16.msra.mxu0 0
      %3381 = vmatprep.subr.bf16.mxu0 0
      %3382 = vmatpush1.bf16.msra.mxu0 0
      %3383 = vmatprep.mubr.bf16.mxu0 0
      %3384 = vmatmul.mubr.bf16.gmra.mrb[0].mxu0 %v3346
      %v3385 = vpop.f32.mrb[0].mxu0
      %v3386 = vadd.f32 0.0, %v3385
      %v3387 = vpop.f32.mrb[0].mxu0
      %v3388 = vpop.f32.mrb[0].mxu0
      %v3389 = vpop.f32.mrb[0].mxu0
      %3390 = vdwg.mxu0
      %v3392 = vsel %vm3199, %v3247, 0
      %v3395 = vsel %vm3255, %v3251, 0
      %3397 = vmatprep.subr.bf16.mxu0 0
      %3398 = vmatpush1.bf16.msra.mxu0 %v3395
      %3399 = vmatprep.subr.bf16.mxu0 0
      %3400 = vmatpush1.bf16.msra.mxu0 0
      %3401 = vmatprep.subr.bf16.mxu0 0
      %3402 = vmatpush1.bf16.msra.mxu0 0
      %3403 = vmatprep.subr.bf16.mxu0 0
      %3404 = vmatpush1.bf16.msra.mxu0 0
      %3405 = vmatprep.subr.bf16.mxu0 0
      %3406 = vmatpush1.bf16.msra.mxu0 0
      %3407 = vmatprep.subr.bf16.mxu0 0
      %3408 = vmatpush1.bf16.msra.mxu0 0
      %3409 = vmatprep.subr.bf16.mxu0 0
      %3410 = vmatpush1.bf16.msra.mxu0 0
      %3411 = vmatprep.subr.bf16.mxu0 0
      %3412 = vmatpush1.bf16.msra.mxu0 0
      %3413 = vmatprep.subr.bf16.mxu0 0
      %3414 = vmatpush1.bf16.msra.mxu0 0
      %3415 = vmatprep.subr.bf16.mxu0 0
      %3416 = vmatpush1.bf16.msra.mxu0 0
      %3417 = vmatprep.subr.bf16.mxu0 0
      %3418 = vmatpush1.bf16.msra.mxu0 0
      %3419 = vmatprep.subr.bf16.mxu0 0
      %3420 = vmatpush1.bf16.msra.mxu0 0
      %3421 = vmatprep.subr.bf16.mxu0 0
      %3422 = vmatpush1.bf16.msra.mxu0 0
      %3423 = vmatprep.subr.bf16.mxu0 0
      %3424 = vmatpush1.bf16.msra.mxu0 0
      %3425 = vmatprep.subr.bf16.mxu0 0
      %3426 = vmatpush1.bf16.msra.mxu0 0
      %3427 = vmatprep.subr.bf16.mxu0 0
      %3428 = vmatpush1.bf16.msra.mxu0 0
      %3429 = vmatprep.mubr.bf16.mxu0 0
      %3430 = vmatmul.mubr.bf16.gmra.mrb[0].mxu0 %v3392
      %v3431 = vpop.f32.mrb[0].mxu0
      %v3432 = vadd.f32 0.0, %v3431
      %v3433 = vpop.f32.mrb[0].mxu0
      %v3434 = vpop.f32.mrb[0].mxu0
      %v3435 = vpop.f32.mrb[0].mxu0
      %3436 = vdwg.mxu0
      %3438 = vrot.lane.b32.xlu0 %v3340, 32
      %v3439 = vpop.permute.xlu0 %3438
      %3442 = vrot.lane.b32.xlu0 %v3386, 64
      %v3443 = vpop.permute.xlu0 %3442
      %3446 = vrot.lane.b32.xlu0 %v3432, 96
      %v3447 = vpop.permute.xlu0 %3446
      %v3449 = vsel %vm1941, %v3294, %v3439
      %vm3450 = vcmask 523264
      %v3451 = vsel %vm3450, %v3449, %v3443
      %vm3452 = vcmask 785408
      %v3453 = vsel %vm3452, %v3451, %v3447
      %v3454 = vpack.c.bf16 %v3453, %v3453
      %v3456 = vlaneseq
      %v3457 = vshrl.u32 %v3456, 7
      %v3458 = vsub.s32 0, %v3457
      %v3459 = vrot.slane %v2736, %v3458
      %v3477 = vunpack.c.l.b16 %v2720
      %v3478 = vunpack.c.l.b16 %v2721
      %v3479 = vunpack.c.l.b16 %v2722
      %v3480 = vunpack.c.l.b16 %v2723
      %v3481 = vunpack.c.l.b16 %v2724
      %v3482 = vunpack.c.l.b16 %v2725
      %v3483 = vunpack.c.l.b16 %v2726
      %v3484 = vunpack.c.l.b16 %v2727
      %v3485 = vunpack.c.l.b16 %v2728
      %v3486 = vunpack.c.l.b16 %v2729
      %v3487 = vunpack.c.l.b16 %v2730
      %v3488 = vunpack.c.l.b16 %v2731
      %v3489 = vunpack.c.l.b16 %v2732
      %v3490 = vunpack.c.l.b16 %v2733
      %v3491 = vunpack.c.l.b16 %v2734
      %v3492 = vunpack.c.l.b16 %v2735
      %v3493 = vpack.c.b16 %v3478, %v3477
      %v3494 = vpack.c.b16 %v3480, %v3479
      %v3495 = vpack.c.b16 %v3482, %v3481
      %v3496 = vpack.c.b16 %v3484, %v3483
      %v3497 = vpack.c.b16 %v3486, %v3485
      %v3498 = vpack.c.b16 %v3488, %v3487
      %v3499 = vpack.c.b16 %v3490, %v3489
      %v3500 = vpack.c.b16 %v3492, %v3491
      %3509 = vmatprep.subr.bf16.mxu0 0
      %3510 = vmatpush1.bf16.msra.mxu0 %v3493
      %3511 = vmatprep.subr.bf16.mxu0 0
      %3512 = vmatpush1.bf16.msra.mxu0 %v3494
      %3513 = vmatprep.subr.bf16.mxu0 0
      %3514 = vmatpush1.bf16.msra.mxu0 %v3495
      %3515 = vmatprep.subr.bf16.mxu0 0
      %3516 = vmatpush1.bf16.msra.mxu0 %v3496
      %3517 = vmatprep.subr.bf16.mxu0 0
      %3518 = vmatpush1.bf16.msra.mxu0 %v3497
      %3519 = vmatprep.subr.bf16.mxu0 0
      %3520 = vmatpush1.bf16.msra.mxu0 %v3498
      %3521 = vmatprep.subr.bf16.mxu0 0
      %3522 = vmatpush1.bf16.msra.mxu0 %v3499
      %3523 = vmatprep.subr.bf16.mxu0 0
      %3524 = vmatpush1.bf16.msra.mxu0 %v3500
      %3525 = vmatprep.subr.bf16.mxu0 0
      %3526 = vmatpush1.bf16.msra.mxu0 0
      %3527 = vmatprep.subr.bf16.mxu0 0
      %3528 = vmatpush1.bf16.msra.mxu0 0
      %3529 = vmatprep.subr.bf16.mxu0 0
      %3530 = vmatpush1.bf16.msra.mxu0 0
      %3531 = vmatprep.subr.bf16.mxu0 0
      %3532 = vmatpush1.bf16.msra.mxu0 0
      %3533 = vmatprep.subr.bf16.mxu0 0
      %3534 = vmatpush1.bf16.msra.mxu0 0
      %3535 = vmatprep.subr.bf16.mxu0 0
      %3536 = vmatpush1.bf16.msra.mxu0 0
      %3537 = vmatprep.subr.bf16.mxu0 0
      %3538 = vmatpush1.bf16.msra.mxu0 0
      %3539 = vmatprep.subr.bf16.mxu0 0
      %3540 = vmatpush1.bf16.msra.mxu0 0
      %3541 = vmatprep.mubr.bf16.mxu0 0
      %3542 = vmatmul.mubr.bf16.gmra.mrb[0].mxu0 %v3454
      %v3543 = vpop.f32.mrb[0].mxu0
      %v3544 = vadd.f32 %v3459, %v3543
      %v3545 = vpop.f32.mrb[0].mxu0
      %v3546 = vpop.f32.mrb[0].mxu0
      %v3547 = vpop.f32.mrb[0].mxu0
      %3548 = vdwg.mxu0
      %v3549 = vadd.f32 %v2645, %v3544
      %v3550 = vld [vmem:[%s57] sm:$0x1]
      %v3551 = vld [vmem:[%s59] sm:$0x1]
      %3552 = vadd.xlane.f32.xlu0 %v3549
      %v3553 = vpop.xlane.xlu0 %3552
      %v3554 = vmul.f32 %v3553, %v2663
      %v3555 = vsub.f32 %v3549, %v3554
      %v3556 = vmul.f32 %v3555, %v3555
      %3557 = vadd.xlane.f32.xlu0 %v3556
      %v3558 = vpop.xlane.xlu0 %3557
      %v3559 = vmul.f32 %v3558, %v2663
      %v3560 = vadd.f32 %v3559, 1e-05
      %v3561 = vrsqrt.pop %v3560
      %v3562 = vmul.f32 %v3555, %v3561
      %v3564 = vlaneseq
      %v3565 = vshrl.u32 %v3564, 7
      %v3566 = vsub.s32 0, %v3565
      %v3567 = vrot.slane %v3550, %v3566
      %v3569 = vmul.f32 %v3562, %v3567
      %v3571 = vlaneseq
      %v3572 = vshrl.u32 %v3571, 7
      %v3573 = vsub.s32 0, %v3572
      %v3574 = vrot.slane %v3551, %v3573
      %v3576 = vadd.f32 %v3569, %v3574
      %v3577 = vld [vmem:[%s61] sm:$0xff]
      %v3578 = vld [vmem:[%s61 + $0x8] sm:$0xff]
      %v3579 = vld [vmem:[%s61 + $0x10] sm:$0xff]
      %v3580 = vld [vmem:[%s61 + $0x18] sm:$0xff]
      %v3581 = vld [vmem:[%s61 + $0x20] sm:$0xff]
      %v3582 = vld [vmem:[%s61 + $0x28] sm:$0xff]
      %v3583 = vld [vmem:[%s61 + $0x30] sm:$0xff]
      %v3584 = vld [vmem:[%s61 + $0x38] sm:$0xff]
      %v3585 = vld [vmem:[%s61 + $0x40] sm:$0xff]
      %v3586 = vld [vmem:[%s61 + $0x48] sm:$0xff]
      %v3587 = vld [vmem:[%s61 + $0x50] sm:$0xff]
      %v3588 = vld [vmem:[%s61 + $0x58] sm:$0xff]
      %v3589 = vld [vmem:[%s61 + $0x60] sm:$0xff]
      %v3590 = vld [vmem:[%s61 + $0x68] sm:$0xff]
      %v3591 = vld [vmem:[%s61 + $0x70] sm:$0xff]
      %v3592 = vld [vmem:[%s61 + $0x78] sm:$0xff]
      %v3593 = vld [vmem:[%s63] sm:$0x3]
      %v3594 = vld [vmem:[%s65] sm:$0xf]
      %v3595 = vld [vmem:[%s65 + $0x4] sm:$0xf]
      %v3596 = vld [vmem:[%s65 + $0x8] sm:$0xf]
      %v3597 = vld [vmem:[%s65 + $0xc] sm:$0xf]
      %v3598 = vld [vmem:[%s65 + $0x10] sm:$0xf]
      %v3599 = vld [vmem:[%s65 + $0x14] sm:$0xf]
      %v3600 = vld [vmem:[%s65 + $0x18] sm:$0xf]
      %v3601 = vld [vmem:[%s65 + $0x1c] sm:$0xf]
      %v3602 = vld [vmem:[%s65 + $0x20] sm:$0xf]
      %v3603 = vld [vmem:[%s65 + $0x24] sm:$0xf]
      %v3604 = vld [vmem:[%s65 + $0x28] sm:$0xf]
      %v3605 = vld [vmem:[%s65 + $0x2c] sm:$0xf]
      %v3606 = vld [vmem:[%s65 + $0x30] sm:$0xf]
      %v3607 = vld [vmem:[%s65 + $0x34] sm:$0xf]
      %v3608 = vld [vmem:[%s65 + $0x38] sm:$0xf]
      %v3609 = vld [vmem:[%s65 + $0x3c] sm:$0xf]
      %v3610 = vld [vmem:[%s65 + $0x40] sm:$0xf]
      %v3611 = vld [vmem:[%s65 + $0x44] sm:$0xf]
      %v3612 = vld [vmem:[%s65 + $0x48] sm:$0xf]
      %v3613 = vld [vmem:[%s65 + $0x4c] sm:$0xf]
      %v3614 = vld [vmem:[%s65 + $0x50] sm:$0xf]
      %v3615 = vld [vmem:[%s65 + $0x54] sm:$0xf]
      %v3616 = vld [vmem:[%s65 + $0x58] sm:$0xf]
      %v3617 = vld [vmem:[%s65 + $0x5c] sm:$0xf]
      %v3618 = vld [vmem:[%s65 + $0x60] sm:$0xf]
      %v3619 = vld [vmem:[%s65 + $0x64] sm:$0xf]
      %v3620 = vld [vmem:[%s65 + $0x68] sm:$0xf]
      %v3621 = vld [vmem:[%s65 + $0x6c] sm:$0xf]
      %v3622 = vld [vmem:[%s65 + $0x70] sm:$0xf]
      %v3623 = vld [vmem:[%s65 + $0x74] sm:$0xf]
      %v3624 = vld [vmem:[%s65 + $0x78] sm:$0xf]
      %v3625 = vld [vmem:[%s65 + $0x7c] sm:$0xf]
      %v3626 = vld [vmem:[%s67] sm:$0x1]
      %v3627 = vpack.c.bf16 %v3576, %v3576
      %v3629 = vlaneseq
      %v3630 = vshrl.u32 %v3629, 7
      %v3631 = vsub.s32 0, %v3630
      %v3632 = vrot.slane %v3593, %v3631
      %v3633 = vlaneseq
      %v3634 = vshrl.u32 %v3633, 7
      %v3635 = vsub.s32 1, %v3634
      %v3636 = vrot.slane %v3593, %v3635
      %v3655 = vunpack.c.l.b16 %v3577
      %v3656 = vunpack.c.h.b16 %v3577
      %v3657 = vunpack.c.l.b16 %v3578
      %v3658 = vunpack.c.h.b16 %v3578
      %v3659 = vunpack.c.l.b16 %v3579
      %v3660 = vunpack.c.h.b16 %v3579
      %v3661 = vunpack.c.l.b16 %v3580
      %v3662 = vunpack.c.h.b16 %v3580
      %v3663 = vunpack.c.l.b16 %v3581
      %v3664 = vunpack.c.h.b16 %v3581
      %v3665 = vunpack.c.l.b16 %v3582
      %v3666 = vunpack.c.h.b16 %v3582
      %v3667 = vunpack.c.l.b16 %v3583
      %v3668 = vunpack.c.h.b16 %v3583
      %v3669 = vunpack.c.l.b16 %v3584
      %v3670 = vunpack.c.h.b16 %v3584
      %v3671 = vunpack.c.l.b16 %v3585
      %v3672 = vunpack.c.h.b16 %v3585
      %v3673 = vunpack.c.l.b16 %v3586
      %v3674 = vunpack.c.h.b16 %v3586
      %v3675 = vunpack.c.l.b16 %v3587
      %v3676 = vunpack.c.h.b16 %v3587
      %v3677 = vunpack.c.l.b16 %v3588
      %v3678 = vunpack.c.h.b16 %v3588
      %v3679 = vunpack.c.l.b16 %v3589
      %v3680 = vunpack.c.h.b16 %v3589
      %v3681 = vunpack.c.l.b16 %v3590
      %v3682 = vunpack.c.h.b16 %v3590
      %v3683 = vunpack.c.l.b16 %v3591
      %v3684 = vunpack.c.h.b16 %v3591
      %v3685 = vunpack.c.l.b16 %v3592
      %v3686 = vunpack.c.h.b16 %v3592
      %v3687 = vpack.c.b16 %v3657, %v3655
      %v3688 = vpack.c.b16 %v3658, %v3656
      %v3689 = vpack.c.b16 %v3661, %v3659
      %v3690 = vpack.c.b16 %v3662, %v3660
      %v3691 = vpack.c.b16 %v3665, %v3663
      %v3692 = vpack.c.b16 %v3666, %v3664
      %v3693 = vpack.c.b16 %v3669, %v3667
      %v3694 = vpack.c.b16 %v3670, %v3668
      %v3695 = vpack.c.b16 %v3673, %v3671
      %v3696 = vpack.c.b16 %v3674, %v3672
      %v3697 = vpack.c.b16 %v3677, %v3675
      %v3698 = vpack.c.b16 %v3678, %v3676
      %v3699 = vpack.c.b16 %v3681, %v3679
      %v3700 = vpack.c.b16 %v3682, %v3680
      %v3701 = vpack.c.b16 %v3685, %v3683
      %v3702 = vpack.c.b16 %v3686, %v3684
      %3719 = vmatprep.subr.bf16.mxu0 %v3688
      %3720 = vmatpush1.bf16.msra.mxu0 %v3687
      %3721 = vmatprep.subr.bf16.mxu0 %v3690
      %3722 = vmatpush1.bf16.msra.mxu0 %v3689
      %3723 = vmatprep.subr.bf16.mxu0 %v3692
      %3724 = vmatpush1.bf16.msra.mxu0 %v3691
      %3725 = vmatprep.subr.bf16.mxu0 %v3694
      %3726 = vmatpush1.bf16.msra.mxu0 %v3693
      %3727 = vmatprep.subr.bf16.mxu0 %v3696
      %3728 = vmatpush1.bf16.msra.mxu0 %v3695
      %3729 = vmatprep.subr.bf16.mxu0 %v3698
      %3730 = vmatpush1.bf16.msra.mxu0 %v3697
      %3731 = vmatprep.subr.bf16.mxu0 %v3700
      %3732 = vmatpush1.bf16.msra.mxu0 %v3699
      %3733 = vmatprep.subr.bf16.mxu0 %v3702
      %3734 = vmatpush1.bf16.msra.mxu0 %v3701
      %3735 = vmatprep.subr.bf16.mxu0 0
      %3736 = vmatpush1.bf16.msra.mxu0 0
      %3737 = vmatprep.subr.bf16.mxu0 0
      %3738 = vmatpush1.bf16.msra.mxu0 0
      %3739 = vmatprep.subr.bf16.mxu0 0
      %3740 = vmatpush1.bf16.msra.mxu0 0
      %3741 = vmatprep.subr.bf16.mxu0 0
      %3742 = vmatpush1.bf16.msra.mxu0 0
      %3743 = vmatprep.subr.bf16.mxu0 0
      %3744 = vmatpush1.bf16.msra.mxu0 0
      %3745 = vmatprep.subr.bf16.mxu0 0
      %3746 = vmatpush1.bf16.msra.mxu0 0
      %3747 = vmatprep.subr.bf16.mxu0 0
      %3748 = vmatpush1.bf16.msra.mxu0 0
      %3749 = vmatprep.subr.bf16.mxu0 0
      %3750 = vmatpush1.bf16.msra.mxu0 0
      %3751 = vmatprep.mubr.bf16.mxu0 0
      %3752 = vmatmul.mubr.bf16.gmra.mrb[0].mxu0 %v3627
      %v3753 = vpop.f32.mrb[0].mxu0
      %v3754 = vadd.f32 %v3632, %v3753
      %v3755 = vpop.f32.mrb[0].mxu0
      %v3756 = vadd.f32 %v3636, %v3755
      %v3757 = vpop.f32.mrb[0].mxu0
      %v3758 = vpop.f32.mrb[0].mxu0
      %3759 = vdwg.mxu0
      %v3760 = vmax.f32 %v3754, 0.0
      %v3761 = vmax.f32 %v3756, 0.0
      %v3762 = vpack.c.bf16 %v3760, %v3760
      %v3763 = vpack.c.bf16 %v3761, %v3761
      %v3765 = vlaneseq
      %v3766 = vshrl.u32 %v3765, 7
      %v3767 = vsub.s32 0, %v3766
      %v3768 = vrot.slane %v3626, %v3767
      %v3802 = vunpack.c.l.b16 %v3594
      %v3803 = vunpack.c.l.b16 %v3595
      %v3804 = vunpack.c.l.b16 %v3596
      %v3805 = vunpack.c.l.b16 %v3597
      %v3806 = vunpack.c.l.b16 %v3598
      %v3807 = vunpack.c.l.b16 %v3599
      %v3808 = vunpack.c.l.b16 %v3600
      %v3809 = vunpack.c.l.b16 %v3601
      %v3810 = vunpack.c.l.b16 %v3602
      %v3811 = vunpack.c.l.b16 %v3603
      %v3812 = vunpack.c.l.b16 %v3604
      %v3813 = vunpack.c.l.b16 %v3605
      %v3814 = vunpack.c.l.b16 %v3606
      %v3815 = vunpack.c.l.b16 %v3607
      %v3816 = vunpack.c.l.b16 %v3608
      %v3817 = vunpack.c.l.b16 %v3609
      %v3818 = vunpack.c.l.b16 %v3610
      %v3819 = vunpack.c.l.b16 %v3611
      %v3820 = vunpack.c.l.b16 %v3612
      %v3821 = vunpack.c.l.b16 %v3613
      %v3822 = vunpack.c.l.b16 %v3614
      %v3823 = vunpack.c.l.b16 %v3615
      %v3824 = vunpack.c.l.b16 %v3616
      %v3825 = vunpack.c.l.b16 %v3617
      %v3826 = vunpack.c.l.b16 %v3618
      %v3827 = vunpack.c.l.b16 %v3619
      %v3828 = vunpack.c.l.b16 %v3620
      %v3829 = vunpack.c.l.b16 %v3621
      %v3830 = vunpack.c.l.b16 %v3622
      %v3831 = vunpack.c.l.b16 %v3623
      %v3832 = vunpack.c.l.b16 %v3624
      %v3833 = vunpack.c.l.b16 %v3625
      %v3834 = vpack.c.b16 %v3803, %v3802
      %v3835 = vpack.c.b16 %v3805, %v3804
      %v3836 = vpack.c.b16 %v3807, %v3806
      %v3837 = vpack.c.b16 %v3809, %v3808
      %v3838 = vpack.c.b16 %v3811, %v3810
      %v3839 = vpack.c.b16 %v3813, %v3812
      %v3840 = vpack.c.b16 %v3815, %v3814
      %v3841 = vpack.c.b16 %v3817, %v3816
      %v3842 = vpack.c.b16 %v3819, %v3818
      %v3843 = vpack.c.b16 %v3821, %v3820
      %v3844 = vpack.c.b16 %v3823, %v3822
      %v3845 = vpack.c.b16 %v3825, %v3824
      %v3846 = vpack.c.b16 %v3827, %v3826
      %v3847 = vpack.c.b16 %v3829, %v3828
      %v3848 = vpack.c.b16 %v3831, %v3830
      %v3849 = vpack.c.b16 %v3833, %v3832
      %3866 = vmatprep.subr.bf16.mxu0 0
      %3867 = vmatpush1.bf16.msra.mxu0 %v3834
      %3868 = vmatprep.subr.bf16.mxu0 0
      %3869 = vmatpush1.bf16.msra.mxu0 %v3835
      %3870 = vmatprep.subr.bf16.mxu0 0
      %3871 = vmatpush1.bf16.msra.mxu0 %v3836
      %3872 = vmatprep.subr.bf16.mxu0 0
      %3873 = vmatpush1.bf16.msra.mxu0 %v3837
      %3874 = vmatprep.subr.bf16.mxu0 0
      %3875 = vmatpush1.bf16.msra.mxu0 %v3838
      %3876 = vmatprep.subr.bf16.mxu0 0
      %3877 = vmatpush1.bf16.msra.mxu0 %v3839
      %3878 = vmatprep.subr.bf16.mxu0 0
      %3879 = vmatpush1.bf16.msra.mxu0 %v3840
      %3880 = vmatprep.subr.bf16.mxu0 0
      %3881 = vmatpush1.bf16.msra.mxu0 %v3841
      %3882 = vmatprep.subr.bf16.mxu0 0
      %3883 = vmatpush1.bf16.msra.mxu0 %v3842
      %3884 = vmatprep.subr.bf16.mxu0 0
      %3885 = vmatpush1.bf16.msra.mxu0 %v3843
      %3886 = vmatprep.subr.bf16.mxu0 0
      %3887 = vmatpush1.bf16.msra.mxu0 %v3844
      %3888 = vmatprep.subr.bf16.mxu0 0
      %3889 = vmatpush1.bf16.msra.mxu0 %v3845
      %3890 = vmatprep.subr.bf16.mxu0 0
      %3891 = vmatpush1.bf16.msra.mxu0 %v3846
      %3892 = vmatprep.subr.bf16.mxu0 0
      %3893 = vmatpush1.bf16.msra.mxu0 %v3847
      %3894 = vmatprep.subr.bf16.mxu0 0
      %3895 = vmatpush1.bf16.msra.mxu0 %v3848
      %3896 = vmatprep.subr.bf16.mxu0 0
      %3897 = vmatpush1.bf16.msra.mxu0 %v3849
      %3898 = vmatprep.mubr.bf16.mxu0 %v3763
      %3899 = vmatmul.mubr.bf16.gmra.mrb[0].mxu0 %v3762
      %v3900 = vpop.f32.mrb[0].mxu0
      %v3901 = vadd.f32 %v3768, %v3900
      %v3902 = vpop.f32.mrb[0].mxu0
      %v3903 = vpop.f32.mrb[0].mxu0
      %v3904 = vpop.f32.mrb[0].mxu0
      %3905 = vdwg.mxu0
      %v3906 = vadd.f32 %v3549, %v3901
      %v3907 = vld [vmem:[%s69] sm:$0x1]
      %v3908 = vld [vmem:[%s71] sm:$0x1]
      %3909 = vadd.xlane.f32.xlu0 %v3906
      %v3910 = vpop.xlane.xlu0 %3909
      %v3911 = vmul.f32 %v3910, %v2663
      %v3912 = vsub.f32 %v3906, %v3911
      %v3913 = vmul.f32 %v3912, %v3912
      %3914 = vadd.xlane.f32.xlu0 %v3913
      %v3915 = vpop.xlane.xlu0 %3914
      %v3916 = vmul.f32 %v3915, %v2663
      %v3917 = vadd.f32 %v3916, 1e-05
      %v3918 = vrsqrt.pop %v3917
      %v3919 = vmul.f32 %v3912, %v3918
      %v3921 = vlaneseq
      %v3922 = vshrl.u32 %v3921, 7
      %v3923 = vsub.s32 0, %v3922
      %v3924 = vrot.slane %v3907, %v3923
      %v3926 = vmul.f32 %v3919, %v3924
      %v3928 = vlaneseq
      %v3929 = vshrl.u32 %v3928, 7
      %v3930 = vsub.s32 0, %v3929
      %v3931 = vrot.slane %v3908, %v3930
      %v3933 = vadd.f32 %v3926, %v3931
      %v3934 = vld [vmem:[%s73] sm:$0x1]
      %v3935 = vld [vmem:[%s75] sm:$0x1]
      %3936 = vadd.xlane.f32.xlu0 %v2315
      %v3937 = vpop.xlane.xlu0 %3936
      %v3938 = vmul.f32 %v3937, %v2663
      %v3939 = vsub.f32 %v2315, %v3938
      %v3940 = vmul.f32 %v3939, %v3939
      %3941 = vadd.xlane.f32.xlu0 %v3940
      %v3942 = vpop.xlane.xlu0 %3941
      %v3943 = vmul.f32 %v3942, %v2663
      %v3944 = vadd.f32 %v3943, 1e-05
      %v3945 = vrsqrt.pop %v3944
      %v3946 = vmul.f32 %v3939, %v3945
      %v3948 = vlaneseq
      %v3949 = vshrl.u32 %v3948, 7
      %v3950 = vsub.s32 0, %v3949
      %v3951 = vrot.slane %v3934, %v3950
      %v3953 = vmul.f32 %v3946, %v3951
      %v3955 = vlaneseq
      %v3956 = vshrl.u32 %v3955, 7
      %v3957 = vsub.s32 0, %v3956
      %v3958 = vrot.slane %v3935, %v3957
      %v3960 = vadd.f32 %v3953, %v3958
      %v3961 = vld [vmem:[%s77] sm:$0xff]
      %v3962 = vld [vmem:[%s77 + $0x8] sm:$0xf]
      %v3963 = vld [vmem:[%s77 + $0xc] sm:$0xff]
      %v3964 = vld [vmem:[%s77 + $0x14] sm:$0xf]
      %v3965 = vld [vmem:[%s77 + $0x18] sm:$0xff]
      %v3966 = vld [vmem:[%s77 + $0x20] sm:$0xf]
      %v3967 = vld [vmem:[%s77 + $0x24] sm:$0xff]
      %v3968 = vld [vmem:[%s77 + $0x2c] sm:$0xf]
      %v3969 = vld [vmem:[%s77 + $0x30] sm:$0xff]
      %v3970 = vld [vmem:[%s77 + $0x38] sm:$0xf]
      %v3971 = vld [vmem:[%s77 + $0x3c] sm:$0xff]
      %v3972 = vld [vmem:[%s77 + $0x44] sm:$0xf]
      %v3973 = vld [vmem:[%s77 + $0x48] sm:$0xff]
      %v3974 = vld [vmem:[%s77 + $0x50] sm:$0xf]
      %v3975 = vld [vmem:[%s77 + $0x54] sm:$0xff]
      %v3976 = vld [vmem:[%s77 + $0x5c] sm:$0xf]
      %v3977 = vld [vmem:[%s77 + $0x60] sm:$0xff]
      %v3978 = vld [vmem:[%s77 + $0x68] sm:$0xf]
      %v3979 = vld [vmem:[%s77 + $0x6c] sm:$0xff]
      %v3980 = vld [vmem:[%s77 + $0x74] sm:$0xf]
      %v3981 = vld [vmem:[%s77 + $0x78] sm:$0xff]
      %v3982 = vld [vmem:[%s77 + $0x80] sm:$0xf]
      %v3983 = vld [vmem:[%s77 + $0x84] sm:$0xff]
      %v3984 = vld [vmem:[%s77 + $0x8c] sm:$0xf]
      %v3985 = vld [vmem:[%s77 + $0x90] sm:$0xff]
      %v3986 = vld [vmem:[%s77 + $0x98] sm:$0xf]
      %v3987 = vld [vmem:[%s77 + $0x9c] sm:$0xff]
      %v3988 = vld [vmem:[%s77 + $0xa4] sm:$0xf]
      %v3989 = vld [vmem:[%s77 + $0xa8] sm:$0xff]
      %v3990 = vld [vmem:[%s77 + $0xb0] sm:$0xf]
      %v3991 = vld [vmem:[%s77 + $0xb4] sm:$0xff]
      %v3992 = vld [vmem:[%s77 + $0xbc] sm:$0xf]
      %v3993 = vld [vmem:[%s79] sm:$0x7]
      %v3994 = vld [vmem:[%s81] sm:$0xf]
      %v3995 = vld [vmem:[%s81 + $0x4] sm:$0xf]
      %v3996 = vld [vmem:[%s81 + $0x8] sm:$0xf]
      %v3997 = vld [vmem:[%s81 + $0xc] sm:$0xf]
      %v3998 = vld [vmem:[%s81 + $0x10] sm:$0xf]
      %v3999 = vld [vmem:[%s81 + $0x14] sm:$0xf]
      %v4000 = vld [vmem:[%s81 + $0x18] sm:$0xf]
      %v4001 = vld [vmem:[%s81 + $0x1c] sm:$0xf]
      %v4002 = vld [vmem:[%s81 + $0x20] sm:$0xf]
      %v4003 = vld [vmem:[%s81 + $0x24] sm:$0xf]
      %v4004 = vld [vmem:[%s81 + $0x28] sm:$0xf]
      %v4005 = vld [vmem:[%s81 + $0x2c] sm:$0xf]
      %v4006 = vld [vmem:[%s81 + $0x30] sm:$0xf]
      %v4007 = vld [vmem:[%s81 + $0x34] sm:$0xf]
      %v4008 = vld [vmem:[%s81 + $0x38] sm:$0xf]
      %v4009 = vld [vmem:[%s81 + $0x3c] sm:$0xf]
      %v4010 = vld [vmem:[%s83] sm:$0x1]
      %v4011 = vpack.c.bf16 %v3960, %v3960
      %v4013 = vlaneseq
      %v4014 = vshrl.u32 %v4013, 7
      %v4015 = vsub.s32 0, %v4014
      %v4016 = vrot.slane %v3993, %v4015
      %v4017 = vlaneseq
      %v4018 = vshrl.u32 %v4017, 7
      %v4019 = vsub.s32 1, %v4018
      %v4020 = vrot.slane %v3993, %v4019
      %v4021 = vlaneseq
      %v4022 = vshrl.u32 %v4021, 7
      %v4023 = vsub.s32 2, %v4022
      %v4024 = vrot.slane %v3993, %v4023
      %v4060 = vunpack.c.l.b16 %v3961
      %v4061 = vunpack.c.h.b16 %v3961
      %v4062 = vunpack.c.l.b16 %v3962
      %v4063 = vunpack.c.l.b16 %v3963
      %v4064 = vunpack.c.h.b16 %v3963
      %v4065 = vunpack.c.l.b16 %v3964
      %v4066 = vunpack.c.l.b16 %v3965
      %v4067 = vunpack.c.h.b16 %v3965
      %v4068 = vunpack.c.l.b16 %v3966
      %v4069 = vunpack.c.l.b16 %v3967
      %v4070 = vunpack.c.h.b16 %v3967
      %v4071 = vunpack.c.l.b16 %v3968
      %v4072 = vunpack.c.l.b16 %v3969
      %v4073 = vunpack.c.h.b16 %v3969
      %v4074 = vunpack.c.l.b16 %v3970
      %v4075 = vunpack.c.l.b16 %v3971
      %v4076 = vunpack.c.h.b16 %v3971
      %v4077 = vunpack.c.l.b16 %v3972
      %v4078 = vunpack.c.l.b16 %v3973
      %v4079 = vunpack.c.h.b16 %v3973
      %v4080 = vunpack.c.l.b16 %v3974
      %v4081 = vunpack.c.l.b16 %v3975
      %v4082 = vunpack.c.h.b16 %v3975
      %v4083 = vunpack.c.l.b16 %v3976
      %v4084 = vunpack.c.l.b16 %v3977
      %v4085 = vunpack.c.h.b16 %v3977
      %v4086 = vunpack.c.l.b16 %v3978
      %v4087 = vunpack.c.l.b16 %v3979
      %v4088 = vunpack.c.h.b16 %v3979
      %v4089 = vunpack.c.l.b16 %v3980
      %v4090 = vunpack.c.l.b16 %v3981
      %v4091 = vunpack.c.h.b16 %v3981
      %v4092 = vunpack.c.l.b16 %v3982
      %v4093 = vunpack.c.l.b16 %v3983
      %v4094 = vunpack.c.h.b16 %v3983
      %v4095 = vunpack.c.l.b16 %v3984
      %v4096 = vunpack.c.l.b16 %v3985
      %v4097 = vunpack.c.h.b16 %v3985
      %v4098 = vunpack.c.l.b16 %v3986
      %v4099 = vunpack.c.l.b16 %v3987
      %v4100 = vunpack.c.h.b16 %v3987
      %v4101 = vunpack.c.l.b16 %v3988
      %v4102 = vunpack.c.l.b16 %v3989
      %v4103 = vunpack.c.h.b16 %v3989
      %v4104 = vunpack.c.l.b16 %v3990
      %v4105 = vunpack.c.l.b16 %v3991
      %v4106 = vunpack.c.h.b16 %v3991
      %v4107 = vunpack.c.l.b16 %v3992
      %v4108 = vpack.c.b16 %v4063, %v4060
      %v4109 = vpack.c.b16 %v4064, %v4061
      %v4110 = vpack.c.b16 %v4065, %v4062
      %v4111 = vpack.c.b16 %v4069, %v4066
      %v4112 = vpack.c.b16 %v4070, %v4067
      %v4113 = vpack.c.b16 %v4071, %v4068
      %v4114 = vpack.c.b16 %v4075, %v4072
      %v4115 = vpack.c.b16 %v4076, %v4073
      %v4116 = vpack.c.b16 %v4077, %v4074
      %v4117 = vpack.c.b16 %v4081, %v4078
      %v4118 = vpack.c.b16 %v4082, %v4079
      %v4119 = vpack.c.b16 %v4083, %v4080
      %v4120 = vpack.c.b16 %v4087, %v4084
      %v4121 = vpack.c.b16 %v4088, %v4085
      %v4122 = vpack.c.b16 %v4089, %v4086
      %v4123 = vpack.c.b16 %v4093, %v4090
      %v4124 = vpack.c.b16 %v4094, %v4091
      %v4125 = vpack.c.b16 %v4095, %v4092
      %v4126 = vpack.c.b16 %v4099, %v4096
      %v4127 = vpack.c.b16 %v4100, %v4097
      %v4128 = vpack.c.b16 %v4101, %v4098
      %v4129 = vpack.c.b16 %v4105, %v4102
      %v4130 = vpack.c.b16 %v4106, %v4103
      %v4131 = vpack.c.b16 %v4107, %v4104
      %4156 = vmatprep.subr.bf16.mxu0 %v4109
      %4157 = vmatpush1.bf16.msra.mxu0 %v4108
      %4158 = vmatprep.subr.bf16.mxu0 %v4112
      %4159 = vmatpush1.bf16.msra.mxu0 %v4111
      %4160 = vmatprep.subr.bf16.mxu0 %v4115
      %4161 = vmatpush1.bf16.msra.mxu0 %v4114
      %4162 = vmatprep.subr.bf16.mxu0 %v4118
      %4163 = vmatpush1.bf16.msra.mxu0 %v4117
      %4164 = vmatprep.subr.bf16.mxu0 %v4121
      %4165 = vmatpush1.bf16.msra.mxu0 %v4120
      %4166 = vmatprep.subr.bf16.mxu0 %v4124
      %4167 = vmatpush1.bf16.msra.mxu0 %v4123
      %4168 = vmatprep.subr.bf16.mxu0 %v4127
      %4169 = vmatpush1.bf16.msra.mxu0 %v4126
      %4170 = vmatprep.subr.bf16.mxu0 %v4130
      %4171 = vmatpush1.bf16.msra.mxu0 %v4129
      %4172 = vmatprep.subr.bf16.mxu0 0
      %4173 = vmatpush1.bf16.msra.mxu0 0
      %4174 = vmatprep.subr.bf16.mxu0 0
      %4175 = vmatpush1.bf16.msra.mxu0 0
      %4176 = vmatprep.subr.bf16.mxu0 0
      %4177 = vmatpush1.bf16.msra.mxu0 0
      %4178 = vmatprep.subr.bf16.mxu0 0
      %4179 = vmatpush1.bf16.msra.mxu0 0
      %4180 = vmatprep.subr.bf16.mxu0 0
      %4181 = vmatpush1.bf16.msra.mxu0 0
      %4182 = vmatprep.subr.bf16.mxu0 0
      %4183 = vmatpush1.bf16.msra.mxu0 0
      %4184 = vmatprep.subr.bf16.mxu0 0
      %4185 = vmatpush1.bf16.msra.mxu0 0
      %4186 = vmatprep.subr.bf16.mxu0 0
      %4187 = vmatpush1.bf16.msra.mxu0 0
      %4188 = vmatprep.mubr.bf16.mxu0 0
      %4189 = vmatmul.mubr.bf16.gmra.mrb[0].mxu0 %v4011
      %v4190 = vpop.f32.mrb[0].mxu0
      %v4191 = vadd.f32 %v4016, %v4190
      %v4192 = vpop.f32.mrb[0].mxu0
      %v4193 = vadd.f32 %v4020, %v4192
      %v4194 = vpop.f32.mrb[0].mxu0
      %v4195 = vpop.f32.mrb[0].mxu0
      %4196 = vdwg.mxu0
      %4197 = vmatprep.subr.bf16.mxu0 0
      %4198 = vmatpush1.bf16.msra.mxu0 %v4110
      %4199 = vmatprep.subr.bf16.mxu0 0
      %4200 = vmatpush1.bf16.msra.mxu0 %v4113
      %4201 = vmatprep.subr.bf16.mxu0 0
      %4202 = vmatpush1.bf16.msra.mxu0 %v4116
      %4203 = vmatprep.subr.bf16.mxu0 0
      %4204 = vmatpush1.bf16.msra.mxu0 %v4119
      %4205 = vmatprep.subr.bf16.mxu0 0
      %4206 = vmatpush1.bf16.msra.mxu0 %v4122
      %4207 = vmatprep.subr.bf16.mxu0 0
      %4208 = vmatpush1.bf16.msra.mxu0 %v4125
      %4209 = vmatprep.subr.bf16.mxu0 0
      %4210 = vmatpush1.bf16.msra.mxu0 %v4128
      %4211 = vmatprep.subr.bf16.mxu0 0
      %4212 = vmatpush1.bf16.msra.mxu0 %v4131
      %4213 = vmatprep.subr.bf16.mxu0 0
      %4214 = vmatpush1.bf16.msra.mxu0 0
      %4215 = vmatprep.subr.bf16.mxu0 0
      %4216 = vmatpush1.bf16.msra.mxu0 0
      %4217 = vmatprep.subr.bf16.mxu0 0
      %4218 = vmatpush1.bf16.msra.mxu0 0
      %4219 = vmatprep.subr.bf16.mxu0 0
      %4220 = vmatpush1.bf16.msra.mxu0 0
      %4221 = vmatprep.subr.bf16.mxu0 0
      %4222 = vmatpush1.bf16.msra.mxu0 0
      %4223 = vmatprep.subr.bf16.mxu0 0
      %4224 = vmatpush1.bf16.msra.mxu0 0
      %4225 = vmatprep.subr.bf16.mxu0 0
      %4226 = vmatpush1.bf16.msra.mxu0 0
      %4227 = vmatprep.subr.bf16.mxu0 0
      %4228 = vmatpush1.bf16.msra.mxu0 0
      %4229 = vmatprep.mubr.bf16.mxu0 0
      %4230 = vmatmul.mubr.bf16.gmra.mrb[0].mxu0 %v4011
      %v4231 = vpop.f32.mrb[0].mxu0
      %v4232 = vadd.f32 %v4024, %v4231
      %v4233 = vpop.f32.mrb[0].mxu0
      %v4234 = vpop.f32.mrb[0].mxu0
      %v4235 = vpop.f32.mrb[0].mxu0
      %4236 = vdwg.mxu0
      %4238 = vrot.lane.b32.xlu0 %v4191, 96
      %v4239 = vpop.permute.xlu0 %4238
      %4241 = vrot.lane.b32.xlu0 %v4191, 64
      %v4242 = vpop.permute.xlu0 %4241
      %4244 = vrot.lane.b32.xlu0 %v4191, 32
      %v4245 = vpop.permute.xlu0 %4244
      %4248 = vrot.lane.b32.xlu0 %v4193, 96
      %v4249 = vpop.permute.xlu0 %4248
      %4251 = vrot.lane.b32.xlu0 %v4193, 64
      %v4252 = vpop.permute.xlu0 %4251
      %4254 = vrot.lane.b32.xlu0 %v4193, 32
      %v4255 = vpop.permute.xlu0 %4254
      %4258 = vrot.lane.b32.xlu0 %v4232, 96
      %v4259 = vpop.permute.xlu0 %4258
      %4261 = vrot.lane.b32.xlu0 %v4232, 64
      %v4262 = vpop.permute.xlu0 %4261
      %4264 = vrot.lane.b32.xlu0 %v4232, 32
      %v4265 = vpop.permute.xlu0 %4264
      %v4267 = vpack.c.bf16 %v4191, %v4191
      %v4268 = vpack.c.bf16 %v4239, %v4239
      %v4269 = vpack.c.bf16 %v4242, %v4242
      %v4270 = vpack.c.bf16 %v4245, %v4245
      %v4271 = vpack.c.bf16 %v4193, %v4193
      %v4272 = vpack.c.bf16 %v4249, %v4249
      %v4273 = vpack.c.bf16 %v4252, %v4252
      %v4274 = vpack.c.bf16 %v4255, %v4255
      %v4276 = vsel %vm1941, %v4267, 0
      %v4279 = vsel %vm1941, %v4271, 0
      %4281 = vmatprep.subr.bf16.mxu0 0
      %4282 = vmatpush1.bf16.xpose.msra.mxu0 %v4279
      %4283 = vmatprep.subr.bf16.mxu0 0
      %4284 = vmatpush1.bf16.xpose.msra.mxu0 0
      %4285 = vmatprep.subr.bf16.mxu0 0
      %4286 = vmatpush1.bf16.xpose.msra.mxu0 0
      %4287 = vmatprep.subr.bf16.mxu0 0
      %4288 = vmatpush1.bf16.xpose.msra.mxu0 0
      %4289 = vmatprep.subr.bf16.mxu0 0
      %4290 = vmatpush1.bf16.xpose.msra.mxu0 0
      %4291 = vmatprep.subr.bf16.mxu0 0
      %4292 = vmatpush1.bf16.xpose.msra.mxu0 0
      %4293 = vmatprep.subr.bf16.mxu0 0
      %4294 = vmatpush1.bf16.xpose.msra.mxu0 0
      %4295 = vmatprep.subr.bf16.mxu0 0
      %4296 = vmatpush1.bf16.xpose.msra.mxu0 0
      %4297 = vmatprep.subr.bf16.mxu0 0
      %4298 = vmatpush1.bf16.xpose.msra.mxu0 0
      %4299 = vmatprep.subr.bf16.mxu0 0
      %4300 = vmatpush1.bf16.xpose.msra.mxu0 0
      %4301 = vmatprep.subr.bf16.mxu0 0
      %4302 = vmatpush1.bf16.xpose.msra.mxu0 0
      %4303 = vmatprep.subr.bf16.mxu0 0
      %4304 = vmatpush1.bf16.xpose.msra.mxu0 0
      %4305 = vmatprep.subr.bf16.mxu0 0
      %4306 = vmatpush1.bf16.xpose.msra.mxu0 0
      %4307 = vmatprep.subr.bf16.mxu0 0
      %4308 = vmatpush1.bf16.xpose.msra.mxu0 0
      %4309 = vmatprep.subr.bf16.mxu0 0
      %4310 = vmatpush1.bf16.xpose.msra.mxu0 0
      %4311 = vmatprep.subr.bf16.mxu0 0
      %4312 = vmatpush1.bf16.xpose.msra.mxu0 0
      %4313 = vmatprep.mubr.bf16.mxu0 0
      %4314 = vmatmul.mubr.bf16.gmra.mrb[0].mxu0 %v4276
      %v4315 = vpop.f32.mrb[0].mxu0
      %v4316 = vadd.f32 0.0, %v4315
      %v4317 = vpop.f32.mrb[0].mxu0
      %v4318 = vpop.f32.mrb[0].mxu0
      %v4319 = vpop.f32.mrb[0].mxu0
      %4320 = vdwg.mxu0
      %v4322 = vsel %vm1941, %v4268, 0
      %v4325 = vsel %vm1941, %v4272, 0
      %4327 = vmatprep.subr.bf16.mxu0 0
      %4328 = vmatpush1.bf16.xpose.msra.mxu0 %v4325
      %4329 = vmatprep.subr.bf16.mxu0 0
      %4330 = vmatpush1.bf16.xpose.msra.mxu0 0
      %4331 = vmatprep.subr.bf16.mxu0 0
      %4332 = vmatpush1.bf16.xpose.msra.mxu0 0
      %4333 = vmatprep.subr.bf16.mxu0 0
      %4334 = vmatpush1.bf16.xpose.msra.mxu0 0
      %4335 = vmatprep.subr.bf16.mxu0 0
      %4336 = vmatpush1.bf16.xpose.msra.mxu0 0
      %4337 = vmatprep.subr.bf16.mxu0 0
      %4338 = vmatpush1.bf16.xpose.msra.mxu0 0
      %4339 = vmatprep.subr.bf16.mxu0 0
      %4340 = vmatpush1.bf16.xpose.msra.mxu0 0
      %4341 = vmatprep.subr.bf16.mxu0 0
      %4342 = vmatpush1.bf16.xpose.msra.mxu0 0
      %4343 = vmatprep.subr.bf16.mxu0 0
      %4344 = vmatpush1.bf16.xpose.msra.mxu0 0
      %4345 = vmatprep.subr.bf16.mxu0 0
      %4346 = vmatpush1.bf16.xpose.msra.mxu0 0
      %4347 = vmatprep.subr.bf16.mxu0 0
      %4348 = vmatpush1.bf16.xpose.msra.mxu0 0
      %4349 = vmatprep.subr.bf16.mxu0 0
      %4350 = vmatpush1.bf16.xpose.msra.mxu0 0
      %4351 = vmatprep.subr.bf16.mxu0 0
      %4352 = vmatpush1.bf16.xpose.msra.mxu0 0
      %4353 = vmatprep.subr.bf16.mxu0 0
      %4354 = vmatpush1.bf16.xpose.msra.mxu0 0
      %4355 = vmatprep.subr.bf16.mxu0 0
      %4356 = vmatpush1.bf16.xpose.msra.mxu0 0
      %4357 = vmatprep.subr.bf16.mxu0 0
      %4358 = vmatpush1.bf16.xpose.msra.mxu0 0
      %4359 = vmatprep.mubr.bf16.mxu0 0
      %4360 = vmatmul.mubr.bf16.gmra.mrb[0].mxu0 %v4322
      %v4361 = vpop.f32.mrb[0].mxu0
      %v4362 = vadd.f32 0.0, %v4361
      %v4363 = vpop.f32.mrb[0].mxu0
      %v4364 = vpop.f32.mrb[0].mxu0
      %v4365 = vpop.f32.mrb[0].mxu0
      %4366 = vdwg.mxu0
      %v4368 = vsel %vm1941, %v4269, 0
      %v4371 = vsel %vm1941, %v4273, 0
      %4373 = vmatprep.subr.bf16.mxu0 0
      %4374 = vmatpush1.bf16.xpose.msra.mxu0 %v4371
      %4375 = vmatprep.subr.bf16.mxu0 0
      %4376 = vmatpush1.bf16.xpose.msra.mxu0 0
      %4377 = vmatprep.subr.bf16.mxu0 0
      %4378 = vmatpush1.bf16.xpose.msra.mxu0 0
      %4379 = vmatprep.subr.bf16.mxu0 0
      %4380 = vmatpush1.bf16.xpose.msra.mxu0 0
      %4381 = vmatprep.subr.bf16.mxu0 0
      %4382 = vmatpush1.bf16.xpose.msra.mxu0 0
      %4383 = vmatprep.subr.bf16.mxu0 0
      %4384 = vmatpush1.bf16.xpose.msra.mxu0 0
      %4385 = vmatprep.subr.bf16.mxu0 0
      %4386 = vmatpush1.bf16.xpose.msra.mxu0 0
      %4387 = vmatprep.subr.bf16.mxu0 0
      %4388 = vmatpush1.bf16.xpose.msra.mxu0 0
      %4389 = vmatprep.subr.bf16.mxu0 0
      %4390 = vmatpush1.bf16.xpose.msra.mxu0 0
      %4391 = vmatprep.subr.bf16.mxu0 0
      %4392 = vmatpush1.bf16.xpose.msra.mxu0 0
      %4393 = vmatprep.subr.bf16.mxu0 0
      %4394 = vmatpush1.bf16.xpose.msra.mxu0 0
      %4395 = vmatprep.subr.bf16.mxu0 0
      %4396 = vmatpush1.bf16.xpose.msra.mxu0 0
      %4397 = vmatprep.subr.bf16.mxu0 0
      %4398 = vmatpush1.bf16.xpose.msra.mxu0 0
      %4399 = vmatprep.subr.bf16.mxu0 0
      %4400 = vmatpush1.bf16.xpose.msra.mxu0 0
      %4401 = vmatprep.subr.bf16.mxu0 0
      %4402 = vmatpush1.bf16.xpose.msra.mxu0 0
      %4403 = vmatprep.subr.bf16.mxu0 0
      %4404 = vmatpush1.bf16.xpose.msra.mxu0 0
      %4405 = vmatprep.mubr.bf16.mxu0 0
      %4406 = vmatmul.mubr.bf16.gmra.mrb[0].mxu0 %v4368
      %v4407 = vpop.f32.mrb[0].mxu0
      %v4408 = vadd.f32 0.0, %v4407
      %v4409 = vpop.f32.mrb[0].mxu0
      %v4410 = vpop.f32.mrb[0].mxu0
      %v4411 = vpop.f32.mrb[0].mxu0
      %4412 = vdwg.mxu0
      %v4414 = vsel %vm1941, %v4270, 0
      %v4417 = vsel %vm1941, %v4274, 0
      %4419 = vmatprep.subr.bf16.mxu0 0
      %4420 = vmatpush1.bf16.xpose.msra.mxu0 %v4417
      %4421 = vmatprep.subr.bf16.mxu0 0
      %4422 = vmatpush1.bf16.xpose.msra.mxu0 0
      %4423 = vmatprep.subr.bf16.mxu0 0
      %4424 = vmatpush1.bf16.xpose.msra.mxu0 0
      %4425 = vmatprep.subr.bf16.mxu0 0
      %4426 = vmatpush1.bf16.xpose.msra.mxu0 0
      %4427 = vmatprep.subr.bf16.mxu0 0
      %4428 = vmatpush1.bf16.xpose.msra.mxu0 0
      %4429 = vmatprep.subr.bf16.mxu0 0
      %4430 = vmatpush1.bf16.xpose.msra.mxu0 0
      %4431 = vmatprep.subr.bf16.mxu0 0
      %4432 = vmatpush1.bf16.xpose.msra.mxu0 0
      %4433 = vmatprep.subr.bf16.mxu0 0
      %4434 = vmatpush1.bf16.xpose.msra.mxu0 0
      %4435 = vmatprep.subr.bf16.mxu0 0
      %4436 = vmatpush1.bf16.xpose.msra.mxu0 0
      %4437 = vmatprep.subr.bf16.mxu0 0
      %4438 = vmatpush1.bf16.xpose.msra.mxu0 0
      %4439 = vmatprep.subr.bf16.mxu0 0
      %4440 = vmatpush1.bf16.xpose.msra.mxu0 0
      %4441 = vmatprep.subr.bf16.mxu0 0
      %4442 = vmatpush1.bf16.xpose.msra.mxu0 0
      %4443 = vmatprep.subr.bf16.mxu0 0
      %4444 = vmatpush1.bf16.xpose.msra.mxu0 0
      %4445 = vmatprep.subr.bf16.mxu0 0
      %4446 = vmatpush1.bf16.xpose.msra.mxu0 0
      %4447 = vmatprep.subr.bf16.mxu0 0
      %4448 = vmatpush1.bf16.xpose.msra.mxu0 0
      %4449 = vmatprep.subr.bf16.mxu0 0
      %4450 = vmatpush1.bf16.xpose.msra.mxu0 0
      %4451 = vmatprep.mubr.bf16.mxu0 0
      %4452 = vmatmul.mubr.bf16.gmra.mrb[0].mxu0 %v4414
      %v4453 = vpop.f32.mrb[0].mxu0
      %v4454 = vadd.f32 0.0, %v4453
      %v4455 = vpop.f32.mrb[0].mxu0
      %v4456 = vpop.f32.mrb[0].mxu0
      %v4457 = vpop.f32.mrb[0].mxu0
      %4458 = vdwg.mxu0
      %v4459 = vmul.f32 %v4316, 0.17677669
      %v4460 = vmul.f32 %v4362, 0.17677669
      %v4461 = vmul.f32 %v4408, 0.17677669
      %v4462 = vmul.f32 %v4454, 0.17677669
      %v4463 = vadd.f32 %v4459, %v2658
      %v4464 = vadd.f32 %v4460, %v2658
      %v4465 = vadd.f32 %v4461, %v2658
      %v4466 = vadd.f32 %v4462, %v2658
      %v4467 = vsel %vm3199, %v4463, -inf
      %4468 = vmax.xlane.f32.xlu0 %v4467
      %v4469 = vpop.xlane.xlu0 %4468
      %v4470 = vsel %vm3199, %v4464, -inf
      %4471 = vmax.xlane.f32.xlu0 %v4470
      %v4472 = vpop.xlane.xlu0 %4471
      %v4473 = vsel %vm3199, %v4465, -inf
      %4474 = vmax.xlane.f32.xlu0 %v4473
      %v4475 = vpop.xlane.xlu0 %4474
      %v4476 = vsel %vm3199, %v4466, -inf
      %4477 = vmax.xlane.f32.xlu0 %v4476
      %v4478 = vpop.xlane.xlu0 %4477
      %v4479 = vsub.f32 %v4463, %v4469
      %v4480 = vsub.f32 %v4464, %v4472
      %v4481 = vsub.f32 %v4465, %v4475
      %v4482 = vsub.f32 %v4466, %v4478
      %v4483 = vmul.f32 %v4479, 1.442695
      %v4484 = vpow.pop %v4483
      %v4485 = vmul.f32 %v4480, 1.442695
      %v4486 = vpow.pop %v4485
      %v4487 = vmul.f32 %v4481, 1.442695
      %v4488 = vpow.pop %v4487
      %v4489 = vmul.f32 %v4482, 1.442695
      %v4490 = vpow.pop %v4489
      %v4491 = vsel %vm3199, %v4484, 0.0
      %4492 = vadd.xlane.f32.xlu0 %v4491
      %v4493 = vpop.xlane.xlu0 %4492
      %v4494 = vsel %vm3199, %v4486, 0.0
      %4495 = vadd.xlane.f32.xlu0 %v4494
      %v4496 = vpop.xlane.xlu0 %4495
      %v4497 = vsel %vm3199, %v4488, 0.0
      %4498 = vadd.xlane.f32.xlu0 %v4497
      %v4499 = vpop.xlane.xlu0 %4498
      %v4500 = vsel %vm3199, %v4490, 0.0
      %4501 = vadd.xlane.f32.xlu0 %v4500
      %v4502 = vpop.xlane.xlu0 %4501
      %v4503 = vrcp.pop %v4493
      %v4504 = vrcp.pop %v4496
      %v4505 = vrcp.pop %v4499
      %v4506 = vrcp.pop %v4502
      %v4507 = vmul.f32 %v4484, %v4503
      %v4508 = vmul.f32 %v4486, %v4504
      %v4509 = vmul.f32 %v4488, %v4505
      %v4510 = vmul.f32 %v4490, %v4506
      %v4511 = vpack.c.bf16 %v4507, %v4507
      %v4512 = vpack.c.bf16 %v4508, %v4508
      %v4513 = vpack.c.bf16 %v4509, %v4509
      %v4514 = vpack.c.bf16 %v4510, %v4510
      %v4515 = vpack.c.bf16 %v4232, %v4232
      %v4516 = vpack.c.bf16 %v4259, %v4259
      %v4517 = vpack.c.bf16 %v4262, %v4262
      %v4518 = vpack.c.bf16 %v4265, %v4265
      %v4520 = vsel %vm3199, %v4511, 0
      %v4523 = vsel %vm3255, %v4515, 0
      %4525 = vmatprep.subr.bf16.mxu0 0
      %4526 = vmatpush1.bf16.msra.mxu0 %v4523
      %4527 = vmatprep.subr.bf16.mxu0 0
      %4528 = vmatpush1.bf16.msra.mxu0 0
      %4529 = vmatprep.subr.bf16.mxu0 0
      %4530 = vmatpush1.bf16.msra.mxu0 0
      %4531 = vmatprep.subr.bf16.mxu0 0
      %4532 = vmatpush1.bf16.msra.mxu0 0
      %4533 = vmatprep.subr.bf16.mxu0 0
      %4534 = vmatpush1.bf16.msra.mxu0 0
      %4535 = vmatprep.subr.bf16.mxu0 0
      %4536 = vmatpush1.bf16.msra.mxu0 0
      %4537 = vmatprep.subr.bf16.mxu0 0
      %4538 = vmatpush1.bf16.msra.mxu0 0
      %4539 = vmatprep.subr.bf16.mxu0 0
      %4540 = vmatpush1.bf16.msra.mxu0 0
      %4541 = vmatprep.subr.bf16.mxu0 0
      %4542 = vmatpush1.bf16.msra.mxu0 0
      %4543 = vmatprep.subr.bf16.mxu0 0
      %4544 = vmatpush1.bf16.msra.mxu0 0
      %4545 = vmatprep.subr.bf16.mxu0 0
      %4546 = vmatpush1.bf16.msra.mxu0 0
      %4547 = vmatprep.subr.bf16.mxu0 0
      %4548 = vmatpush1.bf16.msra.mxu0 0
      %4549 = vmatprep.subr.bf16.mxu0 0
      %4550 = vmatpush1.bf16.msra.mxu0 0
      %4551 = vmatprep.subr.bf16.mxu0 0
      %4552 = vmatpush1.bf16.msra.mxu0 0
      %4553 = vmatprep.subr.bf16.mxu0 0
      %4554 = vmatpush1.bf16.msra.mxu0 0
      %4555 = vmatprep.subr.bf16.mxu0 0
      %4556 = vmatpush1.bf16.msra.mxu0 0
      %4557 = vmatprep.mubr.bf16.mxu0 0
      %4558 = vmatmul.mubr.bf16.gmra.mrb[0].mxu0 %v4520
      %v4559 = vpop.f32.mrb[0].mxu0
      %v4560 = vadd.f32 0.0, %v4559
      %v4561 = vpop.f32.mrb[0].mxu0
      %v4562 = vpop.f32.mrb[0].mxu0
      %v4563 = vpop.f32.mrb[0].mxu0
      %4564 = vdwg.mxu0
      %v4566 = vsel %vm3199, %v4512, 0
      %v4569 = vsel %vm3255, %v4516, 0
      %4571 = vmatprep.subr.bf16.mxu0 0
      %4572 = vmatpush1.bf16.msra.mxu0 %v4569
      %4573 = vmatprep.subr.bf16.mxu0 0
      %4574 = vmatpush1.bf16.msra.mxu0 0
      %4575 = vmatprep.subr.bf16.mxu0 0
      %4576 = vmatpush1.bf16.msra.mxu0 0
      %4577 = vmatprep.subr.bf16.mxu0 0
      %4578 = vmatpush1.bf16.msra.mxu0 0
      %4579 = vmatprep.subr.bf16.mxu0 0
      %4580 = vmatpush1.bf16.msra.mxu0 0
      %4581 = vmatprep.subr.bf16.mxu0 0
      %4582 = vmatpush1.bf16.msra.mxu0 0
      %4583 = vmatprep.subr.bf16.mxu0 0
      %4584 = vmatpush1.bf16.msra.mxu0 0
      %4585 = vmatprep.subr.bf16.mxu0 0
      %4586 = vmatpush1.bf16.msra.mxu0 0
      %4587 = vmatprep.subr.bf16.mxu0 0
      %4588 = vmatpush1.bf16.msra.mxu0 0
      %4589 = vmatprep.subr.bf16.mxu0 0
      %4590 = vmatpush1.bf16.msra.mxu0 0
      %4591 = vmatprep.subr.bf16.mxu0 0
      %4592 = vmatpush1.bf16.msra.mxu0 0
      %4593 = vmatprep.subr.bf16.mxu0 0
      %4594 = vmatpush1.bf16.msra.mxu0 0
      %4595 = vmatprep.subr.bf16.mxu0 0
      %4596 = vmatpush1.bf16.msra.mxu0 0
      %4597 = vmatprep.subr.bf16.mxu0 0
      %4598 = vmatpush1.bf16.msra.mxu0 0
      %4599 = vmatprep.subr.bf16.mxu0 0
      %4600 = vmatpush1.bf16.msra.mxu0 0
      %4601 = vmatprep.subr.bf16.mxu0 0
      %4602 = vmatpush1.bf16.msra.mxu0 0
      %4603 = vmatprep.mubr.bf16.mxu0 0
      %4604 = vmatmul.mubr.bf16.gmra.mrb[0].mxu0 %v4566
      %v4605 = vpop.f32.mrb[0].mxu0
      %v4606 = vadd.f32 0.0, %v4605
      %v4607 = vpop.f32.mrb[0].mxu0
      %v4608 = vpop.f32.mrb[0].mxu0
      %v4609 = vpop.f32.mrb[0].mxu0
      %4610 = vdwg.mxu0
      %v4612 = vsel %vm3199, %v4513, 0
      %v4615 = vsel %vm3255, %v4517, 0
      %4617 = vmatprep.subr.bf16.mxu0 0
      %4618 = vmatpush1.bf16.msra.mxu0 %v4615
      %4619 = vmatprep.subr.bf16.mxu0 0
      %4620 = vmatpush1.bf16.msra.mxu0 0
      %4621 = vmatprep.subr.bf16.mxu0 0
      %4622 = vmatpush1.bf16.msra.mxu0 0
      %4623 = vmatprep.subr.bf16.mxu0 0
      %4624 = vmatpush1.bf16.msra.mxu0 0
      %4625 = vmatprep.subr.bf16.mxu0 0
      %4626 = vmatpush1.bf16.msra.mxu0 0
      %4627 = vmatprep.subr.bf16.mxu0 0
      %4628 = vmatpush1.bf16.msra.mxu0 0
      %4629 = vmatprep.subr.bf16.mxu0 0
      %4630 = vmatpush1.bf16.msra.mxu0 0
      %4631 = vmatprep.subr.bf16.mxu0 0
      %4632 = vmatpush1.bf16.msra.mxu0 0
      %4633 = vmatprep.subr.bf16.mxu0 0
      %4634 = vmatpush1.bf16.msra.mxu0 0
      %4635 = vmatprep.subr.bf16.mxu0 0
      %4636 = vmatpush1.bf16.msra.mxu0 0
      %4637 = vmatprep.subr.bf16.mxu0 0
      %4638 = vmatpush1.bf16.msra.mxu0 0
      %4639 = vmatprep.subr.bf16.mxu0 0
      %4640 = vmatpush1.bf16.msra.mxu0 0
      %4641 = vmatprep.subr.bf16.mxu0 0
      %4642 = vmatpush1.bf16.msra.mxu0 0
      %4643 = vmatprep.subr.bf16.mxu0 0
      %4644 = vmatpush1.bf16.msra.mxu0 0
      %4645 = vmatprep.subr.bf16.mxu0 0
      %4646 = vmatpush1.bf16.msra.mxu0 0
      %4647 = vmatprep.subr.bf16.mxu0 0
      %4648 = vmatpush1.bf16.msra.mxu0 0
      %4649 = vmatprep.mubr.bf16.mxu0 0
      %4650 = vmatmul.mubr.bf16.gmra.mrb[0].mxu0 %v4612
      %v4651 = vpop.f32.mrb[0].mxu0
      %v4652 = vadd.f32 0.0, %v4651
      %v4653 = vpop.f32.mrb[0].mxu0
      %v4654 = vpop.f32.mrb[0].mxu0
      %v4655 = vpop.f32.mrb[0].mxu0
      %4656 = vdwg.mxu0
      %v4658 = vsel %vm3199, %v4514, 0
      %v4661 = vsel %vm3255, %v4518, 0
      %4663 = vmatprep.subr.bf16.mxu0 0
      %4664 = vmatpush1.bf16.msra.mxu0 %v4661
      %4665 = vmatprep.subr.bf16.mxu0 0
      %4666 = vmatpush1.bf16.msra.mxu0 0
      %4667 = vmatprep.subr.bf16.mxu0 0
      %4668 = vmatpush1.bf16.msra.mxu0 0
      %4669 = vmatprep.subr.bf16.mxu0 0
      %4670 = vmatpush1.bf16.msra.mxu0 0
      %4671 = vmatprep.subr.bf16.mxu0 0
      %4672 = vmatpush1.bf16.msra.mxu0 0
      %4673 = vmatprep.subr.bf16.mxu0 0
      %4674 = vmatpush1.bf16.msra.mxu0 0
      %4675 = vmatprep.subr.bf16.mxu0 0
      %4676 = vmatpush1.bf16.msra.mxu0 0
      %4677 = vmatprep.subr.bf16.mxu0 0
      %4678 = vmatpush1.bf16.msra.mxu0 0
      %4679 = vmatprep.subr.bf16.mxu0 0
      %4680 = vmatpush1.bf16.msra.mxu0 0
      %4681 = vmatprep.subr.bf16.mxu0 0
      %4682 = vmatpush1.bf16.msra.mxu0 0
      %4683 = vmatprep.subr.bf16.mxu0 0
      %4684 = vmatpush1.bf16.msra.mxu0 0
      %4685 = vmatprep.subr.bf16.mxu0 0
      %4686 = vmatpush1.bf16.msra.mxu0 0
      %4687 = vmatprep.subr.bf16.mxu0 0
      %4688 = vmatpush1.bf16.msra.mxu0 0
      %4689 = vmatprep.subr.bf16.mxu0 0
      %4690 = vmatpush1.bf16.msra.mxu0 0
      %4691 = vmatprep.subr.bf16.mxu0 0
      %4692 = vmatpush1.bf16.msra.mxu0 0
      %4693 = vmatprep.subr.bf16.mxu0 0
      %4694 = vmatpush1.bf16.msra.mxu0 0
      %4695 = vmatprep.mubr.bf16.mxu0 0
      %4696 = vmatmul.mubr.bf16.gmra.mrb[0].mxu0 %v4658
      %v4697 = vpop.f32.mrb[0].mxu0
      %v4698 = vadd.f32 0.0, %v4697
      %v4699 = vpop.f32.mrb[0].mxu0
      %v4700 = vpop.f32.mrb[0].mxu0
      %v4701 = vpop.f32.mrb[0].mxu0
      %4702 = vdwg.mxu0
      %4704 = vrot.lane.b32.xlu0 %v4606, 32
      %v4705 = vpop.permute.xlu0 %4704
      %4708 = vrot.lane.b32.xlu0 %v4652, 64
      %v4709 = vpop.permute.xlu0 %4708
      %4712 = vrot.lane.b32.xlu0 %v4698, 96
      %v4713 = vpop.permute.xlu0 %4712
      %v4715 = vsel %vm1941, %v4560, %v4705
      %v4716 = vsel %vm3450, %v4715, %v4709
      %v4717 = vsel %vm3452, %v4716, %v4713
      %v4718 = vpack.c.bf16 %v4717, %v4717
      %v4720 = vlaneseq
      %v4721 = vshrl.u32 %v4720, 7
      %v4722 = vsub.s32 0, %v4721
      %v4723 = vrot.slane %v4010, %v4722
      %v4741 = vunpack.c.l.b16 %v3994
      %v4742 = vunpack.c.l.b16 %v3995
      %v4743 = vunpack.c.l.b16 %v3996
      %v4744 = vunpack.c.l.b16 %v3997
      %v4745 = vunpack.c.l.b16 %v3998
      %v4746 = vunpack.c.l.b16 %v3999
      %v4747 = vunpack.c.l.b16 %v4000
      %v4748 = vunpack.c.l.b16 %v4001
      %v4749 = vunpack.c.l.b16 %v4002
      %v4750 = vunpack.c.l.b16 %v4003
      %v4751 = vunpack.c.l.b16 %v4004
      %v4752 = vunpack.c.l.b16 %v4005
      %v4753 = vunpack.c.l.b16 %v4006
      %v4754 = vunpack.c.l.b16 %v4007
      %v4755 = vunpack.c.l.b16 %v4008
      %v4756 = vunpack.c.l.b16 %v4009
      %v4757 = vpack.c.b16 %v4742, %v4741
      %v4758 = vpack.c.b16 %v4744, %v4743
      %v4759 = vpack.c.b16 %v4746, %v4745
      %v4760 = vpack.c.b16 %v4748, %v4747
      %v4761 = vpack.c.b16 %v4750, %v4749
      %v4762 = vpack.c.b16 %v4752, %v4751
      %v4763 = vpack.c.b16 %v4754, %v4753
      %v4764 = vpack.c.b16 %v4756, %v4755
      %4773 = vmatprep.subr.bf16.mxu0 0
      %4774 = vmatpush1.bf16.msra.mxu0 %v4757
      %4775 = vmatprep.subr.bf16.mxu0 0
      %4776 = vmatpush1.bf16.msra.mxu0 %v4758
      %4777 = vmatprep.subr.bf16.mxu0 0
      %4778 = vmatpush1.bf16.msra.mxu0 %v4759
      %4779 = vmatprep.subr.bf16.mxu0 0
      %4780 = vmatpush1.bf16.msra.mxu0 %v4760
      %4781 = vmatprep.subr.bf16.mxu0 0
      %4782 = vmatpush1.bf16.msra.mxu0 %v4761
      %4783 = vmatprep.subr.bf16.mxu0 0
      %4784 = vmatpush1.bf16.msra.mxu0 %v4762
      %4785 = vmatprep.subr.bf16.mxu0 0
      %4786 = vmatpush1.bf16.msra.mxu0 %v4763
      %4787 = vmatprep.subr.bf16.mxu0 0
      %4788 = vmatpush1.bf16.msra.mxu0 %v4764
      %4789 = vmatprep.subr.bf16.mxu0 0
      %4790 = vmatpush1.bf16.msra.mxu0 0
      %4791 = vmatprep.subr.bf16.mxu0 0
      %4792 = vmatpush1.bf16.msra.mxu0 0
      %4793 = vmatprep.subr.bf16.mxu0 0
      %4794 = vmatpush1.bf16.msra.mxu0 0
      %4795 = vmatprep.subr.bf16.mxu0 0
      %4796 = vmatpush1.bf16.msra.mxu0 0
      %4797 = vmatprep.subr.bf16.mxu0 0
      %4798 = vmatpush1.bf16.msra.mxu0 0
      %4799 = vmatprep.subr.bf16.mxu0 0
      %4800 = vmatpush1.bf16.msra.mxu0 0
      %4801 = vmatprep.subr.bf16.mxu0 0
      %4802 = vmatpush1.bf16.msra.mxu0 0
      %4803 = vmatprep.subr.bf16.mxu0 0
      %4804 = vmatpush1.bf16.msra.mxu0 0
      %4805 = vmatprep.mubr.bf16.mxu0 0
      %4806 = vmatmul.mubr.bf16.gmra.mrb[0].mxu0 %v4718
      %v4807 = vpop.f32.mrb[0].mxu0
      %v4808 = vadd.f32 %v4723, %v4807
      %v4809 = vpop.f32.mrb[0].mxu0
      %v4810 = vpop.f32.mrb[0].mxu0
      %v4811 = vpop.f32.mrb[0].mxu0
      %4812 = vdwg.mxu0
      %v4813 = vadd.f32 %v2315, %v4808
      %v4814 = vld [vmem:[%s85] sm:$0x1]
      %v4815 = vld [vmem:[%s87] sm:$0x1]
      %4816 = vadd.xlane.f32.xlu0 %v4813
      %v4817 = vpop.xlane.xlu0 %4816
      %v4818 = vmul.f32 %v4817, %v2663
      %v4819 = vsub.f32 %v4813, %v4818
      %v4820 = vmul.f32 %v4819, %v4819
      %4821 = vadd.xlane.f32.xlu0 %v4820
      %v4822 = vpop.xlane.xlu0 %4821
      %v4823 = vmul.f32 %v4822, %v2663
      %v4824 = vadd.f32 %v4823, 1e-05
      %v4825 = vrsqrt.pop %v4824
      %v4826 = vmul.f32 %v4819, %v4825
      %v4828 = vlaneseq
      %v4829 = vshrl.u32 %v4828, 7
      %v4830 = vsub.s32 0, %v4829
      %v4831 = vrot.slane %v4814, %v4830
      %v4833 = vmul.f32 %v4826, %v4831
      %v4835 = vlaneseq
      %v4836 = vshrl.u32 %v4835, 7
      %v4837 = vsub.s32 0, %v4836
      %v4838 = vrot.slane %v4815, %v4837
      %v4840 = vadd.f32 %v4833, %v4838
      %v4841 = vld [vmem:[%s89] sm:$0xf]
      %v4842 = vld [vmem:[%s89 + $0x4] sm:$0xf]
      %v4843 = vld [vmem:[%s89 + $0x8] sm:$0xf]
      %v4844 = vld [vmem:[%s89 + $0xc] sm:$0xf]
      %v4845 = vld [vmem:[%s89 + $0x10] sm:$0xf]
      %v4846 = vld [vmem:[%s89 + $0x14] sm:$0xf]
      %v4847 = vld [vmem:[%s89 + $0x18] sm:$0xf]
      %v4848 = vld [vmem:[%s89 + $0x1c] sm:$0xf]
      %v4849 = vld [vmem:[%s89 + $0x20] sm:$0xf]
      %v4850 = vld [vmem:[%s89 + $0x24] sm:$0xf]
      %v4851 = vld [vmem:[%s89 + $0x28] sm:$0xf]
      %v4852 = vld [vmem:[%s89 + $0x2c] sm:$0xf]
      %v4853 = vld [vmem:[%s89 + $0x30] sm:$0xf]
      %v4854 = vld [vmem:[%s89 + $0x34] sm:$0xf]
      %v4855 = vld [vmem:[%s89 + $0x38] sm:$0xf]
      %v4856 = vld [vmem:[%s89 + $0x3c] sm:$0xf]
      %v4857 = vld [vmem:[%s91] sm:$0x1]
      %v4858 = vld [vmem:[%s93] sm:$0xff]
      %v4859 = vld [vmem:[%s93 + $0x8] sm:$0xff]
      %v4860 = vld [vmem:[%s93 + $0x10] sm:$0xff]
      %v4861 = vld [vmem:[%s93 + $0x18] sm:$0xff]
      %v4862 = vld [vmem:[%s93 + $0x20] sm:$0xff]
      %v4863 = vld [vmem:[%s93 + $0x28] sm:$0xff]
      %v4864 = vld [vmem:[%s93 + $0x30] sm:$0xff]
      %v4865 = vld [vmem:[%s93 + $0x38] sm:$0xff]
      %v4866 = vld [vmem:[%s93 + $0x40] sm:$0xff]
      %v4867 = vld [vmem:[%s93 + $0x48] sm:$0xff]
      %v4868 = vld [vmem:[%s93 + $0x50] sm:$0xff]
      %v4869 = vld [vmem:[%s93 + $0x58] sm:$0xff]
      %v4870 = vld [vmem:[%s93 + $0x60] sm:$0xff]
      %v4871 = vld [vmem:[%s93 + $0x68] sm:$0xff]
      %v4872 = vld [vmem:[%s93 + $0x70] sm:$0xff]
      %v4873 = vld [vmem:[%s93 + $0x78] sm:$0xff]
      %v4874 = vld [vmem:[%s95] sm:$0x3]
      %v4875 = vld [vmem:[%s97] sm:$0xf]
      %v4876 = vld [vmem:[%s97 + $0x4] sm:$0xf]
      %v4877 = vld [vmem:[%s97 + $0x8] sm:$0xf]
      %v4878 = vld [vmem:[%s97 + $0xc] sm:$0xf]
      %v4879 = vld [vmem:[%s97 + $0x10] sm:$0xf]
      %v4880 = vld [vmem:[%s97 + $0x14] sm:$0xf]
      %v4881 = vld [vmem:[%s97 + $0x18] sm:$0xf]
      %v4882 = vld [vmem:[%s97 + $0x1c] sm:$0xf]
      %v4883 = vld [vmem:[%s97 + $0x20] sm:$0xf]
      %v4884 = vld [vmem:[%s97 + $0x24] sm:$0xf]
      %v4885 = vld [vmem:[%s97 + $0x28] sm:$0xf]
      %v4886 = vld [vmem:[%s97 + $0x2c] sm:$0xf]
      %v4887 = vld [vmem:[%s97 + $0x30] sm:$0xf]
      %v4888 = vld [vmem:[%s97 + $0x34] sm:$0xf]
      %v4889 = vld [vmem:[%s97 + $0x38] sm:$0xf]
      %v4890 = vld [vmem:[%s97 + $0x3c] sm:$0xf]
      %v4891 = vld [vmem:[%s99] sm:$0x1]
      %v4892 = vpack.c.bf16 %v4840, %v4840
      %v4894 = vlaneseq
      %v4895 = vshrl.u32 %v4894, 7
      %v4896 = vsub.s32 0, %v4895
      %v4897 = vrot.slane %v4857, %v4896
      %v4915 = vunpack.c.l.b16 %v4841
      %v4916 = vunpack.c.l.b16 %v4842
      %v4917 = vunpack.c.l.b16 %v4843
      %v4918 = vunpack.c.l.b16 %v4844
      %v4919 = vunpack.c.l.b16 %v4845
      %v4920 = vunpack.c.l.b16 %v4846
      %v4921 = vunpack.c.l.b16 %v4847
      %v4922 = vunpack.c.l.b16 %v4848
      %v4923 = vunpack.c.l.b16 %v4849
      %v4924 = vunpack.c.l.b16 %v4850
      %v4925 = vunpack.c.l.b16 %v4851
      %v4926 = vunpack.c.l.b16 %v4852
      %v4927 = vunpack.c.l.b16 %v4853
      %v4928 = vunpack.c.l.b16 %v4854
      %v4929 = vunpack.c.l.b16 %v4855
      %v4930 = vunpack.c.l.b16 %v4856
      %v4931 = vpack.c.b16 %v4916, %v4915
      %v4932 = vpack.c.b16 %v4918, %v4917
      %v4933 = vpack.c.b16 %v4920, %v4919
      %v4934 = vpack.c.b16 %v4922, %v4921
      %v4935 = vpack.c.b16 %v4924, %v4923
      %v4936 = vpack.c.b16 %v4926, %v4925
      %v4937 = vpack.c.b16 %v4928, %v4927
      %v4938 = vpack.c.b16 %v4930, %v4929
      %4947 = vmatprep.subr.bf16.mxu0 0
      %4948 = vmatpush1.bf16.msra.mxu0 %v4931
      %4949 = vmatprep.subr.bf16.mxu0 0
      %4950 = vmatpush1.bf16.msra.mxu0 %v4932
      %4951 = vmatprep.subr.bf16.mxu0 0
      %4952 = vmatpush1.bf16.msra.mxu0 %v4933
      %4953 = vmatprep.subr.bf16.mxu0 0
      %4954 = vmatpush1.bf16.msra.mxu0 %v4934
      %4955 = vmatprep.subr.bf16.mxu0 0
      %4956 = vmatpush1.bf16.msra.mxu0 %v4935
      %4957 = vmatprep.subr.bf16.mxu0 0
      %4958 = vmatpush1.bf16.msra.mxu0 %v4936
      %4959 = vmatprep.subr.bf16.mxu0 0
      %4960 = vmatpush1.bf16.msra.mxu0 %v4937
      %4961 = vmatprep.subr.bf16.mxu0 0
      %4962 = vmatpush1.bf16.msra.mxu0 %v4938
      %4963 = vmatprep.subr.bf16.mxu0 0
      %4964 = vmatpush1.bf16.msra.mxu0 0
      %4965 = vmatprep.subr.bf16.mxu0 0
      %4966 = vmatpush1.bf16.msra.mxu0 0
      %4967 = vmatprep.subr.bf16.mxu0 0
      %4968 = vmatpush1.bf16.msra.mxu0 0
      %4969 = vmatprep.subr.bf16.mxu0 0
      %4970 = vmatpush1.bf16.msra.mxu0 0
      %4971 = vmatprep.subr.bf16.mxu0 0
      %4972 = vmatpush1.bf16.msra.mxu0 0
      %4973 = vmatprep.subr.bf16.mxu0 0
      %4974 = vmatpush1.bf16.msra.mxu0 0
      %4975 = vmatprep.subr.bf16.mxu0 0
      %4976 = vmatpush1.bf16.msra.mxu0 0
      %4977 = vmatprep.subr.bf16.mxu0 0
      %4978 = vmatpush1.bf16.msra.mxu0 0
      %4979 = vmatprep.mubr.bf16.mxu0 0
      %4980 = vmatmul.mubr.bf16.gmra.mrb[0].mxu0 %v4892
      %v4981 = vpop.f32.mrb[0].mxu0
      %v4982 = vadd.f32 %v4897, %v4981
      %v4983 = vpop.f32.mrb[0].mxu0
      %v4984 = vpop.f32.mrb[0].mxu0
      %v4985 = vpop.f32.mrb[0].mxu0
      %4986 = vdwg.mxu0
      %v4987 = vpack.c.bf16 %v3933, %v3933
      %v4989 = vlaneseq
      %v4990 = vshrl.u32 %v4989, 7
      %v4991 = vsub.s32 0, %v4990
      %v4992 = vrot.slane %v4874, %v4991
      %v4993 = vlaneseq
      %v4994 = vshrl.u32 %v4993, 7
      %v4995 = vsub.s32 1, %v4994
      %v4996 = vrot.slane %v4874, %v4995
      %v5015 = vunpack.c.l.b16 %v4858
      %v5016 = vunpack.c.h.b16 %v4858
      %v5017 = vunpack.c.l.b16 %v4859
      %v5018 = vunpack.c.h.b16 %v4859
      %v5019 = vunpack.c.l.b16 %v4860
      %v5020 = vunpack.c.h.b16 %v4860
      %v5021 = vunpack.c.l.b16 %v4861
      %v5022 = vunpack.c.h.b16 %v4861
      %v5023 = vunpack.c.l.b16 %v4862
      %v5024 = vunpack.c.h.b16 %v4862
      %v5025 = vunpack.c.l.b16 %v4863
      %v5026 = vunpack.c.h.b16 %v4863
      %v5027 = vunpack.c.l.b16 %v4864
      %v5028 = vunpack.c.h.b16 %v4864
      %v5029 = vunpack.c.l.b16 %v4865
      %v5030 = vunpack.c.h.b16 %v4865
      %v5031 = vunpack.c.l.b16 %v4866
      %v5032 = vunpack.c.h.b16 %v4866
      %v5033 = vunpack.c.l.b16 %v4867
      %v5034 = vunpack.c.h.b16 %v4867
      %v5035 = vunpack.c.l.b16 %v4868
      %v5036 = vunpack.c.h.b16 %v4868
      %v5037 = vunpack.c.l.b16 %v4869
      %v5038 = vunpack.c.h.b16 %v4869
      %v5039 = vunpack.c.l.b16 %v4870
      %v5040 = vunpack.c.h.b16 %v4870
      %v5041 = vunpack.c.l.b16 %v4871
      %v5042 = vunpack.c.h.b16 %v4871
      %v5043 = vunpack.c.l.b16 %v4872
      %v5044 = vunpack.c.h.b16 %v4872
      %v5045 = vunpack.c.l.b16 %v4873
      %v5046 = vunpack.c.h.b16 %v4873
      %v5047 = vpack.c.b16 %v5017, %v5015
      %v5048 = vpack.c.b16 %v5018, %v5016
      %v5049 = vpack.c.b16 %v5021, %v5019
      %v5050 = vpack.c.b16 %v5022, %v5020
      %v5051 = vpack.c.b16 %v5025, %v5023
      %v5052 = vpack.c.b16 %v5026, %v5024
      %v5053 = vpack.c.b16 %v5029, %v5027
      %v5054 = vpack.c.b16 %v5030, %v5028
      %v5055 = vpack.c.b16 %v5033, %v5031
      %v5056 = vpack.c.b16 %v5034, %v5032
      %v5057 = vpack.c.b16 %v5037, %v5035
      %v5058 = vpack.c.b16 %v5038, %v5036
      %v5059 = vpack.c.b16 %v5041, %v5039
      %v5060 = vpack.c.b16 %v5042, %v5040
      %v5061 = vpack.c.b16 %v5045, %v5043
      %v5062 = vpack.c.b16 %v5046, %v5044
      %5079 = vmatprep.subr.bf16.mxu0 %v5048
      %5080 = vmatpush1.bf16.msra.mxu0 %v5047
      %5081 = vmatprep.subr.bf16.mxu0 %v5050
      %5082 = vmatpush1.bf16.msra.mxu0 %v5049
      %5083 = vmatprep.subr.bf16.mxu0 %v5052
      %5084 = vmatpush1.bf16.msra.mxu0 %v5051
      %5085 = vmatprep.subr.bf16.mxu0 %v5054
      %5086 = vmatpush1.bf16.msra.mxu0 %v5053
      %5087 = vmatprep.subr.bf16.mxu0 %v5056
      %5088 = vmatpush1.bf16.msra.mxu0 %v5055
      %5089 = vmatprep.subr.bf16.mxu0 %v5058
      %5090 = vmatpush1.bf16.msra.mxu0 %v5057
      %5091 = vmatprep.subr.bf16.mxu0 %v5060
      %5092 = vmatpush1.bf16.msra.mxu0 %v5059
      %5093 = vmatprep.subr.bf16.mxu0 %v5062
      %5094 = vmatpush1.bf16.msra.mxu0 %v5061
      %5095 = vmatprep.subr.bf16.mxu0 0
      %5096 = vmatpush1.bf16.msra.mxu0 0
      %5097 = vmatprep.subr.bf16.mxu0 0
      %5098 = vmatpush1.bf16.msra.mxu0 0
      %5099 = vmatprep.subr.bf16.mxu0 0
      %5100 = vmatpush1.bf16.msra.mxu0 0
      %5101 = vmatprep.subr.bf16.mxu0 0
      %5102 = vmatpush1.bf16.msra.mxu0 0
      %5103 = vmatprep.subr.bf16.mxu0 0
      %5104 = vmatpush1.bf16.msra.mxu0 0
      %5105 = vmatprep.subr.bf16.mxu0 0
      %5106 = vmatpush1.bf16.msra.mxu0 0
      %5107 = vmatprep.subr.bf16.mxu0 0
      %5108 = vmatpush1.bf16.msra.mxu0 0
      %5109 = vmatprep.subr.bf16.mxu0 0
      %5110 = vmatpush1.bf16.msra.mxu0 0
      %5111 = vmatprep.mubr.bf16.mxu0 0
      %5112 = vmatmul.mubr.bf16.gmra.mrb[0].mxu0 %v4987
      %v5113 = vpop.f32.mrb[0].mxu0
      %v5114 = vadd.f32 %v4992, %v5113
      %v5115 = vpop.f32.mrb[0].mxu0
      %v5116 = vadd.f32 %v4996, %v5115
      %v5117 = vpop.f32.mrb[0].mxu0
      %v5118 = vpop.f32.mrb[0].mxu0
      %5119 = vdwg.mxu0
      %5121 = vrot.lane.b32.xlu0 %v4982, 96
      %v5122 = vpop.permute.xlu0 %5121
      %5124 = vrot.lane.b32.xlu0 %v4982, 64
      %v5125 = vpop.permute.xlu0 %5124
      %5127 = vrot.lane.b32.xlu0 %v4982, 32
      %v5128 = vpop.permute.xlu0 %5127
      %5131 = vrot.lane.b32.xlu0 %v5114, 96
      %v5132 = vpop.permute.xlu0 %5131
      %5134 = vrot.lane.b32.xlu0 %v5114, 64
      %v5135 = vpop.permute.xlu0 %5134
      %5137 = vrot.lane.b32.xlu0 %v5114, 32
      %v5138 = vpop.permute.xlu0 %5137
      %5141 = vrot.lane.b32.xlu0 %v5116, 96
      %v5142 = vpop.permute.xlu0 %5141
      %5144 = vrot.lane.b32.xlu0 %v5116, 64
      %v5145 = vpop.permute.xlu0 %5144
      %5147 = vrot.lane.b32.xlu0 %v5116, 32
      %v5148 = vpop.permute.xlu0 %5147
      %v5150 = vpack.c.bf16 %v4982, %v4982
      %v5151 = vpack.c.bf16 %v5122, %v5122
      %v5152 = vpack.c.bf16 %v5125, %v5125
      %v5153 = vpack.c.bf16 %v5128, %v5128
      %v5154 = vpack.c.bf16 %v5114, %v5114
      %v5155 = vpack.c.bf16 %v5132, %v5132
      %v5156 = vpack.c.bf16 %v5135, %v5135
      %v5157 = vpack.c.bf16 %v5138, %v5138
      %v5159 = vsel %vm1941, %v5150, 0
      %v5162 = vsel %vm1941, %v5154, 0
      %5164 = vmatprep.subr.bf16.mxu0 0
      %5165 = vmatpush1.bf16.xpose.msra.mxu0 %v5162
      %5166 = vmatprep.subr.bf16.mxu0 0
      %5167 = vmatpush1.bf16.xpose.msra.mxu0 0
      %5168 = vmatprep.subr.bf16.mxu0 0
      %5169 = vmatpush1.bf16.xpose.msra.mxu0 0
      %5170 = vmatprep.subr.bf16.mxu0 0
      %5171 = vmatpush1.bf16.xpose.msra.mxu0 0
      %5172 = vmatprep.subr.bf16.mxu0 0
      %5173 = vmatpush1.bf16.xpose.msra.mxu0 0
      %5174 = vmatprep.subr.bf16.mxu0 0
      %5175 = vmatpush1.bf16.xpose.msra.mxu0 0
      %5176 = vmatprep.subr.bf16.mxu0 0
      %5177 = vmatpush1.bf16.xpose.msra.mxu0 0
      %5178 = vmatprep.subr.bf16.mxu0 0
      %5179 = vmatpush1.bf16.xpose.msra.mxu0 0
      %5180 = vmatprep.subr.bf16.mxu0 0
      %5181 = vmatpush1.bf16.xpose.msra.mxu0 0
      %5182 = vmatprep.subr.bf16.mxu0 0
      %5183 = vmatpush1.bf16.xpose.msra.mxu0 0
      %5184 = vmatprep.subr.bf16.mxu0 0
      %5185 = vmatpush1.bf16.xpose.msra.mxu0 0
      %5186 = vmatprep.subr.bf16.mxu0 0
      %5187 = vmatpush1.bf16.xpose.msra.mxu0 0
      %5188 = vmatprep.subr.bf16.mxu0 0
      %5189 = vmatpush1.bf16.xpose.msra.mxu0 0
      %5190 = vmatprep.subr.bf16.mxu0 0
      %5191 = vmatpush1.bf16.xpose.msra.mxu0 0
      %5192 = vmatprep.subr.bf16.mxu0 0
      %5193 = vmatpush1.bf16.xpose.msra.mxu0 0
      %5194 = vmatprep.subr.bf16.mxu0 0
      %5195 = vmatpush1.bf16.xpose.msra.mxu0 0
      %5196 = vmatprep.mubr.bf16.mxu0 0
      %5197 = vmatmul.mubr.bf16.gmra.mrb[0].mxu0 %v5159
      %v5198 = vpop.f32.mrb[0].mxu0
      %v5199 = vadd.f32 0.0, %v5198
      %v5200 = vpop.f32.mrb[0].mxu0
      %v5201 = vpop.f32.mrb[0].mxu0
      %v5202 = vpop.f32.mrb[0].mxu0
      %5203 = vdwg.mxu0
      %v5205 = vsel %vm1941, %v5151, 0
      %v5208 = vsel %vm1941, %v5155, 0
      %5210 = vmatprep.subr.bf16.mxu0 0
      %5211 = vmatpush1.bf16.xpose.msra.mxu0 %v5208
      %5212 = vmatprep.subr.bf16.mxu0 0
      %5213 = vmatpush1.bf16.xpose.msra.mxu0 0
      %5214 = vmatprep.subr.bf16.mxu0 0
      %5215 = vmatpush1.bf16.xpose.msra.mxu0 0
      %5216 = vmatprep.subr.bf16.mxu0 0
      %5217 = vmatpush1.bf16.xpose.msra.mxu0 0
      %5218 = vmatprep.subr.bf16.mxu0 0
      %5219 = vmatpush1.bf16.xpose.msra.mxu0 0
      %5220 = vmatprep.subr.bf16.mxu0 0
      %5221 = vmatpush1.bf16.xpose.msra.mxu0 0
      %5222 = vmatprep.subr.bf16.mxu0 0
      %5223 = vmatpush1.bf16.xpose.msra.mxu0 0
      %5224 = vmatprep.subr.bf16.mxu0 0
      %5225 = vmatpush1.bf16.xpose.msra.mxu0 0
      %5226 = vmatprep.subr.bf16.mxu0 0
      %5227 = vmatpush1.bf16.xpose.msra.mxu0 0
      %5228 = vmatprep.subr.bf16.mxu0 0
      %5229 = vmatpush1.bf16.xpose.msra.mxu0 0
      %5230 = vmatprep.subr.bf16.mxu0 0
      %5231 = vmatpush1.bf16.xpose.msra.mxu0 0
      %5232 = vmatprep.subr.bf16.mxu0 0
      %5233 = vmatpush1.bf16.xpose.msra.mxu0 0
      %5234 = vmatprep.subr.bf16.mxu0 0
      %5235 = vmatpush1.bf16.xpose.msra.mxu0 0
      %5236 = vmatprep.subr.bf16.mxu0 0
      %5237 = vmatpush1.bf16.xpose.msra.mxu0 0
      %5238 = vmatprep.subr.bf16.mxu0 0
      %5239 = vmatpush1.bf16.xpose.msra.mxu0 0
      %5240 = vmatprep.subr.bf16.mxu0 0
      %5241 = vmatpush1.bf16.xpose.msra.mxu0 0
      %5242 = vmatprep.mubr.bf16.mxu0 0
      %5243 = vmatmul.mubr.bf16.gmra.mrb[0].mxu0 %v5205
      %v5244 = vpop.f32.mrb[0].mxu0
      %v5245 = vadd.f32 0.0, %v5244
      %v5246 = vpop.f32.mrb[0].mxu0
      %v5247 = vpop.f32.mrb[0].mxu0
      %v5248 = vpop.f32.mrb[0].mxu0
      %5249 = vdwg.mxu0
      %v5251 = vsel %vm1941, %v5152, 0
      %v5254 = vsel %vm1941, %v5156, 0
      %5256 = vmatprep.subr.bf16.mxu0 0
      %5257 = vmatpush1.bf16.xpose.msra.mxu0 %v5254
      %5258 = vmatprep.subr.bf16.mxu0 0
      %5259 = vmatpush1.bf16.xpose.msra.mxu0 0
      %5260 = vmatprep.subr.bf16.mxu0 0
      %5261 = vmatpush1.bf16.xpose.msra.mxu0 0
      %5262 = vmatprep.subr.bf16.mxu0 0
      %5263 = vmatpush1.bf16.xpose.msra.mxu0 0
      %5264 = vmatprep.subr.bf16.mxu0 0
      %5265 = vmatpush1.bf16.xpose.msra.mxu0 0
      %5266 = vmatprep.subr.bf16.mxu0 0
      %5267 = vmatpush1.bf16.xpose.msra.mxu0 0
      %5268 = vmatprep.subr.bf16.mxu0 0
      %5269 = vmatpush1.bf16.xpose.msra.mxu0 0
      %5270 = vmatprep.subr.bf16.mxu0 0
      %5271 = vmatpush1.bf16.xpose.msra.mxu0 0
      %5272 = vmatprep.subr.bf16.mxu0 0
      %5273 = vmatpush1.bf16.xpose.msra.mxu0 0
      %5274 = vmatprep.subr.bf16.mxu0 0
      %5275 = vmatpush1.bf16.xpose.msra.mxu0 0
      %5276 = vmatprep.subr.bf16.mxu0 0
      %5277 = vmatpush1.bf16.xpose.msra.mxu0 0
      %5278 = vmatprep.subr.bf16.mxu0 0
      %5279 = vmatpush1.bf16.xpose.msra.mxu0 0
      %5280 = vmatprep.subr.bf16.mxu0 0
      %5281 = vmatpush1.bf16.xpose.msra.mxu0 0
      %5282 = vmatprep.subr.bf16.mxu0 0
      %5283 = vmatpush1.bf16.xpose.msra.mxu0 0
      %5284 = vmatprep.subr.bf16.mxu0 0
      %5285 = vmatpush1.bf16.xpose.msra.mxu0 0
      %5286 = vmatprep.subr.bf16.mxu0 0
      %5287 = vmatpush1.bf16.xpose.msra.mxu0 0
      %5288 = vmatprep.mubr.bf16.mxu0 0
      %5289 = vmatmul.mubr.bf16.gmra.mrb[0].mxu0 %v5251
      %v5290 = vpop.f32.mrb[0].mxu0
      %v5291 = vadd.f32 0.0, %v5290
      %v5292 = vpop.f32.mrb[0].mxu0
      %v5293 = vpop.f32.mrb[0].mxu0
      %v5294 = vpop.f32.mrb[0].mxu0
      %5295 = vdwg.mxu0
      %v5297 = vsel %vm1941, %v5153, 0
      %v5300 = vsel %vm1941, %v5157, 0
      %5302 = vmatprep.subr.bf16.mxu0 0
      %5303 = vmatpush1.bf16.xpose.msra.mxu0 %v5300
      %5304 = vmatprep.subr.bf16.mxu0 0
      %5305 = vmatpush1.bf16.xpose.msra.mxu0 0
      %5306 = vmatprep.subr.bf16.mxu0 0
      %5307 = vmatpush1.bf16.xpose.msra.mxu0 0
      %5308 = vmatprep.subr.bf16.mxu0 0
      %5309 = vmatpush1.bf16.xpose.msra.mxu0 0
      %5310 = vmatprep.subr.bf16.mxu0 0
      %5311 = vmatpush1.bf16.xpose.msra.mxu0 0
      %5312 = vmatprep.subr.bf16.mxu0 0
      %5313 = vmatpush1.bf16.xpose.msra.mxu0 0
      %5314 = vmatprep.subr.bf16.mxu0 0
      %5315 = vmatpush1.bf16.xpose.msra.mxu0 0
      %5316 = vmatprep.subr.bf16.mxu0 0
      %5317 = vmatpush1.bf16.xpose.msra.mxu0 0
      %5318 = vmatprep.subr.bf16.mxu0 0
      %5319 = vmatpush1.bf16.xpose.msra.mxu0 0
      %5320 = vmatprep.subr.bf16.mxu0 0
      %5321 = vmatpush1.bf16.xpose.msra.mxu0 0
      %5322 = vmatprep.subr.bf16.mxu0 0
      %5323 = vmatpush1.bf16.xpose.msra.mxu0 0
      %5324 = vmatprep.subr.bf16.mxu0 0
      %5325 = vmatpush1.bf16.xpose.msra.mxu0 0
      %5326 = vmatprep.subr.bf16.mxu0 0
      %5327 = vmatpush1.bf16.xpose.msra.mxu0 0
      %5328 = vmatprep.subr.bf16.mxu0 0
      %5329 = vmatpush1.bf16.xpose.msra.mxu0 0
      %5330 = vmatprep.subr.bf16.mxu0 0
      %5331 = vmatpush1.bf16.xpose.msra.mxu0 0
      %5332 = vmatprep.subr.bf16.mxu0 0
      %5333 = vmatpush1.bf16.xpose.msra.mxu0 0
      %5334 = vmatprep.mubr.bf16.mxu0 0
      %5335 = vmatmul.mubr.bf16.gmra.mrb[0].mxu0 %v5297
      %v5336 = vpop.f32.mrb[0].mxu0
      %v5337 = vadd.f32 0.0, %v5336
      %v5338 = vpop.f32.mrb[0].mxu0
      %v5339 = vpop.f32.mrb[0].mxu0
      %v5340 = vpop.f32.mrb[0].mxu0
      %5341 = vdwg.mxu0
      %v5342 = vmul.f32 %v5199, 0.17677669
      %v5343 = vmul.f32 %v5245, 0.17677669
      %v5344 = vmul.f32 %v5291, 0.17677669
      %v5345 = vmul.f32 %v5337, 0.17677669
      %v5346 = vadd.f32 %v5342, %v3193
      %v5347 = vadd.f32 %v5343, %v3193
      %v5348 = vadd.f32 %v5344, %v3193
      %v5349 = vadd.f32 %v5345, %v3193
      %v5350 = vsel %vm3199, %v5346, -inf
      %5351 = vmax.xlane.f32.xlu0 %v5350
      %v5352 = vpop.xlane.xlu0 %5351
      %v5353 = vsel %vm3199, %v5347, -inf
      %5354 = vmax.xlane.f32.xlu0 %v5353
      %v5355 = vpop.xlane.xlu0 %5354
      %v5356 = vsel %vm3199, %v5348, -inf
      %5357 = vmax.xlane.f32.xlu0 %v5356
      %v5358 = vpop.xlane.xlu0 %5357
      %v5359 = vsel %vm3199, %v5349, -inf
      %5360 = vmax.xlane.f32.xlu0 %v5359
      %v5361 = vpop.xlane.xlu0 %5360
      %v5362 = vsub.f32 %v5346, %v5352
      %v5363 = vsub.f32 %v5347, %v5355
      %v5364 = vsub.f32 %v5348, %v5358
      %v5365 = vsub.f32 %v5349, %v5361
      %v5366 = vmul.f32 %v5362, 1.442695
      %v5367 = vpow.pop %v5366
      %v5368 = vmul.f32 %v5363, 1.442695
      %v5369 = vpow.pop %v5368
      %v5370 = vmul.f32 %v5364, 1.442695
      %v5371 = vpow.pop %v5370
      %v5372 = vmul.f32 %v5365, 1.442695
      %v5373 = vpow.pop %v5372
      %v5374 = vsel %vm3199, %v5367, 0.0
      %5375 = vadd.xlane.f32.xlu0 %v5374
      %v5376 = vpop.xlane.xlu0 %5375
      %v5377 = vsel %vm3199, %v5369, 0.0
      %5378 = vadd.xlane.f32.xlu0 %v5377
      %v5379 = vpop.xlane.xlu0 %5378
      %v5380 = vsel %vm3199, %v5371, 0.0
      %5381 = vadd.xlane.f32.xlu0 %v5380
      %v5382 = vpop.xlane.xlu0 %5381
      %v5383 = vsel %vm3199, %v5373, 0.0
      %5384 = vadd.xlane.f32.xlu0 %v5383
      %v5385 = vpop.xlane.xlu0 %5384
      %v5386 = vrcp.pop %v5376
      %v5387 = vrcp.pop %v5379
      %v5388 = vrcp.pop %v5382
      %v5389 = vrcp.pop %v5385
      %v5390 = vmul.f32 %v5367, %v5386
      %v5391 = vmul.f32 %v5369, %v5387
      %v5392 = vmul.f32 %v5371, %v5388
      %v5393 = vmul.f32 %v5373, %v5389
      %v5394 = vpack.c.bf16 %v5390, %v5390
      %v5395 = vpack.c.bf16 %v5391, %v5391
      %v5396 = vpack.c.bf16 %v5392, %v5392
      %v5397 = vpack.c.bf16 %v5393, %v5393
      %v5398 = vpack.c.bf16 %v5116, %v5116
      %v5399 = vpack.c.bf16 %v5142, %v5142
      %v5400 = vpack.c.bf16 %v5145, %v5145
      %v5401 = vpack.c.bf16 %v5148, %v5148
      %v5403 = vsel %vm3199, %v5394, 0
      %v5406 = vsel %vm3255, %v5398, 0
      %5408 = vmatprep.subr.bf16.mxu0 0
      %5409 = vmatpush1.bf16.msra.mxu0 %v5406
      %5410 = vmatprep.subr.bf16.mxu0 0
      %5411 = vmatpush1.bf16.msra.mxu0 0
      %5412 = vmatprep.subr.bf16.mxu0 0
      %5413 = vmatpush1.bf16.msra.mxu0 0
      %5414 = vmatprep.subr.bf16.mxu0 0
      %5415 = vmatpush1.bf16.msra.mxu0 0
      %5416 = vmatprep.subr.bf16.mxu0 0
      %5417 = vmatpush1.bf16.msra.mxu0 0
      %5418 = vmatprep.subr.bf16.mxu0 0
      %5419 = vmatpush1.bf16.msra.mxu0 0
      %5420 = vmatprep.subr.bf16.mxu0 0
      %5421 = vmatpush1.bf16.msra.mxu0 0
      %5422 = vmatprep.subr.bf16.mxu0 0
      %5423 = vmatpush1.bf16.msra.mxu0 0
      %5424 = vmatprep.subr.bf16.mxu0 0
      %5425 = vmatpush1.bf16.msra.mxu0 0
      %5426 = vmatprep.subr.bf16.mxu0 0
      %5427 = vmatpush1.bf16.msra.mxu0 0
      %5428 = vmatprep.subr.bf16.mxu0 0
      %5429 = vmatpush1.bf16.msra.mxu0 0
      %5430 = vmatprep.subr.bf16.mxu0 0
      %5431 = vmatpush1.bf16.msra.mxu0 0
      %5432 = vmatprep.subr.bf16.mxu0 0
      %5433 = vmatpush1.bf16.msra.mxu0 0
      %5434 = vmatprep.subr.bf16.mxu0 0
      %5435 = vmatpush1.bf16.msra.mxu0 0
      %5436 = vmatprep.subr.bf16.mxu0 0
      %5437 = vmatpush1.bf16.msra.mxu0 0
      %5438 = vmatprep.subr.bf16.mxu0 0
      %5439 = vmatpush1.bf16.msra.mxu0 0
      %5440 = vmatprep.mubr.bf16.mxu0 0
      %5441 = vmatmul.mubr.bf16.gmra.mrb[0].mxu0 %v5403
      %v5442 = vpop.f32.mrb[0].mxu0
      %v5443 = vadd.f32 0.0, %v5442
      %v5444 = vpop.f32.mrb[0].mxu0
      %v5445 = vpop.f32.mrb[0].mxu0
      %v5446 = vpop.f32.mrb[0].mxu0
      %5447 = vdwg.mxu0
      %v5449 = vsel %vm3199, %v5395, 0
      %v5452 = vsel %vm3255, %v5399, 0
      %5454 = vmatprep.subr.bf16.mxu0 0
      %5455 = vmatpush1.bf16.msra.mxu0 %v5452
      %5456 = vmatprep.subr.bf16.mxu0 0
      %5457 = vmatpush1.bf16.msra.mxu0 0
      %5458 = vmatprep.subr.bf16.mxu0 0
      %5459 = vmatpush1.bf16.msra.mxu0 0
      %5460 = vmatprep.subr.bf16.mxu0 0
      %5461 = vmatpush1.bf16.msra.mxu0 0
      %5462 = vmatprep.subr.bf16.mxu0 0
      %5463 = vmatpush1.bf16.msra.mxu0 0
      %5464 = vmatprep.subr.bf16.mxu0 0
      %5465 = vmatpush1.bf16.msra.mxu0 0
      %5466 = vmatprep.subr.bf16.mxu0 0
      %5467 = vmatpush1.bf16.msra.mxu0 0
      %5468 = vmatprep.subr.bf16.mxu0 0
      %5469 = vmatpush1.bf16.msra.mxu0 0
      %5470 = vmatprep.subr.bf16.mxu0 0
      %5471 = vmatpush1.bf16.msra.mxu0 0
      %5472 = vmatprep.subr.bf16.mxu0 0
      %5473 = vmatpush1.bf16.msra.mxu0 0
      %5474 = vmatprep.subr.bf16.mxu0 0
      %5475 = vmatpush1.bf16.msra.mxu0 0
      %5476 = vmatprep.subr.bf16.mxu0 0
      %5477 = vmatpush1.bf16.msra.mxu0 0
      %5478 = vmatprep.subr.bf16.mxu0 0
      %5479 = vmatpush1.bf16.msra.mxu0 0
      %5480 = vmatprep.subr.bf16.mxu0 0
      %5481 = vmatpush1.bf16.msra.mxu0 0
      %5482 = vmatprep.subr.bf16.mxu0 0
      %5483 = vmatpush1.bf16.msra.mxu0 0
      %5484 = vmatprep.subr.bf16.mxu0 0
      %5485 = vmatpush1.bf16.msra.mxu0 0
      %5486 = vmatprep.mubr.bf16.mxu0 0
      %5487 = vmatmul.mubr.bf16.gmra.mrb[0].mxu0 %v5449
      %v5488 = vpop.f32.mrb[0].mxu0
      %v5489 = vadd.f32 0.0, %v5488
      %v5490 = vpop.f32.mrb[0].mxu0
      %v5491 = vpop.f32.mrb[0].mxu0
      %v5492 = vpop.f32.mrb[0].mxu0
      %5493 = vdwg.mxu0
      %v5495 = vsel %vm3199, %v5396, 0
      %v5498 = vsel %vm3255, %v5400, 0
      %5500 = vmatprep.subr.bf16.mxu0 0
      %5501 = vmatpush1.bf16.msra.mxu0 %v5498
      %5502 = vmatprep.subr.bf16.mxu0 0
      %5503 = vmatpush1.bf16.msra.mxu0 0
      %5504 = vmatprep.subr.bf16.mxu0 0
      %5505 = vmatpush1.bf16.msra.mxu0 0
      %5506 = vmatprep.subr.bf16.mxu0 0
      %5507 = vmatpush1.bf16.msra.mxu0 0
      %5508 = vmatprep.subr.bf16.mxu0 0
      %5509 = vmatpush1.bf16.msra.mxu0 0
      %5510 = vmatprep.subr.bf16.mxu0 0
      %5511 = vmatpush1.bf16.msra.mxu0 0
      %5512 = vmatprep.subr.bf16.mxu0 0
      %5513 = vmatpush1.bf16.msra.mxu0 0
      %5514 = vmatprep.subr.bf16.mxu0 0
      %5515 = vmatpush1.bf16.msra.mxu0 0
      %5516 = vmatprep.subr.bf16.mxu0 0
      %5517 = vmatpush1.bf16.msra.mxu0 0
      %5518 = vmatprep.subr.bf16.mxu0 0
      %5519 = vmatpush1.bf16.msra.mxu0 0
      %5520 = vmatprep.subr.bf16.mxu0 0
      %5521 = vmatpush1.bf16.msra.mxu0 0
      %5522 = vmatprep.subr.bf16.mxu0 0
      %5523 = vmatpush1.bf16.msra.mxu0 0
      %5524 = vmatprep.subr.bf16.mxu0 0
      %5525 = vmatpush1.bf16.msra.mxu0 0
      %5526 = vmatprep.subr.bf16.mxu0 0
      %5527 = vmatpush1.bf16.msra.mxu0 0
      %5528 = vmatprep.subr.bf16.mxu0 0
      %5529 = vmatpush1.bf16.msra.mxu0 0
      %5530 = vmatprep.subr.bf16.mxu0 0
      %5531 = vmatpush1.bf16.msra.mxu0 0
      %5532 = vmatprep.mubr.bf16.mxu0 0
      %5533 = vmatmul.mubr.bf16.gmra.mrb[0].mxu0 %v5495
      %v5534 = vpop.f32.mrb[0].mxu0
      %v5535 = vadd.f32 0.0, %v5534
      %v5536 = vpop.f32.mrb[0].mxu0
      %v5537 = vpop.f32.mrb[0].mxu0
      %v5538 = vpop.f32.mrb[0].mxu0
      %5539 = vdwg.mxu0
      %v5541 = vsel %vm3199, %v5397, 0
      %v5544 = vsel %vm3255, %v5401, 0
      %5546 = vmatprep.subr.bf16.mxu0 0
      %5547 = vmatpush1.bf16.msra.mxu0 %v5544
      %5548 = vmatprep.subr.bf16.mxu0 0
      %5549 = vmatpush1.bf16.msra.mxu0 0
      %5550 = vmatprep.subr.bf16.mxu0 0
      %5551 = vmatpush1.bf16.msra.mxu0 0
      %5552 = vmatprep.subr.bf16.mxu0 0
      %5553 = vmatpush1.bf16.msra.mxu0 0
      %5554 = vmatprep.subr.bf16.mxu0 0
      %5555 = vmatpush1.bf16.msra.mxu0 0
      %5556 = vmatprep.subr.bf16.mxu0 0
      %5557 = vmatpush1.bf16.msra.mxu0 0
      %5558 = vmatprep.subr.bf16.mxu0 0
      %5559 = vmatpush1.bf16.msra.mxu0 0
      %5560 = vmatprep.subr.bf16.mxu0 0
      %5561 = vmatpush1.bf16.msra.mxu0 0
      %5562 = vmatprep.subr.bf16.mxu0 0
      %5563 = vmatpush1.bf16.msra.mxu0 0
      %5564 = vmatprep.subr.bf16.mxu0 0
      %5565 = vmatpush1.bf16.msra.mxu0 0
      %5566 = vmatprep.subr.bf16.mxu0 0
      %5567 = vmatpush1.bf16.msra.mxu0 0
      %5568 = vmatprep.subr.bf16.mxu0 0
      %5569 = vmatpush1.bf16.msra.mxu0 0
      %5570 = vmatprep.subr.bf16.mxu0 0
      %5571 = vmatpush1.bf16.msra.mxu0 0
      %5572 = vmatprep.subr.bf16.mxu0 0
      %5573 = vmatpush1.bf16.msra.mxu0 0
      %5574 = vmatprep.subr.bf16.mxu0 0
      %5575 = vmatpush1.bf16.msra.mxu0 0
      %5576 = vmatprep.subr.bf16.mxu0 0
      %5577 = vmatpush1.bf16.msra.mxu0 0
      %5578 = vmatprep.mubr.bf16.mxu0 0
      %5579 = vmatmul.mubr.bf16.gmra.mrb[0].mxu0 %v5541
      %v5580 = vpop.f32.mrb[0].mxu0
      %v5581 = vadd.f32 0.0, %v5580
      %v5582 = vpop.f32.mrb[0].mxu0
      %v5583 = vpop.f32.mrb[0].mxu0
      %v5584 = vpop.f32.mrb[0].mxu0
      %5585 = vdwg.mxu0
      %5587 = vrot.lane.b32.xlu0 %v5489, 32
      %v5588 = vpop.permute.xlu0 %5587
      %5591 = vrot.lane.b32.xlu0 %v5535, 64
      %v5592 = vpop.permute.xlu0 %5591
      %5595 = vrot.lane.b32.xlu0 %v5581, 96
      %v5596 = vpop.permute.xlu0 %5595
      %v5598 = vsel %vm1941, %v5443, %v5588
      %v5599 = vsel %vm3450, %v5598, %v5592
      %v5600 = vsel %vm3452, %v5599, %v5596
      %v5601 = vpack.c.bf16 %v5600, %v5600
      %v5603 = vlaneseq
      %v5604 = vshrl.u32 %v5603, 7
      %v5605 = vsub.s32 0, %v5604
      %v5606 = vrot.slane %v4891, %v5605
      %v5624 = vunpack.c.l.b16 %v4875
      %v5625 = vunpack.c.l.b16 %v4876
      %v5626 = vunpack.c.l.b16 %v4877
      %v5627 = vunpack.c.l.b16 %v4878
      %v5628 = vunpack.c.l.b16 %v4879
      %v5629 = vunpack.c.l.b16 %v4880
      %v5630 = vunpack.c.l.b16 %v4881
      %v5631 = vunpack.c.l.b16 %v4882
      %v5632 = vunpack.c.l.b16 %v4883
      %v5633 = vunpack.c.l.b16 %v4884
      %v5634 = vunpack.c.l.b16 %v4885
      %v5635 = vunpack.c.l.b16 %v4886
      %v5636 = vunpack.c.l.b16 %v4887
      %v5637 = vunpack.c.l.b16 %v4888
      %v5638 = vunpack.c.l.b16 %v4889
      %v5639 = vunpack.c.l.b16 %v4890
      %v5640 = vpack.c.b16 %v5625, %v5624
      %v5641 = vpack.c.b16 %v5627, %v5626
      %v5642 = vpack.c.b16 %v5629, %v5628
      %v5643 = vpack.c.b16 %v5631, %v5630
      %v5644 = vpack.c.b16 %v5633, %v5632
      %v5645 = vpack.c.b16 %v5635, %v5634
      %v5646 = vpack.c.b16 %v5637, %v5636
      %v5647 = vpack.c.b16 %v5639, %v5638
      %5656 = vmatprep.subr.bf16.mxu0 0
      %5657 = vmatpush1.bf16.msra.mxu0 %v5640
      %5658 = vmatprep.subr.bf16.mxu0 0
      %5659 = vmatpush1.bf16.msra.mxu0 %v5641
      %5660 = vmatprep.subr.bf16.mxu0 0
      %5661 = vmatpush1.bf16.msra.mxu0 %v5642
      %5662 = vmatprep.subr.bf16.mxu0 0
      %5663 = vmatpush1.bf16.msra.mxu0 %v5643
      %5664 = vmatprep.subr.bf16.mxu0 0
      %5665 = vmatpush1.bf16.msra.mxu0 %v5644
      %5666 = vmatprep.subr.bf16.mxu0 0
      %5667 = vmatpush1.bf16.msra.mxu0 %v5645
      %5668 = vmatprep.subr.bf16.mxu0 0
      %5669 = vmatpush1.bf16.msra.mxu0 %v5646
      %5670 = vmatprep.subr.bf16.mxu0 0
      %5671 = vmatpush1.bf16.msra.mxu0 %v5647
      %5672 = vmatprep.subr.bf16.mxu0 0
      %5673 = vmatpush1.bf16.msra.mxu0 0
      %5674 = vmatprep.subr.bf16.mxu0 0
      %5675 = vmatpush1.bf16.msra.mxu0 0
      %5676 = vmatprep.subr.bf16.mxu0 0
      %5677 = vmatpush1.bf16.msra.mxu0 0
      %5678 = vmatprep.subr.bf16.mxu0 0
      %5679 = vmatpush1.bf16.msra.mxu0 0
      %5680 = vmatprep.subr.bf16.mxu0 0
      %5681 = vmatpush1.bf16.msra.mxu0 0
      %5682 = vmatprep.subr.bf16.mxu0 0
      %5683 = vmatpush1.bf16.msra.mxu0 0
      %5684 = vmatprep.subr.bf16.mxu0 0
      %5685 = vmatpush1.bf16.msra.mxu0 0
      %5686 = vmatprep.subr.bf16.mxu0 0
      %5687 = vmatpush1.bf16.msra.mxu0 0
      %5688 = vmatprep.mubr.bf16.mxu0 0
      %5689 = vmatmul.mubr.bf16.gmra.mrb[0].mxu0 %v5601
      %v5690 = vpop.f32.mrb[0].mxu0
      %v5691 = vadd.f32 %v5606, %v5690
      %v5692 = vpop.f32.mrb[0].mxu0
      %v5693 = vpop.f32.mrb[0].mxu0
      %v5694 = vpop.f32.mrb[0].mxu0
      %5695 = vdwg.mxu0
      %v5696 = vadd.f32 %v4813, %v5691
      %v5697 = vld [vmem:[%s101] sm:$0x1]
      %v5698 = vld [vmem:[%s103] sm:$0x1]
      %5699 = vadd.xlane.f32.xlu0 %v5696
      %v5700 = vpop.xlane.xlu0 %5699
      %v5701 = vmul.f32 %v5700, %v2663
      %v5702 = vsub.f32 %v5696, %v5701
      %v5703 = vmul.f32 %v5702, %v5702
      %5704 = vadd.xlane.f32.xlu0 %v5703
      %v5705 = vpop.xlane.xlu0 %5704
      %v5706 = vmul.f32 %v5705, %v2663
      %v5707 = vadd.f32 %v5706, 1e-05
      %v5708 = vrsqrt.pop %v5707
      %v5709 = vmul.f32 %v5702, %v5708
      %v5711 = vlaneseq
      %v5712 = vshrl.u32 %v5711, 7
      %v5713 = vsub.s32 0, %v5712
      %v5714 = vrot.slane %v5697, %v5713
      %v5716 = vmul.f32 %v5709, %v5714
      %v5718 = vlaneseq
      %v5719 = vshrl.u32 %v5718, 7
      %v5720 = vsub.s32 0, %v5719
      %v5721 = vrot.slane %v5698, %v5720
      %v5723 = vadd.f32 %v5716, %v5721
      %v5724 = vld [vmem:[%s105] sm:$0xff]
      %v5725 = vld [vmem:[%s105 + $0x8] sm:$0xff]
      %v5726 = vld [vmem:[%s105 + $0x10] sm:$0xff]
      %v5727 = vld [vmem:[%s105 + $0x18] sm:$0xff]
      %v5728 = vld [vmem:[%s105 + $0x20] sm:$0xff]
      %v5729 = vld [vmem:[%s105 + $0x28] sm:$0xff]
      %v5730 = vld [vmem:[%s105 + $0x30] sm:$0xff]
      %v5731 = vld [vmem:[%s105 + $0x38] sm:$0xff]
      %v5732 = vld [vmem:[%s105 + $0x40] sm:$0xff]
      %v5733 = vld [vmem:[%s105 + $0x48] sm:$0xff]
      %v5734 = vld [vmem:[%s105 + $0x50] sm:$0xff]
      %v5735 = vld [vmem:[%s105 + $0x58] sm:$0xff]
      %v5736 = vld [vmem:[%s105 + $0x60] sm:$0xff]
      %v5737 = vld [vmem:[%s105 + $0x68] sm:$0xff]
      %v5738 = vld [vmem:[%s105 + $0x70] sm:$0xff]
      %v5739 = vld [vmem:[%s105 + $0x78] sm:$0xff]
      %v5740 = vld [vmem:[%s107] sm:$0x3]
      %v5741 = vld [vmem:[%s109] sm:$0xf]
      %v5742 = vld [vmem:[%s109 + $0x4] sm:$0xf]
      %v5743 = vld [vmem:[%s109 + $0x8] sm:$0xf]
      %v5744 = vld [vmem:[%s109 + $0xc] sm:$0xf]
      %v5745 = vld [vmem:[%s109 + $0x10] sm:$0xf]
      %v5746 = vld [vmem:[%s109 + $0x14] sm:$0xf]
      %v5747 = vld [vmem:[%s109 + $0x18] sm:$0xf]
      %v5748 = vld [vmem:[%s109 + $0x1c] sm:$0xf]
      %v5749 = vld [vmem:[%s109 + $0x20] sm:$0xf]
      %v5750 = vld [vmem:[%s109 + $0x24] sm:$0xf]
      %v5751 = vld [vmem:[%s109 + $0x28] sm:$0xf]
      %v5752 = vld [vmem:[%s109 + $0x2c] sm:$0xf]
      %v5753 = vld [vmem:[%s109 + $0x30] sm:$0xf]
      %v5754 = vld [vmem:[%s109 + $0x34] sm:$0xf]
      %v5755 = vld [vmem:[%s109 + $0x38] sm:$0xf]
      %v5756 = vld [vmem:[%s109 + $0x3c] sm:$0xf]
      %v5757 = vld [vmem:[%s109 + $0x40] sm:$0xf]
      %v5758 = vld [vmem:[%s109 + $0x44] sm:$0xf]
      %v5759 = vld [vmem:[%s109 + $0x48] sm:$0xf]
      %v5760 = vld [vmem:[%s109 + $0x4c] sm:$0xf]
      %v5761 = vld [vmem:[%s109 + $0x50] sm:$0xf]
      %v5762 = vld [vmem:[%s109 + $0x54] sm:$0xf]
      %v5763 = vld [vmem:[%s109 + $0x58] sm:$0xf]
      %v5764 = vld [vmem:[%s109 + $0x5c] sm:$0xf]
      %v5765 = vld [vmem:[%s109 + $0x60] sm:$0xf]
      %v5766 = vld [vmem:[%s109 + $0x64] sm:$0xf]
      %v5767 = vld [vmem:[%s109 + $0x68] sm:$0xf]
      %v5768 = vld [vmem:[%s109 + $0x6c] sm:$0xf]
      %v5769 = vld [vmem:[%s109 + $0x70] sm:$0xf]
      %v5770 = vld [vmem:[%s109 + $0x74] sm:$0xf]
      %v5771 = vld [vmem:[%s109 + $0x78] sm:$0xf]
      %v5772 = vld [vmem:[%s109 + $0x7c] sm:$0xf]
      %v5773 = vld [vmem:[%s111] sm:$0x1]
      %v5774 = vpack.c.bf16 %v5723, %v5723
      %v5776 = vlaneseq
      %v5777 = vshrl.u32 %v5776, 7
      %v5778 = vsub.s32 0, %v5777
      %v5779 = vrot.slane %v5740, %v5778
      %v5780 = vlaneseq
      %v5781 = vshrl.u32 %v5780, 7
      %v5782 = vsub.s32 1, %v5781
      %v5783 = vrot.slane %v5740, %v5782
      %v5802 = vunpack.c.l.b16 %v5724
      %v5803 = vunpack.c.h.b16 %v5724
      %v5804 = vunpack.c.l.b16 %v5725
      %v5805 = vunpack.c.h.b16 %v5725
      %v5806 = vunpack.c.l.b16 %v5726
      %v5807 = vunpack.c.h.b16 %v5726
      %v5808 = vunpack.c.l.b16 %v5727
      %v5809 = vunpack.c.h.b16 %v5727
      %v5810 = vunpack.c.l.b16 %v5728
      %v5811 = vunpack.c.h.b16 %v5728
      %v5812 = vunpack.c.l.b16 %v5729
      %v5813 = vunpack.c.h.b16 %v5729
      %v5814 = vunpack.c.l.b16 %v5730
      %v5815 = vunpack.c.h.b16 %v5730
      %v5816 = vunpack.c.l.b16 %v5731
      %v5817 = vunpack.c.h.b16 %v5731
      %v5818 = vunpack.c.l.b16 %v5732
      %v5819 = vunpack.c.h.b16 %v5732
      %v5820 = vunpack.c.l.b16 %v5733
      %v5821 = vunpack.c.h.b16 %v5733
      %v5822 = vunpack.c.l.b16 %v5734
      %v5823 = vunpack.c.h.b16 %v5734
      %v5824 = vunpack.c.l.b16 %v5735
      %v5825 = vunpack.c.h.b16 %v5735
      %v5826 = vunpack.c.l.b16 %v5736
      %v5827 = vunpack.c.h.b16 %v5736
      %v5828 = vunpack.c.l.b16 %v5737
      %v5829 = vunpack.c.h.b16 %v5737
      %v5830 = vunpack.c.l.b16 %v5738
      %v5831 = vunpack.c.h.b16 %v5738
      %v5832 = vunpack.c.l.b16 %v5739
      %v5833 = vunpack.c.h.b16 %v5739
      %v5834 = vpack.c.b16 %v5804, %v5802
      %v5835 = vpack.c.b16 %v5805, %v5803
      %v5836 = vpack.c.b16 %v5808, %v5806
      %v5837 = vpack.c.b16 %v5809, %v5807
      %v5838 = vpack.c.b16 %v5812, %v5810
      %v5839 = vpack.c.b16 %v5813, %v5811
      %v5840 = vpack.c.b16 %v5816, %v5814
      %v5841 = vpack.c.b16 %v5817, %v5815
      %v5842 = vpack.c.b16 %v5820, %v5818
      %v5843 = vpack.c.b16 %v5821, %v5819
      %v5844 = vpack.c.b16 %v5824, %v5822
      %v5845 = vpack.c.b16 %v5825, %v5823
      %v5846 = vpack.c.b16 %v5828, %v5826
      %v5847 = vpack.c.b16 %v5829, %v5827
      %v5848 = vpack.c.b16 %v5832, %v5830
      %v5849 = vpack.c.b16 %v5833, %v5831
      %5866 = vmatprep.subr.bf16.mxu0 %v5835
      %5867 = vmatpush1.bf16.msra.mxu0 %v5834
      %5868 = vmatprep.subr.bf16.mxu0 %v5837
      %5869 = vmatpush1.bf16.msra.mxu0 %v5836
      %5870 = vmatprep.subr.bf16.mxu0 %v5839
      %5871 = vmatpush1.bf16.msra.mxu0 %v5838
      %5872 = vmatprep.subr.bf16.mxu0 %v5841
      %5873 = vmatpush1.bf16.msra.mxu0 %v5840
      %5874 = vmatprep.subr.bf16.mxu0 %v5843
      %5875 = vmatpush1.bf16.msra.mxu0 %v5842
      %5876 = vmatprep.subr.bf16.mxu0 %v5845
      %5877 = vmatpush1.bf16.msra.mxu0 %v5844
      %5878 = vmatprep.subr.bf16.mxu0 %v5847
      %5879 = vmatpush1.bf16.msra.mxu0 %v5846
      %5880 = vmatprep.subr.bf16.mxu0 %v5849
      %5881 = vmatpush1.bf16.msra.mxu0 %v5848
      %5882 = vmatprep.subr.bf16.mxu0 0
      %5883 = vmatpush1.bf16.msra.mxu0 0
      %5884 = vmatprep.subr.bf16.mxu0 0
      %5885 = vmatpush1.bf16.msra.mxu0 0
      %5886 = vmatprep.subr.bf16.mxu0 0
      %5887 = vmatpush1.bf16.msra.mxu0 0
      %5888 = vmatprep.subr.bf16.mxu0 0
      %5889 = vmatpush1.bf16.msra.mxu0 0
      %5890 = vmatprep.subr.bf16.mxu0 0
      %5891 = vmatpush1.bf16.msra.mxu0 0
      %5892 = vmatprep.subr.bf16.mxu0 0
      %5893 = vmatpush1.bf16.msra.mxu0 0
      %5894 = vmatprep.subr.bf16.mxu0 0
      %5895 = vmatpush1.bf16.msra.mxu0 0
      %5896 = vmatprep.subr.bf16.mxu0 0
      %5897 = vmatpush1.bf16.msra.mxu0 0
      %5898 = vmatprep.mubr.bf16.mxu0 0
      %5899 = vmatmul.mubr.bf16.gmra.mrb[0].mxu0 %v5774
      %v5900 = vpop.f32.mrb[0].mxu0
      %v5901 = vadd.f32 %v5779, %v5900
      %v5902 = vpop.f32.mrb[0].mxu0
      %v5903 = vadd.f32 %v5783, %v5902
      %v5904 = vpop.f32.mrb[0].mxu0
      %v5905 = vpop.f32.mrb[0].mxu0
      %5906 = vdwg.mxu0
      %v5907 = vmax.f32 %v5901, 0.0
      %v5908 = vmax.f32 %v5903, 0.0
      %v5909 = vpack.c.bf16 %v5907, %v5907
      %v5910 = vpack.c.bf16 %v5908, %v5908
      %v5912 = vlaneseq
      %v5913 = vshrl.u32 %v5912, 7
      %v5914 = vsub.s32 0, %v5913
      %v5915 = vrot.slane %v5773, %v5914
      %v5949 = vunpack.c.l.b16 %v5741
      %v5950 = vunpack.c.l.b16 %v5742
      %v5951 = vunpack.c.l.b16 %v5743
      %v5952 = vunpack.c.l.b16 %v5744
      %v5953 = vunpack.c.l.b16 %v5745
      %v5954 = vunpack.c.l.b16 %v5746
      %v5955 = vunpack.c.l.b16 %v5747
      %v5956 = vunpack.c.l.b16 %v5748
      %v5957 = vunpack.c.l.b16 %v5749
      %v5958 = vunpack.c.l.b16 %v5750
      %v5959 = vunpack.c.l.b16 %v5751
      %v5960 = vunpack.c.l.b16 %v5752
      %v5961 = vunpack.c.l.b16 %v5753
      %v5962 = vunpack.c.l.b16 %v5754
      %v5963 = vunpack.c.l.b16 %v5755
      %v5964 = vunpack.c.l.b16 %v5756
      %v5965 = vunpack.c.l.b16 %v5757
      %v5966 = vunpack.c.l.b16 %v5758
      %v5967 = vunpack.c.l.b16 %v5759
      %v5968 = vunpack.c.l.b16 %v5760
      %v5969 = vunpack.c.l.b16 %v5761
      %v5970 = vunpack.c.l.b16 %v5762
      %v5971 = vunpack.c.l.b16 %v5763
      %v5972 = vunpack.c.l.b16 %v5764
      %v5973 = vunpack.c.l.b16 %v5765
      %v5974 = vunpack.c.l.b16 %v5766
      %v5975 = vunpack.c.l.b16 %v5767
      %v5976 = vunpack.c.l.b16 %v5768
      %v5977 = vunpack.c.l.b16 %v5769
      %v5978 = vunpack.c.l.b16 %v5770
      %v5979 = vunpack.c.l.b16 %v5771
      %v5980 = vunpack.c.l.b16 %v5772
      %v5981 = vpack.c.b16 %v5950, %v5949
      %v5982 = vpack.c.b16 %v5952, %v5951
      %v5983 = vpack.c.b16 %v5954, %v5953
      %v5984 = vpack.c.b16 %v5956, %v5955
      %v5985 = vpack.c.b16 %v5958, %v5957
      %v5986 = vpack.c.b16 %v5960, %v5959
      %v5987 = vpack.c.b16 %v5962, %v5961
      %v5988 = vpack.c.b16 %v5964, %v5963
      %v5989 = vpack.c.b16 %v5966, %v5965
      %v5990 = vpack.c.b16 %v5968, %v5967
      %v5991 = vpack.c.b16 %v5970, %v5969
      %v5992 = vpack.c.b16 %v5972, %v5971
      %v5993 = vpack.c.b16 %v5974, %v5973
      %v5994 = vpack.c.b16 %v5976, %v5975
      %v5995 = vpack.c.b16 %v5978, %v5977
      %v5996 = vpack.c.b16 %v5980, %v5979
      %6013 = vmatprep.subr.bf16.mxu0 0
      %6014 = vmatpush1.bf16.msra.mxu0 %v5981
      %6015 = vmatprep.subr.bf16.mxu0 0
      %6016 = vmatpush1.bf16.msra.mxu0 %v5982
      %6017 = vmatprep.subr.bf16.mxu0 0
      %6018 = vmatpush1.bf16.msra.mxu0 %v5983
      %6019 = vmatprep.subr.bf16.mxu0 0
      %6020 = vmatpush1.bf16.msra.mxu0 %v5984
      %6021 = vmatprep.subr.bf16.mxu0 0
      %6022 = vmatpush1.bf16.msra.mxu0 %v5985
      %6023 = vmatprep.subr.bf16.mxu0 0
      %6024 = vmatpush1.bf16.msra.mxu0 %v5986
      %6025 = vmatprep.subr.bf16.mxu0 0
      %6026 = vmatpush1.bf16.msra.mxu0 %v5987
      %6027 = vmatprep.subr.bf16.mxu0 0
      %6028 = vmatpush1.bf16.msra.mxu0 %v5988
      %6029 = vmatprep.subr.bf16.mxu0 0
      %6030 = vmatpush1.bf16.msra.mxu0 %v5989
      %6031 = vmatprep.subr.bf16.mxu0 0
      %6032 = vmatpush1.bf16.msra.mxu0 %v5990
      %6033 = vmatprep.subr.bf16.mxu0 0
      %6034 = vmatpush1.bf16.msra.mxu0 %v5991
      %6035 = vmatprep.subr.bf16.mxu0 0
      %6036 = vmatpush1.bf16.msra.mxu0 %v5992
      %6037 = vmatprep.subr.bf16.mxu0 0
      %6038 = vmatpush1.bf16.msra.mxu0 %v5993
      %6039 = vmatprep.subr.bf16.mxu0 0
      %6040 = vmatpush1.bf16.msra.mxu0 %v5994
      %6041 = vmatprep.subr.bf16.mxu0 0
      %6042 = vmatpush1.bf16.msra.mxu0 %v5995
      %6043 = vmatprep.subr.bf16.mxu0 0
      %6044 = vmatpush1.bf16.msra.mxu0 %v5996
      %6045 = vmatprep.mubr.bf16.mxu0 %v5910
      %6046 = vmatmul.mubr.bf16.gmra.mrb[0].mxu0 %v5909
      %v6047 = vpop.f32.mrb[0].mxu0
      %v6048 = vadd.f32 %v5915, %v6047
      %v6049 = vpop.f32.mrb[0].mxu0
      %v6050 = vpop.f32.mrb[0].mxu0
      %v6051 = vpop.f32.mrb[0].mxu0
      %6052 = vdwg.mxu0
      %v6053 = vadd.f32 %v5696, %v6048
      %v6054 = vld [vmem:[%s113] sm:$0x1]
      %v6055 = vld [vmem:[%s115] sm:$0x1]
      %6056 = vadd.xlane.f32.xlu0 %v6053
      %v6057 = vpop.xlane.xlu0 %6056
      %v6058 = vmul.f32 %v6057, %v2663
      %v6059 = vsub.f32 %v6053, %v6058
      %v6060 = vmul.f32 %v6059, %v6059
      %6061 = vadd.xlane.f32.xlu0 %v6060
      %v6062 = vpop.xlane.xlu0 %6061
      %v6063 = vmul.f32 %v6062, %v2663
      %v6064 = vadd.f32 %v6063, 1e-05
      %v6065 = vrsqrt.pop %v6064
      %v6066 = vmul.f32 %v6059, %v6065
      %v6068 = vlaneseq
      %v6069 = vshrl.u32 %v6068, 7
      %v6070 = vsub.s32 0, %v6069
      %v6071 = vrot.slane %v6054, %v6070
      %v6073 = vmul.f32 %v6066, %v6071
      %v6075 = vlaneseq
      %v6076 = vshrl.u32 %v6075, 7
      %v6077 = vsub.s32 0, %v6076
      %v6078 = vrot.slane %v6055, %v6077
      %v6080 = vadd.f32 %v6073, %v6078
      %v6081 = vld [vmem:[%s117] sm:$0xf]
      %v6082 = vld [vmem:[%s117 + $0x4] sm:$0xf]
      %v6083 = vld [vmem:[%s117 + $0x8] sm:$0xf]
      %v6084 = vld [vmem:[%s117 + $0xc] sm:$0xf]
      %v6085 = vld [vmem:[%s117 + $0x10] sm:$0xf]
      %v6086 = vld [vmem:[%s117 + $0x14] sm:$0xf]
      %v6087 = vld [vmem:[%s117 + $0x18] sm:$0xf]
      %v6088 = vld [vmem:[%s117 + $0x1c] sm:$0xf]
      %v6089 = vld [vmem:[%s117 + $0x20] sm:$0xf]
      %v6090 = vld [vmem:[%s117 + $0x24] sm:$0xf]
      %v6091 = vld [vmem:[%s117 + $0x28] sm:$0xf]
      %v6092 = vld [vmem:[%s117 + $0x2c] sm:$0xf]
      %v6093 = vld [vmem:[%s117 + $0x30] sm:$0xf]
      %v6094 = vld [vmem:[%s117 + $0x34] sm:$0xf]
      %v6095 = vld [vmem:[%s117 + $0x38] sm:$0xf]
      %v6096 = vld [vmem:[%s117 + $0x3c] sm:$0xf]
      %v6097 = vpack.c.bf16 %v6080, %v6080
      %v6098 = vld [vmem:[%s1902] sm:$0xff]
      %v6099 = vld [vmem:[%s119] sm:$0x1]
      %6101 = vset.pattern.permute.xlu0 0
      %6102 = vperm.xlu0 %6101, %v6098
      %v6103 = vpop.permute.xlu0 %6102
      %v6106 = vlaneseq
      %v6107 = vshrl.u32 %v6106, 7
      %v6108 = vsub.s32 0, %v6107
      %v6109 = vrot.slane %v6099, %v6108
      %v6111 = vmul.f32 %v6103, %v6109
      %v6128 = vunpack.c.l.b16 %v6081
      %v6129 = vunpack.c.l.b16 %v6082
      %v6130 = vunpack.c.l.b16 %v6083
      %v6131 = vunpack.c.l.b16 %v6084
      %v6132 = vunpack.c.l.b16 %v6085
      %v6133 = vunpack.c.l.b16 %v6086
      %v6134 = vunpack.c.l.b16 %v6087
      %v6135 = vunpack.c.l.b16 %v6088
      %v6136 = vunpack.c.l.b16 %v6089
      %v6137 = vunpack.c.l.b16 %v6090
      %v6138 = vunpack.c.l.b16 %v6091
      %v6139 = vunpack.c.l.b16 %v6092
      %v6140 = vunpack.c.l.b16 %v6093
      %v6141 = vunpack.c.l.b16 %v6094
      %v6142 = vunpack.c.l.b16 %v6095
      %v6143 = vunpack.c.l.b16 %v6096
      %v6144 = vpack.c.b16 %v6129, %v6128
      %v6145 = vpack.c.b16 %v6131, %v6130
      %v6146 = vpack.c.b16 %v6133, %v6132
      %v6147 = vpack.c.b16 %v6135, %v6134
      %v6148 = vpack.c.b16 %v6137, %v6136
      %v6149 = vpack.c.b16 %v6139, %v6138
      %v6150 = vpack.c.b16 %v6141, %v6140
      %v6151 = vpack.c.b16 %v6143, %v6142
      %6160 = vmatprep.subr.bf16.mxu0 0
      %6161 = vmatpush1.bf16.msra.mxu0 %v6144
      %6162 = vmatprep.subr.bf16.mxu0 0
      %6163 = vmatpush1.bf16.msra.mxu0 %v6145
      %6164 = vmatprep.subr.bf16.mxu0 0
      %6165 = vmatpush1.bf16.msra.mxu0 %v6146
      %6166 = vmatprep.subr.bf16.mxu0 0
      %6167 = vmatpush1.bf16.msra.mxu0 %v6147
      %6168 = vmatprep.subr.bf16.mxu0 0
      %6169 = vmatpush1.bf16.msra.mxu0 %v6148
      %6170 = vmatprep.subr.bf16.mxu0 0
      %6171 = vmatpush1.bf16.msra.mxu0 %v6149
      %6172 = vmatprep.subr.bf16.mxu0 0
      %6173 = vmatpush1.bf16.msra.mxu0 %v6150
      %6174 = vmatprep.subr.bf16.mxu0 0
      %6175 = vmatpush1.bf16.msra.mxu0 %v6151
      %6176 = vmatprep.subr.bf16.mxu0 0
      %6177 = vmatpush1.bf16.msra.mxu0 0
      %6178 = vmatprep.subr.bf16.mxu0 0
      %6179 = vmatpush1.bf16.msra.mxu0 0
      %6180 = vmatprep.subr.bf16.mxu0 0
      %6181 = vmatpush1.bf16.msra.mxu0 0
      %6182 = vmatprep.subr.bf16.mxu0 0
      %6183 = vmatpush1.bf16.msra.mxu0 0
      %6184 = vmatprep.subr.bf16.mxu0 0
      %6185 = vmatpush1.bf16.msra.mxu0 0
      %6186 = vmatprep.subr.bf16.mxu0 0
      %6187 = vmatpush1.bf16.msra.mxu0 0
      %6188 = vmatprep.subr.bf16.mxu0 0
      %6189 = vmatpush1.bf16.msra.mxu0 0
      %6190 = vmatprep.subr.bf16.mxu0 0
      %6191 = vmatpush1.bf16.msra.mxu0 0
      %6192 = vmatprep.mubr.bf16.mxu0 0
      %6193 = vmatmul.mubr.bf16.gmra.mrb[0].mxu0 %v6097
      %v6194 = vpop.f32.mrb[0].mxu0
      %v6195 = vadd.f32 %v6111, %v6194
      %v6196 = vpop.f32.mrb[0].mxu0
      %v6197 = vpop.f32.mrb[0].mxu0
      %v6198 = vpop.f32.mrb[0].mxu0
      %6199 = vdwg.mxu0
      %v6200 = vld [vmem:[%s121] sm:$0x1]
      %v6202 = vlaneseq
      %v6203 = vshrl.u32 %v6202, 7
      %v6204 = vsub.s32 0, %v6203
      %v6205 = vrot.slane %v6200, %v6204
      %v6207 = vadd.f32 %v6195, %v6205
      %6208 = vst [vmem:[%s1906] sm:$0xff] %v6207
      %p6209 = scmp.lt.s32.totalorder %s134, 1
      %s6210 = scalar_select %p6209, %s134, 1
      %s6211 = smul.addr %s6210, 8
      %s6212 = scalar_lea.vmem %s123, %s6211
      // Predicated region
      $region265: #{travel_forward.1} parent=263 // pred_check
        %p6213 = pneg %p1473
      $region266: #{travel_forward.1} parent=263 // pred_check_branch
        %6215 = sbr.rel (%p6213) target = $region268
      $region267: #{travel_forward.1} parent=263 // pred_region
        _
      $region268: #{travel_forward.1} parent=263 // pred_fallthru
        _
    $region264: #{travel_forward.1} parent=5 // pred_fallthru
      _
    %p6216 = scmp.le.s32.totalorder 2, %s129
    // Predicated region
    $region269: #{travel_forward.1} parent=5 // pred_check
      %p6217 = pneg %p6216
    $region270: #{travel_forward.1} parent=5 // pred_check_branch
      %6219 = sbr.rel (%p6217) target = $region272
    $region271: #{travel_forward.1} parent=5 // pred_region
      %s6220 = ssub.s32 %s129, 2
      // Predicated region
      $region273: #{travel_forward.1} parent=271 // pred_check
        %p6221 = pneg %p1479
      $region274: #{travel_forward.1} parent=271 // pred_check_branch
        %6223 = sbr.rel (%p6221) target = $region276
      $region275: #{travel_forward.1} parent=271 // pred_region
        %p6224 = scmp.lt.s32.totalorder %s135, 1
        %s6225 = scalar_select %p6224, %s135, 1
        %s6226 = smul.addr %s6225, 8
        %s6227 = scalar_lea.vmem %s123, %s6226
      $region276: #{travel_forward.1} parent=271 // pred_fallthru
        _
    $region272: #{travel_forward.1} parent=5 // pred_fallthru
      _
  $region6: #{travel_forward.1} parent=0 // loop_footer
    %s133 = sadd.s32 1, %s129
  $region7: #{travel_forward.1} parent=0 // loop_footer_branch
    %128 = sbr.rel target = $region3
  $region8: #{travel_forward.1} parent=0 // loop_exit
    _

</llo_original>
